<compile_context>
chip_gen: v7x
topology: tpu7x:2x2x1
jax: 0.10.0
libtpu: 0.0.40
codegen_flags: <defaults>
</compile_context>

<pallas_src>
from functools import partial

import jax
import jax.numpy as jnp
from jax.experimental import pallas as pl
from jax.experimental.pallas import tpu as pltpu


# Lane-group geometry (128-aligned pool splits).
_G1 = 128        # conv1: 14*8 = 112 real lanes / parity group -> padded to 128 (N = 256)
_G2 = 512        # conv2: 7*64 = 448 real lanes / parity group -> padded to 512 (N = 1024)
_P1_LANES = 128  # conv2 input lanes per (b, h) row: 14*8 = 112 real + 16 zero pad


# ----------------------------------------------------------------------------
# Fused forward kernel (runs once per batch tile)
# ----------------------------------------------------------------------------
def _cnn1_fused_kernel(x_ref, w1_ref, b1_ref, w2_ref, b2_ref,
                       wf1_ref, bf1_ref, wf2_ref, bf2_ref, o_ref):
    cdt = w1_ref.dtype                  # MXU operand dtype (bf16)
    bt = x_ref.shape[0]                 # batch tile

    # ---- conv1: 1->8, 3x3, pad=1  + bias + ReLU + 2x2 max-pool -------------
    x = x_ref[...].astype(cdt)                                       # (bt, 28, 28)
    zr = jnp.zeros((bt, 1, 28), cdt)
    xp = jnp.concatenate([zr, x, zr], axis=1)                        # H zero-pad -> (bt, 30, 28)
    x1 = jnp.concatenate([xp[:, 0:28, :], xp[:, 1:29, :], xp[:, 2:30, :]],
                         axis=-1).reshape(bt * 28, 3 * 28)           # rows=(b,h), K=84
    h1 = jnp.dot(x1, w1_ref[...], preferred_element_type=jnp.float32)  # (bt*28, 256)
    h1 = jnp.maximum(h1 + b1_ref[...], 0.0).astype(cdt)              # bf16 activations
    p1 = jnp.maximum(h1[:, :_G1], h1[:, _G1:])                       # W-pool (whole-vreg)
    p1 = p1.reshape(bt * 14, 2 * _G1)
    p1 = jnp.maximum(p1[:, :_G1], p1[:, _G1:])                       # H-pool
    # p1: rows=(b, h2), lanes = w2*8 + c (112 real + 16 zero)  == padded NHWC (bt,14,14,8)

    # ---- conv2: 8->64, 3x3, pad=1 + bias + ReLU + 2x2 max-pool -------------
    p1 = p1.reshape(bt, 14, _P1_LANES)
    zr2 = jnp.zeros((bt, 1, _P1_LANES), cdt)
    pp = jnp.concatenate([zr2, p1, zr2], axis=1)                     # H zero-pad -> (bt, 16, 128)
    x2 = jnp.concatenate([pp[:, 0:14, :], pp[:, 1:15, :], pp[:, 2:16, :]],
                         axis=-1).reshape(bt * 14, 3 * _P1_LANES)    # rows=(b,h), K=384
    h2 = jnp.dot(x2, w2_ref[...], preferred_element_type=jnp.float32)  # (bt*14, 1024)
    h2 = jnp.maximum(h2 + b2_ref[...], 0.0).astype(cdt)
    p2 = jnp.maximum(h2[:, :_G2], h2[:, _G2:])                       # W-pool
    p2 = p2.reshape(bt * 7, 2 * _G2)
    p2 = jnp.maximum(p2[:, :_G2], p2[:, _G2:])                       # H-pool
    # p2: rows=(b, h4), lanes = w4*64 + c (448 real + 64 zero)  == padded NHWC (bt,7,7,64)

    # ---- fc1 (+ReLU) and fc2 (weights pre-permuted / zero-row-padded) ------
    f = p2.reshape(bt, 7 * _G2)                                      # (bt, 3584) bf16
    y = jnp.dot(f, wf1_ref[...], preferred_element_type=jnp.float32) + bf1_ref[...]
    y = jnp.maximum(y, 0.0).astype(cdt)                              # (bt, 128)
    out = jnp.dot(y, wf2_ref[...], preferred_element_type=jnp.float32) + bf2_ref[...]
    o_ref[...] = out.astype(o_ref.dtype)                             # (bt, 128), lane-dense


# ----------------------------------------------------------------------------
# Host-side (one-time) parameter re-layout
# ----------------------------------------------------------------------------
def _banded_conv_matrix(w_oihw, b_o, w_in, in_lane_pad, out_group_pad, dtype):
    """Fold a 3x3 / pad=1 / stride=1 conv into one banded matmul.

    Rows ordered (dy, w_in, Cin) and zero-padded per dy group to `in_lane_pad`
    (so the in-kernel im2row lane-concat indexes it directly).  Columns ordered
    (w%2, w//2, Cout), each parity group zero-padded to `out_group_pad` lanes so
    the following 2x2 max-pool is a 128-lane-aligned whole-vreg max.  W-padding
    is absorbed by the band structure; H-padding is a zero-row concat in-kernel."""
    c_out, c_in, kh, kw = w_oihw.shape              # (Cout, Cin, 3, 3)
    w_out = w_in                                    # pad=1, stride=1
    half = w_out // 2
    group = half * c_out
    wmat = jnp.transpose(w_oihw, (2, 3, 1, 0))      # (kh, kw, Cin, Cout)
    wi = jnp.arange(w_in)[:, None]                  # input column
    wo = jnp.arange(w_out)[None, :]                 # output column
    dj = wi - wo + 1                                # which 3x3 tap links wi -> wo
    valid = (dj >= 0) & (dj < kw)
    taps = wmat[:, jnp.clip(dj, 0, kw - 1)]         # (kh, w_in, w_out, Cin, Cout)
    taps = taps * valid[None, :, :, None, None].astype(wmat.dtype)
    taps = jnp.transpose(taps, (0, 1, 3, 2, 4))     # (kh, w_in, Cin, w_out, Cout)
    taps = taps.reshape(kh, w_in * c_in, half, 2, c_out)
    taps = jnp.transpose(taps, (0, 1, 3, 2, 4))     # (kh, w_in*Cin, parity, half, Cout)
    taps = taps.reshape(kh, w_in * c_in, 2, group)
    taps = jnp.pad(taps, ((0, 0),
                          (0, in_lane_pad - w_in * c_in),
                          (0, 0),
                          (0, out_group_pad - group)))
    w_banded = taps.reshape(kh * in_lane_pad, 2 * out_group_pad).astype(dtype)

    b_grp = jnp.tile(b_o[None, :], (half, 1)).reshape(group)
    b_grp = jnp.pad(b_grp, (0, out_group_pad - group))
    b_tiled = jnp.tile(b_grp, (2,)).reshape(1, 2 * out_group_pad).astype(jnp.float32)
    return w_banded, b_tiled


def prepare_params(params, compute_dtype=jnp.bfloat16):
    """One-time re-layout of the torch-style parameters into kernel layout."""
    w1, b1 = _banded_conv_matrix(params["conv1_w"], params["conv1_b"],
                                 w_in=28, in_lane_pad=28, out_group_pad=_G1,
                                 dtype=compute_dtype)                 # (84, 256)
    w2, b2 = _banded_conv_matrix(params["conv2_w"], params["conv2_b"],
                                 w_in=14, in_lane_pad=_P1_LANES, out_group_pad=_G2,
                                 dtype=compute_dtype)                 # (384, 1024)
    # fc1 consumes a torch NCHW flatten of (64,7,7); permute its rows once so the
    # kernel's natural padded-(h, w, c) flatten needs no activation transpose.
    wf1 = params["fc1_w"].reshape(128, 64, 7, 7).transpose(2, 3, 1, 0)  # (h, w, c, out)
    wf1 = wf1.reshape(7, 7 * 64, 128)
    wf1 = jnp.pad(wf1, ((0, 0), (0, _G2 - 7 * 64), (0, 0)))             # zero pad lanes
    wf1 = wf1.reshape(7 * _G2, 128).astype(compute_dtype)                # (3584, 128)
    # fc2 padded to a lane-dense N=128 output.
    wf2 = jnp.pad(params["fc2_w"].T, ((0, 0), (0, 128 - 10))).astype(compute_dtype)
    bf2 = jnp.pad(params["fc2_b"], (0, 128 - 10)).reshape(1, 128).astype(jnp.float32)
    return {
        "w1": w1, "b1": b1,
        "w2": w2, "b2": b2,
        "wf1": wf1, "bf1": params["fc1_b"].reshape(1, 128).astype(jnp.float32),
        "wf2": wf2, "bf2": bf2,
    }


# ----------------------------------------------------------------------------
# pallas_call wrapper
# ----------------------------------------------------------------------------
def _round_up(n, m):
    return ((n + m - 1) // m) * m


def _pick_batch_block(batch, max_bt=128):
    # Largest useful tile: 128 rows fills the MXU on fc1 and amortizes per-step
    # overhead; small batches round up to a multiple of 8 (the batch is padded,
    # never truncated, and bt=1 is never used).
    return min(max_bt, _round_up(max(batch, 1), 8))


@partial(jax.jit, static_argnames=("block_b",))
def cnn1_forward(x_nchw, prep, block_b=None):
    batch = x_nchw.shape[0]
    bt = block_b if block_b is not None else _pick_batch_block(batch)
    pb = _round_up(batch, bt)                       # padded batch (always divisible)
    x = x_nchw.reshape(batch, 28, 28).astype(jnp.bfloat16)   # C==1: NCHW -> (B,H,W); bf16 DMA
    if pb != batch:
        x = jnp.pad(x, ((0, pb - batch), (0, 0), (0, 0)))

    def full(shape):
        return pl.BlockSpec(shape, lambda i: (0,) * len(shape))

    out = pl.pallas_call(
        _cnn1_fused_kernel,
        out_shape=jax.ShapeDtypeStruct((pb, 128), jnp.float32),
        grid=(pb // bt,),
        in_specs=[
            pl.BlockSpec((bt, 28, 28), lambda i: (i, 0, 0)),
            full(prep["w1"].shape), full(prep["b1"].shape),
            full(prep["w2"].shape), full(prep["b2"].shape),
            full(prep["wf1"].shape), full(prep["bf1"].shape),
            full(prep["wf2"].shape), full(prep["bf2"].shape),
        ],
        out_specs=pl.BlockSpec((bt, 128), lambda i: (i, 0)),
        compiler_params=pltpu.CompilerParams(
            dimension_semantics=("parallel",),
            vmem_limit_bytes=48 * 1024 * 1024,
        ),
    )(x, prep["w1"], prep["b1"], prep["w2"], prep["b2"],
      prep["wf1"], prep["bf1"], prep["wf2"], prep["bf2"])
    return out[:batch, :10]


# ----------------------------------------------------------------------------
# Params + pure-JAX reference (for a sanity check)
# ----------------------------------------------------------------------------
def init_params(key):
    ks = jax.random.split(key, 8)

    def init(k, shape, fan_in):
        return jax.random.normal(k, shape, jnp.float32) / jnp.sqrt(fan_in)

    return {
        "conv1_w": init(ks[0], (8, 1, 3, 3), 9),
        "conv1_b": init(ks[1], (8,), 9),
        "conv2_w": init(ks[2], (64, 8, 3, 3), 72),
        "conv2_b": init(ks[3], (64,), 72),
        "fc1_w": init(ks[4], (128, 64 * 7 * 7), 64 * 7 * 7),
        "fc1_b": init(ks[5], (128,), 64 * 7 * 7),
        "fc2_w": init(ks[6], (10, 128), 128),
        "fc2_b": init(ks[7], (10,), 128),
    }


def reference_forward(x_nchw, params):
    dn = ("NCHW", "OIHW", "NCHW")
    y = jax.lax.conv_general_dilated(x_nchw, params["conv1_w"], (1, 1),
                                     ((1, 1), (1, 1)), dimension_numbers=dn)
    y = jnp.maximum(y + params["conv1_b"][None, :, None, None], 0.0)
    b, c, h, w = y.shape
    y = y.reshape(b, c, h // 2, 2, w // 2, 2).max(axis=(3, 5))
    y = jax.lax.conv_general_dilated(y, params["conv2_w"], (1, 1),
                                     ((1, 1), (1, 1)), dimension_numbers=dn)
    y = jnp.maximum(y + params["conv2_b"][None, :, None, None], 0.0)
    b, c, h, w = y.shape
    y = y.reshape(b, c, h // 2, 2, w // 2, 2).max(axis=(3, 5))
    y = y.reshape(b, -1)
    y = jnp.maximum(y @ params["fc1_w"].T + params["fc1_b"], 0.0)
    return y @ params["fc2_w"].T + params["fc2_b"]


if __name__ == "__main__":
    key = jax.random.PRNGKey(0)
    k_x, k_p = jax.random.split(key)
    # fc1 expects 64*7*7 features => 28x28 input with 1 channel (two 2x2 pools).
    x = jax.random.normal(k_x, (2, 1, 28, 28), jnp.float32)
    params = init_params(k_p)
    prep = prepare_params(params, compute_dtype=jnp.bfloat16)

    out = jax.block_until_ready(cnn1_forward(x, prep))
    assert out.shape == (2, 10), out.shape

    # Sanity: fused bf16-MXU kernel vs. plain-JAX f32 reference.
    ref = jax.block_until_ready(reference_forward(x, params))
    err = float(jnp.max(jnp.abs(out - ref)))
    assert err < 0.25, f"kernel deviates from reference: max |diff| = {err}"
    print("KERNEL_OK")
</pallas_src>

<mosaic_0001>
module attributes {stable_mosaic.version = 11 : i64} {
  func.func @_cnn1_fused_kernel(%arg0: i32, %arg1: memref<8x28x28xbf16, #tpu.memory_space<vmem>>, %arg2: memref<84x256xbf16, #tpu.memory_space<vmem>>, %arg3: memref<1x256xf32, #tpu.memory_space<vmem>>, %arg4: memref<384x1024xbf16, #tpu.memory_space<vmem>>, %arg5: memref<1x1024xf32, #tpu.memory_space<vmem>>, %arg6: memref<3584x128xbf16, #tpu.memory_space<vmem>>, %arg7: memref<1x128xf32, #tpu.memory_space<vmem>>, %arg8: memref<128x128xbf16, #tpu.memory_space<vmem>>, %arg9: memref<1x128xf32, #tpu.memory_space<vmem>>, %arg10: memref<8x128xf32, #tpu.memory_space<vmem>>) attributes {dimension_semantics = [#tpu.dimension_semantics<parallel>], iteration_bounds = array<i64: 1>, scalar_prefetch = 0 : i64, scratch_operands = 0 : i64, tpu.core_type = #tpu.core_type<tc>, window_params = [{transform_indices = @transform_0, window_bounds = array<i64: 8, 28, 28>}, {pipeline_mode = #tpu.pipeline_mode<synchronous>, transform_indices = @transform_1, window_bounds = array<i64: 84, 256>}, {pipeline_mode = #tpu.pipeline_mode<synchronous>, transform_indices = @transform_2, window_bounds = array<i64: 1, 256>}, {pipeline_mode = #tpu.pipeline_mode<synchronous>, transform_indices = @transform_3, window_bounds = array<i64: 384, 1024>}, {pipeline_mode = #tpu.pipeline_mode<synchronous>, transform_indices = @transform_4, window_bounds = array<i64: 1, 1024>}, {pipeline_mode = #tpu.pipeline_mode<synchronous>, transform_indices = @transform_5, window_bounds = array<i64: 3584, 128>}, {pipeline_mode = #tpu.pipeline_mode<synchronous>, transform_indices = @transform_6, window_bounds = array<i64: 1, 128>}, {pipeline_mode = #tpu.pipeline_mode<synchronous>, transform_indices = @transform_7, window_bounds = array<i64: 128, 128>}, {pipeline_mode = #tpu.pipeline_mode<synchronous>, transform_indices = @transform_8, window_bounds = array<i64: 1, 128>}, {transform_indices = @transform_9, window_bounds = array<i64: 8, 128>}]} {
    %c0 = arith.constant 0 : index
    %c0_0 = arith.constant 0 : index
    %c0_1 = arith.constant 0 : index
    %0 = vector.load %arg1[%c0, %c0_0, %c0_1] : memref<8x28x28xbf16, #tpu.memory_space<vmem>>, vector<8x28x28xbf16>
    %cst = arith.constant 0.000000e+00 : bf16
    %1 = vector.broadcast %cst : bf16 to vector<8x1x28xbf16>
    %2 = tpu.concatenate %1, %0, %1 in 1 : vector<8x1x28xbf16>, vector<8x28x28xbf16>, vector<8x1x28xbf16> -> vector<8x30x28xbf16>
    %3 = vector.extract_strided_slice %2 {offsets = [0, 0, 0], sizes = [8, 28, 28], strides = [1, 1, 1]} : vector<8x30x28xbf16> to vector<8x28x28xbf16>
    %4 = vector.extract_strided_slice %2 {offsets = [0, 1, 0], sizes = [8, 28, 28], strides = [1, 1, 1]} : vector<8x30x28xbf16> to vector<8x28x28xbf16>
    %5 = vector.extract_strided_slice %2 {offsets = [0, 2, 0], sizes = [8, 28, 28], strides = [1, 1, 1]} : vector<8x30x28xbf16> to vector<8x28x28xbf16>
    %6 = tpu.concatenate %3, %4, %5 in 2 : vector<8x28x28xbf16>, vector<8x28x28xbf16>, vector<8x28x28xbf16> -> vector<8x28x84xbf16>
    %7 = vector.shape_cast %6 : vector<8x28x84xbf16> to vector<224x84xbf16>
    %c0_2 = arith.constant 0 : index
    %c0_3 = arith.constant 0 : index
    %8 = vector.load %arg2[%c0_2, %c0_3] : memref<84x256xbf16, #tpu.memory_space<vmem>>, vector<84x256xbf16>
    %cst_4 = arith.constant dense<0.000000e+00> : vector<224x256xf32>
    %9 = tpu.matmul %7, %8, %cst_4 {dimension_numbers = #tpu.dot_dimension_numbers<[1], [0], [0], [1], [0, 0, 1, 1], [], []>} : vector<224x84xbf16>, vector<84x256xbf16>, vector<224x256xf32> -> vector<224x256xf32>
    %c0_5 = arith.constant 0 : index
    %c0_6 = arith.constant 0 : index
    %10 = vector.load %arg3[%c0_5, %c0_6] : memref<1x256xf32, #tpu.memory_space<vmem>>, vector<1x256xf32>
    %11 = vector.broadcast %10 : vector<1x256xf32> to vector<224x256xf32>
    %12 = arith.addf %9, %11 : vector<224x256xf32>
    %cst_7 = arith.constant 0.000000e+00 : f32
    %13 = vector.broadcast %cst_7 : f32 to vector<224x256xf32>
    %14 = arith.maximumf %12, %13 : vector<224x256xf32>
    %15 = arith.truncf %14 : vector<224x256xf32> to vector<224x256xbf16>
    %16 = vector.extract_strided_slice %15 {offsets = [0, 0], sizes = [224, 128], strides = [1, 1]} : vector<224x256xbf16> to vector<224x128xbf16>
    %17 = vector.extract_strided_slice %15 {offsets = [0, 128], sizes = [224, 128], strides = [1, 1]} : vector<224x256xbf16> to vector<224x128xbf16>
    %18 = arith.maximumf %16, %17 : vector<224x128xbf16>
    %19 = vector.shape_cast %18 : vector<224x128xbf16> to vector<112x256xbf16>
    %20 = vector.extract_strided_slice %19 {offsets = [0, 0], sizes = [112, 128], strides = [1, 1]} : vector<112x256xbf16> to vector<112x128xbf16>
    %21 = vector.extract_strided_slice %19 {offsets = [0, 128], sizes = [112, 128], strides = [1, 1]} : vector<112x256xbf16> to vector<112x128xbf16>
    %22 = arith.maximumf %20, %21 : vector<112x128xbf16>
    %23 = vector.shape_cast %22 : vector<112x128xbf16> to vector<8x14x128xbf16>
    %cst_8 = arith.constant 0.000000e+00 : bf16
    %24 = vector.broadcast %cst_8 : bf16 to vector<8x1x128xbf16>
    %25 = tpu.concatenate %24, %23, %24 in 1 : vector<8x1x128xbf16>, vector<8x14x128xbf16>, vector<8x1x128xbf16> -> vector<8x16x128xbf16>
    %26 = vector.extract_strided_slice %25 {offsets = [0, 0, 0], sizes = [8, 14, 128], strides = [1, 1, 1]} : vector<8x16x128xbf16> to vector<8x14x128xbf16>
    %27 = vector.extract_strided_slice %25 {offsets = [0, 1, 0], sizes = [8, 14, 128], strides = [1, 1, 1]} : vector<8x16x128xbf16> to vector<8x14x128xbf16>
    %28 = vector.extract_strided_slice %25 {offsets = [0, 2, 0], sizes = [8, 14, 128], strides = [1, 1, 1]} : vector<8x16x128xbf16> to vector<8x14x128xbf16>
    %29 = tpu.concatenate %26, %27, %28 in 2 : vector<8x14x128xbf16>, vector<8x14x128xbf16>, vector<8x14x128xbf16> -> vector<8x14x384xbf16>
    %30 = vector.shape_cast %29 : vector<8x14x384xbf16> to vector<112x384xbf16>
    %c0_9 = arith.constant 0 : index
    %c0_10 = arith.constant 0 : index
    %31 = vector.load %arg4[%c0_9, %c0_10] : memref<384x1024xbf16, #tpu.memory_space<vmem>>, vector<384x1024xbf16>
    %cst_11 = arith.constant dense<0.000000e+00> : vector<112x1024xf32>
    %32 = tpu.matmul %30, %31, %cst_11 {dimension_numbers = #tpu.dot_dimension_numbers<[1], [0], [0], [1], [0, 0, 1, 1], [], []>} : vector<112x384xbf16>, vector<384x1024xbf16>, vector<112x1024xf32> -> vector<112x1024xf32>
    %c0_12 = arith.constant 0 : index
    %c0_13 = arith.constant 0 : index
    %33 = vector.load %arg5[%c0_12, %c0_13] : memref<1x1024xf32, #tpu.memory_space<vmem>>, vector<1x1024xf32>
    %34 = vector.broadcast %33 : vector<1x1024xf32> to vector<112x1024xf32>
    %35 = arith.addf %32, %34 : vector<112x1024xf32>
    %cst_14 = arith.constant 0.000000e+00 : f32
    %36 = vector.broadcast %cst_14 : f32 to vector<112x1024xf32>
    %37 = arith.maximumf %35, %36 : vector<112x1024xf32>
    %38 = arith.truncf %37 : vector<112x1024xf32> to vector<112x1024xbf16>
    %39 = vector.extract_strided_slice %38 {offsets = [0, 0], sizes = [112, 512], strides = [1, 1]} : vector<112x1024xbf16> to vector<112x512xbf16>
    %40 = vector.extract_strided_slice %38 {offsets = [0, 512], sizes = [112, 512], strides = [1, 1]} : vector<112x1024xbf16> to vector<112x512xbf16>
    %41 = arith.maximumf %39, %40 : vector<112x512xbf16>
    %42 = vector.shape_cast %41 : vector<112x512xbf16> to vector<56x1024xbf16>
    %43 = vector.extract_strided_slice %42 {offsets = [0, 0], sizes = [56, 512], strides = [1, 1]} : vector<56x1024xbf16> to vector<56x512xbf16>
    %44 = vector.extract_strided_slice %42 {offsets = [0, 512], sizes = [56, 512], strides = [1, 1]} : vector<56x1024xbf16> to vector<56x512xbf16>
    %45 = arith.maximumf %43, %44 : vector<56x512xbf16>
    %46 = vector.shape_cast %45 : vector<56x512xbf16> to vector<8x3584xbf16>
    %c0_15 = arith.constant 0 : index
    %c0_16 = arith.constant 0 : index
    %47 = vector.load %arg6[%c0_15, %c0_16] : memref<3584x128xbf16, #tpu.memory_space<vmem>>, vector<3584x128xbf16>
    %cst_17 = arith.constant dense<0.000000e+00> : vector<8x128xf32>
    %48 = tpu.matmul %46, %47, %cst_17 {dimension_numbers = #tpu.dot_dimension_numbers<[1], [0], [0], [1], [0, 0, 1, 1], [], []>} : vector<8x3584xbf16>, vector<3584x128xbf16>, vector<8x128xf32> -> vector<8x128xf32>
    %c0_18 = arith.constant 0 : index
    %c0_19 = arith.constant 0 : index
    %49 = vector.load %arg7[%c0_18, %c0_19] : memref<1x128xf32, #tpu.memory_space<vmem>>, vector<1x128xf32>
    %50 = vector.broadcast %49 : vector<1x128xf32> to vector<8x128xf32>
    %51 = arith.addf %48, %50 : vector<8x128xf32>
    %cst_20 = arith.constant 0.000000e+00 : f32
    %52 = vector.broadcast %cst_20 : f32 to vector<8x128xf32>
    %53 = arith.maximumf %51, %52 : vector<8x128xf32>
    %54 = arith.truncf %53 : vector<8x128xf32> to vector<8x128xbf16>
    %c0_21 = arith.constant 0 : index
    %c0_22 = arith.constant 0 : index
    %55 = vector.load %arg8[%c0_21, %c0_22] : memref<128x128xbf16, #tpu.memory_space<vmem>>, vector<128x128xbf16>
    %cst_23 = arith.constant dense<0.000000e+00> : vector<8x128xf32>
    %56 = tpu.matmul %54, %55, %cst_23 {dimension_numbers = #tpu.dot_dimension_numbers<[1], [0], [0], [1], [0, 0, 1, 1], [], []>} : vector<8x128xbf16>, vector<128x128xbf16>, vector<8x128xf32> -> vector<8x128xf32>
    %c0_24 = arith.constant 0 : index
    %c0_25 = arith.constant 0 : index
    %57 = vector.load %arg9[%c0_24, %c0_25] : memref<1x128xf32, #tpu.memory_space<vmem>>, vector<1x128xf32>
    %58 = vector.broadcast %57 : vector<1x128xf32> to vector<8x128xf32>
    %59 = arith.addf %56, %58 : vector<8x128xf32>
    %c0_26 = arith.constant 0 : index
    %c0_27 = arith.constant 0 : index
    %60 = vector.load %arg10[%c0_26, %c0_27] : memref<8x128xf32, #tpu.memory_space<vmem>>, vector<8x128xf32>
    tpu.vector_store %arg10[%c0_26, %c0_27], %59 {strides = array<i32>} : memref<8x128xf32, #tpu.memory_space<vmem>>, vector<8x128xf32>,
    return
  }
  func.func @transform_0(%arg0: i32) -> (i32, i32, i32) {
    %c0_i32 = arith.constant 0 : i32
    %c0_i32_0 = arith.constant 0 : i32
    %c0_i32_1 = arith.constant 0 : i32
    return %arg0, %c0_i32, %c0_i32_0 : i32, i32, i32
  }
  func.func @transform_1(%arg0: i32) -> (i32, i32) {
    %c0_i32 = arith.constant 0 : i32
    %c0_i32_0 = arith.constant 0 : i32
    %c0_i32_1 = arith.constant 0 : i32
    return %c0_i32, %c0_i32_0 : i32, i32
  }
  func.func @transform_2(%arg0: i32) -> (i32, i32) {
    %c0_i32 = arith.constant 0 : i32
    %c0_i32_0 = arith.constant 0 : i32
    %c0_i32_1 = arith.constant 0 : i32
    return %c0_i32, %c0_i32_0 : i32, i32
  }
  func.func @transform_3(%arg0: i32) -> (i32, i32) {
    %c0_i32 = arith.constant 0 : i32
    %c0_i32_0 = arith.constant 0 : i32
    %c0_i32_1 = arith.constant 0 : i32
    return %c0_i32, %c0_i32_0 : i32, i32
  }
  func.func @transform_4(%arg0: i32) -> (i32, i32) {
    %c0_i32 = arith.constant 0 : i32
    %c0_i32_0 = arith.constant 0 : i32
    %c0_i32_1 = arith.constant 0 : i32
    return %c0_i32, %c0_i32_0 : i32, i32
  }
  func.func @transform_5(%arg0: i32) -> (i32, i32) {
    %c0_i32 = arith.constant 0 : i32
    %c0_i32_0 = arith.constant 0 : i32
    %c0_i32_1 = arith.constant 0 : i32
    return %c0_i32, %c0_i32_0 : i32, i32
  }
  func.func @transform_6(%arg0: i32) -> (i32, i32) {
    %c0_i32 = arith.constant 0 : i32
    %c0_i32_0 = arith.constant 0 : i32
    %c0_i32_1 = arith.constant 0 : i32
    return %c0_i32, %c0_i32_0 : i32, i32
  }
  func.func @transform_7(%arg0: i32) -> (i32, i32) {
    %c0_i32 = arith.constant 0 : i32
    %c0_i32_0 = arith.constant 0 : i32
    %c0_i32_1 = arith.constant 0 : i32
    return %c0_i32, %c0_i32_0 : i32, i32
  }
  func.func @transform_8(%arg0: i32) -> (i32, i32) {
    %c0_i32 = arith.constant 0 : i32
    %c0_i32_0 = arith.constant 0 : i32
    %c0_i32_1 = arith.constant 0 : i32
    return %c0_i32, %c0_i32_0 : i32, i32
  }
  func.func @transform_9(%arg0: i32) -> (i32, i32) {
    %c0_i32 = arith.constant 0 : i32
    %c0_i32_0 = arith.constant 0 : i32
    return %arg0, %c0_i32 : i32, i32
  }
}

</mosaic_0001>

<llo_original>
// kernel: cnn1_forward.1
$region0: #{cnn1_forward.1}
  #allocation0 [shape = 'u32[]', space=smem, size = 0x4, offset = 0x4, fixed_abs, tag = 'smem constant byte address 0x4 - core index']
  #allocation1 [shape = 'u32[144,128]{1,0:T(1,128)}', space=vmem, size = 0x12000, scoped, tag = 'internal scratch']
  %s0 = inlined_call_operand.vmem [shape: bf16[8,28,28], index: 0, kind: input, shape index: {}]
  %s1 = inlined_call_operand.vmem [shape: bf16[84,256], index: 1, kind: input, shape index: {}]
  %s2 = inlined_call_operand.vmem [shape: f32[1,256], index: 2, kind: input, shape index: {}]
  %s3 = inlined_call_operand.hbm [shape: bf16[384,1024], index: 3, kind: input, shape index: {}]
  %s4 = inlined_call_operand.vmem [shape: f32[1,1024], index: 4, kind: input, shape index: {}]
  %s5 = inlined_call_operand.hbm [shape: bf16[3584,128], index: 5, kind: input, shape index: {}]
  %s6 = inlined_call_operand.vmem [shape: f32[1,128], index: 6, kind: input, shape index: {}]
  %s7 = inlined_call_operand.vmem [shape: bf16[128,128], index: 7, kind: input, shape index: {}]
  %s8 = inlined_call_operand.vmem [shape: f32[1,128], index: 8, kind: input, shape index: {}]
  %s9 = inlined_call_operand.vmem [shape: f32[8,128], index: 9, kind: output, shape index: {}]
  %s10 = sld [smem:[#allocation0]]
  $region54: #{cnn1_forward.1} parent=0
    _
  %s12 = ssub.s32 1, %s10
  %s13 = scalar_select 0, %s12, %s10
  $region1: #{cnn1_forward.1} parent=0
    #allocation2 [shape = 'u8[786432]{0}', space=vmem, size = 0xc0000, scoped, tag = 'input window, operand 3, single buffered']
    #allocation3 [shape = 's32[1]{0}', space=sflag, size = 0x4, scoped, tag = 'scoped memory for cnn1_forward.1']
    #allocation4 [shape = 'u8[917504]{0}', space=vmem, size = 0xe0000, scoped, tag = 'input window, operand 5, single buffered']
    #allocation5 [shape = 's32[1]{0}', space=sflag, size = 0x4, scoped, tag = 'scoped memory for cnn1_forward.1']
    %14 = vsyncpa [#allocation3], 0
    %15 = vsyncpa [#allocation5], 0
    // Predicated region
    $region2: #{cnn1_forward.1} parent=1 // pred_check
      _
    $region3: #{cnn1_forward.1} parent=1 // pred_check_branch
      %17 = sbr.rel (0) target = $region5
    $region4: #{cnn1_forward.1} parent=1 // pred_region
      _
    $region5: #{cnn1_forward.1} parent=1 // pred_fallthru
      _
    // Predicated region
    $region6: #{cnn1_forward.1} parent=1 // pred_check
      _
    $region7: #{cnn1_forward.1} parent=1 // pred_check_branch
      %19 = sbr.rel (0) target = $region9
    $region8: #{cnn1_forward.1} parent=1 // pred_region
      _
    $region9: #{cnn1_forward.1} parent=1 // pred_fallthru
      _
    // Predicated region
    $region10: #{cnn1_forward.1} parent=1 // pred_check
      _
    $region11: #{cnn1_forward.1} parent=1 // pred_check_branch
      %21 = sbr.rel (0) target = $region13
    $region12: #{cnn1_forward.1} parent=1 // pred_region
      _
    $region13: #{cnn1_forward.1} parent=1 // pred_fallthru
      _
    // Predicated region
    $region14: #{cnn1_forward.1} parent=1 // pred_check
      _
    $region15: #{cnn1_forward.1} parent=1 // pred_check_branch
      %23 = sbr.rel (0) target = $region17
    $region16: #{cnn1_forward.1} parent=1 // pred_region
      %s25 = ssub.s32 24576, 24576
      %26 = vsyncadd [#allocation3], %s25
      %s27 = sshll.u32 [#allocation2], 4
      %s28 = int_to_ptr.vmem [resolvable:$true] %s27
      %33 = dma.hbm_to_vmem [thread:$0]  %s3, 24576, %s28, [#allocation3], 512, 512, 32
    $region17: #{cnn1_forward.1} parent=1 // pred_fallthru
      _
    // Predicated region
    $region18: #{cnn1_forward.1} parent=1 // pred_check
      _
    $region19: #{cnn1_forward.1} parent=1 // pred_check_branch
      %35 = sbr.rel (0) target = $region21
    $region20: #{cnn1_forward.1} parent=1 // pred_region
      _
    $region21: #{cnn1_forward.1} parent=1 // pred_fallthru
      _
    // Predicated region
    $region22: #{cnn1_forward.1} parent=1 // pred_check
      _
    $region23: #{cnn1_forward.1} parent=1 // pred_check_branch
      %37 = sbr.rel (0) target = $region25
    $region24: #{cnn1_forward.1} parent=1 // pred_region
      %s39 = ssub.s32 28672, 28672
      %40 = vsyncadd [#allocation5], %s39
      %s41 = sshll.u32 [#allocation4], 4
      %s42 = int_to_ptr.vmem [resolvable:$true] %s41
      %47 = dma.hbm_to_vmem [thread:$0]  %s5, 28672, %s42, [#allocation5], 64, 64, 4
    $region25: #{cnn1_forward.1} parent=1 // pred_fallthru
      _
    // Predicated region
    $region26: #{cnn1_forward.1} parent=1 // pred_check
      _
    $region27: #{cnn1_forward.1} parent=1 // pred_check_branch
      %49 = sbr.rel (0) target = $region29
    $region28: #{cnn1_forward.1} parent=1 // pred_region
      _
    $region29: #{cnn1_forward.1} parent=1 // pred_fallthru
      _
    // Predicated region
    $region30: #{cnn1_forward.1} parent=1 // pred_check
      _
    $region31: #{cnn1_forward.1} parent=1 // pred_check_branch
      %51 = sbr.rel (0) target = $region33
    $region32: #{cnn1_forward.1} parent=1 // pred_region
      _
    $region33: #{cnn1_forward.1} parent=1 // pred_fallthru
      _
    // Predicated region
    $region34: #{cnn1_forward.1} parent=1 // pred_check
      _
    $region35: #{cnn1_forward.1} parent=1 // pred_check_branch
      %53 = sbr.rel (0) target = $region37
    $region36: #{cnn1_forward.1} parent=1 // pred_region
      _
    $region37: #{cnn1_forward.1} parent=1 // pred_fallthru
      _
    // Predicated region
    $region38: #{cnn1_forward.1} parent=1 // pred_check
      _
    $region39: #{cnn1_forward.1} parent=1 // pred_check_branch
      %55 = sbr.rel (0) target = $region41
    $region40: #{cnn1_forward.1} parent=1 // pred_region
      %56 = dma.done [#allocation3], 24576
    $region41: #{cnn1_forward.1} parent=1 // pred_fallthru
      _
    // Predicated region
    $region42: #{cnn1_forward.1} parent=1 // pred_check
      _
    $region43: #{cnn1_forward.1} parent=1 // pred_check_branch
      %58 = sbr.rel (0) target = $region45
    $region44: #{cnn1_forward.1} parent=1 // pred_region
      %59 = dma.done [#allocation5], 28672
    $region45: #{cnn1_forward.1} parent=1 // pred_fallthru
      _
    %v61 = vld [vmem:[%s0] sm:$0xf]
    %v62 = vld [vmem:[%s0 + $0x4] sm:$0xf]
    %v63 = vld [vmem:[%s0 + $0x8] sm:$0xf]
    %v64 = vld [vmem:[%s0 + $0xc] sm:$0x3]
    %v65 = vld [vmem:[%s0 + $0x10] sm:$0xf]
    %v66 = vld [vmem:[%s0 + $0x14] sm:$0xf]
    %v67 = vld [vmem:[%s0 + $0x18] sm:$0xf]
    %v68 = vld [vmem:[%s0 + $0x1c] sm:$0x3]
    %v69 = vld [vmem:[%s0 + $0x20] sm:$0xf]
    %v70 = vld [vmem:[%s0 + $0x24] sm:$0xf]
    %v71 = vld [vmem:[%s0 + $0x28] sm:$0xf]
    %v72 = vld [vmem:[%s0 + $0x2c] sm:$0x3]
    %v73 = vld [vmem:[%s0 + $0x30] sm:$0xf]
    %v74 = vld [vmem:[%s0 + $0x34] sm:$0xf]
    %v75 = vld [vmem:[%s0 + $0x38] sm:$0xf]
    %v76 = vld [vmem:[%s0 + $0x3c] sm:$0x3]
    %v77 = vld [vmem:[%s0 + $0x40] sm:$0xf]
    %v78 = vld [vmem:[%s0 + $0x44] sm:$0xf]
    %v79 = vld [vmem:[%s0 + $0x48] sm:$0xf]
    %v80 = vld [vmem:[%s0 + $0x4c] sm:$0x3]
    %v81 = vld [vmem:[%s0 + $0x50] sm:$0xf]
    %v82 = vld [vmem:[%s0 + $0x54] sm:$0xf]
    %v83 = vld [vmem:[%s0 + $0x58] sm:$0xf]
    %v84 = vld [vmem:[%s0 + $0x5c] sm:$0x3]
    %v85 = vld [vmem:[%s0 + $0x60] sm:$0xf]
    %v86 = vld [vmem:[%s0 + $0x64] sm:$0xf]
    %v87 = vld [vmem:[%s0 + $0x68] sm:$0xf]
    %v88 = vld [vmem:[%s0 + $0x6c] sm:$0x3]
    %v89 = vld [vmem:[%s0 + $0x70] sm:$0xf]
    %v90 = vld [vmem:[%s0 + $0x74] sm:$0xf]
    %v91 = vld [vmem:[%s0 + $0x78] sm:$0xf]
    %v92 = vld [vmem:[%s0 + $0x7c] sm:$0x3]
    %v125 = vunpack.c.l.b16 %v61
    %v126 = vunpack.c.l.b16 %v62
    %v127 = vunpack.c.l.b16 %v63
    %v128 = vunpack.c.l.b16 %v64
    %v129 = vunpack.c.l.b16 %v65
    %v130 = vunpack.c.l.b16 %v66
    %v131 = vunpack.c.l.b16 %v67
    %v132 = vunpack.c.l.b16 %v68
    %v133 = vunpack.c.l.b16 %v69
    %v134 = vunpack.c.l.b16 %v70
    %v135 = vunpack.c.l.b16 %v71
    %v136 = vunpack.c.l.b16 %v72
    %v137 = vunpack.c.l.b16 %v73
    %v138 = vunpack.c.l.b16 %v74
    %v139 = vunpack.c.l.b16 %v75
    %v140 = vunpack.c.l.b16 %v76
    %v141 = vunpack.c.l.b16 %v77
    %v142 = vunpack.c.l.b16 %v78
    %v143 = vunpack.c.l.b16 %v79
    %v144 = vunpack.c.l.b16 %v80
    %v145 = vunpack.c.l.b16 %v81
    %v146 = vunpack.c.l.b16 %v82
    %v147 = vunpack.c.l.b16 %v83
    %v148 = vunpack.c.l.b16 %v84
    %v149 = vunpack.c.l.b16 %v85
    %v150 = vunpack.c.l.b16 %v86
    %v151 = vunpack.c.l.b16 %v87
    %v152 = vunpack.c.l.b16 %v88
    %v153 = vunpack.c.l.b16 %v89
    %v154 = vunpack.c.l.b16 %v90
    %v155 = vunpack.c.l.b16 %v91
    %v156 = vunpack.c.l.b16 %v92
    %v157 = vpack.c.b16 %v126, %v125
    %v158 = vpack.c.b16 %v128, %v127
    %v159 = vpack.c.b16 %v130, %v129
    %v160 = vpack.c.b16 %v132, %v131
    %v161 = vpack.c.b16 %v134, %v133
    %v162 = vpack.c.b16 %v136, %v135
    %v163 = vpack.c.b16 %v138, %v137
    %v164 = vpack.c.b16 %v140, %v139
    %v165 = vpack.c.b16 %v142, %v141
    %v166 = vpack.c.b16 %v144, %v143
    %v167 = vpack.c.b16 %v146, %v145
    %v168 = vpack.c.b16 %v148, %v147
    %v169 = vpack.c.b16 %v150, %v149
    %v170 = vpack.c.b16 %v152, %v151
    %v171 = vpack.c.b16 %v154, %v153
    %v172 = vpack.c.b16 %v156, %v155
    %vm173 = vsmask.f32 256
    %v175 = vshrl.u32 %v157, 16
    %v177 = vrot.slane %v175, 7
    %v178 = vshll.u32 %v157, 16
    %v180 = vor.u32 %v177, %v178
    %v182 = vshrl.u32 %v158, 16
    %v184 = vrot.slane %v182, 7
    %v185 = vshll.u32 %v158, 16
    %v187 = vor.u32 %v184, %v185
    %v188 = vsel %vm173, %v177, %v187
    %v190 = vshrl.u32 %v159, 16
    %v192 = vrot.slane %v190, 7
    %v193 = vshll.u32 %v159, 16
    %v195 = vor.u32 %v192, %v193
    %v197 = vshrl.u32 %v160, 16
    %v199 = vrot.slane %v197, 7
    %v200 = vshll.u32 %v160, 16
    %v202 = vor.u32 %v199, %v200
    %v203 = vsel %vm173, %v192, %v202
    %v205 = vshrl.u32 %v161, 16
    %v207 = vrot.slane %v205, 7
    %v208 = vshll.u32 %v161, 16
    %v210 = vor.u32 %v207, %v208
    %v212 = vshrl.u32 %v162, 16
    %v214 = vrot.slane %v212, 7
    %v215 = vshll.u32 %v162, 16
    %v217 = vor.u32 %v214, %v215
    %v218 = vsel %vm173, %v207, %v217
    %v220 = vshrl.u32 %v163, 16
    %v222 = vrot.slane %v220, 7
    %v223 = vshll.u32 %v163, 16
    %v225 = vor.u32 %v222, %v223
    %v227 = vshrl.u32 %v164, 16
    %v229 = vrot.slane %v227, 7
    %v230 = vshll.u32 %v164, 16
    %v232 = vor.u32 %v229, %v230
    %v233 = vsel %vm173, %v222, %v232
    %v235 = vshrl.u32 %v165, 16
    %v237 = vrot.slane %v235, 7
    %v238 = vshll.u32 %v165, 16
    %v240 = vor.u32 %v237, %v238
    %v242 = vshrl.u32 %v166, 16
    %v244 = vrot.slane %v242, 7
    %v245 = vshll.u32 %v166, 16
    %v247 = vor.u32 %v244, %v245
    %v248 = vsel %vm173, %v237, %v247
    %v250 = vshrl.u32 %v167, 16
    %v252 = vrot.slane %v250, 7
    %v253 = vshll.u32 %v167, 16
    %v255 = vor.u32 %v252, %v253
    %v257 = vshrl.u32 %v168, 16
    %v259 = vrot.slane %v257, 7
    %v260 = vshll.u32 %v168, 16
    %v262 = vor.u32 %v259, %v260
    %v263 = vsel %vm173, %v252, %v262
    %v265 = vshrl.u32 %v169, 16
    %v267 = vrot.slane %v265, 7
    %v268 = vshll.u32 %v169, 16
    %v270 = vor.u32 %v267, %v268
    %v272 = vshrl.u32 %v170, 16
    %v274 = vrot.slane %v272, 7
    %v275 = vshll.u32 %v170, 16
    %v277 = vor.u32 %v274, %v275
    %v278 = vsel %vm173, %v267, %v277
    %v280 = vshrl.u32 %v171, 16
    %v282 = vrot.slane %v280, 7
    %v283 = vshll.u32 %v171, 16
    %v285 = vor.u32 %v282, %v283
    %v287 = vshrl.u32 %v172, 16
    %v289 = vrot.slane %v287, 7
    %v290 = vshll.u32 %v172, 16
    %v292 = vor.u32 %v289, %v290
    %v293 = vsel %vm173, %v282, %v292
    %vm310 = vcmask 1040384
    %vm311 = vmand %vm310, %vm173
    %v312 = vsel %vm311, 0, %v180
    %v313 = vsel %vm311, 0, %v195
    %v314 = vsel %vm311, 0, %v210
    %v315 = vsel %vm311, 0, %v225
    %v316 = vsel %vm311, 0, %v240
    %v317 = vsel %vm311, 0, %v255
    %v318 = vsel %vm311, 0, %v270
    %v319 = vsel %vm311, 0, %v285
    %vm320 = vcmask 1046528
    %vm321 = vsmask.f32 6400
    %vm322 = vmand %vm320, %vm321
    %v323 = vsel %vm322, %v188, 0
    %v324 = vsel %vm322, %v203, 0
    %v325 = vsel %vm322, %v218, 0
    %v326 = vsel %vm322, %v233, 0
    %v327 = vsel %vm322, %v248, 0
    %v328 = vsel %vm322, %v263, 0
    %v329 = vsel %vm322, %v278, 0
    %v330 = vsel %vm322, %v293, 0
    %vm331 = vsmask.f32 7424
    %v333 = vshrl.u32 %v312, 16
    %v335 = vshll.u32 %v312, 16
    %v337 = vrot.slane %v335, 1
    %v338 = vor.u32 %v333, %v337
    %v340 = vshll.u32 %v323, 16
    %v342 = vrot.slane %v340, 1
    %v343 = vsel %vm331, %v338, %v342
    %v344 = vshrl.u32 %v323, 16
    %v346 = vor.u32 %v344, %v342
    %v348 = vshrl.u32 %v313, 16
    %v350 = vshll.u32 %v313, 16
    %v352 = vrot.slane %v350, 1
    %v353 = vor.u32 %v348, %v352
    %v355 = vshll.u32 %v324, 16
    %v357 = vrot.slane %v355, 1
    %v358 = vsel %vm331, %v353, %v357
    %v359 = vshrl.u32 %v324, 16
    %v361 = vor.u32 %v359, %v357
    %v363 = vshrl.u32 %v314, 16
    %v365 = vshll.u32 %v314, 16
    %v367 = vrot.slane %v365, 1
    %v368 = vor.u32 %v363, %v367
    %v370 = vshll.u32 %v325, 16
    %v372 = vrot.slane %v370, 1
    %v373 = vsel %vm331, %v368, %v372
    %v374 = vshrl.u32 %v325, 16
    %v376 = vor.u32 %v374, %v372
    %v378 = vshrl.u32 %v315, 16
    %v380 = vshll.u32 %v315, 16
    %v382 = vrot.slane %v380, 1
    %v383 = vor.u32 %v378, %v382
    %v385 = vshll.u32 %v326, 16
    %v387 = vrot.slane %v385, 1
    %v388 = vsel %vm331, %v383, %v387
    %v389 = vshrl.u32 %v326, 16
    %v391 = vor.u32 %v389, %v387
    %v393 = vshrl.u32 %v316, 16
    %v395 = vshll.u32 %v316, 16
    %v397 = vrot.slane %v395, 1
    %v398 = vor.u32 %v393, %v397
    %v400 = vshll.u32 %v327, 16
    %v402 = vrot.slane %v400, 1
    %v403 = vsel %vm331, %v398, %v402
    %v404 = vshrl.u32 %v327, 16
    %v406 = vor.u32 %v404, %v402
    %v408 = vshrl.u32 %v317, 16
    %v410 = vshll.u32 %v317, 16
    %v412 = vrot.slane %v410, 1
    %v413 = vor.u32 %v408, %v412
    %v415 = vshll.u32 %v328, 16
    %v417 = vrot.slane %v415, 1
    %v418 = vsel %vm331, %v413, %v417
    %v419 = vshrl.u32 %v328, 16
    %v421 = vor.u32 %v419, %v417
    %v423 = vshrl.u32 %v318, 16
    %v425 = vshll.u32 %v318, 16
    %v427 = vrot.slane %v425, 1
    %v428 = vor.u32 %v423, %v427
    %v430 = vshll.u32 %v329, 16
    %v432 = vrot.slane %v430, 1
    %v433 = vsel %vm331, %v428, %v432
    %v434 = vshrl.u32 %v329, 16
    %v436 = vor.u32 %v434, %v432
    %v438 = vshrl.u32 %v319, 16
    %v440 = vshll.u32 %v319, 16
    %v442 = vrot.slane %v440, 1
    %v443 = vor.u32 %v438, %v442
    %v445 = vshll.u32 %v330, 16
    %v447 = vrot.slane %v445, 1
    %v448 = vsel %vm331, %v443, %v447
    %v449 = vshrl.u32 %v330, 16
    %v451 = vor.u32 %v449, %v447
    %452 = vrot.lane.b32.xlu0 %v343, 28
    %v453 = vpop.permute.xlu0 %452
    %454 = vrot.lane.b32.xlu0 %v346, 28
    %v455 = vpop.permute.xlu0 %454
    %456 = vrot.lane.b32.xlu0 %v358, 28
    %v457 = vpop.permute.xlu0 %456
    %458 = vrot.lane.b32.xlu0 %v361, 28
    %v459 = vpop.permute.xlu0 %458
    %460 = vrot.lane.b32.xlu0 %v373, 28
    %v461 = vpop.permute.xlu0 %460
    %462 = vrot.lane.b32.xlu0 %v376, 28
    %v463 = vpop.permute.xlu0 %462
    %464 = vrot.lane.b32.xlu0 %v388, 28
    %v465 = vpop.permute.xlu0 %464
    %466 = vrot.lane.b32.xlu0 %v391, 28
    %v467 = vpop.permute.xlu0 %466
    %468 = vrot.lane.b32.xlu0 %v403, 28
    %v469 = vpop.permute.xlu0 %468
    %470 = vrot.lane.b32.xlu0 %v406, 28
    %v471 = vpop.permute.xlu0 %470
    %472 = vrot.lane.b32.xlu0 %v418, 28
    %v473 = vpop.permute.xlu0 %472
    %474 = vrot.lane.b32.xlu0 %v421, 28
    %v475 = vpop.permute.xlu0 %474
    %476 = vrot.lane.b32.xlu0 %v433, 28
    %v477 = vpop.permute.xlu0 %476
    %478 = vrot.lane.b32.xlu0 %v436, 28
    %v479 = vpop.permute.xlu0 %478
    %480 = vrot.lane.b32.xlu0 %v448, 28
    %v481 = vpop.permute.xlu0 %480
    %482 = vrot.lane.b32.xlu0 %v451, 28
    %v483 = vpop.permute.xlu0 %482
    %v500 = vrot.slane %v312, 1
    %v501 = vrot.slane %v323, 1
    %v502 = vsel %vm320, %v500, %v501
    %v503 = vrot.slane %v313, 1
    %v504 = vrot.slane %v324, 1
    %v505 = vsel %vm320, %v503, %v504
    %v506 = vrot.slane %v314, 1
    %v507 = vrot.slane %v325, 1
    %v508 = vsel %vm320, %v506, %v507
    %v509 = vrot.slane %v315, 1
    %v510 = vrot.slane %v326, 1
    %v511 = vsel %vm320, %v509, %v510
    %v512 = vrot.slane %v316, 1
    %v513 = vrot.slane %v327, 1
    %v514 = vsel %vm320, %v512, %v513
    %v515 = vrot.slane %v317, 1
    %v516 = vrot.slane %v328, 1
    %v517 = vsel %vm320, %v515, %v516
    %v518 = vrot.slane %v318, 1
    %v519 = vrot.slane %v329, 1
    %v520 = vsel %vm320, %v518, %v519
    %v521 = vrot.slane %v319, 1
    %v522 = vrot.slane %v330, 1
    %v523 = vsel %vm320, %v521, %v522
    %524 = vrot.lane.b32.xlu0 %v502, 56
    %v525 = vpop.permute.xlu0 %524
    %526 = vrot.lane.b32.xlu0 %v501, 56
    %v527 = vpop.permute.xlu0 %526
    %528 = vrot.lane.b32.xlu0 %v505, 56
    %v529 = vpop.permute.xlu0 %528
    %530 = vrot.lane.b32.xlu0 %v504, 56
    %v531 = vpop.permute.xlu0 %530
    %532 = vrot.lane.b32.xlu0 %v508, 56
    %v533 = vpop.permute.xlu0 %532
    %534 = vrot.lane.b32.xlu0 %v507, 56
    %v535 = vpop.permute.xlu0 %534
    %536 = vrot.lane.b32.xlu0 %v511, 56
    %v537 = vpop.permute.xlu0 %536
    %538 = vrot.lane.b32.xlu0 %v510, 56
    %v539 = vpop.permute.xlu0 %538
    %540 = vrot.lane.b32.xlu0 %v514, 56
    %v541 = vpop.permute.xlu0 %540
    %542 = vrot.lane.b32.xlu0 %v513, 56
    %v543 = vpop.permute.xlu0 %542
    %544 = vrot.lane.b32.xlu0 %v517, 56
    %v545 = vpop.permute.xlu0 %544
    %546 = vrot.lane.b32.xlu0 %v516, 56
    %v547 = vpop.permute.xlu0 %546
    %548 = vrot.lane.b32.xlu0 %v520, 56
    %v549 = vpop.permute.xlu0 %548
    %550 = vrot.lane.b32.xlu0 %v519, 56
    %v551 = vpop.permute.xlu0 %550
    %552 = vrot.lane.b32.xlu0 %v523, 56
    %v553 = vpop.permute.xlu0 %552
    %554 = vrot.lane.b32.xlu0 %v522, 56
    %v555 = vpop.permute.xlu0 %554
    %vm556 = vcmask 228352
    %v558 = vsel %vm556, %v312, %v453
    %v560 = vsel %vm556, %v323, %v455
    %v562 = vsel %vm556, %v313, %v457
    %v564 = vsel %vm556, %v324, %v459
    %v566 = vsel %vm556, %v314, %v461
    %v568 = vsel %vm556, %v325, %v463
    %v570 = vsel %vm556, %v315, %v465
    %v572 = vsel %vm556, %v326, %v467
    %v574 = vsel %vm556, %v316, %v469
    %v576 = vsel %vm556, %v327, %v471
    %v578 = vsel %vm556, %v317, %v473
    %v580 = vsel %vm556, %v328, %v475
    %v582 = vsel %vm556, %v318, %v477
    %v584 = vsel %vm556, %v329, %v479
    %v586 = vsel %vm556, %v319, %v481
    %v588 = vsel %vm556, %v330, %v483
    %vm589 = vcmask 457728
    %v591 = vsel %vm589, %v558, %v525
    %v593 = vsel %vm589, %v560, %v527
    %v595 = vsel %vm589, %v562, %v529
    %v597 = vsel %vm589, %v564, %v531
    %v599 = vsel %vm589, %v566, %v533
    %v601 = vsel %vm589, %v568, %v535
    %v603 = vsel %vm589, %v570, %v537
    %v605 = vsel %vm589, %v572, %v539
    %v607 = vsel %vm589, %v574, %v541
    %v609 = vsel %vm589, %v576, %v543
    %v611 = vsel %vm589, %v578, %v545
    %v613 = vsel %vm589, %v580, %v547
    %v615 = vsel %vm589, %v582, %v549
    %v617 = vsel %vm589, %v584, %v551
    %v619 = vsel %vm589, %v586, %v553
    %v621 = vsel %vm589, %v588, %v555
    %v638 = vcombine.high %v591, %v591
    %v640 = vunpack.c.l.s4 1983009808
    %v641 = vunpack.c.0.s8 %v640
    %v642 = vlaneseq
    %v643 = vshrl.u32 %v642, 7
    %v644 = vsub.s32 %v641, %v643
    %v645 = vrot.slane %v591, %v644
    %v647 = vunpack.c.l.s4 1983009808
    %v648 = vunpack.c.0.s8 %v647
    %v649 = vlaneseq
    %v650 = vshrl.u32 %v649, 7
    %v651 = vsub.s32 %v648, %v650
    %v652 = vrot.slane %v638, %v651
    %v653 = vcombine.high %v645, %v645
    %v654 = vcombine.high %v652, %v652
    %v655 = vcombine.high %v593, %v593
    %v657 = vunpack.c.l.s4 1983009808
    %v658 = vunpack.c.0.s8 %v657
    %v659 = vlaneseq
    %v660 = vshrl.u32 %v659, 7
    %v661 = vsub.s32 %v658, %v660
    %v662 = vrot.slane %v593, %v661
    %v664 = vunpack.c.l.s4 1983009808
    %v665 = vunpack.c.0.s8 %v664
    %v666 = vlaneseq
    %v667 = vshrl.u32 %v666, 7
    %v668 = vsub.s32 %v665, %v667
    %v669 = vrot.slane %v655, %v668
    %v670 = vcombine.high %v662, %v662
    %v671 = vcombine.high %v595, %v595
    %v673 = vunpack.c.l.s4 1983009808
    %v674 = vunpack.c.0.s8 %v673
    %v675 = vlaneseq
    %v676 = vshrl.u32 %v675, 7
    %v677 = vsub.s32 %v674, %v676
    %v678 = vrot.slane %v595, %v677
    %v680 = vunpack.c.l.s4 1983009808
    %v681 = vunpack.c.0.s8 %v680
    %v682 = vlaneseq
    %v683 = vshrl.u32 %v682, 7
    %v684 = vsub.s32 %v681, %v683
    %v685 = vrot.slane %v671, %v684
    %v686 = vcombine.high %v678, %v678
    %v687 = vcombine.high %v685, %v685
    %v688 = vcombine.high %v597, %v597
    %v690 = vunpack.c.l.s4 1983009808
    %v691 = vunpack.c.0.s8 %v690
    %v692 = vlaneseq
    %v693 = vshrl.u32 %v692, 7
    %v694 = vsub.s32 %v691, %v693
    %v695 = vrot.slane %v597, %v694
    %v697 = vunpack.c.l.s4 1983009808
    %v698 = vunpack.c.0.s8 %v697
    %v699 = vlaneseq
    %v700 = vshrl.u32 %v699, 7
    %v701 = vsub.s32 %v698, %v700
    %v702 = vrot.slane %v688, %v701
    %v703 = vcombine.high %v695, %v695
    %v704 = vcombine.high %v599, %v599
    %v706 = vunpack.c.l.s4 1983009808
    %v707 = vunpack.c.0.s8 %v706
    %v708 = vlaneseq
    %v709 = vshrl.u32 %v708, 7
    %v710 = vsub.s32 %v707, %v709
    %v711 = vrot.slane %v599, %v710
    %v713 = vunpack.c.l.s4 1983009808
    %v714 = vunpack.c.0.s8 %v713
    %v715 = vlaneseq
    %v716 = vshrl.u32 %v715, 7
    %v717 = vsub.s32 %v714, %v716
    %v718 = vrot.slane %v704, %v717
    %v719 = vcombine.high %v711, %v711
    %v720 = vcombine.high %v718, %v718
    %v721 = vcombine.high %v601, %v601
    %v723 = vunpack.c.l.s4 1983009808
    %v724 = vunpack.c.0.s8 %v723
    %v725 = vlaneseq
    %v726 = vshrl.u32 %v725, 7
    %v727 = vsub.s32 %v724, %v726
    %v728 = vrot.slane %v601, %v727
    %v730 = vunpack.c.l.s4 1983009808
    %v731 = vunpack.c.0.s8 %v730
    %v732 = vlaneseq
    %v733 = vshrl.u32 %v732, 7
    %v734 = vsub.s32 %v731, %v733
    %v735 = vrot.slane %v721, %v734
    %v736 = vcombine.high %v728, %v728
    %v737 = vcombine.high %v603, %v603
    %v739 = vunpack.c.l.s4 1983009808
    %v740 = vunpack.c.0.s8 %v739
    %v741 = vlaneseq
    %v742 = vshrl.u32 %v741, 7
    %v743 = vsub.s32 %v740, %v742
    %v744 = vrot.slane %v603, %v743
    %v746 = vunpack.c.l.s4 1983009808
    %v747 = vunpack.c.0.s8 %v746
    %v748 = vlaneseq
    %v749 = vshrl.u32 %v748, 7
    %v750 = vsub.s32 %v747, %v749
    %v751 = vrot.slane %v737, %v750
    %v752 = vcombine.high %v744, %v744
    %v753 = vcombine.high %v751, %v751
    %v754 = vcombine.high %v605, %v605
    %v756 = vunpack.c.l.s4 1983009808
    %v757 = vunpack.c.0.s8 %v756
    %v758 = vlaneseq
    %v759 = vshrl.u32 %v758, 7
    %v760 = vsub.s32 %v757, %v759
    %v761 = vrot.slane %v605, %v760
    %v763 = vunpack.c.l.s4 1983009808
    %v764 = vunpack.c.0.s8 %v763
    %v765 = vlaneseq
    %v766 = vshrl.u32 %v765, 7
    %v767 = vsub.s32 %v764, %v766
    %v768 = vrot.slane %v754, %v767
    %v769 = vcombine.high %v761, %v761
    %v770 = vcombine.high %v607, %v607
    %v772 = vunpack.c.l.s4 1983009808
    %v773 = vunpack.c.0.s8 %v772
    %v774 = vlaneseq
    %v775 = vshrl.u32 %v774, 7
    %v776 = vsub.s32 %v773, %v775
    %v777 = vrot.slane %v607, %v776
    %v779 = vunpack.c.l.s4 1983009808
    %v780 = vunpack.c.0.s8 %v779
    %v781 = vlaneseq
    %v782 = vshrl.u32 %v781, 7
    %v783 = vsub.s32 %v780, %v782
    %v784 = vrot.slane %v770, %v783
    %v785 = vcombine.high %v777, %v777
    %v786 = vcombine.high %v784, %v784
    %v787 = vcombine.high %v609, %v609
    %v789 = vunpack.c.l.s4 1983009808
    %v790 = vunpack.c.0.s8 %v789
    %v791 = vlaneseq
    %v792 = vshrl.u32 %v791, 7
    %v793 = vsub.s32 %v790, %v792
    %v794 = vrot.slane %v609, %v793
    %v796 = vunpack.c.l.s4 1983009808
    %v797 = vunpack.c.0.s8 %v796
    %v798 = vlaneseq
    %v799 = vshrl.u32 %v798, 7
    %v800 = vsub.s32 %v797, %v799
    %v801 = vrot.slane %v787, %v800
    %v802 = vcombine.high %v794, %v794
    %v803 = vcombine.high %v611, %v611
    %v805 = vunpack.c.l.s4 1983009808
    %v806 = vunpack.c.0.s8 %v805
    %v807 = vlaneseq
    %v808 = vshrl.u32 %v807, 7
    %v809 = vsub.s32 %v806, %v808
    %v810 = vrot.slane %v611, %v809
    %v812 = vunpack.c.l.s4 1983009808
    %v813 = vunpack.c.0.s8 %v812
    %v814 = vlaneseq
    %v815 = vshrl.u32 %v814, 7
    %v816 = vsub.s32 %v813, %v815
    %v817 = vrot.slane %v803, %v816
    %v818 = vcombine.high %v810, %v810
    %v819 = vcombine.high %v817, %v817
    %v820 = vcombine.high %v613, %v613
    %v822 = vunpack.c.l.s4 1983009808
    %v823 = vunpack.c.0.s8 %v822
    %v824 = vlaneseq
    %v825 = vshrl.u32 %v824, 7
    %v826 = vsub.s32 %v823, %v825
    %v827 = vrot.slane %v613, %v826
    %v829 = vunpack.c.l.s4 1983009808
    %v830 = vunpack.c.0.s8 %v829
    %v831 = vlaneseq
    %v832 = vshrl.u32 %v831, 7
    %v833 = vsub.s32 %v830, %v832
    %v834 = vrot.slane %v820, %v833
    %v835 = vcombine.high %v827, %v827
    %v836 = vcombine.high %v615, %v615
    %v838 = vunpack.c.l.s4 1983009808
    %v839 = vunpack.c.0.s8 %v838
    %v840 = vlaneseq
    %v841 = vshrl.u32 %v840, 7
    %v842 = vsub.s32 %v839, %v841
    %v843 = vrot.slane %v615, %v842
    %v845 = vunpack.c.l.s4 1983009808
    %v846 = vunpack.c.0.s8 %v845
    %v847 = vlaneseq
    %v848 = vshrl.u32 %v847, 7
    %v849 = vsub.s32 %v846, %v848
    %v850 = vrot.slane %v836, %v849
    %v851 = vcombine.high %v843, %v843
    %v852 = vcombine.high %v850, %v850
    %v853 = vcombine.high %v617, %v617
    %v855 = vunpack.c.l.s4 1983009808
    %v856 = vunpack.c.0.s8 %v855
    %v857 = vlaneseq
    %v858 = vshrl.u32 %v857, 7
    %v859 = vsub.s32 %v856, %v858
    %v860 = vrot.slane %v617, %v859
    %v862 = vunpack.c.l.s4 1983009808
    %v863 = vunpack.c.0.s8 %v862
    %v864 = vlaneseq
    %v865 = vshrl.u32 %v864, 7
    %v866 = vsub.s32 %v863, %v865
    %v867 = vrot.slane %v853, %v866
    %v868 = vcombine.high %v860, %v860
    %v869 = vcombine.high %v619, %v619
    %v871 = vunpack.c.l.s4 1983009808
    %v872 = vunpack.c.0.s8 %v871
    %v873 = vlaneseq
    %v874 = vshrl.u32 %v873, 7
    %v875 = vsub.s32 %v872, %v874
    %v876 = vrot.slane %v619, %v875
    %v878 = vunpack.c.l.s4 1983009808
    %v879 = vunpack.c.0.s8 %v878
    %v880 = vlaneseq
    %v881 = vshrl.u32 %v880, 7
    %v882 = vsub.s32 %v879, %v881
    %v883 = vrot.slane %v869, %v882
    %v884 = vcombine.high %v876, %v876
    %v885 = vcombine.high %v883, %v883
    %v886 = vcombine.high %v621, %v621
    %v888 = vunpack.c.l.s4 1983009808
    %v889 = vunpack.c.0.s8 %v888
    %v890 = vlaneseq
    %v891 = vshrl.u32 %v890, 7
    %v892 = vsub.s32 %v889, %v891
    %v893 = vrot.slane %v621, %v892
    %v895 = vunpack.c.l.s4 1983009808
    %v896 = vunpack.c.0.s8 %v895
    %v897 = vlaneseq
    %v898 = vshrl.u32 %v897, 7
    %v899 = vsub.s32 %v896, %v898
    %v900 = vrot.slane %v886, %v899
    %v901 = vcombine.high %v893, %v893
    %v902 = vld [vmem:[%s1] sm:$0xff]
    %v903 = vld [vmem:[%s1 + $0x8] sm:$0xff]
    %v904 = vld [vmem:[%s1 + $0x10] sm:$0xff]
    %v905 = vld [vmem:[%s1 + $0x18] sm:$0xff]
    %v906 = vld [vmem:[%s1 + $0x20] sm:$0xff]
    %v907 = vld [vmem:[%s1 + $0x28] sm:$0xff]
    %v908 = vld [vmem:[%s1 + $0x30] sm:$0xff]
    %v909 = vld [vmem:[%s1 + $0x38] sm:$0xff]
    %v910 = vld [vmem:[%s1 + $0x40] sm:$0xff]
    %v911 = vld [vmem:[%s1 + $0x48] sm:$0xff]
    %v912 = vld [vmem:[%s1 + $0x50] sm:$0x33]
    %v913 = vld [vmem:[%s2] sm:$0x3]
    %v915 = vlaneseq
    %v916 = vshrl.u32 %v915, 7
    %v917 = vsub.s32 0, %v916
    %v918 = vrot.slane %v913, %v917
    %v919 = vlaneseq
    %v920 = vshrl.u32 %v919, 7
    %v921 = vsub.s32 1, %v920
    %v922 = vrot.slane %v913, %v921
    %v925 = vcombine.low %v645, %v653
    %v926 = vcombine.low %v652, %v654
    %v928 = vunpack.c.l.s4 1983009808
    %v929 = vunpack.c.0.s8 %v928
    %v930 = vlaneseq
    %v931 = vshrl.u32 %v930, 7
    %v932 = vsub.s32 %v929, %v931
    %v933 = vrot.slane %v925, %v932
    %v935 = vunpack.c.l.s4 1983009808
    %v936 = vunpack.c.0.s8 %v935
    %v937 = vlaneseq
    %v938 = vshrl.u32 %v937, 7
    %v939 = vsub.s32 %v936, %v938
    %v940 = vrot.slane %v926, %v939
    %v941 = vcombine.low %v933, %v940
    %v942 = vcombine.low %v662, %v670
    %v943 = vcombine.low %v669, %v678
    %v945 = vunpack.c.l.s4 1983009808
    %v946 = vunpack.c.0.s8 %v945
    %v947 = vlaneseq
    %v948 = vshrl.u32 %v947, 7
    %v949 = vsub.s32 %v946, %v948
    %v950 = vrot.slane %v942, %v949
    %v952 = vunpack.c.l.s4 1983009808
    %v953 = vunpack.c.0.s8 %v952
    %v954 = vlaneseq
    %v955 = vshrl.u32 %v954, 7
    %v956 = vsub.s32 %v953, %v955
    %v957 = vrot.slane %v943, %v956
    %v958 = vcombine.low %v950, %v957
    %v959 = vcombine.low %v686, %v685
    %v960 = vcombine.low %v687, %v695
    %v962 = vunpack.c.l.s4 1983009808
    %v963 = vunpack.c.0.s8 %v962
    %v964 = vlaneseq
    %v965 = vshrl.u32 %v964, 7
    %v966 = vsub.s32 %v963, %v965
    %v967 = vrot.slane %v959, %v966
    %v969 = vunpack.c.l.s4 1983009808
    %v970 = vunpack.c.0.s8 %v969
    %v971 = vlaneseq
    %v972 = vshrl.u32 %v971, 7
    %v973 = vsub.s32 %v970, %v972
    %v974 = vrot.slane %v960, %v973
    %v975 = vcombine.low %v967, %v974
    %v976 = vcombine.low %v703, %v702
    %v977 = vcombine.low %v711, %v719
    %v979 = vunpack.c.l.s4 1983009808
    %v980 = vunpack.c.0.s8 %v979
    %v981 = vlaneseq
    %v982 = vshrl.u32 %v981, 7
    %v983 = vsub.s32 %v980, %v982
    %v984 = vrot.slane %v976, %v983
    %v986 = vunpack.c.l.s4 1983009808
    %v987 = vunpack.c.0.s8 %v986
    %v988 = vlaneseq
    %v989 = vshrl.u32 %v988, 7
    %v990 = vsub.s32 %v987, %v989
    %v991 = vrot.slane %v977, %v990
    %v992 = vcombine.low %v984, %v991
    %v993 = vcombine.low %v718, %v720
    %v994 = vcombine.low %v728, %v736
    %v996 = vunpack.c.l.s4 1983009808
    %v997 = vunpack.c.0.s8 %v996
    %v998 = vlaneseq
    %v999 = vshrl.u32 %v998, 7
    %v1000 = vsub.s32 %v997, %v999
    %v1001 = vrot.slane %v993, %v1000
    %v1003 = vunpack.c.l.s4 1983009808
    %v1004 = vunpack.c.0.s8 %v1003
    %v1005 = vlaneseq
    %v1006 = vshrl.u32 %v1005, 7
    %v1007 = vsub.s32 %v1004, %v1006
    %v1008 = vrot.slane %v994, %v1007
    %v1009 = vcombine.low %v1001, %v1008
    %v1010 = vcombine.low %v735, %v744
    %v1011 = vcombine.low %v752, %v751
    %v1013 = vunpack.c.l.s4 1983009808
    %v1014 = vunpack.c.0.s8 %v1013
    %v1015 = vlaneseq
    %v1016 = vshrl.u32 %v1015, 7
    %v1017 = vsub.s32 %v1014, %v1016
    %v1018 = vrot.slane %v1010, %v1017
    %v1020 = vunpack.c.l.s4 1983009808
    %v1021 = vunpack.c.0.s8 %v1020
    %v1022 = vlaneseq
    %v1023 = vshrl.u32 %v1022, 7
    %v1024 = vsub.s32 %v1021, %v1023
    %v1025 = vrot.slane %v1011, %v1024
    %v1026 = vcombine.low %v1018, %v1025
    %v1027 = vcombine.low %v753, %v761
    %v1028 = vcombine.low %v769, %v768
    %v1030 = vunpack.c.l.s4 1983009808
    %v1031 = vunpack.c.0.s8 %v1030
    %v1032 = vlaneseq
    %v1033 = vshrl.u32 %v1032, 7
    %v1034 = vsub.s32 %v1031, %v1033
    %v1035 = vrot.slane %v1027, %v1034
    %v1037 = vunpack.c.l.s4 1983009808
    %v1038 = vunpack.c.0.s8 %v1037
    %v1039 = vlaneseq
    %v1040 = vshrl.u32 %v1039, 7
    %v1041 = vsub.s32 %v1038, %v1040
    %v1042 = vrot.slane %v1028, %v1041
    %v1043 = vcombine.low %v1035, %v1042
    %v1044 = vcombine.low %v777, %v785
    %v1045 = vcombine.low %v784, %v786
    %v1047 = vunpack.c.l.s4 1983009808
    %v1048 = vunpack.c.0.s8 %v1047
    %v1049 = vlaneseq
    %v1050 = vshrl.u32 %v1049, 7
    %v1051 = vsub.s32 %v1048, %v1050
    %v1052 = vrot.slane %v1044, %v1051
    %v1054 = vunpack.c.l.s4 1983009808
    %v1055 = vunpack.c.0.s8 %v1054
    %v1056 = vlaneseq
    %v1057 = vshrl.u32 %v1056, 7
    %v1058 = vsub.s32 %v1055, %v1057
    %v1059 = vrot.slane %v1045, %v1058
    %v1060 = vcombine.low %v1052, %v1059
    %v1061 = vcombine.low %v794, %v802
    %v1062 = vcombine.low %v801, %v810
    %v1064 = vunpack.c.l.s4 1983009808
    %v1065 = vunpack.c.0.s8 %v1064
    %v1066 = vlaneseq
    %v1067 = vshrl.u32 %v1066, 7
    %v1068 = vsub.s32 %v1065, %v1067
    %v1069 = vrot.slane %v1061, %v1068
    %v1071 = vunpack.c.l.s4 1983009808
    %v1072 = vunpack.c.0.s8 %v1071
    %v1073 = vlaneseq
    %v1074 = vshrl.u32 %v1073, 7
    %v1075 = vsub.s32 %v1072, %v1074
    %v1076 = vrot.slane %v1062, %v1075
    %v1077 = vcombine.low %v1069, %v1076
    %v1078 = vcombine.low %v818, %v817
    %v1079 = vcombine.low %v819, %v827
    %v1081 = vunpack.c.l.s4 1983009808
    %v1082 = vunpack.c.0.s8 %v1081
    %v1083 = vlaneseq
    %v1084 = vshrl.u32 %v1083, 7
    %v1085 = vsub.s32 %v1082, %v1084
    %v1086 = vrot.slane %v1078, %v1085
    %v1088 = vunpack.c.l.s4 1983009808
    %v1089 = vunpack.c.0.s8 %v1088
    %v1090 = vlaneseq
    %v1091 = vshrl.u32 %v1090, 7
    %v1092 = vsub.s32 %v1089, %v1091
    %v1093 = vrot.slane %v1079, %v1092
    %v1094 = vcombine.low %v1086, %v1093
    %v1095 = vcombine.low %v835, %v834
    %v1096 = vcombine.low %v843, %v851
    %v1098 = vunpack.c.l.s4 1983009808
    %v1099 = vunpack.c.0.s8 %v1098
    %v1100 = vlaneseq
    %v1101 = vshrl.u32 %v1100, 7
    %v1102 = vsub.s32 %v1099, %v1101
    %v1103 = vrot.slane %v1095, %v1102
    %v1105 = vunpack.c.l.s4 1983009808
    %v1106 = vunpack.c.0.s8 %v1105
    %v1107 = vlaneseq
    %v1108 = vshrl.u32 %v1107, 7
    %v1109 = vsub.s32 %v1106, %v1108
    %v1110 = vrot.slane %v1096, %v1109
    %v1111 = vcombine.low %v1103, %v1110
    %v1112 = vcombine.low %v850, %v852
    %v1113 = vcombine.low %v860, %v868
    %v1115 = vunpack.c.l.s4 1983009808
    %v1116 = vunpack.c.0.s8 %v1115
    %v1117 = vlaneseq
    %v1118 = vshrl.u32 %v1117, 7
    %v1119 = vsub.s32 %v1116, %v1118
    %v1120 = vrot.slane %v1112, %v1119
    %v1122 = vunpack.c.l.s4 1983009808
    %v1123 = vunpack.c.0.s8 %v1122
    %v1124 = vlaneseq
    %v1125 = vshrl.u32 %v1124, 7
    %v1126 = vsub.s32 %v1123, %v1125
    %v1127 = vrot.slane %v1113, %v1126
    %v1128 = vcombine.low %v1120, %v1127
    %v1129 = vcombine.low %v867, %v876
    %v1130 = vcombine.low %v884, %v883
    %v1132 = vunpack.c.l.s4 1983009808
    %v1133 = vunpack.c.0.s8 %v1132
    %v1134 = vlaneseq
    %v1135 = vshrl.u32 %v1134, 7
    %v1136 = vsub.s32 %v1133, %v1135
    %v1137 = vrot.slane %v1129, %v1136
    %v1139 = vunpack.c.l.s4 1983009808
    %v1140 = vunpack.c.0.s8 %v1139
    %v1141 = vlaneseq
    %v1142 = vshrl.u32 %v1141, 7
    %v1143 = vsub.s32 %v1140, %v1142
    %v1144 = vrot.slane %v1130, %v1143
    %v1145 = vcombine.low %v1137, %v1144
    %v1146 = vcombine.low %v885, %v893
    %v1147 = vcombine.low %v901, %v900
    %v1149 = vunpack.c.l.s4 1983009808
    %v1150 = vunpack.c.0.s8 %v1149
    %v1151 = vlaneseq
    %v1152 = vshrl.u32 %v1151, 7
    %v1153 = vsub.s32 %v1150, %v1152
    %v1154 = vrot.slane %v1146, %v1153
    %v1156 = vunpack.c.l.s4 1983009808
    %v1157 = vunpack.c.0.s8 %v1156
    %v1158 = vlaneseq
    %v1159 = vshrl.u32 %v1158, 7
    %v1160 = vsub.s32 %v1157, %v1159
    %v1161 = vrot.slane %v1147, %v1160
    %v1162 = vcombine.low %v1154, %v1161
    %v1174 = vunpack.c.l.b16 %v902
    %v1175 = vunpack.c.h.b16 %v902
    %v1176 = vunpack.c.l.b16 %v903
    %v1177 = vunpack.c.h.b16 %v903
    %v1178 = vunpack.c.l.b16 %v904
    %v1179 = vunpack.c.h.b16 %v904
    %v1180 = vunpack.c.l.b16 %v905
    %v1181 = vunpack.c.h.b16 %v905
    %v1182 = vunpack.c.l.b16 %v906
    %v1183 = vunpack.c.h.b16 %v906
    %v1184 = vunpack.c.l.b16 %v907
    %v1185 = vunpack.c.h.b16 %v907
    %v1186 = vunpack.c.l.b16 %v908
    %v1187 = vunpack.c.h.b16 %v908
    %v1188 = vunpack.c.l.b16 %v909
    %v1189 = vunpack.c.h.b16 %v909
    %v1190 = vunpack.c.l.b16 %v910
    %v1191 = vunpack.c.h.b16 %v910
    %v1192 = vunpack.c.l.b16 %v911
    %v1193 = vunpack.c.h.b16 %v911
    %v1194 = vunpack.c.l.b16 %v912
    %v1195 = vunpack.c.h.b16 %v912
    %v1196 = vpack.c.b16 %v1176, %v1174
    %v1197 = vpack.c.b16 %v1177, %v1175
    %v1198 = vpack.c.b16 %v1180, %v1178
    %v1199 = vpack.c.b16 %v1181, %v1179
    %v1200 = vpack.c.b16 %v1184, %v1182
    %v1201 = vpack.c.b16 %v1185, %v1183
    %v1202 = vpack.c.b16 %v1188, %v1186
    %v1203 = vpack.c.b16 %v1189, %v1187
    %v1204 = vpack.c.b16 %v1192, %v1190
    %v1205 = vpack.c.b16 %v1193, %v1191
    %v1206 = vpack.c.b16 %v1194, %v1194
    %v1207 = vpack.c.b16 %v1195, %v1195
    %vm1218 = vcmask 687104
    %v1220 = vsel %vm1218, %v941, 0
    %v1223 = vsel %vm1218, %v958, 0
    %v1226 = vsel %vm1218, %v975, 0
    %v1229 = vsel %vm1218, %v992, 0
    %v1232 = vsel %vm1218, %v1009, 0
    %v1235 = vsel %vm1218, %v1026, 0
    %v1238 = vsel %vm1218, %v1043, 0
    %v1241 = vsel %vm1218, %v1060, 0
    %v1244 = vsel %vm1218, %v1077, 0
    %v1247 = vsel %vm1218, %v1094, 0
    %v1250 = vsel %vm1218, %v1111, 0
    %v1253 = vsel %vm1218, %v1128, 0
    %v1256 = vsel %vm1218, %v1145, 0
    %v1259 = vsel %vm1218, %v1162, 0
    %vm1261 = vcmask 1041408
    %v1263 = vsel %vm1261, %v1206, 0
    %v1266 = vsel %vm1261, %v1207, 0
    %1268 = vmatprep.subr.bf16.mxu0 %v1197
    %1269 = vmatpush1.bf16.msra.mxu0 %v1196
    %1270 = vmatprep.subr.bf16.mxu0 %v1199
    %1271 = vmatpush1.bf16.msra.mxu0 %v1198
    %1272 = vmatprep.subr.bf16.mxu0 %v1201
    %1273 = vmatpush1.bf16.msra.mxu0 %v1200
    %1274 = vmatprep.subr.bf16.mxu0 %v1203
    %1275 = vmatpush1.bf16.msra.mxu0 %v1202
    %1276 = vmatprep.subr.bf16.mxu0 %v1205
    %1277 = vmatpush1.bf16.msra.mxu0 %v1204
    %1278 = vmatprep.subr.bf16.mxu0 %v1266
    %1279 = vmatpush1.bf16.msra.mxu0 %v1263
    %1280 = vmatprep.subr.bf16.mxu0 0
    %1281 = vmatpush1.bf16.msra.mxu0 0
    %1282 = vmatprep.subr.bf16.mxu0 0
    %1283 = vmatpush1.bf16.msra.mxu0 0
    %1284 = vmatprep.subr.bf16.mxu0 0
    %1285 = vmatpush1.bf16.msra.mxu0 0
    %1286 = vmatprep.subr.bf16.mxu0 0
    %1287 = vmatpush1.bf16.msra.mxu0 0
    %1288 = vmatprep.subr.bf16.mxu0 0
    %1289 = vmatpush1.bf16.msra.mxu0 0
    %1290 = vmatprep.subr.bf16.mxu0 0
    %1291 = vmatpush1.bf16.msra.mxu0 0
    %1292 = vmatprep.subr.bf16.mxu0 0
    %1293 = vmatpush1.bf16.msra.mxu0 0
    %1294 = vmatprep.subr.bf16.mxu0 0
    %1295 = vmatpush1.bf16.msra.mxu0 0
    %1296 = vmatprep.subr.bf16.mxu0 0
    %1297 = vmatpush1.bf16.msra.mxu0 0
    %1298 = vmatprep.subr.bf16.mxu0 0
    %1299 = vmatpush1.bf16.msra.mxu0 0
    %1300 = vmatprep.mubr.bf16.mxu0 0
    %1301 = vmatmul.mubr.bf16.gmra.mrb[0].mxu0 %v1220
    %v1302 = vpop.f32.mrb[0].mxu0
    %v1303 = vadd.f32 %v918, %v1302
    %v1304 = vpop.f32.mrb[0].mxu0
    %v1305 = vadd.f32 %v922, %v1304
    %v1306 = vpop.f32.mrb[0].mxu0
    %v1307 = vadd.f32 %v918, %v1306
    %v1308 = vpop.f32.mrb[0].mxu0
    %v1309 = vadd.f32 %v922, %v1308
    %1310 = vmatprep.mubr.bf16.mxu0 0
    %1311 = vmatmul.mubr.bf16.gmra.mrb[0].mxu0 %v1223
    %v1312 = vpop.f32.mrb[0].mxu0
    %v1313 = vadd.f32 %v918, %v1312
    %v1314 = vpop.f32.mrb[0].mxu0
    %v1315 = vadd.f32 %v922, %v1314
    %v1316 = vpop.f32.mrb[0].mxu0
    %v1317 = vadd.f32 %v918, %v1316
    %v1318 = vpop.f32.mrb[0].mxu0
    %v1319 = vadd.f32 %v922, %v1318
    %1320 = vmatprep.mubr.bf16.mxu0 0
    %1321 = vmatmul.mubr.bf16.gmra.mrb[0].mxu0 %v1226
    %v1322 = vpop.f32.mrb[0].mxu0
    %v1323 = vadd.f32 %v918, %v1322
    %v1324 = vpop.f32.mrb[0].mxu0
    %v1325 = vadd.f32 %v922, %v1324
    %v1326 = vpop.f32.mrb[0].mxu0
    %v1327 = vadd.f32 %v918, %v1326
    %v1328 = vpop.f32.mrb[0].mxu0
    %v1329 = vadd.f32 %v922, %v1328
    %1330 = vmatprep.mubr.bf16.mxu0 0
    %1331 = vmatmul.mubr.bf16.gmra.mrb[0].mxu0 %v1229
    %v1332 = vpop.f32.mrb[0].mxu0
    %v1333 = vadd.f32 %v918, %v1332
    %v1334 = vpop.f32.mrb[0].mxu0
    %v1335 = vadd.f32 %v922, %v1334
    %v1336 = vpop.f32.mrb[0].mxu0
    %v1337 = vadd.f32 %v918, %v1336
    %v1338 = vpop.f32.mrb[0].mxu0
    %v1339 = vadd.f32 %v922, %v1338
    %1340 = vmatprep.mubr.bf16.mxu0 0
    %1341 = vmatmul.mubr.bf16.gmra.mrb[0].mxu0 %v1232
    %v1342 = vpop.f32.mrb[0].mxu0
    %v1343 = vadd.f32 %v918, %v1342
    %v1344 = vpop.f32.mrb[0].mxu0
    %v1345 = vadd.f32 %v922, %v1344
    %v1346 = vpop.f32.mrb[0].mxu0
    %v1347 = vadd.f32 %v918, %v1346
    %v1348 = vpop.f32.mrb[0].mxu0
    %v1349 = vadd.f32 %v922, %v1348
    %1350 = vmatprep.mubr.bf16.mxu0 0
    %1351 = vmatmul.mubr.bf16.gmra.mrb[0].mxu0 %v1235
    %v1352 = vpop.f32.mrb[0].mxu0
    %v1353 = vadd.f32 %v918, %v1352
    %v1354 = vpop.f32.mrb[0].mxu0
    %v1355 = vadd.f32 %v922, %v1354
    %v1356 = vpop.f32.mrb[0].mxu0
    %v1357 = vadd.f32 %v918, %v1356
    %v1358 = vpop.f32.mrb[0].mxu0
    %v1359 = vadd.f32 %v922, %v1358
    %1360 = vmatprep.mubr.bf16.mxu0 0
    %1361 = vmatmul.mubr.bf16.gmra.mrb[0].mxu0 %v1238
    %v1362 = vpop.f32.mrb[0].mxu0
    %v1363 = vadd.f32 %v918, %v1362
    %v1364 = vpop.f32.mrb[0].mxu0
    %v1365 = vadd.f32 %v922, %v1364
    %v1366 = vpop.f32.mrb[0].mxu0
    %v1367 = vadd.f32 %v918, %v1366
    %v1368 = vpop.f32.mrb[0].mxu0
    %v1369 = vadd.f32 %v922, %v1368
    %1370 = vmatprep.mubr.bf16.mxu0 0
    %1371 = vmatmul.mubr.bf16.gmra.mrb[0].mxu0 %v1241
    %v1372 = vpop.f32.mrb[0].mxu0
    %v1373 = vadd.f32 %v918, %v1372
    %v1374 = vpop.f32.mrb[0].mxu0
    %v1375 = vadd.f32 %v922, %v1374
    %v1376 = vpop.f32.mrb[0].mxu0
    %v1377 = vadd.f32 %v918, %v1376
    %v1378 = vpop.f32.mrb[0].mxu0
    %v1379 = vadd.f32 %v922, %v1378
    %1380 = vmatprep.mubr.bf16.mxu0 0
    %1381 = vmatmul.mubr.bf16.gmra.mrb[0].mxu0 %v1244
    %v1382 = vpop.f32.mrb[0].mxu0
    %v1383 = vadd.f32 %v918, %v1382
    %v1384 = vpop.f32.mrb[0].mxu0
    %v1385 = vadd.f32 %v922, %v1384
    %v1386 = vpop.f32.mrb[0].mxu0
    %v1387 = vadd.f32 %v918, %v1386
    %v1388 = vpop.f32.mrb[0].mxu0
    %v1389 = vadd.f32 %v922, %v1388
    %1390 = vmatprep.mubr.bf16.mxu0 0
    %1391 = vmatmul.mubr.bf16.gmra.mrb[0].mxu0 %v1247
    %v1392 = vpop.f32.mrb[0].mxu0
    %v1393 = vadd.f32 %v918, %v1392
    %v1394 = vpop.f32.mrb[0].mxu0
    %v1395 = vadd.f32 %v922, %v1394
    %v1396 = vpop.f32.mrb[0].mxu0
    %v1397 = vadd.f32 %v918, %v1396
    %v1398 = vpop.f32.mrb[0].mxu0
    %v1399 = vadd.f32 %v922, %v1398
    %1400 = vmatprep.mubr.bf16.mxu0 0
    %1401 = vmatmul.mubr.bf16.gmra.mrb[0].mxu0 %v1250
    %v1402 = vpop.f32.mrb[0].mxu0
    %v1403 = vadd.f32 %v918, %v1402
    %v1404 = vpop.f32.mrb[0].mxu0
    %v1405 = vadd.f32 %v922, %v1404
    %v1406 = vpop.f32.mrb[0].mxu0
    %v1407 = vadd.f32 %v918, %v1406
    %v1408 = vpop.f32.mrb[0].mxu0
    %v1409 = vadd.f32 %v922, %v1408
    %1410 = vmatprep.mubr.bf16.mxu0 0
    %1411 = vmatmul.mubr.bf16.gmra.mrb[0].mxu0 %v1253
    %v1412 = vpop.f32.mrb[0].mxu0
    %v1413 = vadd.f32 %v918, %v1412
    %v1414 = vpop.f32.mrb[0].mxu0
    %v1415 = vadd.f32 %v922, %v1414
    %v1416 = vpop.f32.mrb[0].mxu0
    %v1417 = vadd.f32 %v918, %v1416
    %v1418 = vpop.f32.mrb[0].mxu0
    %v1419 = vadd.f32 %v922, %v1418
    %1420 = vmatprep.mubr.bf16.mxu0 0
    %1421 = vmatmul.mubr.bf16.gmra.mrb[0].mxu0 %v1256
    %v1422 = vpop.f32.mrb[0].mxu0
    %v1423 = vadd.f32 %v918, %v1422
    %v1424 = vpop.f32.mrb[0].mxu0
    %v1425 = vadd.f32 %v922, %v1424
    %v1426 = vpop.f32.mrb[0].mxu0
    %v1427 = vadd.f32 %v918, %v1426
    %v1428 = vpop.f32.mrb[0].mxu0
    %v1429 = vadd.f32 %v922, %v1428
    %1430 = vmatprep.mubr.bf16.mxu0 0
    %1431 = vmatmul.mubr.bf16.gmra.mrb[0].mxu0 %v1259
    %v1432 = vpop.f32.mrb[0].mxu0
    %v1433 = vadd.f32 %v918, %v1432
    %v1434 = vpop.f32.mrb[0].mxu0
    %v1435 = vadd.f32 %v922, %v1434
    %v1436 = vpop.f32.mrb[0].mxu0
    %v1437 = vadd.f32 %v918, %v1436
    %v1438 = vpop.f32.mrb[0].mxu0
    %v1439 = vadd.f32 %v922, %v1438
    %1440 = vdwg.mxu0
    %v1441 = vmax.f32 %v1303, 0.0
    %v1442 = vmax.f32 %v1305, 0.0
    %v1443 = vmax.f32 %v1307, 0.0
    %v1444 = vmax.f32 %v1309, 0.0
    %v1445 = vmax.f32 %v1313, 0.0
    %v1446 = vmax.f32 %v1315, 0.0
    %v1447 = vmax.f32 %v1317, 0.0
    %v1448 = vmax.f32 %v1319, 0.0
    %v1449 = vmax.f32 %v1323, 0.0
    %v1450 = vmax.f32 %v1325, 0.0
    %v1451 = vmax.f32 %v1327, 0.0
    %v1452 = vmax.f32 %v1329, 0.0
    %v1453 = vmax.f32 %v1333, 0.0
    %v1454 = vmax.f32 %v1335, 0.0
    %v1455 = vmax.f32 %v1337, 0.0
    %v1456 = vmax.f32 %v1339, 0.0
    %v1457 = vmax.f32 %v1343, 0.0
    %v1458 = vmax.f32 %v1345, 0.0
    %v1459 = vmax.f32 %v1347, 0.0
    %v1460 = vmax.f32 %v1349, 0.0
    %v1461 = vmax.f32 %v1353, 0.0
    %v1462 = vmax.f32 %v1355, 0.0
    %v1463 = vmax.f32 %v1357, 0.0
    %v1464 = vmax.f32 %v1359, 0.0
    %v1465 = vmax.f32 %v1363, 0.0
    %v1466 = vmax.f32 %v1365, 0.0
    %v1467 = vmax.f32 %v1367, 0.0
    %v1468 = vmax.f32 %v1369, 0.0
    %v1469 = vmax.f32 %v1373, 0.0
    %v1470 = vmax.f32 %v1375, 0.0
    %v1471 = vmax.f32 %v1377, 0.0
    %v1472 = vmax.f32 %v1379, 0.0
    %v1473 = vmax.f32 %v1383, 0.0
    %v1474 = vmax.f32 %v1385, 0.0
    %v1475 = vmax.f32 %v1387, 0.0
    %v1476 = vmax.f32 %v1389, 0.0
    %v1477 = vmax.f32 %v1393, 0.0
    %v1478 = vmax.f32 %v1395, 0.0
    %v1479 = vmax.f32 %v1397, 0.0
    %v1480 = vmax.f32 %v1399, 0.0
    %v1481 = vmax.f32 %v1403, 0.0
    %v1482 = vmax.f32 %v1405, 0.0
    %v1483 = vmax.f32 %v1407, 0.0
    %v1484 = vmax.f32 %v1409, 0.0
    %v1485 = vmax.f32 %v1413, 0.0
    %v1486 = vmax.f32 %v1415, 0.0
    %v1487 = vmax.f32 %v1417, 0.0
    %v1488 = vmax.f32 %v1419, 0.0
    %v1489 = vmax.f32 %v1423, 0.0
    %v1490 = vmax.f32 %v1425, 0.0
    %v1491 = vmax.f32 %v1427, 0.0
    %v1492 = vmax.f32 %v1429, 0.0
    %v1493 = vmax.f32 %v1433, 0.0
    %v1494 = vmax.f32 %v1435, 0.0
    %v1495 = vmax.f32 %v1437, 0.0
    %v1496 = vmax.f32 %v1439, 0.0
    %v1497 = vpack.c.bf16 %v1443, %v1441
    %v1498 = vpack.c.bf16 %v1444, %v1442
    %v1499 = vpack.c.bf16 %v1447, %v1445
    %v1500 = vpack.c.bf16 %v1448, %v1446
    %v1501 = vpack.c.bf16 %v1451, %v1449
    %v1502 = vpack.c.bf16 %v1452, %v1450
    %v1503 = vpack.c.bf16 %v1455, %v1453
    %v1504 = vpack.c.bf16 %v1456, %v1454
    %v1505 = vpack.c.bf16 %v1459, %v1457
    %v1506 = vpack.c.bf16 %v1460, %v1458
    %v1507 = vpack.c.bf16 %v1463, %v1461
    %v1508 = vpack.c.bf16 %v1464, %v1462
    %v1509 = vpack.c.bf16 %v1467, %v1465
    %v1510 = vpack.c.bf16 %v1468, %v1466
    %v1511 = vpack.c.bf16 %v1471, %v1469
    %v1512 = vpack.c.bf16 %v1472, %v1470
    %v1513 = vpack.c.bf16 %v1475, %v1473
    %v1514 = vpack.c.bf16 %v1476, %v1474
    %v1515 = vpack.c.bf16 %v1479, %v1477
    %v1516 = vpack.c.bf16 %v1480, %v1478
    %v1517 = vpack.c.bf16 %v1483, %v1481
    %v1518 = vpack.c.bf16 %v1484, %v1482
    %v1519 = vpack.c.bf16 %v1487, %v1485
    %v1520 = vpack.c.bf16 %v1488, %v1486
    %v1521 = vpack.c.bf16 %v1491, %v1489
    %v1522 = vpack.c.bf16 %v1492, %v1490
    %v1523 = vpack.c.bf16 %v1495, %v1493
    %v1524 = vpack.c.bf16 %v1496, %v1494
    %v1525 = vmax.bf16 %v1497, %v1498
    %v1526 = vmax.bf16 %v1499, %v1500
    %v1527 = vmax.bf16 %v1501, %v1502
    %v1528 = vmax.bf16 %v1503, %v1504
    %v1529 = vmax.bf16 %v1505, %v1506
    %v1530 = vmax.bf16 %v1507, %v1508
    %v1531 = vmax.bf16 %v1509, %v1510
    %v1532 = vmax.bf16 %v1511, %v1512
    %v1533 = vmax.bf16 %v1513, %v1514
    %v1534 = vmax.bf16 %v1515, %v1516
    %v1535 = vmax.bf16 %v1517, %v1518
    %v1536 = vmax.bf16 %v1519, %v1520
    %v1537 = vmax.bf16 %v1521, %v1522
    %v1538 = vmax.bf16 %v1523, %v1524
    %v1540 = vunpack.i.l.s16 %v1525
    %v1541 = vunpack.i.h.s16 %v1525
    %v1542 = vpack.c.b16 %v1541, %v1540
    %v1545 = vunpack.i.l.s16 %v1526
    %v1546 = vunpack.i.h.s16 %v1526
    %v1547 = vpack.c.b16 %v1546, %v1545
    %v1550 = vunpack.i.l.s16 %v1527
    %v1551 = vunpack.i.h.s16 %v1527
    %v1552 = vpack.c.b16 %v1551, %v1550
    %v1555 = vunpack.i.l.s16 %v1528
    %v1556 = vunpack.i.h.s16 %v1528
    %v1557 = vpack.c.b16 %v1556, %v1555
    %v1560 = vunpack.i.l.s16 %v1529
    %v1561 = vunpack.i.h.s16 %v1529
    %v1562 = vpack.c.b16 %v1561, %v1560
    %v1565 = vunpack.i.l.s16 %v1530
    %v1566 = vunpack.i.h.s16 %v1530
    %v1567 = vpack.c.b16 %v1566, %v1565
    %v1570 = vunpack.i.l.s16 %v1531
    %v1571 = vunpack.i.h.s16 %v1531
    %v1572 = vpack.c.b16 %v1571, %v1570
    %v1575 = vunpack.i.l.s16 %v1532
    %v1576 = vunpack.i.h.s16 %v1532
    %v1577 = vpack.c.b16 %v1576, %v1575
    %v1580 = vunpack.i.l.s16 %v1533
    %v1581 = vunpack.i.h.s16 %v1533
    %v1582 = vpack.c.b16 %v1581, %v1580
    %v1585 = vunpack.i.l.s16 %v1534
    %v1586 = vunpack.i.h.s16 %v1534
    %v1587 = vpack.c.b16 %v1586, %v1585
    %v1590 = vunpack.i.l.s16 %v1535
    %v1591 = vunpack.i.h.s16 %v1535
    %v1592 = vpack.c.b16 %v1591, %v1590
    %v1595 = vunpack.i.l.s16 %v1536
    %v1596 = vunpack.i.h.s16 %v1536
    %v1597 = vpack.c.b16 %v1596, %v1595
    %v1600 = vunpack.i.l.s16 %v1537
    %v1601 = vunpack.i.h.s16 %v1537
    %v1602 = vpack.c.b16 %v1601, %v1600
    %v1605 = vunpack.i.l.s16 %v1538
    %v1606 = vunpack.i.h.s16 %v1538
    %v1607 = vpack.c.b16 %v1606, %v1605
    %v1609 = vrot.slane %v1542, 4
    %v1610 = vrot.slane %v1547, 4
    %v1611 = vrot.slane %v1552, 4
    %v1612 = vrot.slane %v1557, 4
    %v1613 = vrot.slane %v1562, 4
    %v1614 = vrot.slane %v1567, 4
    %v1615 = vrot.slane %v1572, 4
    %v1616 = vrot.slane %v1577, 4
    %v1617 = vrot.slane %v1582, 4
    %v1618 = vrot.slane %v1587, 4
    %v1619 = vrot.slane %v1592, 4
    %v1620 = vrot.slane %v1597, 4
    %v1621 = vrot.slane %v1602, 4
    %v1622 = vrot.slane %v1607, 4
    %v1637 = vmax.bf16 %v1542, %v1609
    %v1638 = vmax.bf16 %v1547, %v1610
    %v1639 = vmax.bf16 %v1552, %v1611
    %v1640 = vmax.bf16 %v1557, %v1612
    %v1641 = vmax.bf16 %v1562, %v1613
    %v1642 = vmax.bf16 %v1567, %v1614
    %v1643 = vmax.bf16 %v1572, %v1615
    %v1644 = vmax.bf16 %v1577, %v1616
    %v1645 = vmax.bf16 %v1582, %v1617
    %v1646 = vmax.bf16 %v1587, %v1618
    %v1647 = vmax.bf16 %v1592, %v1619
    %v1648 = vmax.bf16 %v1597, %v1620
    %v1649 = vmax.bf16 %v1602, %v1621
    %v1650 = vmax.bf16 %v1607, %v1622
    %v1666 = vunpack.c.l.s4 1966171168
    %v1667 = vunpack.c.0.s8 %v1666
    %v1668 = vlaneseq
    %v1669 = vshrl.u32 %v1668, 7
    %v1670 = vsub.s32 %v1667, %v1669
    %v1671 = vrot.slane %v1637, %v1670
    %v1672 = vcombine.high %v1671, %v1671
    %v1674 = vunpack.c.l.s4 1966171168
    %v1675 = vunpack.c.0.s8 %v1674
    %v1676 = vlaneseq
    %v1677 = vshrl.u32 %v1676, 7
    %v1678 = vsub.s32 %v1675, %v1677
    %v1679 = vrot.slane %v1671, %v1678
    %v1681 = vunpack.c.l.s4 1966171168
    %v1682 = vunpack.c.0.s8 %v1681
    %v1683 = vlaneseq
    %v1684 = vshrl.u32 %v1683, 7
    %v1685 = vsub.s32 %v1682, %v1684
    %v1686 = vrot.slane %v1672, %v1685
    %v1687 = vcombine.high %v1679, %v1679
    %v1688 = vcombine.high %v1686, %v1686
    %v1690 = vunpack.c.l.s4 1966171168
    %v1691 = vunpack.c.0.s8 %v1690
    %v1692 = vlaneseq
    %v1693 = vshrl.u32 %v1692, 7
    %v1694 = vsub.s32 %v1691, %v1693
    %v1695 = vrot.slane %v1638, %v1694
    %v1696 = vcombine.high %v1695, %v1695
    %v1698 = vunpack.c.l.s4 1966171168
    %v1699 = vunpack.c.0.s8 %v1698
    %v1700 = vlaneseq
    %v1701 = vshrl.u32 %v1700, 7
    %v1702 = vsub.s32 %v1699, %v1701
    %v1703 = vrot.slane %v1695, %v1702
    %v1705 = vunpack.c.l.s4 1966171168
    %v1706 = vunpack.c.0.s8 %v1705
    %v1707 = vlaneseq
    %v1708 = vshrl.u32 %v1707, 7
    %v1709 = vsub.s32 %v1706, %v1708
    %v1710 = vrot.slane %v1696, %v1709
    %v1711 = vcombine.high %v1703, %v1703
    %v1712 = vcombine.high %v1710, %v1710
    %v1714 = vunpack.c.l.s4 1966171168
    %v1715 = vunpack.c.0.s8 %v1714
    %v1716 = vlaneseq
    %v1717 = vshrl.u32 %v1716, 7
    %v1718 = vsub.s32 %v1715, %v1717
    %v1719 = vrot.slane %v1639, %v1718
    %v1720 = vcombine.high %v1719, %v1719
    %v1722 = vunpack.c.l.s4 1966171168
    %v1723 = vunpack.c.0.s8 %v1722
    %v1724 = vlaneseq
    %v1725 = vshrl.u32 %v1724, 7
    %v1726 = vsub.s32 %v1723, %v1725
    %v1727 = vrot.slane %v1719, %v1726
    %v1729 = vunpack.c.l.s4 1966171168
    %v1730 = vunpack.c.0.s8 %v1729
    %v1731 = vlaneseq
    %v1732 = vshrl.u32 %v1731, 7
    %v1733 = vsub.s32 %v1730, %v1732
    %v1734 = vrot.slane %v1720, %v1733
    %v1735 = vcombine.high %v1727, %v1727
    %v1736 = vcombine.high %v1734, %v1734
    %v1738 = vunpack.c.l.s4 1966171168
    %v1739 = vunpack.c.0.s8 %v1738
    %v1740 = vlaneseq
    %v1741 = vshrl.u32 %v1740, 7
    %v1742 = vsub.s32 %v1739, %v1741
    %v1743 = vrot.slane %v1640, %v1742
    %v1744 = vcombine.high %v1743, %v1743
    %v1746 = vunpack.c.l.s4 1966171168
    %v1747 = vunpack.c.0.s8 %v1746
    %v1748 = vlaneseq
    %v1749 = vshrl.u32 %v1748, 7
    %v1750 = vsub.s32 %v1747, %v1749
    %v1751 = vrot.slane %v1743, %v1750
    %v1753 = vunpack.c.l.s4 1966171168
    %v1754 = vunpack.c.0.s8 %v1753
    %v1755 = vlaneseq
    %v1756 = vshrl.u32 %v1755, 7
    %v1757 = vsub.s32 %v1754, %v1756
    %v1758 = vrot.slane %v1744, %v1757
    %v1759 = vcombine.high %v1751, %v1751
    %v1760 = vcombine.high %v1758, %v1758
    %v1762 = vunpack.c.l.s4 1966171168
    %v1763 = vunpack.c.0.s8 %v1762
    %v1764 = vlaneseq
    %v1765 = vshrl.u32 %v1764, 7
    %v1766 = vsub.s32 %v1763, %v1765
    %v1767 = vrot.slane %v1641, %v1766
    %v1768 = vcombine.high %v1767, %v1767
    %v1770 = vunpack.c.l.s4 1966171168
    %v1771 = vunpack.c.0.s8 %v1770
    %v1772 = vlaneseq
    %v1773 = vshrl.u32 %v1772, 7
    %v1774 = vsub.s32 %v1771, %v1773
    %v1775 = vrot.slane %v1767, %v1774
    %v1777 = vunpack.c.l.s4 1966171168
    %v1778 = vunpack.c.0.s8 %v1777
    %v1779 = vlaneseq
    %v1780 = vshrl.u32 %v1779, 7
    %v1781 = vsub.s32 %v1778, %v1780
    %v1782 = vrot.slane %v1768, %v1781
    %v1783 = vcombine.high %v1775, %v1775
    %v1784 = vcombine.high %v1782, %v1782
    %v1786 = vunpack.c.l.s4 1966171168
    %v1787 = vunpack.c.0.s8 %v1786
    %v1788 = vlaneseq
    %v1789 = vshrl.u32 %v1788, 7
    %v1790 = vsub.s32 %v1787, %v1789
    %v1791 = vrot.slane %v1642, %v1790
    %v1792 = vcombine.high %v1791, %v1791
    %v1794 = vunpack.c.l.s4 1966171168
    %v1795 = vunpack.c.0.s8 %v1794
    %v1796 = vlaneseq
    %v1797 = vshrl.u32 %v1796, 7
    %v1798 = vsub.s32 %v1795, %v1797
    %v1799 = vrot.slane %v1791, %v1798
    %v1801 = vunpack.c.l.s4 1966171168
    %v1802 = vunpack.c.0.s8 %v1801
    %v1803 = vlaneseq
    %v1804 = vshrl.u32 %v1803, 7
    %v1805 = vsub.s32 %v1802, %v1804
    %v1806 = vrot.slane %v1792, %v1805
    %v1807 = vcombine.high %v1799, %v1799
    %v1808 = vcombine.high %v1806, %v1806
    %v1810 = vunpack.c.l.s4 1966171168
    %v1811 = vunpack.c.0.s8 %v1810
    %v1812 = vlaneseq
    %v1813 = vshrl.u32 %v1812, 7
    %v1814 = vsub.s32 %v1811, %v1813
    %v1815 = vrot.slane %v1643, %v1814
    %v1816 = vcombine.high %v1815, %v1815
    %v1818 = vunpack.c.l.s4 1966171168
    %v1819 = vunpack.c.0.s8 %v1818
    %v1820 = vlaneseq
    %v1821 = vshrl.u32 %v1820, 7
    %v1822 = vsub.s32 %v1819, %v1821
    %v1823 = vrot.slane %v1815, %v1822
    %v1825 = vunpack.c.l.s4 1966171168
    %v1826 = vunpack.c.0.s8 %v1825
    %v1827 = vlaneseq
    %v1828 = vshrl.u32 %v1827, 7
    %v1829 = vsub.s32 %v1826, %v1828
    %v1830 = vrot.slane %v1816, %v1829
    %v1831 = vcombine.high %v1823, %v1823
    %v1832 = vcombine.high %v1830, %v1830
    %v1834 = vunpack.c.l.s4 1966171168
    %v1835 = vunpack.c.0.s8 %v1834
    %v1836 = vlaneseq
    %v1837 = vshrl.u32 %v1836, 7
    %v1838 = vsub.s32 %v1835, %v1837
    %v1839 = vrot.slane %v1644, %v1838
    %v1840 = vcombine.high %v1839, %v1839
    %v1842 = vunpack.c.l.s4 1966171168
    %v1843 = vunpack.c.0.s8 %v1842
    %v1844 = vlaneseq
    %v1845 = vshrl.u32 %v1844, 7
    %v1846 = vsub.s32 %v1843, %v1845
    %v1847 = vrot.slane %v1839, %v1846
    %v1849 = vunpack.c.l.s4 1966171168
    %v1850 = vunpack.c.0.s8 %v1849
    %v1851 = vlaneseq
    %v1852 = vshrl.u32 %v1851, 7
    %v1853 = vsub.s32 %v1850, %v1852
    %v1854 = vrot.slane %v1840, %v1853
    %v1855 = vcombine.high %v1847, %v1847
    %v1856 = vcombine.high %v1854, %v1854
    %v1858 = vunpack.c.l.s4 1966171168
    %v1859 = vunpack.c.0.s8 %v1858
    %v1860 = vlaneseq
    %v1861 = vshrl.u32 %v1860, 7
    %v1862 = vsub.s32 %v1859, %v1861
    %v1863 = vrot.slane %v1645, %v1862
    %v1864 = vcombine.high %v1863, %v1863
    %v1866 = vunpack.c.l.s4 1966171168
    %v1867 = vunpack.c.0.s8 %v1866
    %v1868 = vlaneseq
    %v1869 = vshrl.u32 %v1868, 7
    %v1870 = vsub.s32 %v1867, %v1869
    %v1871 = vrot.slane %v1863, %v1870
    %v1873 = vunpack.c.l.s4 1966171168
    %v1874 = vunpack.c.0.s8 %v1873
    %v1875 = vlaneseq
    %v1876 = vshrl.u32 %v1875, 7
    %v1877 = vsub.s32 %v1874, %v1876
    %v1878 = vrot.slane %v1864, %v1877
    %v1879 = vcombine.high %v1871, %v1871
    %v1880 = vcombine.high %v1878, %v1878
    %v1882 = vunpack.c.l.s4 1966171168
    %v1883 = vunpack.c.0.s8 %v1882
    %v1884 = vlaneseq
    %v1885 = vshrl.u32 %v1884, 7
    %v1886 = vsub.s32 %v1883, %v1885
    %v1887 = vrot.slane %v1646, %v1886
    %v1888 = vcombine.high %v1887, %v1887
    %v1890 = vunpack.c.l.s4 1966171168
    %v1891 = vunpack.c.0.s8 %v1890
    %v1892 = vlaneseq
    %v1893 = vshrl.u32 %v1892, 7
    %v1894 = vsub.s32 %v1891, %v1893
    %v1895 = vrot.slane %v1887, %v1894
    %v1897 = vunpack.c.l.s4 1966171168
    %v1898 = vunpack.c.0.s8 %v1897
    %v1899 = vlaneseq
    %v1900 = vshrl.u32 %v1899, 7
    %v1901 = vsub.s32 %v1898, %v1900
    %v1902 = vrot.slane %v1888, %v1901
    %v1903 = vcombine.high %v1895, %v1895
    %v1904 = vcombine.high %v1902, %v1902
    %v1906 = vunpack.c.l.s4 1966171168
    %v1907 = vunpack.c.0.s8 %v1906
    %v1908 = vlaneseq
    %v1909 = vshrl.u32 %v1908, 7
    %v1910 = vsub.s32 %v1907, %v1909
    %v1911 = vrot.slane %v1647, %v1910
    %v1912 = vcombine.high %v1911, %v1911
    %v1914 = vunpack.c.l.s4 1966171168
    %v1915 = vunpack.c.0.s8 %v1914
    %v1916 = vlaneseq
    %v1917 = vshrl.u32 %v1916, 7
    %v1918 = vsub.s32 %v1915, %v1917
    %v1919 = vrot.slane %v1911, %v1918
    %v1921 = vunpack.c.l.s4 1966171168
    %v1922 = vunpack.c.0.s8 %v1921
    %v1923 = vlaneseq
    %v1924 = vshrl.u32 %v1923, 7
    %v1925 = vsub.s32 %v1922, %v1924
    %v1926 = vrot.slane %v1912, %v1925
    %v1927 = vcombine.high %v1919, %v1919
    %v1928 = vcombine.high %v1926, %v1926
    %v1930 = vunpack.c.l.s4 1966171168
    %v1931 = vunpack.c.0.s8 %v1930
    %v1932 = vlaneseq
    %v1933 = vshrl.u32 %v1932, 7
    %v1934 = vsub.s32 %v1931, %v1933
    %v1935 = vrot.slane %v1648, %v1934
    %v1936 = vcombine.high %v1935, %v1935
    %v1938 = vunpack.c.l.s4 1966171168
    %v1939 = vunpack.c.0.s8 %v1938
    %v1940 = vlaneseq
    %v1941 = vshrl.u32 %v1940, 7
    %v1942 = vsub.s32 %v1939, %v1941
    %v1943 = vrot.slane %v1935, %v1942
    %v1945 = vunpack.c.l.s4 1966171168
    %v1946 = vunpack.c.0.s8 %v1945
    %v1947 = vlaneseq
    %v1948 = vshrl.u32 %v1947, 7
    %v1949 = vsub.s32 %v1946, %v1948
    %v1950 = vrot.slane %v1936, %v1949
    %v1951 = vcombine.high %v1943, %v1943
    %v1952 = vcombine.high %v1950, %v1950
    %v1954 = vunpack.c.l.s4 1966171168
    %v1955 = vunpack.c.0.s8 %v1954
    %v1956 = vlaneseq
    %v1957 = vshrl.u32 %v1956, 7
    %v1958 = vsub.s32 %v1955, %v1957
    %v1959 = vrot.slane %v1649, %v1958
    %v1960 = vcombine.high %v1959, %v1959
    %v1962 = vunpack.c.l.s4 1966171168
    %v1963 = vunpack.c.0.s8 %v1962
    %v1964 = vlaneseq
    %v1965 = vshrl.u32 %v1964, 7
    %v1966 = vsub.s32 %v1963, %v1965
    %v1967 = vrot.slane %v1959, %v1966
    %v1969 = vunpack.c.l.s4 1966171168
    %v1970 = vunpack.c.0.s8 %v1969
    %v1971 = vlaneseq
    %v1972 = vshrl.u32 %v1971, 7
    %v1973 = vsub.s32 %v1970, %v1972
    %v1974 = vrot.slane %v1960, %v1973
    %v1975 = vcombine.high %v1967, %v1967
    %v1976 = vcombine.high %v1974, %v1974
    %v1978 = vunpack.c.l.s4 1966171168
    %v1979 = vunpack.c.0.s8 %v1978
    %v1980 = vlaneseq
    %v1981 = vshrl.u32 %v1980, 7
    %v1982 = vsub.s32 %v1979, %v1981
    %v1983 = vrot.slane %v1650, %v1982
    %v1984 = vcombine.high %v1983, %v1983
    %v1986 = vunpack.c.l.s4 1966171168
    %v1987 = vunpack.c.0.s8 %v1986
    %v1988 = vlaneseq
    %v1989 = vshrl.u32 %v1988, 7
    %v1990 = vsub.s32 %v1987, %v1989
    %v1991 = vrot.slane %v1983, %v1990
    %v1993 = vunpack.c.l.s4 1966171168
    %v1994 = vunpack.c.0.s8 %v1993
    %v1995 = vlaneseq
    %v1996 = vshrl.u32 %v1995, 7
    %v1997 = vsub.s32 %v1994, %v1996
    %v1998 = vrot.slane %v1984, %v1997
    %v1999 = vcombine.high %v1991, %v1991
    %v2000 = vcombine.high %v1998, %v1998
    %v2001 = vcombine.low %v1679, %v1686
    %v2002 = vcombine.low %v1687, %v1688
    %v2003 = vcombine.low %v1703, %v1710
    %v2005 = vunpack.c.l.s4 1966171168
    %v2006 = vunpack.c.0.s8 %v2005
    %v2007 = vlaneseq
    %v2008 = vshrl.u32 %v2007, 7
    %v2009 = vsub.s32 %v2006, %v2008
    %v2010 = vrot.slane %v2001, %v2009
    %v2012 = vunpack.c.l.s4 1966171168
    %v2013 = vunpack.c.0.s8 %v2012
    %v2014 = vlaneseq
    %v2015 = vshrl.u32 %v2014, 7
    %v2016 = vsub.s32 %v2013, %v2015
    %v2017 = vrot.slane %v2002, %v2016
    %v2019 = vunpack.c.l.s4 1966171168
    %v2020 = vunpack.c.0.s8 %v2019
    %v2021 = vlaneseq
    %v2022 = vshrl.u32 %v2021, 7
    %v2023 = vsub.s32 %v2020, %v2022
    %v2024 = vrot.slane %v2003, %v2023
    %v2026 = vunpack.c.l.s4 1966171168
    %v2027 = vunpack.c.0.s8 %v2026
    %v2028 = vlaneseq
    %v2029 = vshrl.u32 %v2028, 7
    %v2030 = vsub.s32 %v2027, %v2029
    %v2031 = vrot.slane %v1711, %v2030
    %v2032 = vcombine.low %v2010, %v2017
    %v2033 = vcombine.low %v2024, %v2031
    %v2035 = vunpack.c.l.s4 1966171168
    %v2036 = vunpack.c.0.s8 %v2035
    %v2037 = vlaneseq
    %v2038 = vshrl.u32 %v2037, 7
    %v2039 = vsub.s32 %v2036, %v2038
    %v2040 = vrot.slane %v2032, %v2039
    %v2042 = vunpack.c.l.s4 1966171168
    %v2043 = vunpack.c.0.s8 %v2042
    %v2044 = vlaneseq
    %v2045 = vshrl.u32 %v2044, 7
    %v2046 = vsub.s32 %v2043, %v2045
    %v2047 = vrot.slane %v2033, %v2046
    %v2048 = vcombine.low %v2040, %v2047
    %v2049 = vcombine.low %v1712, %v1727
    %v2050 = vcombine.low %v1734, %v1735
    %v2051 = vcombine.low %v1736, %v1751
    %v2053 = vunpack.c.l.s4 1966171168
    %v2054 = vunpack.c.0.s8 %v2053
    %v2055 = vlaneseq
    %v2056 = vshrl.u32 %v2055, 7
    %v2057 = vsub.s32 %v2054, %v2056
    %v2058 = vrot.slane %v2049, %v2057
    %v2060 = vunpack.c.l.s4 1966171168
    %v2061 = vunpack.c.0.s8 %v2060
    %v2062 = vlaneseq
    %v2063 = vshrl.u32 %v2062, 7
    %v2064 = vsub.s32 %v2061, %v2063
    %v2065 = vrot.slane %v2050, %v2064
    %v2067 = vunpack.c.l.s4 1966171168
    %v2068 = vunpack.c.0.s8 %v2067
    %v2069 = vlaneseq
    %v2070 = vshrl.u32 %v2069, 7
    %v2071 = vsub.s32 %v2068, %v2070
    %v2072 = vrot.slane %v2051, %v2071
    %v2074 = vunpack.c.l.s4 1966171168
    %v2075 = vunpack.c.0.s8 %v2074
    %v2076 = vlaneseq
    %v2077 = vshrl.u32 %v2076, 7
    %v2078 = vsub.s32 %v2075, %v2077
    %v2079 = vrot.slane %v1758, %v2078
    %v2080 = vcombine.low %v2058, %v2065
    %v2081 = vcombine.low %v2072, %v2079
    %v2083 = vunpack.c.l.s4 1966171168
    %v2084 = vunpack.c.0.s8 %v2083
    %v2085 = vlaneseq
    %v2086 = vshrl.u32 %v2085, 7
    %v2087 = vsub.s32 %v2084, %v2086
    %v2088 = vrot.slane %v2080, %v2087
    %v2090 = vunpack.c.l.s4 1966171168
    %v2091 = vunpack.c.0.s8 %v2090
    %v2092 = vlaneseq
    %v2093 = vshrl.u32 %v2092, 7
    %v2094 = vsub.s32 %v2091, %v2093
    %v2095 = vrot.slane %v2081, %v2094
    %v2096 = vcombine.low %v2088, %v2095
    %v2097 = vcombine.low %v1759, %v1760
    %v2098 = vcombine.low %v1775, %v1782
    %v2099 = vcombine.low %v1783, %v1784
    %v2101 = vunpack.c.l.s4 1966171168
    %v2102 = vunpack.c.0.s8 %v2101
    %v2103 = vlaneseq
    %v2104 = vshrl.u32 %v2103, 7
    %v2105 = vsub.s32 %v2102, %v2104
    %v2106 = vrot.slane %v2097, %v2105
    %v2108 = vunpack.c.l.s4 1966171168
    %v2109 = vunpack.c.0.s8 %v2108
    %v2110 = vlaneseq
    %v2111 = vshrl.u32 %v2110, 7
    %v2112 = vsub.s32 %v2109, %v2111
    %v2113 = vrot.slane %v2098, %v2112
    %v2115 = vunpack.c.l.s4 1966171168
    %v2116 = vunpack.c.0.s8 %v2115
    %v2117 = vlaneseq
    %v2118 = vshrl.u32 %v2117, 7
    %v2119 = vsub.s32 %v2116, %v2118
    %v2120 = vrot.slane %v2099, %v2119
    %v2122 = vunpack.c.l.s4 1966171168
    %v2123 = vunpack.c.0.s8 %v2122
    %v2124 = vlaneseq
    %v2125 = vshrl.u32 %v2124, 7
    %v2126 = vsub.s32 %v2123, %v2125
    %v2127 = vrot.slane %v1799, %v2126
    %v2128 = vcombine.low %v2106, %v2113
    %v2129 = vcombine.low %v2120, %v2127
    %v2131 = vunpack.c.l.s4 1966171168
    %v2132 = vunpack.c.0.s8 %v2131
    %v2133 = vlaneseq
    %v2134 = vshrl.u32 %v2133, 7
    %v2135 = vsub.s32 %v2132, %v2134
    %v2136 = vrot.slane %v2128, %v2135
    %v2138 = vunpack.c.l.s4 1966171168
    %v2139 = vunpack.c.0.s8 %v2138
    %v2140 = vlaneseq
    %v2141 = vshrl.u32 %v2140, 7
    %v2142 = vsub.s32 %v2139, %v2141
    %v2143 = vrot.slane %v2129, %v2142
    %v2144 = vcombine.low %v2136, %v2143
    %v2145 = vcombine.low %v1806, %v1807
    %v2146 = vcombine.low %v1808, %v1823
    %v2147 = vcombine.low %v1830, %v1831
    %v2149 = vunpack.c.l.s4 1966171168
    %v2150 = vunpack.c.0.s8 %v2149
    %v2151 = vlaneseq
    %v2152 = vshrl.u32 %v2151, 7
    %v2153 = vsub.s32 %v2150, %v2152
    %v2154 = vrot.slane %v2145, %v2153
    %v2156 = vunpack.c.l.s4 1966171168
    %v2157 = vunpack.c.0.s8 %v2156
    %v2158 = vlaneseq
    %v2159 = vshrl.u32 %v2158, 7
    %v2160 = vsub.s32 %v2157, %v2159
    %v2161 = vrot.slane %v2146, %v2160
    %v2163 = vunpack.c.l.s4 1966171168
    %v2164 = vunpack.c.0.s8 %v2163
    %v2165 = vlaneseq
    %v2166 = vshrl.u32 %v2165, 7
    %v2167 = vsub.s32 %v2164, %v2166
    %v2168 = vrot.slane %v2147, %v2167
    %v2170 = vunpack.c.l.s4 1966171168
    %v2171 = vunpack.c.0.s8 %v2170
    %v2172 = vlaneseq
    %v2173 = vshrl.u32 %v2172, 7
    %v2174 = vsub.s32 %v2171, %v2173
    %v2175 = vrot.slane %v1832, %v2174
    %v2176 = vcombine.low %v2154, %v2161
    %v2177 = vcombine.low %v2168, %v2175
    %v2179 = vunpack.c.l.s4 1966171168
    %v2180 = vunpack.c.0.s8 %v2179
    %v2181 = vlaneseq
    %v2182 = vshrl.u32 %v2181, 7
    %v2183 = vsub.s32 %v2180, %v2182
    %v2184 = vrot.slane %v2176, %v2183
    %v2186 = vunpack.c.l.s4 1966171168
    %v2187 = vunpack.c.0.s8 %v2186
    %v2188 = vlaneseq
    %v2189 = vshrl.u32 %v2188, 7
    %v2190 = vsub.s32 %v2187, %v2189
    %v2191 = vrot.slane %v2177, %v2190
    %v2192 = vcombine.low %v2184, %v2191
    %v2193 = vcombine.low %v1847, %v1854
    %v2194 = vcombine.low %v1855, %v1856
    %v2195 = vcombine.low %v1871, %v1878
    %v2197 = vunpack.c.l.s4 1966171168
    %v2198 = vunpack.c.0.s8 %v2197
    %v2199 = vlaneseq
    %v2200 = vshrl.u32 %v2199, 7
    %v2201 = vsub.s32 %v2198, %v2200
    %v2202 = vrot.slane %v2193, %v2201
    %v2204 = vunpack.c.l.s4 1966171168
    %v2205 = vunpack.c.0.s8 %v2204
    %v2206 = vlaneseq
    %v2207 = vshrl.u32 %v2206, 7
    %v2208 = vsub.s32 %v2205, %v2207
    %v2209 = vrot.slane %v2194, %v2208
    %v2211 = vunpack.c.l.s4 1966171168
    %v2212 = vunpack.c.0.s8 %v2211
    %v2213 = vlaneseq
    %v2214 = vshrl.u32 %v2213, 7
    %v2215 = vsub.s32 %v2212, %v2214
    %v2216 = vrot.slane %v2195, %v2215
    %v2218 = vunpack.c.l.s4 1966171168
    %v2219 = vunpack.c.0.s8 %v2218
    %v2220 = vlaneseq
    %v2221 = vshrl.u32 %v2220, 7
    %v2222 = vsub.s32 %v2219, %v2221
    %v2223 = vrot.slane %v1879, %v2222
    %v2224 = vcombine.low %v2202, %v2209
    %v2225 = vcombine.low %v2216, %v2223
    %v2227 = vunpack.c.l.s4 1966171168
    %v2228 = vunpack.c.0.s8 %v2227
    %v2229 = vlaneseq
    %v2230 = vshrl.u32 %v2229, 7
    %v2231 = vsub.s32 %v2228, %v2230
    %v2232 = vrot.slane %v2224, %v2231
    %v2234 = vunpack.c.l.s4 1966171168
    %v2235 = vunpack.c.0.s8 %v2234
    %v2236 = vlaneseq
    %v2237 = vshrl.u32 %v2236, 7
    %v2238 = vsub.s32 %v2235, %v2237
    %v2239 = vrot.slane %v2225, %v2238
    %v2240 = vcombine.low %v2232, %v2239
    %v2241 = vcombine.low %v1880, %v1895
    %v2242 = vcombine.low %v1902, %v1903
    %v2243 = vcombine.low %v1904, %v1919
    %v2245 = vunpack.c.l.s4 1966171168
    %v2246 = vunpack.c.0.s8 %v2245
    %v2247 = vlaneseq
    %v2248 = vshrl.u32 %v2247, 7
    %v2249 = vsub.s32 %v2246, %v2248
    %v2250 = vrot.slane %v2241, %v2249
    %v2252 = vunpack.c.l.s4 1966171168
    %v2253 = vunpack.c.0.s8 %v2252
    %v2254 = vlaneseq
    %v2255 = vshrl.u32 %v2254, 7
    %v2256 = vsub.s32 %v2253, %v2255
    %v2257 = vrot.slane %v2242, %v2256
    %v2259 = vunpack.c.l.s4 1966171168
    %v2260 = vunpack.c.0.s8 %v2259
    %v2261 = vlaneseq
    %v2262 = vshrl.u32 %v2261, 7
    %v2263 = vsub.s32 %v2260, %v2262
    %v2264 = vrot.slane %v2243, %v2263
    %v2266 = vunpack.c.l.s4 1966171168
    %v2267 = vunpack.c.0.s8 %v2266
    %v2268 = vlaneseq
    %v2269 = vshrl.u32 %v2268, 7
    %v2270 = vsub.s32 %v2267, %v2269
    %v2271 = vrot.slane %v1926, %v2270
    %v2272 = vcombine.low %v2250, %v2257
    %v2273 = vcombine.low %v2264, %v2271
    %v2275 = vunpack.c.l.s4 1966171168
    %v2276 = vunpack.c.0.s8 %v2275
    %v2277 = vlaneseq
    %v2278 = vshrl.u32 %v2277, 7
    %v2279 = vsub.s32 %v2276, %v2278
    %v2280 = vrot.slane %v2272, %v2279
    %v2282 = vunpack.c.l.s4 1966171168
    %v2283 = vunpack.c.0.s8 %v2282
    %v2284 = vlaneseq
    %v2285 = vshrl.u32 %v2284, 7
    %v2286 = vsub.s32 %v2283, %v2285
    %v2287 = vrot.slane %v2273, %v2286
    %v2288 = vcombine.low %v2280, %v2287
    %v2289 = vcombine.low %v1927, %v1928
    %v2290 = vcombine.low %v1943, %v1950
    %v2291 = vcombine.low %v1951, %v1952
    %v2293 = vunpack.c.l.s4 1966171168
    %v2294 = vunpack.c.0.s8 %v2293
    %v2295 = vlaneseq
    %v2296 = vshrl.u32 %v2295, 7
    %v2297 = vsub.s32 %v2294, %v2296
    %v2298 = vrot.slane %v2289, %v2297
    %v2300 = vunpack.c.l.s4 1966171168
    %v2301 = vunpack.c.0.s8 %v2300
    %v2302 = vlaneseq
    %v2303 = vshrl.u32 %v2302, 7
    %v2304 = vsub.s32 %v2301, %v2303
    %v2305 = vrot.slane %v2290, %v2304
    %v2307 = vunpack.c.l.s4 1966171168
    %v2308 = vunpack.c.0.s8 %v2307
    %v2309 = vlaneseq
    %v2310 = vshrl.u32 %v2309, 7
    %v2311 = vsub.s32 %v2308, %v2310
    %v2312 = vrot.slane %v2291, %v2311
    %v2314 = vunpack.c.l.s4 1966171168
    %v2315 = vunpack.c.0.s8 %v2314
    %v2316 = vlaneseq
    %v2317 = vshrl.u32 %v2316, 7
    %v2318 = vsub.s32 %v2315, %v2317
    %v2319 = vrot.slane %v1967, %v2318
    %v2320 = vcombine.low %v2298, %v2305
    %v2321 = vcombine.low %v2312, %v2319
    %v2323 = vunpack.c.l.s4 1966171168
    %v2324 = vunpack.c.0.s8 %v2323
    %v2325 = vlaneseq
    %v2326 = vshrl.u32 %v2325, 7
    %v2327 = vsub.s32 %v2324, %v2326
    %v2328 = vrot.slane %v2320, %v2327
    %v2330 = vunpack.c.l.s4 1966171168
    %v2331 = vunpack.c.0.s8 %v2330
    %v2332 = vlaneseq
    %v2333 = vshrl.u32 %v2332, 7
    %v2334 = vsub.s32 %v2331, %v2333
    %v2335 = vrot.slane %v2321, %v2334
    %v2336 = vcombine.low %v2328, %v2335
    %v2337 = vcombine.low %v1974, %v1975
    %v2338 = vcombine.low %v1976, %v1991
    %v2339 = vcombine.low %v1998, %v1999
    %v2341 = vunpack.c.l.s4 1966171168
    %v2342 = vunpack.c.0.s8 %v2341
    %v2343 = vlaneseq
    %v2344 = vshrl.u32 %v2343, 7
    %v2345 = vsub.s32 %v2342, %v2344
    %v2346 = vrot.slane %v2337, %v2345
    %v2348 = vunpack.c.l.s4 1966171168
    %v2349 = vunpack.c.0.s8 %v2348
    %v2350 = vlaneseq
    %v2351 = vshrl.u32 %v2350, 7
    %v2352 = vsub.s32 %v2349, %v2351
    %v2353 = vrot.slane %v2338, %v2352
    %v2355 = vunpack.c.l.s4 1966171168
    %v2356 = vunpack.c.0.s8 %v2355
    %v2357 = vlaneseq
    %v2358 = vshrl.u32 %v2357, 7
    %v2359 = vsub.s32 %v2356, %v2358
    %v2360 = vrot.slane %v2339, %v2359
    %v2362 = vunpack.c.l.s4 1966171168
    %v2363 = vunpack.c.0.s8 %v2362
    %v2364 = vlaneseq
    %v2365 = vshrl.u32 %v2364, 7
    %v2366 = vsub.s32 %v2363, %v2365
    %v2367 = vrot.slane %v2000, %v2366
    %v2368 = vcombine.low %v2346, %v2353
    %v2369 = vcombine.low %v2360, %v2367
    %v2371 = vunpack.c.l.s4 1966171168
    %v2372 = vunpack.c.0.s8 %v2371
    %v2373 = vlaneseq
    %v2374 = vshrl.u32 %v2373, 7
    %v2375 = vsub.s32 %v2372, %v2374
    %v2376 = vrot.slane %v2368, %v2375
    %v2378 = vunpack.c.l.s4 1966171168
    %v2379 = vunpack.c.0.s8 %v2378
    %v2380 = vlaneseq
    %v2381 = vshrl.u32 %v2380, 7
    %v2382 = vsub.s32 %v2379, %v2381
    %v2383 = vrot.slane %v2369, %v2382
    %v2384 = vcombine.low %v2376, %v2383
    %v2386 = vshrl.u32 %v2048, 16
    %v2388 = vrot.slane %v2386, 7
    %v2389 = vshll.u32 %v2048, 16
    %v2391 = vor.u32 %v2388, %v2389
    %v2393 = vshrl.u32 %v2096, 16
    %v2395 = vrot.slane %v2393, 7
    %v2396 = vshll.u32 %v2096, 16
    %v2398 = vor.u32 %v2395, %v2396
    %v2400 = vshrl.u32 %v2144, 16
    %v2402 = vrot.slane %v2400, 7
    %v2403 = vshll.u32 %v2144, 16
    %v2405 = vor.u32 %v2402, %v2403
    %v2407 = vshrl.u32 %v2192, 16
    %v2409 = vrot.slane %v2407, 7
    %v2410 = vshll.u32 %v2192, 16
    %v2412 = vor.u32 %v2409, %v2410
    %v2414 = vshrl.u32 %v2240, 16
    %v2416 = vrot.slane %v2414, 7
    %v2417 = vshll.u32 %v2240, 16
    %v2419 = vor.u32 %v2416, %v2417
    %v2421 = vshrl.u32 %v2288, 16
    %v2423 = vrot.slane %v2421, 7
    %v2424 = vshll.u32 %v2288, 16
    %v2426 = vor.u32 %v2423, %v2424
    %v2428 = vshrl.u32 %v2336, 16
    %v2430 = vrot.slane %v2428, 7
    %v2431 = vshll.u32 %v2336, 16
    %v2433 = vor.u32 %v2430, %v2431
    %v2435 = vshrl.u32 %v2384, 16
    %v2437 = vrot.slane %v2435, 7
    %v2438 = vshll.u32 %v2384, 16
    %v2440 = vor.u32 %v2437, %v2438
    %v2449 = vsel %vm311, 0, %v2391
    %v2450 = vsel %vm311, 0, %v2398
    %v2451 = vsel %vm311, 0, %v2405
    %v2452 = vsel %vm311, 0, %v2412
    %v2453 = vsel %vm311, 0, %v2419
    %v2454 = vsel %vm311, 0, %v2426
    %v2455 = vsel %vm311, 0, %v2433
    %v2456 = vsel %vm311, 0, %v2440
    %vm2457 = vcmask 1047552
    %vm2458 = vmand %vm2457, %vm331
    %v2459 = vsel %vm2458, %v2449, 0
    %v2460 = vsel %vm2458, %v2450, 0
    %v2461 = vsel %vm2458, %v2451, 0
    %v2462 = vsel %vm2458, %v2452, 0
    %v2463 = vsel %vm2458, %v2453, 0
    %v2464 = vsel %vm2458, %v2454, 0
    %v2465 = vsel %vm2458, %v2455, 0
    %v2466 = vsel %vm2458, %v2456, 0
    %v2468 = vshrl.u32 %v2459, 16
    %v2470 = vshll.u32 %v2459, 16
    %v2472 = vrot.slane %v2470, 1
    %v2473 = vor.u32 %v2468, %v2472
    %v2475 = vshrl.u32 %v2460, 16
    %v2477 = vshll.u32 %v2460, 16
    %v2479 = vrot.slane %v2477, 1
    %v2480 = vor.u32 %v2475, %v2479
    %v2482 = vshrl.u32 %v2461, 16
    %v2484 = vshll.u32 %v2461, 16
    %v2486 = vrot.slane %v2484, 1
    %v2487 = vor.u32 %v2482, %v2486
    %v2489 = vshrl.u32 %v2462, 16
    %v2491 = vshll.u32 %v2462, 16
    %v2493 = vrot.slane %v2491, 1
    %v2494 = vor.u32 %v2489, %v2493
    %v2496 = vshrl.u32 %v2463, 16
    %v2498 = vshll.u32 %v2463, 16
    %v2500 = vrot.slane %v2498, 1
    %v2501 = vor.u32 %v2496, %v2500
    %v2503 = vshrl.u32 %v2464, 16
    %v2505 = vshll.u32 %v2464, 16
    %v2507 = vrot.slane %v2505, 1
    %v2508 = vor.u32 %v2503, %v2507
    %v2510 = vshrl.u32 %v2465, 16
    %v2512 = vshll.u32 %v2465, 16
    %v2514 = vrot.slane %v2512, 1
    %v2515 = vor.u32 %v2510, %v2514
    %v2517 = vshrl.u32 %v2466, 16
    %v2519 = vshll.u32 %v2466, 16
    %v2521 = vrot.slane %v2519, 1
    %v2522 = vor.u32 %v2517, %v2521
    %v2531 = vrot.slane %v2459, 1
    %v2532 = vrot.slane %v2460, 1
    %v2533 = vrot.slane %v2461, 1
    %v2534 = vrot.slane %v2462, 1
    %v2535 = vrot.slane %v2463, 1
    %v2536 = vrot.slane %v2464, 1
    %v2537 = vrot.slane %v2465, 1
    %v2538 = vrot.slane %v2466, 1
    %v2539 = vcombine.low %v2459, %v2473
    %v2540 = vcombine.high %v2459, %v2473
    %v2541 = vcombine.high %v2531, %v2531
    %v2543 = vunpack.c.l.s4 1966171168
    %v2544 = vunpack.c.0.s8 %v2543
    %v2545 = vlaneseq
    %v2546 = vshrl.u32 %v2545, 7
    %v2547 = vsub.s32 %v2544, %v2546
    %v2548 = vrot.slane %v2539, %v2547
    %v2550 = vunpack.c.l.s4 1966171168
    %v2551 = vunpack.c.0.s8 %v2550
    %v2552 = vlaneseq
    %v2553 = vshrl.u32 %v2552, 7
    %v2554 = vsub.s32 %v2551, %v2553
    %v2555 = vrot.slane %v2540, %v2554
    %v2557 = vunpack.c.l.s4 1966171168
    %v2558 = vunpack.c.0.s8 %v2557
    %v2559 = vlaneseq
    %v2560 = vshrl.u32 %v2559, 7
    %v2561 = vsub.s32 %v2558, %v2560
    %v2562 = vrot.slane %v2531, %v2561
    %v2564 = vunpack.c.l.s4 1966171168
    %v2565 = vunpack.c.0.s8 %v2564
    %v2566 = vlaneseq
    %v2567 = vshrl.u32 %v2566, 7
    %v2568 = vsub.s32 %v2565, %v2567
    %v2569 = vrot.slane %v2541, %v2568
    %v2570 = vcombine.low %v2548, %v2562
    %v2571 = vcombine.high %v2548, %v2562
    %v2572 = vcombine.low %v2555, %v2569
    %v2573 = vcombine.high %v2555, %v2569
    %v2575 = vunpack.c.l.s4 1966171168
    %v2576 = vunpack.c.0.s8 %v2575
    %v2577 = vlaneseq
    %v2578 = vshrl.u32 %v2577, 7
    %v2579 = vsub.s32 %v2576, %v2578
    %v2580 = vrot.slane %v2570, %v2579
    %v2582 = vunpack.c.l.s4 1966171168
    %v2583 = vunpack.c.0.s8 %v2582
    %v2584 = vlaneseq
    %v2585 = vshrl.u32 %v2584, 7
    %v2586 = vsub.s32 %v2583, %v2585
    %v2587 = vrot.slane %v2572, %v2586
    %v2589 = vunpack.c.l.s4 1966171168
    %v2590 = vunpack.c.0.s8 %v2589
    %v2591 = vlaneseq
    %v2592 = vshrl.u32 %v2591, 7
    %v2593 = vsub.s32 %v2590, %v2592
    %v2594 = vrot.slane %v2571, %v2593
    %v2596 = vunpack.c.l.s4 1966171168
    %v2597 = vunpack.c.0.s8 %v2596
    %v2598 = vlaneseq
    %v2599 = vshrl.u32 %v2598, 7
    %v2600 = vsub.s32 %v2597, %v2599
    %v2601 = vrot.slane %v2573, %v2600
    %v2602 = vcombine.high %v2580, %v2580
    %v2603 = vcombine.high %v2587, %v2587
    %v2604 = vcombine.high %v2594, %v2594
    %v2605 = vcombine.low %v2460, %v2480
    %v2606 = vcombine.high %v2460, %v2480
    %v2607 = vcombine.high %v2532, %v2532
    %v2609 = vunpack.c.l.s4 1966171168
    %v2610 = vunpack.c.0.s8 %v2609
    %v2611 = vlaneseq
    %v2612 = vshrl.u32 %v2611, 7
    %v2613 = vsub.s32 %v2610, %v2612
    %v2614 = vrot.slane %v2605, %v2613
    %v2616 = vunpack.c.l.s4 1966171168
    %v2617 = vunpack.c.0.s8 %v2616
    %v2618 = vlaneseq
    %v2619 = vshrl.u32 %v2618, 7
    %v2620 = vsub.s32 %v2617, %v2619
    %v2621 = vrot.slane %v2606, %v2620
    %v2623 = vunpack.c.l.s4 1966171168
    %v2624 = vunpack.c.0.s8 %v2623
    %v2625 = vlaneseq
    %v2626 = vshrl.u32 %v2625, 7
    %v2627 = vsub.s32 %v2624, %v2626
    %v2628 = vrot.slane %v2532, %v2627
    %v2630 = vunpack.c.l.s4 1966171168
    %v2631 = vunpack.c.0.s8 %v2630
    %v2632 = vlaneseq
    %v2633 = vshrl.u32 %v2632, 7
    %v2634 = vsub.s32 %v2631, %v2633
    %v2635 = vrot.slane %v2607, %v2634
    %v2636 = vcombine.low %v2614, %v2628
    %v2637 = vcombine.high %v2614, %v2628
    %v2638 = vcombine.low %v2621, %v2635
    %v2639 = vcombine.high %v2621, %v2635
    %v2641 = vunpack.c.l.s4 1966171168
    %v2642 = vunpack.c.0.s8 %v2641
    %v2643 = vlaneseq
    %v2644 = vshrl.u32 %v2643, 7
    %v2645 = vsub.s32 %v2642, %v2644
    %v2646 = vrot.slane %v2636, %v2645
    %v2648 = vunpack.c.l.s4 1966171168
    %v2649 = vunpack.c.0.s8 %v2648
    %v2650 = vlaneseq
    %v2651 = vshrl.u32 %v2650, 7
    %v2652 = vsub.s32 %v2649, %v2651
    %v2653 = vrot.slane %v2638, %v2652
    %v2655 = vunpack.c.l.s4 1966171168
    %v2656 = vunpack.c.0.s8 %v2655
    %v2657 = vlaneseq
    %v2658 = vshrl.u32 %v2657, 7
    %v2659 = vsub.s32 %v2656, %v2658
    %v2660 = vrot.slane %v2637, %v2659
    %v2662 = vunpack.c.l.s4 1966171168
    %v2663 = vunpack.c.0.s8 %v2662
    %v2664 = vlaneseq
    %v2665 = vshrl.u32 %v2664, 7
    %v2666 = vsub.s32 %v2663, %v2665
    %v2667 = vrot.slane %v2639, %v2666
    %v2668 = vcombine.high %v2646, %v2646
    %v2669 = vcombine.high %v2653, %v2653
    %v2670 = vcombine.high %v2660, %v2660
    %v2671 = vcombine.low %v2461, %v2487
    %v2672 = vcombine.high %v2461, %v2487
    %v2673 = vcombine.high %v2533, %v2533
    %v2675 = vunpack.c.l.s4 1966171168
    %v2676 = vunpack.c.0.s8 %v2675
    %v2677 = vlaneseq
    %v2678 = vshrl.u32 %v2677, 7
    %v2679 = vsub.s32 %v2676, %v2678
    %v2680 = vrot.slane %v2671, %v2679
    %v2682 = vunpack.c.l.s4 1966171168
    %v2683 = vunpack.c.0.s8 %v2682
    %v2684 = vlaneseq
    %v2685 = vshrl.u32 %v2684, 7
    %v2686 = vsub.s32 %v2683, %v2685
    %v2687 = vrot.slane %v2672, %v2686
    %v2689 = vunpack.c.l.s4 1966171168
    %v2690 = vunpack.c.0.s8 %v2689
    %v2691 = vlaneseq
    %v2692 = vshrl.u32 %v2691, 7
    %v2693 = vsub.s32 %v2690, %v2692
    %v2694 = vrot.slane %v2533, %v2693
    %v2696 = vunpack.c.l.s4 1966171168
    %v2697 = vunpack.c.0.s8 %v2696
    %v2698 = vlaneseq
    %v2699 = vshrl.u32 %v2698, 7
    %v2700 = vsub.s32 %v2697, %v2699
    %v2701 = vrot.slane %v2673, %v2700
    %v2702 = vcombine.low %v2680, %v2694
    %v2703 = vcombine.high %v2680, %v2694
    %v2704 = vcombine.low %v2687, %v2701
    %v2705 = vcombine.high %v2687, %v2701
    %v2707 = vunpack.c.l.s4 1966171168
    %v2708 = vunpack.c.0.s8 %v2707
    %v2709 = vlaneseq
    %v2710 = vshrl.u32 %v2709, 7
    %v2711 = vsub.s32 %v2708, %v2710
    %v2712 = vrot.slane %v2702, %v2711
    %v2714 = vunpack.c.l.s4 1966171168
    %v2715 = vunpack.c.0.s8 %v2714
    %v2716 = vlaneseq
    %v2717 = vshrl.u32 %v2716, 7
    %v2718 = vsub.s32 %v2715, %v2717
    %v2719 = vrot.slane %v2704, %v2718
    %v2721 = vunpack.c.l.s4 1966171168
    %v2722 = vunpack.c.0.s8 %v2721
    %v2723 = vlaneseq
    %v2724 = vshrl.u32 %v2723, 7
    %v2725 = vsub.s32 %v2722, %v2724
    %v2726 = vrot.slane %v2703, %v2725
    %v2728 = vunpack.c.l.s4 1966171168
    %v2729 = vunpack.c.0.s8 %v2728
    %v2730 = vlaneseq
    %v2731 = vshrl.u32 %v2730, 7
    %v2732 = vsub.s32 %v2729, %v2731
    %v2733 = vrot.slane %v2705, %v2732
    %v2734 = vcombine.high %v2712, %v2712
    %v2735 = vcombine.high %v2719, %v2719
    %v2736 = vcombine.high %v2726, %v2726
    %v2737 = vcombine.low %v2462, %v2494
    %v2738 = vcombine.high %v2462, %v2494
    %v2739 = vcombine.high %v2534, %v2534
    %v2741 = vunpack.c.l.s4 1966171168
    %v2742 = vunpack.c.0.s8 %v2741
    %v2743 = vlaneseq
    %v2744 = vshrl.u32 %v2743, 7
    %v2745 = vsub.s32 %v2742, %v2744
    %v2746 = vrot.slane %v2737, %v2745
    %v2748 = vunpack.c.l.s4 1966171168
    %v2749 = vunpack.c.0.s8 %v2748
    %v2750 = vlaneseq
    %v2751 = vshrl.u32 %v2750, 7
    %v2752 = vsub.s32 %v2749, %v2751
    %v2753 = vrot.slane %v2738, %v2752
    %v2755 = vunpack.c.l.s4 1966171168
    %v2756 = vunpack.c.0.s8 %v2755
    %v2757 = vlaneseq
    %v2758 = vshrl.u32 %v2757, 7
    %v2759 = vsub.s32 %v2756, %v2758
    %v2760 = vrot.slane %v2534, %v2759
    %v2762 = vunpack.c.l.s4 1966171168
    %v2763 = vunpack.c.0.s8 %v2762
    %v2764 = vlaneseq
    %v2765 = vshrl.u32 %v2764, 7
    %v2766 = vsub.s32 %v2763, %v2765
    %v2767 = vrot.slane %v2739, %v2766
    %v2768 = vcombine.low %v2746, %v2760
    %v2769 = vcombine.high %v2746, %v2760
    %v2770 = vcombine.low %v2753, %v2767
    %v2771 = vcombine.high %v2753, %v2767
    %v2773 = vunpack.c.l.s4 1966171168
    %v2774 = vunpack.c.0.s8 %v2773
    %v2775 = vlaneseq
    %v2776 = vshrl.u32 %v2775, 7
    %v2777 = vsub.s32 %v2774, %v2776
    %v2778 = vrot.slane %v2768, %v2777
    %v2780 = vunpack.c.l.s4 1966171168
    %v2781 = vunpack.c.0.s8 %v2780
    %v2782 = vlaneseq
    %v2783 = vshrl.u32 %v2782, 7
    %v2784 = vsub.s32 %v2781, %v2783
    %v2785 = vrot.slane %v2770, %v2784
    %v2787 = vunpack.c.l.s4 1966171168
    %v2788 = vunpack.c.0.s8 %v2787
    %v2789 = vlaneseq
    %v2790 = vshrl.u32 %v2789, 7
    %v2791 = vsub.s32 %v2788, %v2790
    %v2792 = vrot.slane %v2769, %v2791
    %v2794 = vunpack.c.l.s4 1966171168
    %v2795 = vunpack.c.0.s8 %v2794
    %v2796 = vlaneseq
    %v2797 = vshrl.u32 %v2796, 7
    %v2798 = vsub.s32 %v2795, %v2797
    %v2799 = vrot.slane %v2771, %v2798
    %v2800 = vcombine.high %v2778, %v2778
    %v2801 = vcombine.high %v2785, %v2785
    %v2802 = vcombine.high %v2792, %v2792
    %v2803 = vcombine.low %v2463, %v2501
    %v2804 = vcombine.high %v2463, %v2501
    %v2805 = vcombine.high %v2535, %v2535
    %v2807 = vunpack.c.l.s4 1966171168
    %v2808 = vunpack.c.0.s8 %v2807
    %v2809 = vlaneseq
    %v2810 = vshrl.u32 %v2809, 7
    %v2811 = vsub.s32 %v2808, %v2810
    %v2812 = vrot.slane %v2803, %v2811
    %v2814 = vunpack.c.l.s4 1966171168
    %v2815 = vunpack.c.0.s8 %v2814
    %v2816 = vlaneseq
    %v2817 = vshrl.u32 %v2816, 7
    %v2818 = vsub.s32 %v2815, %v2817
    %v2819 = vrot.slane %v2804, %v2818
    %v2821 = vunpack.c.l.s4 1966171168
    %v2822 = vunpack.c.0.s8 %v2821
    %v2823 = vlaneseq
    %v2824 = vshrl.u32 %v2823, 7
    %v2825 = vsub.s32 %v2822, %v2824
    %v2826 = vrot.slane %v2535, %v2825
    %v2828 = vunpack.c.l.s4 1966171168
    %v2829 = vunpack.c.0.s8 %v2828
    %v2830 = vlaneseq
    %v2831 = vshrl.u32 %v2830, 7
    %v2832 = vsub.s32 %v2829, %v2831
    %v2833 = vrot.slane %v2805, %v2832
    %v2834 = vcombine.low %v2812, %v2826
    %v2835 = vcombine.high %v2812, %v2826
    %v2836 = vcombine.low %v2819, %v2833
    %v2837 = vcombine.high %v2819, %v2833
    %v2839 = vunpack.c.l.s4 1966171168
    %v2840 = vunpack.c.0.s8 %v2839
    %v2841 = vlaneseq
    %v2842 = vshrl.u32 %v2841, 7
    %v2843 = vsub.s32 %v2840, %v2842
    %v2844 = vrot.slane %v2834, %v2843
    %v2846 = vunpack.c.l.s4 1966171168
    %v2847 = vunpack.c.0.s8 %v2846
    %v2848 = vlaneseq
    %v2849 = vshrl.u32 %v2848, 7
    %v2850 = vsub.s32 %v2847, %v2849
    %v2851 = vrot.slane %v2836, %v2850
    %v2853 = vunpack.c.l.s4 1966171168
    %v2854 = vunpack.c.0.s8 %v2853
    %v2855 = vlaneseq
    %v2856 = vshrl.u32 %v2855, 7
    %v2857 = vsub.s32 %v2854, %v2856
    %v2858 = vrot.slane %v2835, %v2857
    %v2860 = vunpack.c.l.s4 1966171168
    %v2861 = vunpack.c.0.s8 %v2860
    %v2862 = vlaneseq
    %v2863 = vshrl.u32 %v2862, 7
    %v2864 = vsub.s32 %v2861, %v2863
    %v2865 = vrot.slane %v2837, %v2864
    %v2866 = vcombine.high %v2844, %v2844
    %v2867 = vcombine.high %v2851, %v2851
    %v2868 = vcombine.high %v2858, %v2858
    %v2869 = vcombine.low %v2464, %v2508
    %v2870 = vcombine.high %v2464, %v2508
    %v2871 = vcombine.high %v2536, %v2536
    %v2873 = vunpack.c.l.s4 1966171168
    %v2874 = vunpack.c.0.s8 %v2873
    %v2875 = vlaneseq
    %v2876 = vshrl.u32 %v2875, 7
    %v2877 = vsub.s32 %v2874, %v2876
    %v2878 = vrot.slane %v2869, %v2877
    %v2880 = vunpack.c.l.s4 1966171168
    %v2881 = vunpack.c.0.s8 %v2880
    %v2882 = vlaneseq
    %v2883 = vshrl.u32 %v2882, 7
    %v2884 = vsub.s32 %v2881, %v2883
    %v2885 = vrot.slane %v2870, %v2884
    %v2887 = vunpack.c.l.s4 1966171168
    %v2888 = vunpack.c.0.s8 %v2887
    %v2889 = vlaneseq
    %v2890 = vshrl.u32 %v2889, 7
    %v2891 = vsub.s32 %v2888, %v2890
    %v2892 = vrot.slane %v2536, %v2891
    %v2894 = vunpack.c.l.s4 1966171168
    %v2895 = vunpack.c.0.s8 %v2894
    %v2896 = vlaneseq
    %v2897 = vshrl.u32 %v2896, 7
    %v2898 = vsub.s32 %v2895, %v2897
    %v2899 = vrot.slane %v2871, %v2898
    %v2900 = vcombine.low %v2878, %v2892
    %v2901 = vcombine.high %v2878, %v2892
    %v2902 = vcombine.low %v2885, %v2899
    %v2903 = vcombine.high %v2885, %v2899
    %v2905 = vunpack.c.l.s4 1966171168
    %v2906 = vunpack.c.0.s8 %v2905
    %v2907 = vlaneseq
    %v2908 = vshrl.u32 %v2907, 7
    %v2909 = vsub.s32 %v2906, %v2908
    %v2910 = vrot.slane %v2900, %v2909
    %v2912 = vunpack.c.l.s4 1966171168
    %v2913 = vunpack.c.0.s8 %v2912
    %v2914 = vlaneseq
    %v2915 = vshrl.u32 %v2914, 7
    %v2916 = vsub.s32 %v2913, %v2915
    %v2917 = vrot.slane %v2902, %v2916
    %v2919 = vunpack.c.l.s4 1966171168
    %v2920 = vunpack.c.0.s8 %v2919
    %v2921 = vlaneseq
    %v2922 = vshrl.u32 %v2921, 7
    %v2923 = vsub.s32 %v2920, %v2922
    %v2924 = vrot.slane %v2901, %v2923
    %v2926 = vunpack.c.l.s4 1966171168
    %v2927 = vunpack.c.0.s8 %v2926
    %v2928 = vlaneseq
    %v2929 = vshrl.u32 %v2928, 7
    %v2930 = vsub.s32 %v2927, %v2929
    %v2931 = vrot.slane %v2903, %v2930
    %v2932 = vcombine.high %v2910, %v2910
    %v2933 = vcombine.high %v2917, %v2917
    %v2934 = vcombine.high %v2924, %v2924
    %v2935 = vcombine.low %v2465, %v2515
    %v2936 = vcombine.high %v2465, %v2515
    %v2937 = vcombine.high %v2537, %v2537
    %v2939 = vunpack.c.l.s4 1966171168
    %v2940 = vunpack.c.0.s8 %v2939
    %v2941 = vlaneseq
    %v2942 = vshrl.u32 %v2941, 7
    %v2943 = vsub.s32 %v2940, %v2942
    %v2944 = vrot.slane %v2935, %v2943
    %v2946 = vunpack.c.l.s4 1966171168
    %v2947 = vunpack.c.0.s8 %v2946
    %v2948 = vlaneseq
    %v2949 = vshrl.u32 %v2948, 7
    %v2950 = vsub.s32 %v2947, %v2949
    %v2951 = vrot.slane %v2936, %v2950
    %v2953 = vunpack.c.l.s4 1966171168
    %v2954 = vunpack.c.0.s8 %v2953
    %v2955 = vlaneseq
    %v2956 = vshrl.u32 %v2955, 7
    %v2957 = vsub.s32 %v2954, %v2956
    %v2958 = vrot.slane %v2537, %v2957
    %v2960 = vunpack.c.l.s4 1966171168
    %v2961 = vunpack.c.0.s8 %v2960
    %v2962 = vlaneseq
    %v2963 = vshrl.u32 %v2962, 7
    %v2964 = vsub.s32 %v2961, %v2963
    %v2965 = vrot.slane %v2937, %v2964
    %v2966 = vcombine.low %v2944, %v2958
    %v2967 = vcombine.high %v2944, %v2958
    %v2968 = vcombine.low %v2951, %v2965
    %v2969 = vcombine.high %v2951, %v2965
    %v2971 = vunpack.c.l.s4 1966171168
    %v2972 = vunpack.c.0.s8 %v2971
    %v2973 = vlaneseq
    %v2974 = vshrl.u32 %v2973, 7
    %v2975 = vsub.s32 %v2972, %v2974
    %v2976 = vrot.slane %v2966, %v2975
    %v2978 = vunpack.c.l.s4 1966171168
    %v2979 = vunpack.c.0.s8 %v2978
    %v2980 = vlaneseq
    %v2981 = vshrl.u32 %v2980, 7
    %v2982 = vsub.s32 %v2979, %v2981
    %v2983 = vrot.slane %v2968, %v2982
    %v2985 = vunpack.c.l.s4 1966171168
    %v2986 = vunpack.c.0.s8 %v2985
    %v2987 = vlaneseq
    %v2988 = vshrl.u32 %v2987, 7
    %v2989 = vsub.s32 %v2986, %v2988
    %v2990 = vrot.slane %v2967, %v2989
    %v2992 = vunpack.c.l.s4 1966171168
    %v2993 = vunpack.c.0.s8 %v2992
    %v2994 = vlaneseq
    %v2995 = vshrl.u32 %v2994, 7
    %v2996 = vsub.s32 %v2993, %v2995
    %v2997 = vrot.slane %v2969, %v2996
    %v2998 = vcombine.high %v2976, %v2976
    %v2999 = vcombine.high %v2983, %v2983
    %v3000 = vcombine.high %v2990, %v2990
    %v3001 = vcombine.low %v2466, %v2522
    %v3002 = vcombine.high %v2466, %v2522
    %v3003 = vcombine.high %v2538, %v2538
    %v3005 = vunpack.c.l.s4 1966171168
    %v3006 = vunpack.c.0.s8 %v3005
    %v3007 = vlaneseq
    %v3008 = vshrl.u32 %v3007, 7
    %v3009 = vsub.s32 %v3006, %v3008
    %v3010 = vrot.slane %v3001, %v3009
    %v3012 = vunpack.c.l.s4 1966171168
    %v3013 = vunpack.c.0.s8 %v3012
    %v3014 = vlaneseq
    %v3015 = vshrl.u32 %v3014, 7
    %v3016 = vsub.s32 %v3013, %v3015
    %v3017 = vrot.slane %v3002, %v3016
    %v3019 = vunpack.c.l.s4 1966171168
    %v3020 = vunpack.c.0.s8 %v3019
    %v3021 = vlaneseq
    %v3022 = vshrl.u32 %v3021, 7
    %v3023 = vsub.s32 %v3020, %v3022
    %v3024 = vrot.slane %v2538, %v3023
    %v3026 = vunpack.c.l.s4 1966171168
    %v3027 = vunpack.c.0.s8 %v3026
    %v3028 = vlaneseq
    %v3029 = vshrl.u32 %v3028, 7
    %v3030 = vsub.s32 %v3027, %v3029
    %v3031 = vrot.slane %v3003, %v3030
    %v3032 = vcombine.low %v3010, %v3024
    %v3033 = vcombine.high %v3010, %v3024
    %v3034 = vcombine.low %v3017, %v3031
    %v3035 = vcombine.high %v3017, %v3031
    %v3037 = vunpack.c.l.s4 1966171168
    %v3038 = vunpack.c.0.s8 %v3037
    %v3039 = vlaneseq
    %v3040 = vshrl.u32 %v3039, 7
    %v3041 = vsub.s32 %v3038, %v3040
    %v3042 = vrot.slane %v3032, %v3041
    %v3044 = vunpack.c.l.s4 1966171168
    %v3045 = vunpack.c.0.s8 %v3044
    %v3046 = vlaneseq
    %v3047 = vshrl.u32 %v3046, 7
    %v3048 = vsub.s32 %v3045, %v3047
    %v3049 = vrot.slane %v3034, %v3048
    %v3051 = vunpack.c.l.s4 1966171168
    %v3052 = vunpack.c.0.s8 %v3051
    %v3053 = vlaneseq
    %v3054 = vshrl.u32 %v3053, 7
    %v3055 = vsub.s32 %v3052, %v3054
    %v3056 = vrot.slane %v3033, %v3055
    %v3058 = vunpack.c.l.s4 1966171168
    %v3059 = vunpack.c.0.s8 %v3058
    %v3060 = vlaneseq
    %v3061 = vshrl.u32 %v3060, 7
    %v3062 = vsub.s32 %v3059, %v3061
    %v3063 = vrot.slane %v3035, %v3062
    %v3064 = vcombine.high %v3042, %v3042
    %v3065 = vcombine.high %v3049, %v3049
    %v3066 = vcombine.high %v3056, %v3056
    %v3067 = vld [vmem:[#allocation2] sm:$0xff]
    %v3068 = vld [vmem:[#allocation2 + $0x8] sm:$0xff]
    %v3069 = vld [vmem:[#allocation2 + $0x10] sm:$0xff]
    %v3070 = vld [vmem:[#allocation2 + $0x18] sm:$0xff]
    %v3071 = vld [vmem:[#allocation2 + $0x20] sm:$0xff]
    %v3072 = vld [vmem:[#allocation2 + $0x28] sm:$0xff]
    %v3073 = vld [vmem:[#allocation2 + $0x30] sm:$0xff]
    %v3074 = vld [vmem:[#allocation2 + $0x38] sm:$0xff]
    %v3075 = vld [vmem:[#allocation2 + $0x40] sm:$0xff]
    %v3076 = vld [vmem:[#allocation2 + $0x48] sm:$0xff]
    %v3077 = vld [vmem:[#allocation2 + $0x50] sm:$0xff]
    %v3078 = vld [vmem:[#allocation2 + $0x58] sm:$0xff]
    %v3079 = vld [vmem:[#allocation2 + $0x60] sm:$0xff]
    %v3080 = vld [vmem:[#allocation2 + $0x68] sm:$0xff]
    %v3081 = vld [vmem:[#allocation2 + $0x70] sm:$0xff]
    %v3082 = vld [vmem:[#allocation2 + $0x78] sm:$0xff]
    %v3083 = vld [vmem:[#allocation2 + $0x80] sm:$0xff]
    %v3084 = vld [vmem:[#allocation2 + $0x88] sm:$0xff]
    %v3085 = vld [vmem:[#allocation2 + $0x90] sm:$0xff]
    %v3086 = vld [vmem:[#allocation2 + $0x98] sm:$0xff]
    %v3087 = vld [vmem:[#allocation2 + $0xa0] sm:$0xff]
    %v3088 = vld [vmem:[#allocation2 + $0xa8] sm:$0xff]
    %v3089 = vld [vmem:[#allocation2 + $0xb0] sm:$0xff]
    %v3090 = vld [vmem:[#allocation2 + $0xb8] sm:$0xff]
    %v3091 = vld [vmem:[#allocation2 + $0xc0] sm:$0xff]
    %v3092 = vld [vmem:[#allocation2 + $0xc8] sm:$0xff]
    %v3093 = vld [vmem:[#allocation2 + $0xd0] sm:$0xff]
    %v3094 = vld [vmem:[#allocation2 + $0xd8] sm:$0xff]
    %v3095 = vld [vmem:[#allocation2 + $0xe0] sm:$0xff]
    %v3096 = vld [vmem:[#allocation2 + $0xe8] sm:$0xff]
    %v3097 = vld [vmem:[#allocation2 + $0xf0] sm:$0xff]
    %v3098 = vld [vmem:[#allocation2 + $0xf8] sm:$0xff]
    %v3099 = vld [vmem:[#allocation2 + $0x100] sm:$0xff]
    %v3100 = vld [vmem:[#allocation2 + $0x108] sm:$0xff]
    %v3101 = vld [vmem:[#allocation2 + $0x110] sm:$0xff]
    %v3102 = vld [vmem:[#allocation2 + $0x118] sm:$0xff]
    %v3103 = vld [vmem:[#allocation2 + $0x120] sm:$0xff]
    %v3104 = vld [vmem:[#allocation2 + $0x128] sm:$0xff]
    %v3105 = vld [vmem:[#allocation2 + $0x130] sm:$0xff]
    %v3106 = vld [vmem:[#allocation2 + $0x138] sm:$0xff]
    %v3107 = vld [vmem:[#allocation2 + $0x140] sm:$0xff]
    %v3108 = vld [vmem:[#allocation2 + $0x148] sm:$0xff]
    %v3109 = vld [vmem:[#allocation2 + $0x150] sm:$0xff]
    %v3110 = vld [vmem:[#allocation2 + $0x158] sm:$0xff]
    %v3111 = vld [vmem:[#allocation2 + $0x160] sm:$0xff]
    %v3112 = vld [vmem:[#allocation2 + $0x168] sm:$0xff]
    %v3113 = vld [vmem:[#allocation2 + $0x170] sm:$0xff]
    %v3114 = vld [vmem:[#allocation2 + $0x178] sm:$0xff]
    %v3115 = vld [vmem:[#allocation2 + $0x180] sm:$0xff]
    %v3116 = vld [vmem:[#allocation2 + $0x188] sm:$0xff]
    %v3117 = vld [vmem:[#allocation2 + $0x190] sm:$0xff]
    %v3118 = vld [vmem:[#allocation2 + $0x198] sm:$0xff]
    %v3119 = vld [vmem:[#allocation2 + $0x1a0] sm:$0xff]
    %v3120 = vld [vmem:[#allocation2 + $0x1a8] sm:$0xff]
    %v3121 = vld [vmem:[#allocation2 + $0x1b0] sm:$0xff]
    %v3122 = vld [vmem:[#allocation2 + $0x1b8] sm:$0xff]
    %v3123 = vld [vmem:[#allocation2 + $0x1c0] sm:$0xff]
    %v3124 = vld [vmem:[#allocation2 + $0x1c8] sm:$0xff]
    %v3125 = vld [vmem:[#allocation2 + $0x1d0] sm:$0xff]
    %v3126 = vld [vmem:[#allocation2 + $0x1d8] sm:$0xff]
    %v3127 = vld [vmem:[#allocation2 + $0x1e0] sm:$0xff]
    %v3128 = vld [vmem:[#allocation2 + $0x1e8] sm:$0xff]
    %v3129 = vld [vmem:[#allocation2 + $0x1f0] sm:$0xff]
    %v3130 = vld [vmem:[#allocation2 + $0x1f8] sm:$0xff]
    %v3131 = vld [vmem:[#allocation2 + $0x200] sm:$0xff]
    %v3132 = vld [vmem:[#allocation2 + $0x208] sm:$0xff]
    %v3133 = vld [vmem:[#allocation2 + $0x210] sm:$0xff]
    %v3134 = vld [vmem:[#allocation2 + $0x218] sm:$0xff]
    %v3135 = vld [vmem:[#allocation2 + $0x220] sm:$0xff]
    %v3136 = vld [vmem:[#allocation2 + $0x228] sm:$0xff]
    %v3137 = vld [vmem:[#allocation2 + $0x230] sm:$0xff]
    %v3138 = vld [vmem:[#allocation2 + $0x238] sm:$0xff]
    %v3139 = vld [vmem:[#allocation2 + $0x240] sm:$0xff]
    %v3140 = vld [vmem:[#allocation2 + $0x248] sm:$0xff]
    %v3141 = vld [vmem:[#allocation2 + $0x250] sm:$0xff]
    %v3142 = vld [vmem:[#allocation2 + $0x258] sm:$0xff]
    %v3143 = vld [vmem:[#allocation2 + $0x260] sm:$0xff]
    %v3144 = vld [vmem:[#allocation2 + $0x268] sm:$0xff]
    %v3145 = vld [vmem:[#allocation2 + $0x270] sm:$0xff]
    %v3146 = vld [vmem:[#allocation2 + $0x278] sm:$0xff]
    %v3147 = vld [vmem:[#allocation2 + $0x280] sm:$0xff]
    %v3148 = vld [vmem:[#allocation2 + $0x288] sm:$0xff]
    %v3149 = vld [vmem:[#allocation2 + $0x290] sm:$0xff]
    %v3150 = vld [vmem:[#allocation2 + $0x298] sm:$0xff]
    %v3151 = vld [vmem:[#allocation2 + $0x2a0] sm:$0xff]
    %v3152 = vld [vmem:[#allocation2 + $0x2a8] sm:$0xff]
    %v3153 = vld [vmem:[#allocation2 + $0x2b0] sm:$0xff]
    %v3154 = vld [vmem:[#allocation2 + $0x2b8] sm:$0xff]
    %v3155 = vld [vmem:[#allocation2 + $0x2c0] sm:$0xff]
    %v3156 = vld [vmem:[#allocation2 + $0x2c8] sm:$0xff]
    %v3157 = vld [vmem:[#allocation2 + $0x2d0] sm:$0xff]
    %v3158 = vld [vmem:[#allocation2 + $0x2d8] sm:$0xff]
    %v3159 = vld [vmem:[#allocation2 + $0x2e0] sm:$0xff]
    %v3160 = vld [vmem:[#allocation2 + $0x2e8] sm:$0xff]
    %v3161 = vld [vmem:[#allocation2 + $0x2f0] sm:$0xff]
    %v3162 = vld [vmem:[#allocation2 + $0x2f8] sm:$0xff]
    %v3163 = vld [vmem:[#allocation2 + $0x300] sm:$0xff]
    %v3164 = vld [vmem:[#allocation2 + $0x308] sm:$0xff]
    %v3165 = vld [vmem:[#allocation2 + $0x310] sm:$0xff]
    %v3166 = vld [vmem:[#allocation2 + $0x318] sm:$0xff]
    %v3167 = vld [vmem:[#allocation2 + $0x320] sm:$0xff]
    %v3168 = vld [vmem:[#allocation2 + $0x328] sm:$0xff]
    %v3169 = vld [vmem:[#allocation2 + $0x330] sm:$0xff]
    %v3170 = vld [vmem:[#allocation2 + $0x338] sm:$0xff]
    %v3171 = vld [vmem:[#allocation2 + $0x340] sm:$0xff]
    %v3172 = vld [vmem:[#allocation2 + $0x348] sm:$0xff]
    %v3173 = vld [vmem:[#allocation2 + $0x350] sm:$0xff]
    %v3174 = vld [vmem:[#allocation2 + $0x358] sm:$0xff]
    %v3175 = vld [vmem:[#allocation2 + $0x360] sm:$0xff]
    %v3176 = vld [vmem:[#allocation2 + $0x368] sm:$0xff]
    %v3177 = vld [vmem:[#allocation2 + $0x370] sm:$0xff]
    %v3178 = vld [vmem:[#allocation2 + $0x378] sm:$0xff]
    %v3179 = vld [vmem:[#allocation2 + $0x380] sm:$0xff]
    %v3180 = vld [vmem:[#allocation2 + $0x388] sm:$0xff]
    %v3181 = vld [vmem:[#allocation2 + $0x390] sm:$0xff]
    %v3182 = vld [vmem:[#allocation2 + $0x398] sm:$0xff]
    %v3183 = vld [vmem:[#allocation2 + $0x3a0] sm:$0xff]
    %v3184 = vld [vmem:[#allocation2 + $0x3a8] sm:$0xff]
    %v3185 = vld [vmem:[#allocation2 + $0x3b0] sm:$0xff]
    %v3186 = vld [vmem:[#allocation2 + $0x3b8] sm:$0xff]
    %v3187 = vld [vmem:[#allocation2 + $0x3c0] sm:$0xff]
    %v3188 = vld [vmem:[#allocation2 + $0x3c8] sm:$0xff]
    %v3189 = vld [vmem:[#allocation2 + $0x3d0] sm:$0xff]
    %v3190 = vld [vmem:[#allocation2 + $0x3d8] sm:$0xff]
    %v3191 = vld [vmem:[#allocation2 + $0x3e0] sm:$0xff]
    %v3192 = vld [vmem:[#allocation2 + $0x3e8] sm:$0xff]
    %v3193 = vld [vmem:[#allocation2 + $0x3f0] sm:$0xff]
    %v3194 = vld [vmem:[#allocation2 + $0x3f8] sm:$0xff]
    %v3195 = vld [vmem:[#allocation2 + $0x400] sm:$0xff]
    %v3196 = vld [vmem:[#allocation2 + $0x408] sm:$0xff]
    %v3197 = vld [vmem:[#allocation2 + $0x410] sm:$0xff]
    %v3198 = vld [vmem:[#allocation2 + $0x418] sm:$0xff]
    %v3199 = vld [vmem:[#allocation2 + $0x420] sm:$0xff]
    %v3200 = vld [vmem:[#allocation2 + $0x428] sm:$0xff]
    %v3201 = vld [vmem:[#allocation2 + $0x430] sm:$0xff]
    %v3202 = vld [vmem:[#allocation2 + $0x438] sm:$0xff]
    %v3203 = vld [vmem:[#allocation2 + $0x440] sm:$0xff]
    %v3204 = vld [vmem:[#allocation2 + $0x448] sm:$0xff]
    %v3205 = vld [vmem:[#allocation2 + $0x450] sm:$0xff]
    %v3206 = vld [vmem:[#allocation2 + $0x458] sm:$0xff]
    %v3207 = vld [vmem:[#allocation2 + $0x460] sm:$0xff]
    %v3208 = vld [vmem:[#allocation2 + $0x468] sm:$0xff]
    %v3209 = vld [vmem:[#allocation2 + $0x470] sm:$0xff]
    %v3210 = vld [vmem:[#allocation2 + $0x478] sm:$0xff]
    %v3211 = vld [vmem:[#allocation2 + $0x480] sm:$0xff]
    %v3212 = vld [vmem:[#allocation2 + $0x488] sm:$0xff]
    %v3213 = vld [vmem:[#allocation2 + $0x490] sm:$0xff]
    %v3214 = vld [vmem:[#allocation2 + $0x498] sm:$0xff]
    %v3215 = vld [vmem:[#allocation2 + $0x4a0] sm:$0xff]
    %v3216 = vld [vmem:[#allocation2 + $0x4a8] sm:$0xff]
    %v3217 = vld [vmem:[#allocation2 + $0x4b0] sm:$0xff]
    %v3218 = vld [vmem:[#allocation2 + $0x4b8] sm:$0xff]
    %v3219 = vld [vmem:[#allocation2 + $0x4c0] sm:$0xff]
    %v3220 = vld [vmem:[#allocation2 + $0x4c8] sm:$0xff]
    %v3221 = vld [vmem:[#allocation2 + $0x4d0] sm:$0xff]
    %v3222 = vld [vmem:[#allocation2 + $0x4d8] sm:$0xff]
    %v3223 = vld [vmem:[#allocation2 + $0x4e0] sm:$0xff]
    %v3224 = vld [vmem:[#allocation2 + $0x4e8] sm:$0xff]
    %v3225 = vld [vmem:[#allocation2 + $0x4f0] sm:$0xff]
    %v3226 = vld [vmem:[#allocation2 + $0x4f8] sm:$0xff]
    %v3227 = vld [vmem:[#allocation2 + $0x500] sm:$0xff]
    %v3228 = vld [vmem:[#allocation2 + $0x508] sm:$0xff]
    %v3229 = vld [vmem:[#allocation2 + $0x510] sm:$0xff]
    %v3230 = vld [vmem:[#allocation2 + $0x518] sm:$0xff]
    %v3231 = vld [vmem:[#allocation2 + $0x520] sm:$0xff]
    %v3232 = vld [vmem:[#allocation2 + $0x528] sm:$0xff]
    %v3233 = vld [vmem:[#allocation2 + $0x530] sm:$0xff]
    %v3234 = vld [vmem:[#allocation2 + $0x538] sm:$0xff]
    %v3235 = vld [vmem:[#allocation2 + $0x540] sm:$0xff]
    %v3236 = vld [vmem:[#allocation2 + $0x548] sm:$0xff]
    %v3237 = vld [vmem:[#allocation2 + $0x550] sm:$0xff]
    %v3238 = vld [vmem:[#allocation2 + $0x558] sm:$0xff]
    %v3239 = vld [vmem:[#allocation2 + $0x560] sm:$0xff]
    %v3240 = vld [vmem:[#allocation2 + $0x568] sm:$0xff]
    %v3241 = vld [vmem:[#allocation2 + $0x570] sm:$0xff]
    %v3242 = vld [vmem:[#allocation2 + $0x578] sm:$0xff]
    %v3243 = vld [vmem:[#allocation2 + $0x580] sm:$0xff]
    %v3244 = vld [vmem:[#allocation2 + $0x588] sm:$0xff]
    %v3245 = vld [vmem:[#allocation2 + $0x590] sm:$0xff]
    %v3246 = vld [vmem:[#allocation2 + $0x598] sm:$0xff]
    %v3247 = vld [vmem:[#allocation2 + $0x5a0] sm:$0xff]
    %v3248 = vld [vmem:[#allocation2 + $0x5a8] sm:$0xff]
    %v3249 = vld [vmem:[#allocation2 + $0x5b0] sm:$0xff]
    %v3250 = vld [vmem:[#allocation2 + $0x5b8] sm:$0xff]
    %v3251 = vld [vmem:[#allocation2 + $0x5c0] sm:$0xff]
    %v3252 = vld [vmem:[#allocation2 + $0x5c8] sm:$0xff]
    %v3253 = vld [vmem:[#allocation2 + $0x5d0] sm:$0xff]
    %v3254 = vld [vmem:[#allocation2 + $0x5d8] sm:$0xff]
    %v3255 = vld [vmem:[#allocation2 + $0x5e0] sm:$0xff]
    %v3256 = vld [vmem:[#allocation2 + $0x5e8] sm:$0xff]
    %v3257 = vld [vmem:[#allocation2 + $0x5f0] sm:$0xff]
    %v3258 = vld [vmem:[#allocation2 + $0x5f8] sm:$0xff]
    %v3259 = vld [vmem:[%s4] sm:$0xff]
    %v3261 = vlaneseq
    %v3262 = vshrl.u32 %v3261, 7
    %v3263 = vsub.s32 0, %v3262
    %v3264 = vrot.slane %v3259, %v3263
    %v3265 = vlaneseq
    %v3266 = vshrl.u32 %v3265, 7
    %v3267 = vsub.s32 1, %v3266
    %v3268 = vrot.slane %v3259, %v3267
    %v3269 = vlaneseq
    %v3270 = vshrl.u32 %v3269, 7
    %v3271 = vsub.s32 2, %v3270
    %v3272 = vrot.slane %v3259, %v3271
    %v3273 = vlaneseq
    %v3274 = vshrl.u32 %v3273, 7
    %v3275 = vsub.s32 3, %v3274
    %v3276 = vrot.slane %v3259, %v3275
    %v3277 = vlaneseq
    %v3278 = vshrl.u32 %v3277, 7
    %v3279 = vsub.s32 4, %v3278
    %v3280 = vrot.slane %v3259, %v3279
    %v3281 = vlaneseq
    %v3282 = vshrl.u32 %v3281, 7
    %v3283 = vsub.s32 5, %v3282
    %v3284 = vrot.slane %v3259, %v3283
    %v3285 = vlaneseq
    %v3286 = vshrl.u32 %v3285, 7
    %v3287 = vsub.s32 6, %v3286
    %v3288 = vrot.slane %v3259, %v3287
    %v3289 = vlaneseq
    %v3290 = vshrl.u32 %v3289, 7
    %v3291 = vsub.s32 7, %v3290
    %v3292 = vrot.slane %v3259, %v3291
    %v3301 = vcombine.low %v2580, %v2594
    %v3302 = vcombine.low %v2602, %v2604
    %v3303 = vcombine.low %v2587, %v2601
    %v3304 = vcombine.low %v2603, %v2646
    %v3306 = vunpack.c.l.s4 1966171168
    %v3307 = vunpack.c.0.s8 %v3306
    %v3308 = vlaneseq
    %v3309 = vshrl.u32 %v3308, 7
    %v3310 = vsub.s32 %v3307, %v3309
    %v3311 = vrot.slane %v3301, %v3310
    %v3313 = vunpack.c.l.s4 1966171168
    %v3314 = vunpack.c.0.s8 %v3313
    %v3315 = vlaneseq
    %v3316 = vshrl.u32 %v3315, 7
    %v3317 = vsub.s32 %v3314, %v3316
    %v3318 = vrot.slane %v3302, %v3317
    %v3320 = vunpack.c.l.s4 1966171168
    %v3321 = vunpack.c.0.s8 %v3320
    %v3322 = vlaneseq
    %v3323 = vshrl.u32 %v3322, 7
    %v3324 = vsub.s32 %v3321, %v3323
    %v3325 = vrot.slane %v3303, %v3324
    %v3327 = vunpack.c.l.s4 1966171168
    %v3328 = vunpack.c.0.s8 %v3327
    %v3329 = vlaneseq
    %v3330 = vshrl.u32 %v3329, 7
    %v3331 = vsub.s32 %v3328, %v3330
    %v3332 = vrot.slane %v3304, %v3331
    %v3333 = vcombine.low %v3311, %v3318
    %v3334 = vcombine.high %v3311, %v3318
    %v3335 = vcombine.low %v3325, %v3332
    %v3336 = vcombine.high %v3325, %v3332
    %v3338 = vunpack.c.l.s4 1966171168
    %v3339 = vunpack.c.0.s8 %v3338
    %v3340 = vlaneseq
    %v3341 = vshrl.u32 %v3340, 7
    %v3342 = vsub.s32 %v3339, %v3341
    %v3343 = vrot.slane %v3333, %v3342
    %v3345 = vunpack.c.l.s4 1966171168
    %v3346 = vunpack.c.0.s8 %v3345
    %v3347 = vlaneseq
    %v3348 = vshrl.u32 %v3347, 7
    %v3349 = vsub.s32 %v3346, %v3348
    %v3350 = vrot.slane %v3334, %v3349
    %v3352 = vunpack.c.l.s4 1966171168
    %v3353 = vunpack.c.0.s8 %v3352
    %v3354 = vlaneseq
    %v3355 = vshrl.u32 %v3354, 7
    %v3356 = vsub.s32 %v3353, %v3355
    %v3357 = vrot.slane %v3335, %v3356
    %v3359 = vunpack.c.l.s4 1966171168
    %v3360 = vunpack.c.0.s8 %v3359
    %v3361 = vlaneseq
    %v3362 = vshrl.u32 %v3361, 7
    %v3363 = vsub.s32 %v3360, %v3362
    %v3364 = vrot.slane %v3336, %v3363
    %v3365 = vcombine.low %v3343, %v3357
    %v3366 = vcombine.high %v3343, %v3357
    %v3367 = vcombine.low %v3350, %v3364
    %v3368 = vcombine.low %v2660, %v2668
    %v3369 = vcombine.low %v2670, %v2653
    %v3370 = vcombine.low %v2667, %v2669
    %v3371 = vcombine.low %v2712, %v2726
    %v3373 = vunpack.c.l.s4 1966171168
    %v3374 = vunpack.c.0.s8 %v3373
    %v3375 = vlaneseq
    %v3376 = vshrl.u32 %v3375, 7
    %v3377 = vsub.s32 %v3374, %v3376
    %v3378 = vrot.slane %v3368, %v3377
    %v3380 = vunpack.c.l.s4 1966171168
    %v3381 = vunpack.c.0.s8 %v3380
    %v3382 = vlaneseq
    %v3383 = vshrl.u32 %v3382, 7
    %v3384 = vsub.s32 %v3381, %v3383
    %v3385 = vrot.slane %v3369, %v3384
    %v3387 = vunpack.c.l.s4 1966171168
    %v3388 = vunpack.c.0.s8 %v3387
    %v3389 = vlaneseq
    %v3390 = vshrl.u32 %v3389, 7
    %v3391 = vsub.s32 %v3388, %v3390
    %v3392 = vrot.slane %v3370, %v3391
    %v3394 = vunpack.c.l.s4 1966171168
    %v3395 = vunpack.c.0.s8 %v3394
    %v3396 = vlaneseq
    %v3397 = vshrl.u32 %v3396, 7
    %v3398 = vsub.s32 %v3395, %v3397
    %v3399 = vrot.slane %v3371, %v3398
    %v3400 = vcombine.low %v3378, %v3385
    %v3401 = vcombine.high %v3378, %v3385
    %v3402 = vcombine.low %v3392, %v3399
    %v3403 = vcombine.high %v3392, %v3399
    %v3405 = vunpack.c.l.s4 1966171168
    %v3406 = vunpack.c.0.s8 %v3405
    %v3407 = vlaneseq
    %v3408 = vshrl.u32 %v3407, 7
    %v3409 = vsub.s32 %v3406, %v3408
    %v3410 = vrot.slane %v3400, %v3409
    %v3412 = vunpack.c.l.s4 1966171168
    %v3413 = vunpack.c.0.s8 %v3412
    %v3414 = vlaneseq
    %v3415 = vshrl.u32 %v3414, 7
    %v3416 = vsub.s32 %v3413, %v3415
    %v3417 = vrot.slane %v3401, %v3416
    %v3419 = vunpack.c.l.s4 1966171168
    %v3420 = vunpack.c.0.s8 %v3419
    %v3421 = vlaneseq
    %v3422 = vshrl.u32 %v3421, 7
    %v3423 = vsub.s32 %v3420, %v3422
    %v3424 = vrot.slane %v3402, %v3423
    %v3426 = vunpack.c.l.s4 1966171168
    %v3427 = vunpack.c.0.s8 %v3426
    %v3428 = vlaneseq
    %v3429 = vshrl.u32 %v3428, 7
    %v3430 = vsub.s32 %v3427, %v3429
    %v3431 = vrot.slane %v3403, %v3430
    %v3432 = vcombine.low %v3410, %v3424
    %v3433 = vcombine.high %v3410, %v3424
    %v3434 = vcombine.low %v3417, %v3431
    %v3435 = vcombine.low %v2734, %v2736
    %v3436 = vcombine.low %v2719, %v2733
    %v3437 = vcombine.low %v2735, %v2778
    %v3438 = vcombine.low %v2792, %v2800
    %v3440 = vunpack.c.l.s4 1966171168
    %v3441 = vunpack.c.0.s8 %v3440
    %v3442 = vlaneseq
    %v3443 = vshrl.u32 %v3442, 7
    %v3444 = vsub.s32 %v3441, %v3443
    %v3445 = vrot.slane %v3435, %v3444
    %v3447 = vunpack.c.l.s4 1966171168
    %v3448 = vunpack.c.0.s8 %v3447
    %v3449 = vlaneseq
    %v3450 = vshrl.u32 %v3449, 7
    %v3451 = vsub.s32 %v3448, %v3450
    %v3452 = vrot.slane %v3436, %v3451
    %v3454 = vunpack.c.l.s4 1966171168
    %v3455 = vunpack.c.0.s8 %v3454
    %v3456 = vlaneseq
    %v3457 = vshrl.u32 %v3456, 7
    %v3458 = vsub.s32 %v3455, %v3457
    %v3459 = vrot.slane %v3437, %v3458
    %v3461 = vunpack.c.l.s4 1966171168
    %v3462 = vunpack.c.0.s8 %v3461
    %v3463 = vlaneseq
    %v3464 = vshrl.u32 %v3463, 7
    %v3465 = vsub.s32 %v3462, %v3464
    %v3466 = vrot.slane %v3438, %v3465
    %v3467 = vcombine.low %v3445, %v3452
    %v3468 = vcombine.high %v3445, %v3452
    %v3469 = vcombine.low %v3459, %v3466
    %v3470 = vcombine.high %v3459, %v3466
    %v3472 = vunpack.c.l.s4 1966171168
    %v3473 = vunpack.c.0.s8 %v3472
    %v3474 = vlaneseq
    %v3475 = vshrl.u32 %v3474, 7
    %v3476 = vsub.s32 %v3473, %v3475
    %v3477 = vrot.slane %v3467, %v3476
    %v3479 = vunpack.c.l.s4 1966171168
    %v3480 = vunpack.c.0.s8 %v3479
    %v3481 = vlaneseq
    %v3482 = vshrl.u32 %v3481, 7
    %v3483 = vsub.s32 %v3480, %v3482
    %v3484 = vrot.slane %v3468, %v3483
    %v3486 = vunpack.c.l.s4 1966171168
    %v3487 = vunpack.c.0.s8 %v3486
    %v3488 = vlaneseq
    %v3489 = vshrl.u32 %v3488, 7
    %v3490 = vsub.s32 %v3487, %v3489
    %v3491 = vrot.slane %v3469, %v3490
    %v3493 = vunpack.c.l.s4 1966171168
    %v3494 = vunpack.c.0.s8 %v3493
    %v3495 = vlaneseq
    %v3496 = vshrl.u32 %v3495, 7
    %v3497 = vsub.s32 %v3494, %v3496
    %v3498 = vrot.slane %v3470, %v3497
    %v3499 = vcombine.low %v3477, %v3491
    %v3500 = vcombine.high %v3477, %v3491
    %v3501 = vcombine.low %v3484, %v3498
    %v3502 = vcombine.low %v2802, %v2785
    %v3503 = vcombine.low %v2799, %v2801
    %v3504 = vcombine.low %v2844, %v2858
    %v3505 = vcombine.low %v2866, %v2868
    %v3507 = vunpack.c.l.s4 1966171168
    %v3508 = vunpack.c.0.s8 %v3507
    %v3509 = vlaneseq
    %v3510 = vshrl.u32 %v3509, 7
    %v3511 = vsub.s32 %v3508, %v3510
    %v3512 = vrot.slane %v3502, %v3511
    %v3514 = vunpack.c.l.s4 1966171168
    %v3515 = vunpack.c.0.s8 %v3514
    %v3516 = vlaneseq
    %v3517 = vshrl.u32 %v3516, 7
    %v3518 = vsub.s32 %v3515, %v3517
    %v3519 = vrot.slane %v3503, %v3518
    %v3521 = vunpack.c.l.s4 1966171168
    %v3522 = vunpack.c.0.s8 %v3521
    %v3523 = vlaneseq
    %v3524 = vshrl.u32 %v3523, 7
    %v3525 = vsub.s32 %v3522, %v3524
    %v3526 = vrot.slane %v3504, %v3525
    %v3528 = vunpack.c.l.s4 1966171168
    %v3529 = vunpack.c.0.s8 %v3528
    %v3530 = vlaneseq
    %v3531 = vshrl.u32 %v3530, 7
    %v3532 = vsub.s32 %v3529, %v3531
    %v3533 = vrot.slane %v3505, %v3532
    %v3534 = vcombine.low %v3512, %v3519
    %v3535 = vcombine.high %v3512, %v3519
    %v3536 = vcombine.low %v3526, %v3533
    %v3537 = vcombine.high %v3526, %v3533
    %v3539 = vunpack.c.l.s4 1966171168
    %v3540 = vunpack.c.0.s8 %v3539
    %v3541 = vlaneseq
    %v3542 = vshrl.u32 %v3541, 7
    %v3543 = vsub.s32 %v3540, %v3542
    %v3544 = vrot.slane %v3534, %v3543
    %v3546 = vunpack.c.l.s4 1966171168
    %v3547 = vunpack.c.0.s8 %v3546
    %v3548 = vlaneseq
    %v3549 = vshrl.u32 %v3548, 7
    %v3550 = vsub.s32 %v3547, %v3549
    %v3551 = vrot.slane %v3535, %v3550
    %v3553 = vunpack.c.l.s4 1966171168
    %v3554 = vunpack.c.0.s8 %v3553
    %v3555 = vlaneseq
    %v3556 = vshrl.u32 %v3555, 7
    %v3557 = vsub.s32 %v3554, %v3556
    %v3558 = vrot.slane %v3536, %v3557
    %v3560 = vunpack.c.l.s4 1966171168
    %v3561 = vunpack.c.0.s8 %v3560
    %v3562 = vlaneseq
    %v3563 = vshrl.u32 %v3562, 7
    %v3564 = vsub.s32 %v3561, %v3563
    %v3565 = vrot.slane %v3537, %v3564
    %v3566 = vcombine.low %v3544, %v3558
    %v3567 = vcombine.high %v3544, %v3558
    %v3568 = vcombine.low %v3551, %v3565
    %v3569 = vcombine.low %v2851, %v2865
    %v3570 = vcombine.low %v2867, %v2910
    %v3571 = vcombine.low %v2924, %v2932
    %v3572 = vcombine.low %v2934, %v2917
    %v3574 = vunpack.c.l.s4 1966171168
    %v3575 = vunpack.c.0.s8 %v3574
    %v3576 = vlaneseq
    %v3577 = vshrl.u32 %v3576, 7
    %v3578 = vsub.s32 %v3575, %v3577
    %v3579 = vrot.slane %v3569, %v3578
    %v3581 = vunpack.c.l.s4 1966171168
    %v3582 = vunpack.c.0.s8 %v3581
    %v3583 = vlaneseq
    %v3584 = vshrl.u32 %v3583, 7
    %v3585 = vsub.s32 %v3582, %v3584
    %v3586 = vrot.slane %v3570, %v3585
    %v3588 = vunpack.c.l.s4 1966171168
    %v3589 = vunpack.c.0.s8 %v3588
    %v3590 = vlaneseq
    %v3591 = vshrl.u32 %v3590, 7
    %v3592 = vsub.s32 %v3589, %v3591
    %v3593 = vrot.slane %v3571, %v3592
    %v3595 = vunpack.c.l.s4 1966171168
    %v3596 = vunpack.c.0.s8 %v3595
    %v3597 = vlaneseq
    %v3598 = vshrl.u32 %v3597, 7
    %v3599 = vsub.s32 %v3596, %v3598
    %v3600 = vrot.slane %v3572, %v3599
    %v3601 = vcombine.low %v3579, %v3586
    %v3602 = vcombine.high %v3579, %v3586
    %v3603 = vcombine.low %v3593, %v3600
    %v3604 = vcombine.high %v3593, %v3600
    %v3606 = vunpack.c.l.s4 1966171168
    %v3607 = vunpack.c.0.s8 %v3606
    %v3608 = vlaneseq
    %v3609 = vshrl.u32 %v3608, 7
    %v3610 = vsub.s32 %v3607, %v3609
    %v3611 = vrot.slane %v3601, %v3610
    %v3613 = vunpack.c.l.s4 1966171168
    %v3614 = vunpack.c.0.s8 %v3613
    %v3615 = vlaneseq
    %v3616 = vshrl.u32 %v3615, 7
    %v3617 = vsub.s32 %v3614, %v3616
    %v3618 = vrot.slane %v3602, %v3617
    %v3620 = vunpack.c.l.s4 1966171168
    %v3621 = vunpack.c.0.s8 %v3620
    %v3622 = vlaneseq
    %v3623 = vshrl.u32 %v3622, 7
    %v3624 = vsub.s32 %v3621, %v3623
    %v3625 = vrot.slane %v3603, %v3624
    %v3627 = vunpack.c.l.s4 1966171168
    %v3628 = vunpack.c.0.s8 %v3627
    %v3629 = vlaneseq
    %v3630 = vshrl.u32 %v3629, 7
    %v3631 = vsub.s32 %v3628, %v3630
    %v3632 = vrot.slane %v3604, %v3631
    %v3633 = vcombine.low %v3611, %v3625
    %v3634 = vcombine.high %v3611, %v3625
    %v3635 = vcombine.low %v3618, %v3632
    %v3636 = vcombine.low %v2931, %v2933
    %v3637 = vcombine.low %v2976, %v2990
    %v3638 = vcombine.low %v2998, %v3000
    %v3639 = vcombine.low %v2983, %v2997
    %v3641 = vunpack.c.l.s4 1966171168
    %v3642 = vunpack.c.0.s8 %v3641
    %v3643 = vlaneseq
    %v3644 = vshrl.u32 %v3643, 7
    %v3645 = vsub.s32 %v3642, %v3644
    %v3646 = vrot.slane %v3636, %v3645
    %v3648 = vunpack.c.l.s4 1966171168
    %v3649 = vunpack.c.0.s8 %v3648
    %v3650 = vlaneseq
    %v3651 = vshrl.u32 %v3650, 7
    %v3652 = vsub.s32 %v3649, %v3651
    %v3653 = vrot.slane %v3637, %v3652
    %v3655 = vunpack.c.l.s4 1966171168
    %v3656 = vunpack.c.0.s8 %v3655
    %v3657 = vlaneseq
    %v3658 = vshrl.u32 %v3657, 7
    %v3659 = vsub.s32 %v3656, %v3658
    %v3660 = vrot.slane %v3638, %v3659
    %v3662 = vunpack.c.l.s4 1966171168
    %v3663 = vunpack.c.0.s8 %v3662
    %v3664 = vlaneseq
    %v3665 = vshrl.u32 %v3664, 7
    %v3666 = vsub.s32 %v3663, %v3665
    %v3667 = vrot.slane %v3639, %v3666
    %v3668 = vcombine.low %v3646, %v3653
    %v3669 = vcombine.high %v3646, %v3653
    %v3670 = vcombine.low %v3660, %v3667
    %v3671 = vcombine.high %v3660, %v3667
    %v3673 = vunpack.c.l.s4 1966171168
    %v3674 = vunpack.c.0.s8 %v3673
    %v3675 = vlaneseq
    %v3676 = vshrl.u32 %v3675, 7
    %v3677 = vsub.s32 %v3674, %v3676
    %v3678 = vrot.slane %v3668, %v3677
    %v3680 = vunpack.c.l.s4 1966171168
    %v3681 = vunpack.c.0.s8 %v3680
    %v3682 = vlaneseq
    %v3683 = vshrl.u32 %v3682, 7
    %v3684 = vsub.s32 %v3681, %v3683
    %v3685 = vrot.slane %v3669, %v3684
    %v3687 = vunpack.c.l.s4 1966171168
    %v3688 = vunpack.c.0.s8 %v3687
    %v3689 = vlaneseq
    %v3690 = vshrl.u32 %v3689, 7
    %v3691 = vsub.s32 %v3688, %v3690
    %v3692 = vrot.slane %v3670, %v3691
    %v3694 = vunpack.c.l.s4 1966171168
    %v3695 = vunpack.c.0.s8 %v3694
    %v3696 = vlaneseq
    %v3697 = vshrl.u32 %v3696, 7
    %v3698 = vsub.s32 %v3695, %v3697
    %v3699 = vrot.slane %v3671, %v3698
    %v3700 = vcombine.low %v3678, %v3692
    %v3701 = vcombine.high %v3678, %v3692
    %v3702 = vcombine.low %v3685, %v3699
    %v3703 = vcombine.low %v2999, %v3042
    %v3704 = vcombine.low %v3056, %v3064
    %v3705 = vcombine.low %v3066, %v3049
    %v3706 = vcombine.low %v3063, %v3065
    %v3708 = vunpack.c.l.s4 1966171168
    %v3709 = vunpack.c.0.s8 %v3708
    %v3710 = vlaneseq
    %v3711 = vshrl.u32 %v3710, 7
    %v3712 = vsub.s32 %v3709, %v3711
    %v3713 = vrot.slane %v3703, %v3712
    %v3715 = vunpack.c.l.s4 1966171168
    %v3716 = vunpack.c.0.s8 %v3715
    %v3717 = vlaneseq
    %v3718 = vshrl.u32 %v3717, 7
    %v3719 = vsub.s32 %v3716, %v3718
    %v3720 = vrot.slane %v3704, %v3719
    %v3722 = vunpack.c.l.s4 1966171168
    %v3723 = vunpack.c.0.s8 %v3722
    %v3724 = vlaneseq
    %v3725 = vshrl.u32 %v3724, 7
    %v3726 = vsub.s32 %v3723, %v3725
    %v3727 = vrot.slane %v3705, %v3726
    %v3729 = vunpack.c.l.s4 1966171168
    %v3730 = vunpack.c.0.s8 %v3729
    %v3731 = vlaneseq
    %v3732 = vshrl.u32 %v3731, 7
    %v3733 = vsub.s32 %v3730, %v3732
    %v3734 = vrot.slane %v3706, %v3733
    %v3735 = vcombine.low %v3713, %v3720
    %v3736 = vcombine.high %v3713, %v3720
    %v3737 = vcombine.low %v3727, %v3734
    %v3738 = vcombine.high %v3727, %v3734
    %v3740 = vunpack.c.l.s4 1966171168
    %v3741 = vunpack.c.0.s8 %v3740
    %v3742 = vlaneseq
    %v3743 = vshrl.u32 %v3742, 7
    %v3744 = vsub.s32 %v3741, %v3743
    %v3745 = vrot.slane %v3735, %v3744
    %v3747 = vunpack.c.l.s4 1966171168
    %v3748 = vunpack.c.0.s8 %v3747
    %v3749 = vlaneseq
    %v3750 = vshrl.u32 %v3749, 7
    %v3751 = vsub.s32 %v3748, %v3750
    %v3752 = vrot.slane %v3736, %v3751
    %v3754 = vunpack.c.l.s4 1966171168
    %v3755 = vunpack.c.0.s8 %v3754
    %v3756 = vlaneseq
    %v3757 = vshrl.u32 %v3756, 7
    %v3758 = vsub.s32 %v3755, %v3757
    %v3759 = vrot.slane %v3737, %v3758
    %v3761 = vunpack.c.l.s4 1966171168
    %v3762 = vunpack.c.0.s8 %v3761
    %v3763 = vlaneseq
    %v3764 = vshrl.u32 %v3763, 7
    %v3765 = vsub.s32 %v3762, %v3764
    %v3766 = vrot.slane %v3738, %v3765
    %v3767 = vcombine.low %v3745, %v3759
    %v3768 = vcombine.high %v3745, %v3759
    %v3769 = vcombine.low %v3752, %v3766
    %v3983 = vunpack.c.l.b16 %v3067
    %v3984 = vunpack.c.h.b16 %v3067
    %v3985 = vunpack.c.l.b16 %v3068
    %v3986 = vunpack.c.h.b16 %v3068
    %v3987 = vunpack.c.l.b16 %v3069
    %v3988 = vunpack.c.h.b16 %v3069
    %v3989 = vunpack.c.l.b16 %v3070
    %v3990 = vunpack.c.h.b16 %v3070
    %v3991 = vunpack.c.l.b16 %v3071
    %v3992 = vunpack.c.h.b16 %v3071
    %v3993 = vunpack.c.l.b16 %v3072
    %v3994 = vunpack.c.h.b16 %v3072
    %v3995 = vunpack.c.l.b16 %v3073
    %v3996 = vunpack.c.h.b16 %v3073
    %v3997 = vunpack.c.l.b16 %v3074
    %v3998 = vunpack.c.h.b16 %v3074
    %v3999 = vunpack.c.l.b16 %v3075
    %v4000 = vunpack.c.h.b16 %v3075
    %v4001 = vunpack.c.l.b16 %v3076
    %v4002 = vunpack.c.h.b16 %v3076
    %v4003 = vunpack.c.l.b16 %v3077
    %v4004 = vunpack.c.h.b16 %v3077
    %v4005 = vunpack.c.l.b16 %v3078
    %v4006 = vunpack.c.h.b16 %v3078
    %v4007 = vunpack.c.l.b16 %v3079
    %v4008 = vunpack.c.h.b16 %v3079
    %v4009 = vunpack.c.l.b16 %v3080
    %v4010 = vunpack.c.h.b16 %v3080
    %v4011 = vunpack.c.l.b16 %v3081
    %v4012 = vunpack.c.h.b16 %v3081
    %v4013 = vunpack.c.l.b16 %v3082
    %v4014 = vunpack.c.h.b16 %v3082
    %v4015 = vunpack.c.l.b16 %v3083
    %v4016 = vunpack.c.h.b16 %v3083
    %v4017 = vunpack.c.l.b16 %v3084
    %v4018 = vunpack.c.h.b16 %v3084
    %v4019 = vunpack.c.l.b16 %v3085
    %v4020 = vunpack.c.h.b16 %v3085
    %v4021 = vunpack.c.l.b16 %v3086
    %v4022 = vunpack.c.h.b16 %v3086
    %v4023 = vunpack.c.l.b16 %v3087
    %v4024 = vunpack.c.h.b16 %v3087
    %v4025 = vunpack.c.l.b16 %v3088
    %v4026 = vunpack.c.h.b16 %v3088
    %v4027 = vunpack.c.l.b16 %v3089
    %v4028 = vunpack.c.h.b16 %v3089
    %v4029 = vunpack.c.l.b16 %v3090
    %v4030 = vunpack.c.h.b16 %v3090
    %v4031 = vunpack.c.l.b16 %v3091
    %v4032 = vunpack.c.h.b16 %v3091
    %v4033 = vunpack.c.l.b16 %v3092
    %v4034 = vunpack.c.h.b16 %v3092
    %v4035 = vunpack.c.l.b16 %v3093
    %v4036 = vunpack.c.h.b16 %v3093
    %v4037 = vunpack.c.l.b16 %v3094
    %v4038 = vunpack.c.h.b16 %v3094
    %v4039 = vunpack.c.l.b16 %v3095
    %v4040 = vunpack.c.h.b16 %v3095
    %v4041 = vunpack.c.l.b16 %v3096
    %v4042 = vunpack.c.h.b16 %v3096
    %v4043 = vunpack.c.l.b16 %v3097
    %v4044 = vunpack.c.h.b16 %v3097
    %v4045 = vunpack.c.l.b16 %v3098
    %v4046 = vunpack.c.h.b16 %v3098
    %v4047 = vunpack.c.l.b16 %v3099
    %v4048 = vunpack.c.h.b16 %v3099
    %v4049 = vunpack.c.l.b16 %v3100
    %v4050 = vunpack.c.h.b16 %v3100
    %v4051 = vunpack.c.l.b16 %v3101
    %v4052 = vunpack.c.h.b16 %v3101
    %v4053 = vunpack.c.l.b16 %v3102
    %v4054 = vunpack.c.h.b16 %v3102
    %v4055 = vunpack.c.l.b16 %v3103
    %v4056 = vunpack.c.h.b16 %v3103
    %v4057 = vunpack.c.l.b16 %v3104
    %v4058 = vunpack.c.h.b16 %v3104
    %v4059 = vunpack.c.l.b16 %v3105
    %v4060 = vunpack.c.h.b16 %v3105
    %v4061 = vunpack.c.l.b16 %v3106
    %v4062 = vunpack.c.h.b16 %v3106
    %v4063 = vunpack.c.l.b16 %v3107
    %v4064 = vunpack.c.h.b16 %v3107
    %v4065 = vunpack.c.l.b16 %v3108
    %v4066 = vunpack.c.h.b16 %v3108
    %v4067 = vunpack.c.l.b16 %v3109
    %v4068 = vunpack.c.h.b16 %v3109
    %v4069 = vunpack.c.l.b16 %v3110
    %v4070 = vunpack.c.h.b16 %v3110
    %v4071 = vunpack.c.l.b16 %v3111
    %v4072 = vunpack.c.h.b16 %v3111
    %v4073 = vunpack.c.l.b16 %v3112
    %v4074 = vunpack.c.h.b16 %v3112
    %v4075 = vunpack.c.l.b16 %v3113
    %v4076 = vunpack.c.h.b16 %v3113
    %v4077 = vunpack.c.l.b16 %v3114
    %v4078 = vunpack.c.h.b16 %v3114
    %v4079 = vunpack.c.l.b16 %v3115
    %v4080 = vunpack.c.h.b16 %v3115
    %v4081 = vunpack.c.l.b16 %v3116
    %v4082 = vunpack.c.h.b16 %v3116
    %v4083 = vunpack.c.l.b16 %v3117
    %v4084 = vunpack.c.h.b16 %v3117
    %v4085 = vunpack.c.l.b16 %v3118
    %v4086 = vunpack.c.h.b16 %v3118
    %v4087 = vunpack.c.l.b16 %v3119
    %v4088 = vunpack.c.h.b16 %v3119
    %v4089 = vunpack.c.l.b16 %v3120
    %v4090 = vunpack.c.h.b16 %v3120
    %v4091 = vunpack.c.l.b16 %v3121
    %v4092 = vunpack.c.h.b16 %v3121
    %v4093 = vunpack.c.l.b16 %v3122
    %v4094 = vunpack.c.h.b16 %v3122
    %v4095 = vunpack.c.l.b16 %v3123
    %v4096 = vunpack.c.h.b16 %v3123
    %v4097 = vunpack.c.l.b16 %v3124
    %v4098 = vunpack.c.h.b16 %v3124
    %v4099 = vunpack.c.l.b16 %v3125
    %v4100 = vunpack.c.h.b16 %v3125
    %v4101 = vunpack.c.l.b16 %v3126
    %v4102 = vunpack.c.h.b16 %v3126
    %v4103 = vunpack.c.l.b16 %v3127
    %v4104 = vunpack.c.h.b16 %v3127
    %v4105 = vunpack.c.l.b16 %v3128
    %v4106 = vunpack.c.h.b16 %v3128
    %v4107 = vunpack.c.l.b16 %v3129
    %v4108 = vunpack.c.h.b16 %v3129
    %v4109 = vunpack.c.l.b16 %v3130
    %v4110 = vunpack.c.h.b16 %v3130
    %v4111 = vunpack.c.l.b16 %v3131
    %v4112 = vunpack.c.h.b16 %v3131
    %v4113 = vunpack.c.l.b16 %v3132
    %v4114 = vunpack.c.h.b16 %v3132
    %v4115 = vunpack.c.l.b16 %v3133
    %v4116 = vunpack.c.h.b16 %v3133
    %v4117 = vunpack.c.l.b16 %v3134
    %v4118 = vunpack.c.h.b16 %v3134
    %v4119 = vunpack.c.l.b16 %v3135
    %v4120 = vunpack.c.h.b16 %v3135
    %v4121 = vunpack.c.l.b16 %v3136
    %v4122 = vunpack.c.h.b16 %v3136
    %v4123 = vunpack.c.l.b16 %v3137
    %v4124 = vunpack.c.h.b16 %v3137
    %v4125 = vunpack.c.l.b16 %v3138
    %v4126 = vunpack.c.h.b16 %v3138
    %v4127 = vunpack.c.l.b16 %v3139
    %v4128 = vunpack.c.h.b16 %v3139
    %v4129 = vunpack.c.l.b16 %v3140
    %v4130 = vunpack.c.h.b16 %v3140
    %v4131 = vunpack.c.l.b16 %v3141
    %v4132 = vunpack.c.h.b16 %v3141
    %v4133 = vunpack.c.l.b16 %v3142
    %v4134 = vunpack.c.h.b16 %v3142
    %v4135 = vunpack.c.l.b16 %v3143
    %v4136 = vunpack.c.h.b16 %v3143
    %v4137 = vunpack.c.l.b16 %v3144
    %v4138 = vunpack.c.h.b16 %v3144
    %v4139 = vunpack.c.l.b16 %v3145
    %v4140 = vunpack.c.h.b16 %v3145
    %v4141 = vunpack.c.l.b16 %v3146
    %v4142 = vunpack.c.h.b16 %v3146
    %v4143 = vunpack.c.l.b16 %v3147
    %v4144 = vunpack.c.h.b16 %v3147
    %v4145 = vunpack.c.l.b16 %v3148
    %v4146 = vunpack.c.h.b16 %v3148
    %v4147 = vunpack.c.l.b16 %v3149
    %v4148 = vunpack.c.h.b16 %v3149
    %v4149 = vunpack.c.l.b16 %v3150
    %v4150 = vunpack.c.h.b16 %v3150
    %v4151 = vunpack.c.l.b16 %v3151
    %v4152 = vunpack.c.h.b16 %v3151
    %v4153 = vunpack.c.l.b16 %v3152
    %v4154 = vunpack.c.h.b16 %v3152
    %v4155 = vunpack.c.l.b16 %v3153
    %v4156 = vunpack.c.h.b16 %v3153
    %v4157 = vunpack.c.l.b16 %v3154
    %v4158 = vunpack.c.h.b16 %v3154
    %v4159 = vunpack.c.l.b16 %v3155
    %v4160 = vunpack.c.h.b16 %v3155
    %v4161 = vunpack.c.l.b16 %v3156
    %v4162 = vunpack.c.h.b16 %v3156
    %v4163 = vunpack.c.l.b16 %v3157
    %v4164 = vunpack.c.h.b16 %v3157
    %v4165 = vunpack.c.l.b16 %v3158
    %v4166 = vunpack.c.h.b16 %v3158
    %v4167 = vunpack.c.l.b16 %v3159
    %v4168 = vunpack.c.h.b16 %v3159
    %v4169 = vunpack.c.l.b16 %v3160
    %v4170 = vunpack.c.h.b16 %v3160
    %v4171 = vunpack.c.l.b16 %v3161
    %v4172 = vunpack.c.h.b16 %v3161
    %v4173 = vunpack.c.l.b16 %v3162
    %v4174 = vunpack.c.h.b16 %v3162
    %v4175 = vunpack.c.l.b16 %v3163
    %v4176 = vunpack.c.h.b16 %v3163
    %v4177 = vunpack.c.l.b16 %v3164
    %v4178 = vunpack.c.h.b16 %v3164
    %v4179 = vunpack.c.l.b16 %v3165
    %v4180 = vunpack.c.h.b16 %v3165
    %v4181 = vunpack.c.l.b16 %v3166
    %v4182 = vunpack.c.h.b16 %v3166
    %v4183 = vunpack.c.l.b16 %v3167
    %v4184 = vunpack.c.h.b16 %v3167
    %v4185 = vunpack.c.l.b16 %v3168
    %v4186 = vunpack.c.h.b16 %v3168
    %v4187 = vunpack.c.l.b16 %v3169
    %v4188 = vunpack.c.h.b16 %v3169
    %v4189 = vunpack.c.l.b16 %v3170
    %v4190 = vunpack.c.h.b16 %v3170
    %v4191 = vunpack.c.l.b16 %v3171
    %v4192 = vunpack.c.h.b16 %v3171
    %v4193 = vunpack.c.l.b16 %v3172
    %v4194 = vunpack.c.h.b16 %v3172
    %v4195 = vunpack.c.l.b16 %v3173
    %v4196 = vunpack.c.h.b16 %v3173
    %v4197 = vunpack.c.l.b16 %v3174
    %v4198 = vunpack.c.h.b16 %v3174
    %v4199 = vunpack.c.l.b16 %v3175
    %v4200 = vunpack.c.h.b16 %v3175
    %v4201 = vunpack.c.l.b16 %v3176
    %v4202 = vunpack.c.h.b16 %v3176
    %v4203 = vunpack.c.l.b16 %v3177
    %v4204 = vunpack.c.h.b16 %v3177
    %v4205 = vunpack.c.l.b16 %v3178
    %v4206 = vunpack.c.h.b16 %v3178
    %v4207 = vunpack.c.l.b16 %v3179
    %v4208 = vunpack.c.h.b16 %v3179
    %v4209 = vunpack.c.l.b16 %v3180
    %v4210 = vunpack.c.h.b16 %v3180
    %v4211 = vunpack.c.l.b16 %v3181
    %v4212 = vunpack.c.h.b16 %v3181
    %v4213 = vunpack.c.l.b16 %v3182
    %v4214 = vunpack.c.h.b16 %v3182
    %v4215 = vunpack.c.l.b16 %v3183
    %v4216 = vunpack.c.h.b16 %v3183
    %v4217 = vunpack.c.l.b16 %v3184
    %v4218 = vunpack.c.h.b16 %v3184
    %v4219 = vunpack.c.l.b16 %v3185
    %v4220 = vunpack.c.h.b16 %v3185
    %v4221 = vunpack.c.l.b16 %v3186
    %v4222 = vunpack.c.h.b16 %v3186
    %v4223 = vunpack.c.l.b16 %v3187
    %v4224 = vunpack.c.h.b16 %v3187
    %v4225 = vunpack.c.l.b16 %v3188
    %v4226 = vunpack.c.h.b16 %v3188
    %v4227 = vunpack.c.l.b16 %v3189
    %v4228 = vunpack.c.h.b16 %v3189
    %v4229 = vunpack.c.l.b16 %v3190
    %v4230 = vunpack.c.h.b16 %v3190
    %v4231 = vunpack.c.l.b16 %v3191
    %v4232 = vunpack.c.h.b16 %v3191
    %v4233 = vunpack.c.l.b16 %v3192
    %v4234 = vunpack.c.h.b16 %v3192
    %v4235 = vunpack.c.l.b16 %v3193
    %v4236 = vunpack.c.h.b16 %v3193
    %v4237 = vunpack.c.l.b16 %v3194
    %v4238 = vunpack.c.h.b16 %v3194
    %v4239 = vunpack.c.l.b16 %v3195
    %v4240 = vunpack.c.h.b16 %v3195
    %v4241 = vunpack.c.l.b16 %v3196
    %v4242 = vunpack.c.h.b16 %v3196
    %v4243 = vunpack.c.l.b16 %v3197
    %v4244 = vunpack.c.h.b16 %v3197
    %v4245 = vunpack.c.l.b16 %v3198
    %v4246 = vunpack.c.h.b16 %v3198
    %v4247 = vunpack.c.l.b16 %v3199
    %v4248 = vunpack.c.h.b16 %v3199
    %v4249 = vunpack.c.l.b16 %v3200
    %v4250 = vunpack.c.h.b16 %v3200
    %v4251 = vunpack.c.l.b16 %v3201
    %v4252 = vunpack.c.h.b16 %v3201
    %v4253 = vunpack.c.l.b16 %v3202
    %v4254 = vunpack.c.h.b16 %v3202
    %v4255 = vunpack.c.l.b16 %v3203
    %v4256 = vunpack.c.h.b16 %v3203
    %v4257 = vunpack.c.l.b16 %v3204
    %v4258 = vunpack.c.h.b16 %v3204
    %v4259 = vunpack.c.l.b16 %v3205
    %v4260 = vunpack.c.h.b16 %v3205
    %v4261 = vunpack.c.l.b16 %v3206
    %v4262 = vunpack.c.h.b16 %v3206
    %v4263 = vunpack.c.l.b16 %v3207
    %v4264 = vunpack.c.h.b16 %v3207
    %v4265 = vunpack.c.l.b16 %v3208
    %v4266 = vunpack.c.h.b16 %v3208
    %v4267 = vunpack.c.l.b16 %v3209
    %v4268 = vunpack.c.h.b16 %v3209
    %v4269 = vunpack.c.l.b16 %v3210
    %v4270 = vunpack.c.h.b16 %v3210
    %v4271 = vunpack.c.l.b16 %v3211
    %v4272 = vunpack.c.h.b16 %v3211
    %v4273 = vunpack.c.l.b16 %v3212
    %v4274 = vunpack.c.h.b16 %v3212
    %v4275 = vunpack.c.l.b16 %v3213
    %v4276 = vunpack.c.h.b16 %v3213
    %v4277 = vunpack.c.l.b16 %v3214
    %v4278 = vunpack.c.h.b16 %v3214
    %v4279 = vunpack.c.l.b16 %v3215
    %v4280 = vunpack.c.h.b16 %v3215
    %v4281 = vunpack.c.l.b16 %v3216
    %v4282 = vunpack.c.h.b16 %v3216
    %v4283 = vunpack.c.l.b16 %v3217
    %v4284 = vunpack.c.h.b16 %v3217
    %v4285 = vunpack.c.l.b16 %v3218
    %v4286 = vunpack.c.h.b16 %v3218
    %v4287 = vunpack.c.l.b16 %v3219
    %v4288 = vunpack.c.h.b16 %v3219
    %v4289 = vunpack.c.l.b16 %v3220
    %v4290 = vunpack.c.h.b16 %v3220
    %v4291 = vunpack.c.l.b16 %v3221
    %v4292 = vunpack.c.h.b16 %v3221
    %v4293 = vunpack.c.l.b16 %v3222
    %v4294 = vunpack.c.h.b16 %v3222
    %v4295 = vunpack.c.l.b16 %v3223
    %v4296 = vunpack.c.h.b16 %v3223
    %v4297 = vunpack.c.l.b16 %v3224
    %v4298 = vunpack.c.h.b16 %v3224
    %v4299 = vunpack.c.l.b16 %v3225
    %v4300 = vunpack.c.h.b16 %v3225
    %v4301 = vunpack.c.l.b16 %v3226
    %v4302 = vunpack.c.h.b16 %v3226
    %v4303 = vunpack.c.l.b16 %v3227
    %v4304 = vunpack.c.h.b16 %v3227
    %v4305 = vunpack.c.l.b16 %v3228
    %v4306 = vunpack.c.h.b16 %v3228
    %v4307 = vunpack.c.l.b16 %v3229
    %v4308 = vunpack.c.h.b16 %v3229
    %v4309 = vunpack.c.l.b16 %v3230
    %v4310 = vunpack.c.h.b16 %v3230
    %v4311 = vunpack.c.l.b16 %v3231
    %v4312 = vunpack.c.h.b16 %v3231
    %v4313 = vunpack.c.l.b16 %v3232
    %v4314 = vunpack.c.h.b16 %v3232
    %v4315 = vunpack.c.l.b16 %v3233
    %v4316 = vunpack.c.h.b16 %v3233
    %v4317 = vunpack.c.l.b16 %v3234
    %v4318 = vunpack.c.h.b16 %v3234
    %v4319 = vunpack.c.l.b16 %v3235
    %v4320 = vunpack.c.h.b16 %v3235
    %v4321 = vunpack.c.l.b16 %v3236
    %v4322 = vunpack.c.h.b16 %v3236
    %v4323 = vunpack.c.l.b16 %v3237
    %v4324 = vunpack.c.h.b16 %v3237
    %v4325 = vunpack.c.l.b16 %v3238
    %v4326 = vunpack.c.h.b16 %v3238
    %v4327 = vunpack.c.l.b16 %v3239
    %v4328 = vunpack.c.h.b16 %v3239
    %v4329 = vunpack.c.l.b16 %v3240
    %v4330 = vunpack.c.h.b16 %v3240
    %v4331 = vunpack.c.l.b16 %v3241
    %v4332 = vunpack.c.h.b16 %v3241
    %v4333 = vunpack.c.l.b16 %v3242
    %v4334 = vunpack.c.h.b16 %v3242
    %v4335 = vunpack.c.l.b16 %v3243
    %v4336 = vunpack.c.h.b16 %v3243
    %v4337 = vunpack.c.l.b16 %v3244
    %v4338 = vunpack.c.h.b16 %v3244
    %v4339 = vunpack.c.l.b16 %v3245
    %v4340 = vunpack.c.h.b16 %v3245
    %v4341 = vunpack.c.l.b16 %v3246
    %v4342 = vunpack.c.h.b16 %v3246
    %v4343 = vunpack.c.l.b16 %v3247
    %v4344 = vunpack.c.h.b16 %v3247
    %v4345 = vunpack.c.l.b16 %v3248
    %v4346 = vunpack.c.h.b16 %v3248
    %v4347 = vunpack.c.l.b16 %v3249
    %v4348 = vunpack.c.h.b16 %v3249
    %v4349 = vunpack.c.l.b16 %v3250
    %v4350 = vunpack.c.h.b16 %v3250
    %v4351 = vunpack.c.l.b16 %v3251
    %v4352 = vunpack.c.h.b16 %v3251
    %v4353 = vunpack.c.l.b16 %v3252
    %v4354 = vunpack.c.h.b16 %v3252
    %v4355 = vunpack.c.l.b16 %v3253
    %v4356 = vunpack.c.h.b16 %v3253
    %v4357 = vunpack.c.l.b16 %v3254
    %v4358 = vunpack.c.h.b16 %v3254
    %v4359 = vunpack.c.l.b16 %v3255
    %v4360 = vunpack.c.h.b16 %v3255
    %v4361 = vunpack.c.l.b16 %v3256
    %v4362 = vunpack.c.h.b16 %v3256
    %v4363 = vunpack.c.l.b16 %v3257
    %v4364 = vunpack.c.h.b16 %v3257
    %v4365 = vunpack.c.l.b16 %v3258
    %v4366 = vunpack.c.h.b16 %v3258
    %v4367 = vpack.c.b16 %v3991, %v3983
    %v4368 = vpack.c.b16 %v3992, %v3984
    %v4369 = vpack.c.b16 %v3993, %v3985
    %v4370 = vpack.c.b16 %v3994, %v3986
    %v4371 = vpack.c.b16 %v3995, %v3987
    %v4372 = vpack.c.b16 %v3996, %v3988
    %v4373 = vpack.c.b16 %v3997, %v3989
    %v4374 = vpack.c.b16 %v3998, %v3990
    %v4375 = vpack.c.b16 %v4007, %v3999
    %v4376 = vpack.c.b16 %v4008, %v4000
    %v4377 = vpack.c.b16 %v4009, %v4001
    %v4378 = vpack.c.b16 %v4010, %v4002
    %v4379 = vpack.c.b16 %v4011, %v4003
    %v4380 = vpack.c.b16 %v4012, %v4004
    %v4381 = vpack.c.b16 %v4013, %v4005
    %v4382 = vpack.c.b16 %v4014, %v4006
    %v4383 = vpack.c.b16 %v4023, %v4015
    %v4384 = vpack.c.b16 %v4024, %v4016
    %v4385 = vpack.c.b16 %v4025, %v4017
    %v4386 = vpack.c.b16 %v4026, %v4018
    %v4387 = vpack.c.b16 %v4027, %v4019
    %v4388 = vpack.c.b16 %v4028, %v4020
    %v4389 = vpack.c.b16 %v4029, %v4021
    %v4390 = vpack.c.b16 %v4030, %v4022
    %v4391 = vpack.c.b16 %v4039, %v4031
    %v4392 = vpack.c.b16 %v4040, %v4032
    %v4393 = vpack.c.b16 %v4041, %v4033
    %v4394 = vpack.c.b16 %v4042, %v4034
    %v4395 = vpack.c.b16 %v4043, %v4035
    %v4396 = vpack.c.b16 %v4044, %v4036
    %v4397 = vpack.c.b16 %v4045, %v4037
    %v4398 = vpack.c.b16 %v4046, %v4038
    %v4399 = vpack.c.b16 %v4055, %v4047
    %v4400 = vpack.c.b16 %v4056, %v4048
    %v4401 = vpack.c.b16 %v4057, %v4049
    %v4402 = vpack.c.b16 %v4058, %v4050
    %v4403 = vpack.c.b16 %v4059, %v4051
    %v4404 = vpack.c.b16 %v4060, %v4052
    %v4405 = vpack.c.b16 %v4061, %v4053
    %v4406 = vpack.c.b16 %v4062, %v4054
    %v4407 = vpack.c.b16 %v4071, %v4063
    %v4408 = vpack.c.b16 %v4072, %v4064
    %v4409 = vpack.c.b16 %v4073, %v4065
    %v4410 = vpack.c.b16 %v4074, %v4066
    %v4411 = vpack.c.b16 %v4075, %v4067
    %v4412 = vpack.c.b16 %v4076, %v4068
    %v4413 = vpack.c.b16 %v4077, %v4069
    %v4414 = vpack.c.b16 %v4078, %v4070
    %v4415 = vpack.c.b16 %v4087, %v4079
    %v4416 = vpack.c.b16 %v4088, %v4080
    %v4417 = vpack.c.b16 %v4089, %v4081
    %v4418 = vpack.c.b16 %v4090, %v4082
    %v4419 = vpack.c.b16 %v4091, %v4083
    %v4420 = vpack.c.b16 %v4092, %v4084
    %v4421 = vpack.c.b16 %v4093, %v4085
    %v4422 = vpack.c.b16 %v4094, %v4086
    %v4423 = vpack.c.b16 %v4103, %v4095
    %v4424 = vpack.c.b16 %v4104, %v4096
    %v4425 = vpack.c.b16 %v4105, %v4097
    %v4426 = vpack.c.b16 %v4106, %v4098
    %v4427 = vpack.c.b16 %v4107, %v4099
    %v4428 = vpack.c.b16 %v4108, %v4100
    %v4429 = vpack.c.b16 %v4109, %v4101
    %v4430 = vpack.c.b16 %v4110, %v4102
    %v4431 = vpack.c.b16 %v4119, %v4111
    %v4432 = vpack.c.b16 %v4120, %v4112
    %v4433 = vpack.c.b16 %v4121, %v4113
    %v4434 = vpack.c.b16 %v4122, %v4114
    %v4435 = vpack.c.b16 %v4123, %v4115
    %v4436 = vpack.c.b16 %v4124, %v4116
    %v4437 = vpack.c.b16 %v4125, %v4117
    %v4438 = vpack.c.b16 %v4126, %v4118
    %v4439 = vpack.c.b16 %v4135, %v4127
    %v4440 = vpack.c.b16 %v4136, %v4128
    %v4441 = vpack.c.b16 %v4137, %v4129
    %v4442 = vpack.c.b16 %v4138, %v4130
    %v4443 = vpack.c.b16 %v4139, %v4131
    %v4444 = vpack.c.b16 %v4140, %v4132
    %v4445 = vpack.c.b16 %v4141, %v4133
    %v4446 = vpack.c.b16 %v4142, %v4134
    %v4447 = vpack.c.b16 %v4151, %v4143
    %v4448 = vpack.c.b16 %v4152, %v4144
    %v4449 = vpack.c.b16 %v4153, %v4145
    %v4450 = vpack.c.b16 %v4154, %v4146
    %v4451 = vpack.c.b16 %v4155, %v4147
    %v4452 = vpack.c.b16 %v4156, %v4148
    %v4453 = vpack.c.b16 %v4157, %v4149
    %v4454 = vpack.c.b16 %v4158, %v4150
    %v4455 = vpack.c.b16 %v4167, %v4159
    %v4456 = vpack.c.b16 %v4168, %v4160
    %v4457 = vpack.c.b16 %v4169, %v4161
    %v4458 = vpack.c.b16 %v4170, %v4162
    %v4459 = vpack.c.b16 %v4171, %v4163
    %v4460 = vpack.c.b16 %v4172, %v4164
    %v4461 = vpack.c.b16 %v4173, %v4165
    %v4462 = vpack.c.b16 %v4174, %v4166
    %v4463 = vpack.c.b16 %v4183, %v4175
    %v4464 = vpack.c.b16 %v4184, %v4176
    %v4465 = vpack.c.b16 %v4185, %v4177
    %v4466 = vpack.c.b16 %v4186, %v4178
    %v4467 = vpack.c.b16 %v4187, %v4179
    %v4468 = vpack.c.b16 %v4188, %v4180
    %v4469 = vpack.c.b16 %v4189, %v4181
    %v4470 = vpack.c.b16 %v4190, %v4182
    %v4471 = vpack.c.b16 %v4199, %v4191
    %v4472 = vpack.c.b16 %v4200, %v4192
    %v4473 = vpack.c.b16 %v4201, %v4193
    %v4474 = vpack.c.b16 %v4202, %v4194
    %v4475 = vpack.c.b16 %v4203, %v4195
    %v4476 = vpack.c.b16 %v4204, %v4196
    %v4477 = vpack.c.b16 %v4205, %v4197
    %v4478 = vpack.c.b16 %v4206, %v4198
    %v4479 = vpack.c.b16 %v4215, %v4207
    %v4480 = vpack.c.b16 %v4216, %v4208
    %v4481 = vpack.c.b16 %v4217, %v4209
    %v4482 = vpack.c.b16 %v4218, %v4210
    %v4483 = vpack.c.b16 %v4219, %v4211
    %v4484 = vpack.c.b16 %v4220, %v4212
    %v4485 = vpack.c.b16 %v4221, %v4213
    %v4486 = vpack.c.b16 %v4222, %v4214
    %v4487 = vpack.c.b16 %v4231, %v4223
    %v4488 = vpack.c.b16 %v4232, %v4224
    %v4489 = vpack.c.b16 %v4233, %v4225
    %v4490 = vpack.c.b16 %v4234, %v4226
    %v4491 = vpack.c.b16 %v4235, %v4227
    %v4492 = vpack.c.b16 %v4236, %v4228
    %v4493 = vpack.c.b16 %v4237, %v4229
    %v4494 = vpack.c.b16 %v4238, %v4230
    %v4495 = vpack.c.b16 %v4247, %v4239
    %v4496 = vpack.c.b16 %v4248, %v4240
    %v4497 = vpack.c.b16 %v4249, %v4241
    %v4498 = vpack.c.b16 %v4250, %v4242
    %v4499 = vpack.c.b16 %v4251, %v4243
    %v4500 = vpack.c.b16 %v4252, %v4244
    %v4501 = vpack.c.b16 %v4253, %v4245
    %v4502 = vpack.c.b16 %v4254, %v4246
    %v4503 = vpack.c.b16 %v4263, %v4255
    %v4504 = vpack.c.b16 %v4264, %v4256
    %v4505 = vpack.c.b16 %v4265, %v4257
    %v4506 = vpack.c.b16 %v4266, %v4258
    %v4507 = vpack.c.b16 %v4267, %v4259
    %v4508 = vpack.c.b16 %v4268, %v4260
    %v4509 = vpack.c.b16 %v4269, %v4261
    %v4510 = vpack.c.b16 %v4270, %v4262
    %v4511 = vpack.c.b16 %v4279, %v4271
    %v4512 = vpack.c.b16 %v4280, %v4272
    %v4513 = vpack.c.b16 %v4281, %v4273
    %v4514 = vpack.c.b16 %v4282, %v4274
    %v4515 = vpack.c.b16 %v4283, %v4275
    %v4516 = vpack.c.b16 %v4284, %v4276
    %v4517 = vpack.c.b16 %v4285, %v4277
    %v4518 = vpack.c.b16 %v4286, %v4278
    %v4519 = vpack.c.b16 %v4295, %v4287
    %v4520 = vpack.c.b16 %v4296, %v4288
    %v4521 = vpack.c.b16 %v4297, %v4289
    %v4522 = vpack.c.b16 %v4298, %v4290
    %v4523 = vpack.c.b16 %v4299, %v4291
    %v4524 = vpack.c.b16 %v4300, %v4292
    %v4525 = vpack.c.b16 %v4301, %v4293
    %v4526 = vpack.c.b16 %v4302, %v4294
    %v4527 = vpack.c.b16 %v4311, %v4303
    %v4528 = vpack.c.b16 %v4312, %v4304
    %v4529 = vpack.c.b16 %v4313, %v4305
    %v4530 = vpack.c.b16 %v4314, %v4306
    %v4531 = vpack.c.b16 %v4315, %v4307
    %v4532 = vpack.c.b16 %v4316, %v4308
    %v4533 = vpack.c.b16 %v4317, %v4309
    %v4534 = vpack.c.b16 %v4318, %v4310
    %v4535 = vpack.c.b16 %v4327, %v4319
    %v4536 = vpack.c.b16 %v4328, %v4320
    %v4537 = vpack.c.b16 %v4329, %v4321
    %v4538 = vpack.c.b16 %v4330, %v4322
    %v4539 = vpack.c.b16 %v4331, %v4323
    %v4540 = vpack.c.b16 %v4332, %v4324
    %v4541 = vpack.c.b16 %v4333, %v4325
    %v4542 = vpack.c.b16 %v4334, %v4326
    %v4543 = vpack.c.b16 %v4343, %v4335
    %v4544 = vpack.c.b16 %v4344, %v4336
    %v4545 = vpack.c.b16 %v4345, %v4337
    %v4546 = vpack.c.b16 %v4346, %v4338
    %v4547 = vpack.c.b16 %v4347, %v4339
    %v4548 = vpack.c.b16 %v4348, %v4340
    %v4549 = vpack.c.b16 %v4349, %v4341
    %v4550 = vpack.c.b16 %v4350, %v4342
    %v4551 = vpack.c.b16 %v4359, %v4351
    %v4552 = vpack.c.b16 %v4360, %v4352
    %v4553 = vpack.c.b16 %v4361, %v4353
    %v4554 = vpack.c.b16 %v4362, %v4354
    %v4555 = vpack.c.b16 %v4363, %v4355
    %v4556 = vpack.c.b16 %v4364, %v4356
    %v4557 = vpack.c.b16 %v4365, %v4357
    %v4558 = vpack.c.b16 %v4366, %v4358
    %4751 = vmatprep.subr.bf16.mxu0 %v4368
    %4752 = vmatpush1.bf16.msra.mxu0 %v4367
    %4753 = vmatprep.subr.bf16.mxu0 %v4376
    %4754 = vmatpush1.bf16.msra.mxu0 %v4375
    %4755 = vmatprep.subr.bf16.mxu0 %v4384
    %4756 = vmatpush1.bf16.msra.mxu0 %v4383
    %4757 = vmatprep.subr.bf16.mxu0 %v4392
    %4758 = vmatpush1.bf16.msra.mxu0 %v4391
    %4759 = vmatprep.subr.bf16.mxu0 %v4400
    %4760 = vmatpush1.bf16.msra.mxu0 %v4399
    %4761 = vmatprep.subr.bf16.mxu0 %v4408
    %4762 = vmatpush1.bf16.msra.mxu0 %v4407
    %4763 = vmatprep.subr.bf16.mxu0 %v4416
    %4764 = vmatpush1.bf16.msra.mxu0 %v4415
    %4765 = vmatprep.subr.bf16.mxu0 %v4424
    %4766 = vmatpush1.bf16.msra.mxu0 %v4423
    %4767 = vmatprep.subr.bf16.mxu0 %v4432
    %4768 = vmatpush1.bf16.msra.mxu0 %v4431
    %4769 = vmatprep.subr.bf16.mxu0 %v4440
    %4770 = vmatpush1.bf16.msra.mxu0 %v4439
    %4771 = vmatprep.subr.bf16.mxu0 %v4448
    %4772 = vmatpush1.bf16.msra.mxu0 %v4447
    %4773 = vmatprep.subr.bf16.mxu0 %v4456
    %4774 = vmatpush1.bf16.msra.mxu0 %v4455
    %4775 = vmatprep.subr.bf16.mxu0 %v4464
    %4776 = vmatpush1.bf16.msra.mxu0 %v4463
    %4777 = vmatprep.subr.bf16.mxu0 %v4472
    %4778 = vmatpush1.bf16.msra.mxu0 %v4471
    %4779 = vmatprep.subr.bf16.mxu0 %v4480
    %4780 = vmatpush1.bf16.msra.mxu0 %v4479
    %4781 = vmatprep.subr.bf16.mxu0 %v4488
    %4782 = vmatpush1.bf16.msra.mxu0 %v4487
    %4783 = vmatprep.mubr.bf16.mxu0 %v3367
    %4784 = vmatmul.mubr.bf16.gmra.mrb[0].mxu0 %v3365
    %v4785 = vpop.f32.mrb[0].mxu0
    %v4786 = vadd.f32 %v3264, %v4785
    %v4787 = vpop.f32.mrb[0].mxu0
    %v4788 = vadd.f32 %v3268, %v4787
    %v4789 = vpop.f32.mrb[0].mxu0
    %v4790 = vadd.f32 %v3264, %v4789
    %v4791 = vpop.f32.mrb[0].mxu0
    %v4792 = vadd.f32 %v3268, %v4791
    %4793 = vmatprep.mubr.bf16.mxu0 %v3434
    %4794 = vmatmul.mubr.bf16.gmra.mrb[0].mxu0 %v3432
    %v4795 = vpop.f32.mrb[0].mxu0
    %v4796 = vadd.f32 %v3264, %v4795
    %v4797 = vpop.f32.mrb[0].mxu0
    %v4798 = vadd.f32 %v3268, %v4797
    %v4799 = vpop.f32.mrb[0].mxu0
    %v4800 = vadd.f32 %v3264, %v4799
    %v4801 = vpop.f32.mrb[0].mxu0
    %v4802 = vadd.f32 %v3268, %v4801
    %4803 = vmatprep.mubr.bf16.mxu0 %v3501
    %4804 = vmatmul.mubr.bf16.gmra.mrb[0].mxu0 %v3499
    %v4805 = vpop.f32.mrb[0].mxu0
    %v4806 = vadd.f32 %v3264, %v4805
    %v4807 = vpop.f32.mrb[0].mxu0
    %v4808 = vadd.f32 %v3268, %v4807
    %v4809 = vpop.f32.mrb[0].mxu0
    %v4810 = vadd.f32 %v3264, %v4809
    %v4811 = vpop.f32.mrb[0].mxu0
    %v4812 = vadd.f32 %v3268, %v4811
    %4813 = vmatprep.mubr.bf16.mxu0 %v3568
    %4814 = vmatmul.mubr.bf16.gmra.mrb[0].mxu0 %v3566
    %v4815 = vpop.f32.mrb[0].mxu0
    %v4816 = vadd.f32 %v3264, %v4815
    %v4817 = vpop.f32.mrb[0].mxu0
    %v4818 = vadd.f32 %v3268, %v4817
    %v4819 = vpop.f32.mrb[0].mxu0
    %v4820 = vadd.f32 %v3264, %v4819
    %v4821 = vpop.f32.mrb[0].mxu0
    %v4822 = vadd.f32 %v3268, %v4821
    %4823 = vmatprep.mubr.bf16.mxu0 %v3635
    %4824 = vmatmul.mubr.bf16.gmra.mrb[0].mxu0 %v3633
    %v4825 = vpop.f32.mrb[0].mxu0
    %v4826 = vadd.f32 %v3264, %v4825
    %v4827 = vpop.f32.mrb[0].mxu0
    %v4828 = vadd.f32 %v3268, %v4827
    %v4829 = vpop.f32.mrb[0].mxu0
    %v4830 = vadd.f32 %v3264, %v4829
    %v4831 = vpop.f32.mrb[0].mxu0
    %v4832 = vadd.f32 %v3268, %v4831
    %4833 = vmatprep.mubr.bf16.mxu0 %v3702
    %4834 = vmatmul.mubr.bf16.gmra.mrb[0].mxu0 %v3700
    %v4835 = vpop.f32.mrb[0].mxu0
    %v4836 = vadd.f32 %v3264, %v4835
    %v4837 = vpop.f32.mrb[0].mxu0
    %v4838 = vadd.f32 %v3268, %v4837
    %v4839 = vpop.f32.mrb[0].mxu0
    %v4840 = vadd.f32 %v3264, %v4839
    %v4841 = vpop.f32.mrb[0].mxu0
    %v4842 = vadd.f32 %v3268, %v4841
    %4843 = vmatprep.mubr.bf16.mxu0 %v3769
    %4844 = vmatmul.mubr.bf16.gmra.mrb[0].mxu0 %v3767
    %v4845 = vpop.f32.mrb[0].mxu0
    %v4846 = vadd.f32 %v3264, %v4845
    %v4847 = vpop.f32.mrb[0].mxu0
    %v4848 = vadd.f32 %v3268, %v4847
    %v4849 = vpop.f32.mrb[0].mxu0
    %v4850 = vadd.f32 %v3264, %v4849
    %v4851 = vpop.f32.mrb[0].mxu0
    %v4852 = vadd.f32 %v3268, %v4851
    %4853 = vdwg.mxu0
    %4854 = vmatprep.subr.bf16.mxu0 %v4496
    %4855 = vmatpush1.bf16.msra.mxu0 %v4495
    %4856 = vmatprep.subr.bf16.mxu0 %v4504
    %4857 = vmatpush1.bf16.msra.mxu0 %v4503
    %4858 = vmatprep.subr.bf16.mxu0 %v4512
    %4859 = vmatpush1.bf16.msra.mxu0 %v4511
    %4860 = vmatprep.subr.bf16.mxu0 %v4520
    %4861 = vmatpush1.bf16.msra.mxu0 %v4519
    %4862 = vmatprep.subr.bf16.mxu0 %v4528
    %4863 = vmatpush1.bf16.msra.mxu0 %v4527
    %4864 = vmatprep.subr.bf16.mxu0 %v4536
    %4865 = vmatpush1.bf16.msra.mxu0 %v4535
    %4866 = vmatprep.subr.bf16.mxu0 %v4544
    %4867 = vmatpush1.bf16.msra.mxu0 %v4543
    %4868 = vmatprep.subr.bf16.mxu0 %v4552
    %4869 = vmatpush1.bf16.msra.mxu0 %v4551
    %4870 = vmatprep.subr.bf16.mxu0 0
    %4871 = vmatpush1.bf16.msra.mxu0 0
    %4872 = vmatprep.subr.bf16.mxu0 0
    %4873 = vmatpush1.bf16.msra.mxu0 0
    %4874 = vmatprep.subr.bf16.mxu0 0
    %4875 = vmatpush1.bf16.msra.mxu0 0
    %4876 = vmatprep.subr.bf16.mxu0 0
    %4877 = vmatpush1.bf16.msra.mxu0 0
    %4878 = vmatprep.subr.bf16.mxu0 0
    %4879 = vmatpush1.bf16.msra.mxu0 0
    %4880 = vmatprep.subr.bf16.mxu0 0
    %4881 = vmatpush1.bf16.msra.mxu0 0
    %4882 = vmatprep.subr.bf16.mxu0 0
    %4883 = vmatpush1.bf16.msra.mxu0 0
    %4884 = vmatprep.subr.bf16.mxu0 0
    %4885 = vmatpush1.bf16.msra.mxu0 0
    %4886 = vmatprep.mubr.bf16.mxu0 0
    %4887 = vmatmul.mubr.bf16.gmra.mrb[0].mxu0 %v3366
    %v4888 = vpop.f32.mrb[0].mxu0
    %v4889 = vadd.f32 %v4786, %v4888
    %v4890 = vpop.f32.mrb[0].mxu0
    %v4891 = vadd.f32 %v4788, %v4890
    %v4892 = vpop.f32.mrb[0].mxu0
    %v4893 = vadd.f32 %v4790, %v4892
    %v4894 = vpop.f32.mrb[0].mxu0
    %v4895 = vadd.f32 %v4792, %v4894
    %4896 = vmatprep.mubr.bf16.mxu0 0
    %4897 = vmatmul.mubr.bf16.gmra.mrb[0].mxu0 %v3433
    %v4898 = vpop.f32.mrb[0].mxu0
    %v4899 = vadd.f32 %v4796, %v4898
    %v4900 = vpop.f32.mrb[0].mxu0
    %v4901 = vadd.f32 %v4798, %v4900
    %v4902 = vpop.f32.mrb[0].mxu0
    %v4903 = vadd.f32 %v4800, %v4902
    %v4904 = vpop.f32.mrb[0].mxu0
    %v4905 = vadd.f32 %v4802, %v4904
    %4906 = vmatprep.mubr.bf16.mxu0 0
    %4907 = vmatmul.mubr.bf16.gmra.mrb[0].mxu0 %v3500
    %v4908 = vpop.f32.mrb[0].mxu0
    %v4909 = vadd.f32 %v4806, %v4908
    %v4910 = vpop.f32.mrb[0].mxu0
    %v4911 = vadd.f32 %v4808, %v4910
    %v4912 = vpop.f32.mrb[0].mxu0
    %v4913 = vadd.f32 %v4810, %v4912
    %v4914 = vpop.f32.mrb[0].mxu0
    %v4915 = vadd.f32 %v4812, %v4914
    %4916 = vmatprep.mubr.bf16.mxu0 0
    %4917 = vmatmul.mubr.bf16.gmra.mrb[0].mxu0 %v3567
    %v4918 = vpop.f32.mrb[0].mxu0
    %v4919 = vadd.f32 %v4816, %v4918
    %v4920 = vpop.f32.mrb[0].mxu0
    %v4921 = vadd.f32 %v4818, %v4920
    %v4922 = vpop.f32.mrb[0].mxu0
    %v4923 = vadd.f32 %v4820, %v4922
    %v4924 = vpop.f32.mrb[0].mxu0
    %v4925 = vadd.f32 %v4822, %v4924
    %4926 = vmatprep.mubr.bf16.mxu0 0
    %4927 = vmatmul.mubr.bf16.gmra.mrb[0].mxu0 %v3634
    %v4928 = vpop.f32.mrb[0].mxu0
    %v4929 = vadd.f32 %v4826, %v4928
    %v4930 = vpop.f32.mrb[0].mxu0
    %v4931 = vadd.f32 %v4828, %v4930
    %v4932 = vpop.f32.mrb[0].mxu0
    %v4933 = vadd.f32 %v4830, %v4932
    %v4934 = vpop.f32.mrb[0].mxu0
    %v4935 = vadd.f32 %v4832, %v4934
    %4936 = vmatprep.mubr.bf16.mxu0 0
    %4937 = vmatmul.mubr.bf16.gmra.mrb[0].mxu0 %v3701
    %v4938 = vpop.f32.mrb[0].mxu0
    %v4939 = vadd.f32 %v4836, %v4938
    %v4940 = vpop.f32.mrb[0].mxu0
    %v4941 = vadd.f32 %v4838, %v4940
    %v4942 = vpop.f32.mrb[0].mxu0
    %v4943 = vadd.f32 %v4840, %v4942
    %v4944 = vpop.f32.mrb[0].mxu0
    %v4945 = vadd.f32 %v4842, %v4944
    %4946 = vmatprep.mubr.bf16.mxu0 0
    %4947 = vmatmul.mubr.bf16.gmra.mrb[0].mxu0 %v3768
    %v4948 = vpop.f32.mrb[0].mxu0
    %v4949 = vadd.f32 %v4846, %v4948
    %v4950 = vpop.f32.mrb[0].mxu0
    %v4951 = vadd.f32 %v4848, %v4950
    %v4952 = vpop.f32.mrb[0].mxu0
    %v4953 = vadd.f32 %v4850, %v4952
    %v4954 = vpop.f32.mrb[0].mxu0
    %v4955 = vadd.f32 %v4852, %v4954
    %4956 = vdwg.mxu0
    %4957 = vmatprep.subr.bf16.mxu0 %v4370
    %4958 = vmatpush1.bf16.msra.mxu0 %v4369
    %4959 = vmatprep.subr.bf16.mxu0 %v4378
    %4960 = vmatpush1.bf16.msra.mxu0 %v4377
    %4961 = vmatprep.subr.bf16.mxu0 %v4386
    %4962 = vmatpush1.bf16.msra.mxu0 %v4385
    %4963 = vmatprep.subr.bf16.mxu0 %v4394
    %4964 = vmatpush1.bf16.msra.mxu0 %v4393
    %4965 = vmatprep.subr.bf16.mxu0 %v4402
    %4966 = vmatpush1.bf16.msra.mxu0 %v4401
    %4967 = vmatprep.subr.bf16.mxu0 %v4410
    %4968 = vmatpush1.bf16.msra.mxu0 %v4409
    %4969 = vmatprep.subr.bf16.mxu0 %v4418
    %4970 = vmatpush1.bf16.msra.mxu0 %v4417
    %4971 = vmatprep.subr.bf16.mxu0 %v4426
    %4972 = vmatpush1.bf16.msra.mxu0 %v4425
    %4973 = vmatprep.subr.bf16.mxu0 %v4434
    %4974 = vmatpush1.bf16.msra.mxu0 %v4433
    %4975 = vmatprep.subr.bf16.mxu0 %v4442
    %4976 = vmatpush1.bf16.msra.mxu0 %v4441
    %4977 = vmatprep.subr.bf16.mxu0 %v4450
    %4978 = vmatpush1.bf16.msra.mxu0 %v4449
    %4979 = vmatprep.subr.bf16.mxu0 %v4458
    %4980 = vmatpush1.bf16.msra.mxu0 %v4457
    %4981 = vmatprep.subr.bf16.mxu0 %v4466
    %4982 = vmatpush1.bf16.msra.mxu0 %v4465
    %4983 = vmatprep.subr.bf16.mxu0 %v4474
    %4984 = vmatpush1.bf16.msra.mxu0 %v4473
    %4985 = vmatprep.subr.bf16.mxu0 %v4482
    %4986 = vmatpush1.bf16.msra.mxu0 %v4481
    %4987 = vmatprep.subr.bf16.mxu0 %v4490
    %4988 = vmatpush1.bf16.msra.mxu0 %v4489
    %4989 = vmatprep.mubr.bf16.mxu0 %v3367
    %4990 = vmatmul.mubr.bf16.gmra.mrb[0].mxu0 %v3365
    %v4991 = vpop.f32.mrb[0].mxu0
    %v4992 = vadd.f32 %v3272, %v4991
    %v4993 = vpop.f32.mrb[0].mxu0
    %v4994 = vadd.f32 %v3276, %v4993
    %v4995 = vpop.f32.mrb[0].mxu0
    %v4996 = vadd.f32 %v3272, %v4995
    %v4997 = vpop.f32.mrb[0].mxu0
    %v4998 = vadd.f32 %v3276, %v4997
    %4999 = vmatprep.mubr.bf16.mxu0 %v3434
    %5000 = vmatmul.mubr.bf16.gmra.mrb[0].mxu0 %v3432
    %v5001 = vpop.f32.mrb[0].mxu0
    %v5002 = vadd.f32 %v3272, %v5001
    %v5003 = vpop.f32.mrb[0].mxu0
    %v5004 = vadd.f32 %v3276, %v5003
    %v5005 = vpop.f32.mrb[0].mxu0
    %v5006 = vadd.f32 %v3272, %v5005
    %v5007 = vpop.f32.mrb[0].mxu0
    %v5008 = vadd.f32 %v3276, %v5007
    %5009 = vmatprep.mubr.bf16.mxu0 %v3501
    %5010 = vmatmul.mubr.bf16.gmra.mrb[0].mxu0 %v3499
    %v5011 = vpop.f32.mrb[0].mxu0
    %v5012 = vadd.f32 %v3272, %v5011
    %v5013 = vpop.f32.mrb[0].mxu0
    %v5014 = vadd.f32 %v3276, %v5013
    %v5015 = vpop.f32.mrb[0].mxu0
    %v5016 = vadd.f32 %v3272, %v5015
    %v5017 = vpop.f32.mrb[0].mxu0
    %v5018 = vadd.f32 %v3276, %v5017
    %5019 = vmatprep.mubr.bf16.mxu0 %v3568
    %5020 = vmatmul.mubr.bf16.gmra.mrb[0].mxu0 %v3566
    %v5021 = vpop.f32.mrb[0].mxu0
    %v5022 = vadd.f32 %v3272, %v5021
    %v5023 = vpop.f32.mrb[0].mxu0
    %v5024 = vadd.f32 %v3276, %v5023
    %v5025 = vpop.f32.mrb[0].mxu0
    %v5026 = vadd.f32 %v3272, %v5025
    %v5027 = vpop.f32.mrb[0].mxu0
    %v5028 = vadd.f32 %v3276, %v5027
    %5029 = vmatprep.mubr.bf16.mxu0 %v3635
    %5030 = vmatmul.mubr.bf16.gmra.mrb[0].mxu0 %v3633
    %v5031 = vpop.f32.mrb[0].mxu0
    %v5032 = vadd.f32 %v3272, %v5031
    %v5033 = vpop.f32.mrb[0].mxu0
    %v5034 = vadd.f32 %v3276, %v5033
    %v5035 = vpop.f32.mrb[0].mxu0
    %v5036 = vadd.f32 %v3272, %v5035
    %v5037 = vpop.f32.mrb[0].mxu0
    %v5038 = vadd.f32 %v3276, %v5037
    %5039 = vmatprep.mubr.bf16.mxu0 %v3702
    %5040 = vmatmul.mubr.bf16.gmra.mrb[0].mxu0 %v3700
    %v5041 = vpop.f32.mrb[0].mxu0
    %v5042 = vadd.f32 %v3272, %v5041
    %v5043 = vpop.f32.mrb[0].mxu0
    %v5044 = vadd.f32 %v3276, %v5043
    %v5045 = vpop.f32.mrb[0].mxu0
    %v5046 = vadd.f32 %v3272, %v5045
    %v5047 = vpop.f32.mrb[0].mxu0
    %v5048 = vadd.f32 %v3276, %v5047
    %5049 = vmatprep.mubr.bf16.mxu0 %v3769
    %5050 = vmatmul.mubr.bf16.gmra.mrb[0].mxu0 %v3767
    %v5051 = vpop.f32.mrb[0].mxu0
    %v5052 = vadd.f32 %v3272, %v5051
    %v5053 = vpop.f32.mrb[0].mxu0
    %v5054 = vadd.f32 %v3276, %v5053
    %v5055 = vpop.f32.mrb[0].mxu0
    %v5056 = vadd.f32 %v3272, %v5055
    %v5057 = vpop.f32.mrb[0].mxu0
    %v5058 = vadd.f32 %v3276, %v5057
    %5059 = vdwg.mxu0
    %5060 = vmatprep.subr.bf16.mxu0 %v4498
    %5061 = vmatpush1.bf16.msra.mxu0 %v4497
    %5062 = vmatprep.subr.bf16.mxu0 %v4506
    %5063 = vmatpush1.bf16.msra.mxu0 %v4505
    %5064 = vmatprep.subr.bf16.mxu0 %v4514
    %5065 = vmatpush1.bf16.msra.mxu0 %v4513
    %5066 = vmatprep.subr.bf16.mxu0 %v4522
    %5067 = vmatpush1.bf16.msra.mxu0 %v4521
    %5068 = vmatprep.subr.bf16.mxu0 %v4530
    %5069 = vmatpush1.bf16.msra.mxu0 %v4529
    %5070 = vmatprep.subr.bf16.mxu0 %v4538
    %5071 = vmatpush1.bf16.msra.mxu0 %v4537
    %5072 = vmatprep.subr.bf16.mxu0 %v4546
    %5073 = vmatpush1.bf16.msra.mxu0 %v4545
    %5074 = vmatprep.subr.bf16.mxu0 %v4554
    %5075 = vmatpush1.bf16.msra.mxu0 %v4553
    %5076 = vmatprep.subr.bf16.mxu0 0
    %5077 = vmatpush1.bf16.msra.mxu0 0
    %5078 = vmatprep.subr.bf16.mxu0 0
    %5079 = vmatpush1.bf16.msra.mxu0 0
    %5080 = vmatprep.subr.bf16.mxu0 0
    %5081 = vmatpush1.bf16.msra.mxu0 0
    %5082 = vmatprep.subr.bf16.mxu0 0
    %5083 = vmatpush1.bf16.msra.mxu0 0
    %5084 = vmatprep.subr.bf16.mxu0 0
    %5085 = vmatpush1.bf16.msra.mxu0 0
    %5086 = vmatprep.subr.bf16.mxu0 0
    %5087 = vmatpush1.bf16.msra.mxu0 0
    %5088 = vmatprep.subr.bf16.mxu0 0
    %5089 = vmatpush1.bf16.msra.mxu0 0
    %5090 = vmatprep.subr.bf16.mxu0 0
    %5091 = vmatpush1.bf16.msra.mxu0 0
    %5092 = vmatprep.mubr.bf16.mxu0 0
    %5093 = vmatmul.mubr.bf16.gmra.mrb[0].mxu0 %v3366
    %v5094 = vpop.f32.mrb[0].mxu0
    %v5095 = vadd.f32 %v4992, %v5094
    %v5096 = vpop.f32.mrb[0].mxu0
    %v5097 = vadd.f32 %v4994, %v5096
    %v5098 = vpop.f32.mrb[0].mxu0
    %v5099 = vadd.f32 %v4996, %v5098
    %v5100 = vpop.f32.mrb[0].mxu0
    %v5101 = vadd.f32 %v4998, %v5100
    %5102 = vmatprep.mubr.bf16.mxu0 0
    %5103 = vmatmul.mubr.bf16.gmra.mrb[0].mxu0 %v3433
    %v5104 = vpop.f32.mrb[0].mxu0
    %v5105 = vadd.f32 %v5002, %v5104
    %v5106 = vpop.f32.mrb[0].mxu0
    %v5107 = vadd.f32 %v5004, %v5106
    %v5108 = vpop.f32.mrb[0].mxu0
    %v5109 = vadd.f32 %v5006, %v5108
    %v5110 = vpop.f32.mrb[0].mxu0
    %v5111 = vadd.f32 %v5008, %v5110
    %5112 = vmatprep.mubr.bf16.mxu0 0
    %5113 = vmatmul.mubr.bf16.gmra.mrb[0].mxu0 %v3500
    %v5114 = vpop.f32.mrb[0].mxu0
    %v5115 = vadd.f32 %v5012, %v5114
    %v5116 = vpop.f32.mrb[0].mxu0
    %v5117 = vadd.f32 %v5014, %v5116
    %v5118 = vpop.f32.mrb[0].mxu0
    %v5119 = vadd.f32 %v5016, %v5118
    %v5120 = vpop.f32.mrb[0].mxu0
    %v5121 = vadd.f32 %v5018, %v5120
    %5122 = vmatprep.mubr.bf16.mxu0 0
    %5123 = vmatmul.mubr.bf16.gmra.mrb[0].mxu0 %v3567
    %v5124 = vpop.f32.mrb[0].mxu0
    %v5125 = vadd.f32 %v5022, %v5124
    %v5126 = vpop.f32.mrb[0].mxu0
    %v5127 = vadd.f32 %v5024, %v5126
    %v5128 = vpop.f32.mrb[0].mxu0
    %v5129 = vadd.f32 %v5026, %v5128
    %v5130 = vpop.f32.mrb[0].mxu0
    %v5131 = vadd.f32 %v5028, %v5130
    %5132 = vmatprep.mubr.bf16.mxu0 0
    %5133 = vmatmul.mubr.bf16.gmra.mrb[0].mxu0 %v3634
    %v5134 = vpop.f32.mrb[0].mxu0
    %v5135 = vadd.f32 %v5032, %v5134
    %v5136 = vpop.f32.mrb[0].mxu0
    %v5137 = vadd.f32 %v5034, %v5136
    %v5138 = vpop.f32.mrb[0].mxu0
    %v5139 = vadd.f32 %v5036, %v5138
    %v5140 = vpop.f32.mrb[0].mxu0
    %v5141 = vadd.f32 %v5038, %v5140
    %5142 = vmatprep.mubr.bf16.mxu0 0
    %5143 = vmatmul.mubr.bf16.gmra.mrb[0].mxu0 %v3701
    %v5144 = vpop.f32.mrb[0].mxu0
    %v5145 = vadd.f32 %v5042, %v5144
    %v5146 = vpop.f32.mrb[0].mxu0
    %v5147 = vadd.f32 %v5044, %v5146
    %v5148 = vpop.f32.mrb[0].mxu0
    %v5149 = vadd.f32 %v5046, %v5148
    %v5150 = vpop.f32.mrb[0].mxu0
    %v5151 = vadd.f32 %v5048, %v5150
    %5152 = vmatprep.mubr.bf16.mxu0 0
    %5153 = vmatmul.mubr.bf16.gmra.mrb[0].mxu0 %v3768
    %v5154 = vpop.f32.mrb[0].mxu0
    %v5155 = vadd.f32 %v5052, %v5154
    %v5156 = vpop.f32.mrb[0].mxu0
    %v5157 = vadd.f32 %v5054, %v5156
    %v5158 = vpop.f32.mrb[0].mxu0
    %v5159 = vadd.f32 %v5056, %v5158
    %v5160 = vpop.f32.mrb[0].mxu0
    %v5161 = vadd.f32 %v5058, %v5160
    %5162 = vdwg.mxu0
    %5163 = vmatprep.subr.bf16.mxu0 %v4372
    %5164 = vmatpush1.bf16.msra.mxu0 %v4371
    %5165 = vmatprep.subr.bf16.mxu0 %v4380
    %5166 = vmatpush1.bf16.msra.mxu0 %v4379
    %5167 = vmatprep.subr.bf16.mxu0 %v4388
    %5168 = vmatpush1.bf16.msra.mxu0 %v4387
    %5169 = vmatprep.subr.bf16.mxu0 %v4396
    %5170 = vmatpush1.bf16.msra.mxu0 %v4395
    %5171 = vmatprep.subr.bf16.mxu0 %v4404
    %5172 = vmatpush1.bf16.msra.mxu0 %v4403
    %5173 = vmatprep.subr.bf16.mxu0 %v4412
    %5174 = vmatpush1.bf16.msra.mxu0 %v4411
    %5175 = vmatprep.subr.bf16.mxu0 %v4420
    %5176 = vmatpush1.bf16.msra.mxu0 %v4419
    %5177 = vmatprep.subr.bf16.mxu0 %v4428
    %5178 = vmatpush1.bf16.msra.mxu0 %v4427
    %5179 = vmatprep.subr.bf16.mxu0 %v4436
    %5180 = vmatpush1.bf16.msra.mxu0 %v4435
    %5181 = vmatprep.subr.bf16.mxu0 %v4444
    %5182 = vmatpush1.bf16.msra.mxu0 %v4443
    %5183 = vmatprep.subr.bf16.mxu0 %v4452
    %5184 = vmatpush1.bf16.msra.mxu0 %v4451
    %5185 = vmatprep.subr.bf16.mxu0 %v4460
    %5186 = vmatpush1.bf16.msra.mxu0 %v4459
    %5187 = vmatprep.subr.bf16.mxu0 %v4468
    %5188 = vmatpush1.bf16.msra.mxu0 %v4467
    %5189 = vmatprep.subr.bf16.mxu0 %v4476
    %5190 = vmatpush1.bf16.msra.mxu0 %v4475
    %5191 = vmatprep.subr.bf16.mxu0 %v4484
    %5192 = vmatpush1.bf16.msra.mxu0 %v4483
    %5193 = vmatprep.subr.bf16.mxu0 %v4492
    %5194 = vmatpush1.bf16.msra.mxu0 %v4491
    %5195 = vmatprep.mubr.bf16.mxu0 %v3367
    %5196 = vmatmul.mubr.bf16.gmra.mrb[0].mxu0 %v3365
    %v5197 = vpop.f32.mrb[0].mxu0
    %v5198 = vadd.f32 %v3280, %v5197
    %v5199 = vpop.f32.mrb[0].mxu0
    %v5200 = vadd.f32 %v3284, %v5199
    %v5201 = vpop.f32.mrb[0].mxu0
    %v5202 = vadd.f32 %v3280, %v5201
    %v5203 = vpop.f32.mrb[0].mxu0
    %v5204 = vadd.f32 %v3284, %v5203
    %5205 = vmatprep.mubr.bf16.mxu0 %v3434
    %5206 = vmatmul.mubr.bf16.gmra.mrb[0].mxu0 %v3432
    %v5207 = vpop.f32.mrb[0].mxu0
    %v5208 = vadd.f32 %v3280, %v5207
    %v5209 = vpop.f32.mrb[0].mxu0
    %v5210 = vadd.f32 %v3284, %v5209
    %v5211 = vpop.f32.mrb[0].mxu0
    %v5212 = vadd.f32 %v3280, %v5211
    %v5213 = vpop.f32.mrb[0].mxu0
    %v5214 = vadd.f32 %v3284, %v5213
    %5215 = vmatprep.mubr.bf16.mxu0 %v3501
    %5216 = vmatmul.mubr.bf16.gmra.mrb[0].mxu0 %v3499
    %v5217 = vpop.f32.mrb[0].mxu0
    %v5218 = vadd.f32 %v3280, %v5217
    %v5219 = vpop.f32.mrb[0].mxu0
    %v5220 = vadd.f32 %v3284, %v5219
    %v5221 = vpop.f32.mrb[0].mxu0
    %v5222 = vadd.f32 %v3280, %v5221
    %v5223 = vpop.f32.mrb[0].mxu0
    %v5224 = vadd.f32 %v3284, %v5223
    %5225 = vmatprep.mubr.bf16.mxu0 %v3568
    %5226 = vmatmul.mubr.bf16.gmra.mrb[0].mxu0 %v3566
    %v5227 = vpop.f32.mrb[0].mxu0
    %v5228 = vadd.f32 %v3280, %v5227
    %v5229 = vpop.f32.mrb[0].mxu0
    %v5230 = vadd.f32 %v3284, %v5229
    %v5231 = vpop.f32.mrb[0].mxu0
    %v5232 = vadd.f32 %v3280, %v5231
    %v5233 = vpop.f32.mrb[0].mxu0
    %v5234 = vadd.f32 %v3284, %v5233
    %5235 = vmatprep.mubr.bf16.mxu0 %v3635
    %5236 = vmatmul.mubr.bf16.gmra.mrb[0].mxu0 %v3633
    %v5237 = vpop.f32.mrb[0].mxu0
    %v5238 = vadd.f32 %v3280, %v5237
    %v5239 = vpop.f32.mrb[0].mxu0
    %v5240 = vadd.f32 %v3284, %v5239
    %v5241 = vpop.f32.mrb[0].mxu0
    %v5242 = vadd.f32 %v3280, %v5241
    %v5243 = vpop.f32.mrb[0].mxu0
    %v5244 = vadd.f32 %v3284, %v5243
    %5245 = vmatprep.mubr.bf16.mxu0 %v3702
    %5246 = vmatmul.mubr.bf16.gmra.mrb[0].mxu0 %v3700
    %v5247 = vpop.f32.mrb[0].mxu0
    %v5248 = vadd.f32 %v3280, %v5247
    %v5249 = vpop.f32.mrb[0].mxu0
    %v5250 = vadd.f32 %v3284, %v5249
    %v5251 = vpop.f32.mrb[0].mxu0
    %v5252 = vadd.f32 %v3280, %v5251
    %v5253 = vpop.f32.mrb[0].mxu0
    %v5254 = vadd.f32 %v3284, %v5253
    %5255 = vmatprep.mubr.bf16.mxu0 %v3769
    %5256 = vmatmul.mubr.bf16.gmra.mrb[0].mxu0 %v3767
    %v5257 = vpop.f32.mrb[0].mxu0
    %v5258 = vadd.f32 %v3280, %v5257
    %v5259 = vpop.f32.mrb[0].mxu0
    %v5260 = vadd.f32 %v3284, %v5259
    %v5261 = vpop.f32.mrb[0].mxu0
    %v5262 = vadd.f32 %v3280, %v5261
    %v5263 = vpop.f32.mrb[0].mxu0
    %v5264 = vadd.f32 %v3284, %v5263
    %5265 = vdwg.mxu0
    %5266 = vmatprep.subr.bf16.mxu0 %v4500
    %5267 = vmatpush1.bf16.msra.mxu0 %v4499
    %5268 = vmatprep.subr.bf16.mxu0 %v4508
    %5269 = vmatpush1.bf16.msra.mxu0 %v4507
    %5270 = vmatprep.subr.bf16.mxu0 %v4516
    %5271 = vmatpush1.bf16.msra.mxu0 %v4515
    %5272 = vmatprep.subr.bf16.mxu0 %v4524
    %5273 = vmatpush1.bf16.msra.mxu0 %v4523
    %5274 = vmatprep.subr.bf16.mxu0 %v4532
    %5275 = vmatpush1.bf16.msra.mxu0 %v4531
    %5276 = vmatprep.subr.bf16.mxu0 %v4540
    %5277 = vmatpush1.bf16.msra.mxu0 %v4539
    %5278 = vmatprep.subr.bf16.mxu0 %v4548
    %5279 = vmatpush1.bf16.msra.mxu0 %v4547
    %5280 = vmatprep.subr.bf16.mxu0 %v4556
    %5281 = vmatpush1.bf16.msra.mxu0 %v4555
    %5282 = vmatprep.subr.bf16.mxu0 0
    %5283 = vmatpush1.bf16.msra.mxu0 0
    %5284 = vmatprep.subr.bf16.mxu0 0
    %5285 = vmatpush1.bf16.msra.mxu0 0
    %5286 = vmatprep.subr.bf16.mxu0 0
    %5287 = vmatpush1.bf16.msra.mxu0 0
    %5288 = vmatprep.subr.bf16.mxu0 0
    %5289 = vmatpush1.bf16.msra.mxu0 0
    %5290 = vmatprep.subr.bf16.mxu0 0
    %5291 = vmatpush1.bf16.msra.mxu0 0
    %5292 = vmatprep.subr.bf16.mxu0 0
    %5293 = vmatpush1.bf16.msra.mxu0 0
    %5294 = vmatprep.subr.bf16.mxu0 0
    %5295 = vmatpush1.bf16.msra.mxu0 0
    %5296 = vmatprep.subr.bf16.mxu0 0
    %5297 = vmatpush1.bf16.msra.mxu0 0
    %5298 = vmatprep.mubr.bf16.mxu0 0
    %5299 = vmatmul.mubr.bf16.gmra.mrb[0].mxu0 %v3366
    %v5300 = vpop.f32.mrb[0].mxu0
    %v5301 = vadd.f32 %v5198, %v5300
    %v5302 = vpop.f32.mrb[0].mxu0
    %v5303 = vadd.f32 %v5200, %v5302
    %v5304 = vpop.f32.mrb[0].mxu0
    %v5305 = vadd.f32 %v5202, %v5304
    %v5306 = vpop.f32.mrb[0].mxu0
    %v5307 = vadd.f32 %v5204, %v5306
    %5308 = vmatprep.mubr.bf16.mxu0 0
    %5309 = vmatmul.mubr.bf16.gmra.mrb[0].mxu0 %v3433
    %v5310 = vpop.f32.mrb[0].mxu0
    %v5311 = vadd.f32 %v5208, %v5310
    %v5312 = vpop.f32.mrb[0].mxu0
    %v5313 = vadd.f32 %v5210, %v5312
    %v5314 = vpop.f32.mrb[0].mxu0
    %v5315 = vadd.f32 %v5212, %v5314
    %v5316 = vpop.f32.mrb[0].mxu0
    %v5317 = vadd.f32 %v5214, %v5316
    %5318 = vmatprep.mubr.bf16.mxu0 0
    %5319 = vmatmul.mubr.bf16.gmra.mrb[0].mxu0 %v3500
    %v5320 = vpop.f32.mrb[0].mxu0
    %v5321 = vadd.f32 %v5218, %v5320
    %v5322 = vpop.f32.mrb[0].mxu0
    %v5323 = vadd.f32 %v5220, %v5322
    %v5324 = vpop.f32.mrb[0].mxu0
    %v5325 = vadd.f32 %v5222, %v5324
    %v5326 = vpop.f32.mrb[0].mxu0
    %v5327 = vadd.f32 %v5224, %v5326
    %5328 = vmatprep.mubr.bf16.mxu0 0
    %5329 = vmatmul.mubr.bf16.gmra.mrb[0].mxu0 %v3567
    %v5330 = vpop.f32.mrb[0].mxu0
    %v5331 = vadd.f32 %v5228, %v5330
    %v5332 = vpop.f32.mrb[0].mxu0
    %v5333 = vadd.f32 %v5230, %v5332
    %v5334 = vpop.f32.mrb[0].mxu0
    %v5335 = vadd.f32 %v5232, %v5334
    %v5336 = vpop.f32.mrb[0].mxu0
    %v5337 = vadd.f32 %v5234, %v5336
    %5338 = vmatprep.mubr.bf16.mxu0 0
    %5339 = vmatmul.mubr.bf16.gmra.mrb[0].mxu0 %v3634
    %v5340 = vpop.f32.mrb[0].mxu0
    %v5341 = vadd.f32 %v5238, %v5340
    %v5342 = vpop.f32.mrb[0].mxu0
    %v5343 = vadd.f32 %v5240, %v5342
    %v5344 = vpop.f32.mrb[0].mxu0
    %v5345 = vadd.f32 %v5242, %v5344
    %v5346 = vpop.f32.mrb[0].mxu0
    %v5347 = vadd.f32 %v5244, %v5346
    %5348 = vmatprep.mubr.bf16.mxu0 0
    %5349 = vmatmul.mubr.bf16.gmra.mrb[0].mxu0 %v3701
    %v5350 = vpop.f32.mrb[0].mxu0
    %v5351 = vadd.f32 %v5248, %v5350
    %v5352 = vpop.f32.mrb[0].mxu0
    %v5353 = vadd.f32 %v5250, %v5352
    %v5354 = vpop.f32.mrb[0].mxu0
    %v5355 = vadd.f32 %v5252, %v5354
    %v5356 = vpop.f32.mrb[0].mxu0
    %v5357 = vadd.f32 %v5254, %v5356
    %5358 = vmatprep.mubr.bf16.mxu0 0
    %5359 = vmatmul.mubr.bf16.gmra.mrb[0].mxu0 %v3768
    %v5360 = vpop.f32.mrb[0].mxu0
    %v5361 = vadd.f32 %v5258, %v5360
    %v5362 = vpop.f32.mrb[0].mxu0
    %v5363 = vadd.f32 %v5260, %v5362
    %v5364 = vpop.f32.mrb[0].mxu0
    %v5365 = vadd.f32 %v5262, %v5364
    %v5366 = vpop.f32.mrb[0].mxu0
    %v5367 = vadd.f32 %v5264, %v5366
    %5368 = vdwg.mxu0
    %5369 = vmatprep.subr.bf16.mxu0 %v4374
    %5370 = vmatpush1.bf16.msra.mxu0 %v4373
    %5371 = vmatprep.subr.bf16.mxu0 %v4382
    %5372 = vmatpush1.bf16.msra.mxu0 %v4381
    %5373 = vmatprep.subr.bf16.mxu0 %v4390
    %5374 = vmatpush1.bf16.msra.mxu0 %v4389
    %5375 = vmatprep.subr.bf16.mxu0 %v4398
    %5376 = vmatpush1.bf16.msra.mxu0 %v4397
    %5377 = vmatprep.subr.bf16.mxu0 %v4406
    %5378 = vmatpush1.bf16.msra.mxu0 %v4405
    %5379 = vmatprep.subr.bf16.mxu0 %v4414
    %5380 = vmatpush1.bf16.msra.mxu0 %v4413
    %5381 = vmatprep.subr.bf16.mxu0 %v4422
    %5382 = vmatpush1.bf16.msra.mxu0 %v4421
    %5383 = vmatprep.subr.bf16.mxu0 %v4430
    %5384 = vmatpush1.bf16.msra.mxu0 %v4429
    %5385 = vmatprep.subr.bf16.mxu0 %v4438
    %5386 = vmatpush1.bf16.msra.mxu0 %v4437
    %5387 = vmatprep.subr.bf16.mxu0 %v4446
    %5388 = vmatpush1.bf16.msra.mxu0 %v4445
    %5389 = vmatprep.subr.bf16.mxu0 %v4454
    %5390 = vmatpush1.bf16.msra.mxu0 %v4453
    %5391 = vmatprep.subr.bf16.mxu0 %v4462
    %5392 = vmatpush1.bf16.msra.mxu0 %v4461
    %5393 = vmatprep.subr.bf16.mxu0 %v4470
    %5394 = vmatpush1.bf16.msra.mxu0 %v4469
    %5395 = vmatprep.subr.bf16.mxu0 %v4478
    %5396 = vmatpush1.bf16.msra.mxu0 %v4477
    %5397 = vmatprep.subr.bf16.mxu0 %v4486
    %5398 = vmatpush1.bf16.msra.mxu0 %v4485
    %5399 = vmatprep.subr.bf16.mxu0 %v4494
    %5400 = vmatpush1.bf16.msra.mxu0 %v4493
    %5401 = vmatprep.mubr.bf16.mxu0 %v3367
    %5402 = vmatmul.mubr.bf16.gmra.mrb[0].mxu0 %v3365
    %v5403 = vpop.f32.mrb[0].mxu0
    %v5404 = vadd.f32 %v3288, %v5403
    %v5405 = vpop.f32.mrb[0].mxu0
    %v5406 = vadd.f32 %v3292, %v5405
    %v5407 = vpop.f32.mrb[0].mxu0
    %v5408 = vadd.f32 %v3288, %v5407
    %v5409 = vpop.f32.mrb[0].mxu0
    %v5410 = vadd.f32 %v3292, %v5409
    %5411 = vmatprep.mubr.bf16.mxu0 %v3434
    %5412 = vmatmul.mubr.bf16.gmra.mrb[0].mxu0 %v3432
    %v5413 = vpop.f32.mrb[0].mxu0
    %v5414 = vadd.f32 %v3288, %v5413
    %v5415 = vpop.f32.mrb[0].mxu0
    %v5416 = vadd.f32 %v3292, %v5415
    %v5417 = vpop.f32.mrb[0].mxu0
    %v5418 = vadd.f32 %v3288, %v5417
    %v5419 = vpop.f32.mrb[0].mxu0
    %v5420 = vadd.f32 %v3292, %v5419
    %5421 = vmatprep.mubr.bf16.mxu0 %v3501
    %5422 = vmatmul.mubr.bf16.gmra.mrb[0].mxu0 %v3499
    %v5423 = vpop.f32.mrb[0].mxu0
    %v5424 = vadd.f32 %v3288, %v5423
    %v5425 = vpop.f32.mrb[0].mxu0
    %v5426 = vadd.f32 %v3292, %v5425
    %v5427 = vpop.f32.mrb[0].mxu0
    %v5428 = vadd.f32 %v3288, %v5427
    %v5429 = vpop.f32.mrb[0].mxu0
    %v5430 = vadd.f32 %v3292, %v5429
    %5431 = vmatprep.mubr.bf16.mxu0 %v3568
    %5432 = vmatmul.mubr.bf16.gmra.mrb[0].mxu0 %v3566
    %v5433 = vpop.f32.mrb[0].mxu0
    %v5434 = vadd.f32 %v3288, %v5433
    %v5435 = vpop.f32.mrb[0].mxu0
    %v5436 = vadd.f32 %v3292, %v5435
    %v5437 = vpop.f32.mrb[0].mxu0
    %v5438 = vadd.f32 %v3288, %v5437
    %v5439 = vpop.f32.mrb[0].mxu0
    %v5440 = vadd.f32 %v3292, %v5439
    %5441 = vmatprep.mubr.bf16.mxu0 %v3635
    %5442 = vmatmul.mubr.bf16.gmra.mrb[0].mxu0 %v3633
    %v5443 = vpop.f32.mrb[0].mxu0
    %v5444 = vadd.f32 %v3288, %v5443
    %v5445 = vpop.f32.mrb[0].mxu0
    %v5446 = vadd.f32 %v3292, %v5445
    %v5447 = vpop.f32.mrb[0].mxu0
    %v5448 = vadd.f32 %v3288, %v5447
    %v5449 = vpop.f32.mrb[0].mxu0
    %v5450 = vadd.f32 %v3292, %v5449
    %5451 = vmatprep.mubr.bf16.mxu0 %v3702
    %5452 = vmatmul.mubr.bf16.gmra.mrb[0].mxu0 %v3700
    %v5453 = vpop.f32.mrb[0].mxu0
    %v5454 = vadd.f32 %v3288, %v5453
    %v5455 = vpop.f32.mrb[0].mxu0
    %v5456 = vadd.f32 %v3292, %v5455
    %v5457 = vpop.f32.mrb[0].mxu0
    %v5458 = vadd.f32 %v3288, %v5457
    %v5459 = vpop.f32.mrb[0].mxu0
    %v5460 = vadd.f32 %v3292, %v5459
    %5461 = vmatprep.mubr.bf16.mxu0 %v3769
    %5462 = vmatmul.mubr.bf16.gmra.mrb[0].mxu0 %v3767
    %v5463 = vpop.f32.mrb[0].mxu0
    %v5464 = vadd.f32 %v3288, %v5463
    %v5465 = vpop.f32.mrb[0].mxu0
    %v5466 = vadd.f32 %v3292, %v5465
    %v5467 = vpop.f32.mrb[0].mxu0
    %v5468 = vadd.f32 %v3288, %v5467
    %v5469 = vpop.f32.mrb[0].mxu0
    %v5470 = vadd.f32 %v3292, %v5469
    %5471 = vdwg.mxu0
    %5472 = vmatprep.subr.bf16.mxu0 %v4502
    %5473 = vmatpush1.bf16.msra.mxu0 %v4501
    %5474 = vmatprep.subr.bf16.mxu0 %v4510
    %5475 = vmatpush1.bf16.msra.mxu0 %v4509
    %5476 = vmatprep.subr.bf16.mxu0 %v4518
    %5477 = vmatpush1.bf16.msra.mxu0 %v4517
    %5478 = vmatprep.subr.bf16.mxu0 %v4526
    %5479 = vmatpush1.bf16.msra.mxu0 %v4525
    %5480 = vmatprep.subr.bf16.mxu0 %v4534
    %5481 = vmatpush1.bf16.msra.mxu0 %v4533
    %5482 = vmatprep.subr.bf16.mxu0 %v4542
    %5483 = vmatpush1.bf16.msra.mxu0 %v4541
    %5484 = vmatprep.subr.bf16.mxu0 %v4550
    %5485 = vmatpush1.bf16.msra.mxu0 %v4549
    %5486 = vmatprep.subr.bf16.mxu0 %v4558
    %5487 = vmatpush1.bf16.msra.mxu0 %v4557
    %5488 = vmatprep.subr.bf16.mxu0 0
    %5489 = vmatpush1.bf16.msra.mxu0 0
    %5490 = vmatprep.subr.bf16.mxu0 0
    %5491 = vmatpush1.bf16.msra.mxu0 0
    %5492 = vmatprep.subr.bf16.mxu0 0
    %5493 = vmatpush1.bf16.msra.mxu0 0
    %5494 = vmatprep.subr.bf16.mxu0 0
    %5495 = vmatpush1.bf16.msra.mxu0 0
    %5496 = vmatprep.subr.bf16.mxu0 0
    %5497 = vmatpush1.bf16.msra.mxu0 0
    %5498 = vmatprep.subr.bf16.mxu0 0
    %5499 = vmatpush1.bf16.msra.mxu0 0
    %5500 = vmatprep.subr.bf16.mxu0 0
    %5501 = vmatpush1.bf16.msra.mxu0 0
    %5502 = vmatprep.subr.bf16.mxu0 0
    %5503 = vmatpush1.bf16.msra.mxu0 0
    %5504 = vmatprep.mubr.bf16.mxu0 0
    %5505 = vmatmul.mubr.bf16.gmra.mrb[0].mxu0 %v3366
    %v5506 = vpop.f32.mrb[0].mxu0
    %v5507 = vadd.f32 %v5404, %v5506
    %v5508 = vpop.f32.mrb[0].mxu0
    %v5509 = vadd.f32 %v5406, %v5508
    %v5510 = vpop.f32.mrb[0].mxu0
    %v5511 = vadd.f32 %v5408, %v5510
    %v5512 = vpop.f32.mrb[0].mxu0
    %v5513 = vadd.f32 %v5410, %v5512
    %5514 = vmatprep.mubr.bf16.mxu0 0
    %5515 = vmatmul.mubr.bf16.gmra.mrb[0].mxu0 %v3433
    %v5516 = vpop.f32.mrb[0].mxu0
    %v5517 = vadd.f32 %v5414, %v5516
    %v5518 = vpop.f32.mrb[0].mxu0
    %v5519 = vadd.f32 %v5416, %v5518
    %v5520 = vpop.f32.mrb[0].mxu0
    %v5521 = vadd.f32 %v5418, %v5520
    %v5522 = vpop.f32.mrb[0].mxu0
    %v5523 = vadd.f32 %v5420, %v5522
    %5524 = vmatprep.mubr.bf16.mxu0 0
    %5525 = vmatmul.mubr.bf16.gmra.mrb[0].mxu0 %v3500
    %v5526 = vpop.f32.mrb[0].mxu0
    %v5527 = vadd.f32 %v5424, %v5526
    %v5528 = vpop.f32.mrb[0].mxu0
    %v5529 = vadd.f32 %v5426, %v5528
    %v5530 = vpop.f32.mrb[0].mxu0
    %v5531 = vadd.f32 %v5428, %v5530
    %v5532 = vpop.f32.mrb[0].mxu0
    %v5533 = vadd.f32 %v5430, %v5532
    %5534 = vmatprep.mubr.bf16.mxu0 0
    %5535 = vmatmul.mubr.bf16.gmra.mrb[0].mxu0 %v3567
    %v5536 = vpop.f32.mrb[0].mxu0
    %v5537 = vadd.f32 %v5434, %v5536
    %v5538 = vpop.f32.mrb[0].mxu0
    %v5539 = vadd.f32 %v5436, %v5538
    %v5540 = vpop.f32.mrb[0].mxu0
    %v5541 = vadd.f32 %v5438, %v5540
    %v5542 = vpop.f32.mrb[0].mxu0
    %v5543 = vadd.f32 %v5440, %v5542
    %5544 = vmatprep.mubr.bf16.mxu0 0
    %5545 = vmatmul.mubr.bf16.gmra.mrb[0].mxu0 %v3634
    %v5546 = vpop.f32.mrb[0].mxu0
    %v5547 = vadd.f32 %v5444, %v5546
    %v5548 = vpop.f32.mrb[0].mxu0
    %v5549 = vadd.f32 %v5446, %v5548
    %v5550 = vpop.f32.mrb[0].mxu0
    %v5551 = vadd.f32 %v5448, %v5550
    %v5552 = vpop.f32.mrb[0].mxu0
    %v5553 = vadd.f32 %v5450, %v5552
    %5554 = vmatprep.mubr.bf16.mxu0 0
    %5555 = vmatmul.mubr.bf16.gmra.mrb[0].mxu0 %v3701
    %v5556 = vpop.f32.mrb[0].mxu0
    %v5557 = vadd.f32 %v5454, %v5556
    %v5558 = vpop.f32.mrb[0].mxu0
    %v5559 = vadd.f32 %v5456, %v5558
    %v5560 = vpop.f32.mrb[0].mxu0
    %v5561 = vadd.f32 %v5458, %v5560
    %v5562 = vpop.f32.mrb[0].mxu0
    %v5563 = vadd.f32 %v5460, %v5562
    %5564 = vmatprep.mubr.bf16.mxu0 0
    %5565 = vmatmul.mubr.bf16.gmra.mrb[0].mxu0 %v3768
    %v5566 = vpop.f32.mrb[0].mxu0
    %v5567 = vadd.f32 %v5464, %v5566
    %v5568 = vpop.f32.mrb[0].mxu0
    %v5569 = vadd.f32 %v5466, %v5568
    %v5570 = vpop.f32.mrb[0].mxu0
    %v5571 = vadd.f32 %v5468, %v5570
    %v5572 = vpop.f32.mrb[0].mxu0
    %v5573 = vadd.f32 %v5470, %v5572
    %5574 = vdwg.mxu0
    %v5575 = vmax.f32 %v4889, 0.0
    %v5576 = vmax.f32 %v4891, 0.0
    %v5577 = vmax.f32 %v5095, 0.0
    %v5578 = vmax.f32 %v5097, 0.0
    %v5579 = vmax.f32 %v5301, 0.0
    %v5580 = vmax.f32 %v5303, 0.0
    %v5581 = vmax.f32 %v5507, 0.0
    %v5582 = vmax.f32 %v5509, 0.0
    %v5583 = vmax.f32 %v4893, 0.0
    %v5584 = vmax.f32 %v4895, 0.0
    %v5585 = vmax.f32 %v5099, 0.0
    %v5586 = vmax.f32 %v5101, 0.0
    %v5587 = vmax.f32 %v5305, 0.0
    %v5588 = vmax.f32 %v5307, 0.0
    %v5589 = vmax.f32 %v5511, 0.0
    %v5590 = vmax.f32 %v5513, 0.0
    %v5591 = vmax.f32 %v4899, 0.0
    %v5592 = vmax.f32 %v4901, 0.0
    %v5593 = vmax.f32 %v5105, 0.0
    %v5594 = vmax.f32 %v5107, 0.0
    %v5595 = vmax.f32 %v5311, 0.0
    %v5596 = vmax.f32 %v5313, 0.0
    %v5597 = vmax.f32 %v5517, 0.0
    %v5598 = vmax.f32 %v5519, 0.0
    %v5599 = vmax.f32 %v4903, 0.0
    %v5600 = vmax.f32 %v4905, 0.0
    %v5601 = vmax.f32 %v5109, 0.0
    %v5602 = vmax.f32 %v5111, 0.0
    %v5603 = vmax.f32 %v5315, 0.0
    %v5604 = vmax.f32 %v5317, 0.0
    %v5605 = vmax.f32 %v5521, 0.0
    %v5606 = vmax.f32 %v5523, 0.0
    %v5607 = vmax.f32 %v4909, 0.0
    %v5608 = vmax.f32 %v4911, 0.0
    %v5609 = vmax.f32 %v5115, 0.0
    %v5610 = vmax.f32 %v5117, 0.0
    %v5611 = vmax.f32 %v5321, 0.0
    %v5612 = vmax.f32 %v5323, 0.0
    %v5613 = vmax.f32 %v5527, 0.0
    %v5614 = vmax.f32 %v5529, 0.0
    %v5615 = vmax.f32 %v4913, 0.0
    %v5616 = vmax.f32 %v4915, 0.0
    %v5617 = vmax.f32 %v5119, 0.0
    %v5618 = vmax.f32 %v5121, 0.0
    %v5619 = vmax.f32 %v5325, 0.0
    %v5620 = vmax.f32 %v5327, 0.0
    %v5621 = vmax.f32 %v5531, 0.0
    %v5622 = vmax.f32 %v5533, 0.0
    %v5623 = vmax.f32 %v4919, 0.0
    %v5624 = vmax.f32 %v4921, 0.0
    %v5625 = vmax.f32 %v5125, 0.0
    %v5626 = vmax.f32 %v5127, 0.0
    %v5627 = vmax.f32 %v5331, 0.0
    %v5628 = vmax.f32 %v5333, 0.0
    %v5629 = vmax.f32 %v5537, 0.0
    %v5630 = vmax.f32 %v5539, 0.0
    %v5631 = vmax.f32 %v4923, 0.0
    %v5632 = vmax.f32 %v4925, 0.0
    %v5633 = vmax.f32 %v5129, 0.0
    %v5634 = vmax.f32 %v5131, 0.0
    %v5635 = vmax.f32 %v5335, 0.0
    %v5636 = vmax.f32 %v5337, 0.0
    %v5637 = vmax.f32 %v5541, 0.0
    %v5638 = vmax.f32 %v5543, 0.0
    %v5639 = vmax.f32 %v4929, 0.0
    %v5640 = vmax.f32 %v4931, 0.0
    %v5641 = vmax.f32 %v5135, 0.0
    %v5642 = vmax.f32 %v5137, 0.0
    %v5643 = vmax.f32 %v5341, 0.0
    %v5644 = vmax.f32 %v5343, 0.0
    %v5645 = vmax.f32 %v5547, 0.0
    %v5646 = vmax.f32 %v5549, 0.0
    %v5647 = vmax.f32 %v4933, 0.0
    %v5648 = vmax.f32 %v4935, 0.0
    %v5649 = vmax.f32 %v5139, 0.0
    %v5650 = vmax.f32 %v5141, 0.0
    %v5651 = vmax.f32 %v5345, 0.0
    %v5652 = vmax.f32 %v5347, 0.0
    %v5653 = vmax.f32 %v5551, 0.0
    %v5654 = vmax.f32 %v5553, 0.0
    %v5655 = vmax.f32 %v4939, 0.0
    %v5656 = vmax.f32 %v4941, 0.0
    %v5657 = vmax.f32 %v5145, 0.0
    %v5658 = vmax.f32 %v5147, 0.0
    %v5659 = vmax.f32 %v5351, 0.0
    %v5660 = vmax.f32 %v5353, 0.0
    %v5661 = vmax.f32 %v5557, 0.0
    %v5662 = vmax.f32 %v5559, 0.0
    %v5663 = vmax.f32 %v4943, 0.0
    %v5664 = vmax.f32 %v4945, 0.0
    %v5665 = vmax.f32 %v5149, 0.0
    %v5666 = vmax.f32 %v5151, 0.0
    %v5667 = vmax.f32 %v5355, 0.0
    %v5668 = vmax.f32 %v5357, 0.0
    %v5669 = vmax.f32 %v5561, 0.0
    %v5670 = vmax.f32 %v5563, 0.0
    %v5671 = vmax.f32 %v4949, 0.0
    %v5672 = vmax.f32 %v4951, 0.0
    %v5673 = vmax.f32 %v5155, 0.0
    %v5674 = vmax.f32 %v5157, 0.0
    %v5675 = vmax.f32 %v5361, 0.0
    %v5676 = vmax.f32 %v5363, 0.0
    %v5677 = vmax.f32 %v5567, 0.0
    %v5678 = vmax.f32 %v5569, 0.0
    %v5679 = vmax.f32 %v4953, 0.0
    %v5680 = vmax.f32 %v4955, 0.0
    %v5681 = vmax.f32 %v5159, 0.0
    %v5682 = vmax.f32 %v5161, 0.0
    %v5683 = vmax.f32 %v5365, 0.0
    %v5684 = vmax.f32 %v5367, 0.0
    %v5685 = vmax.f32 %v5571, 0.0
    %v5686 = vmax.f32 %v5573, 0.0
    %v5687 = vpack.c.bf16 %v5583, %v5575
    %v5688 = vpack.c.bf16 %v5584, %v5576
    %v5689 = vpack.c.bf16 %v5585, %v5577
    %v5690 = vpack.c.bf16 %v5586, %v5578
    %v5691 = vpack.c.bf16 %v5587, %v5579
    %v5692 = vpack.c.bf16 %v5588, %v5580
    %v5693 = vpack.c.bf16 %v5589, %v5581
    %v5694 = vpack.c.bf16 %v5590, %v5582
    %v5695 = vpack.c.bf16 %v5599, %v5591
    %v5696 = vpack.c.bf16 %v5600, %v5592
    %v5697 = vpack.c.bf16 %v5601, %v5593
    %v5698 = vpack.c.bf16 %v5602, %v5594
    %v5699 = vpack.c.bf16 %v5603, %v5595
    %v5700 = vpack.c.bf16 %v5604, %v5596
    %v5701 = vpack.c.bf16 %v5605, %v5597
    %v5702 = vpack.c.bf16 %v5606, %v5598
    %v5703 = vpack.c.bf16 %v5615, %v5607
    %v5704 = vpack.c.bf16 %v5616, %v5608
    %v5705 = vpack.c.bf16 %v5617, %v5609
    %v5706 = vpack.c.bf16 %v5618, %v5610
    %v5707 = vpack.c.bf16 %v5619, %v5611
    %v5708 = vpack.c.bf16 %v5620, %v5612
    %v5709 = vpack.c.bf16 %v5621, %v5613
    %v5710 = vpack.c.bf16 %v5622, %v5614
    %v5711 = vpack.c.bf16 %v5631, %v5623
    %v5712 = vpack.c.bf16 %v5632, %v5624
    %v5713 = vpack.c.bf16 %v5633, %v5625
    %v5714 = vpack.c.bf16 %v5634, %v5626
    %v5715 = vpack.c.bf16 %v5635, %v5627
    %v5716 = vpack.c.bf16 %v5636, %v5628
    %v5717 = vpack.c.bf16 %v5637, %v5629
    %v5718 = vpack.c.bf16 %v5638, %v5630
    %v5719 = vpack.c.bf16 %v5647, %v5639
    %v5720 = vpack.c.bf16 %v5648, %v5640
    %v5721 = vpack.c.bf16 %v5649, %v5641
    %v5722 = vpack.c.bf16 %v5650, %v5642
    %v5723 = vpack.c.bf16 %v5651, %v5643
    %v5724 = vpack.c.bf16 %v5652, %v5644
    %v5725 = vpack.c.bf16 %v5653, %v5645
    %v5726 = vpack.c.bf16 %v5654, %v5646
    %v5727 = vpack.c.bf16 %v5663, %v5655
    %v5728 = vpack.c.bf16 %v5664, %v5656
    %v5729 = vpack.c.bf16 %v5665, %v5657
    %v5730 = vpack.c.bf16 %v5666, %v5658
    %v5731 = vpack.c.bf16 %v5667, %v5659
    %v5732 = vpack.c.bf16 %v5668, %v5660
    %v5733 = vpack.c.bf16 %v5669, %v5661
    %v5734 = vpack.c.bf16 %v5670, %v5662
    %v5735 = vpack.c.bf16 %v5679, %v5671
    %v5736 = vpack.c.bf16 %v5680, %v5672
    %v5737 = vpack.c.bf16 %v5681, %v5673
    %v5738 = vpack.c.bf16 %v5682, %v5674
    %v5739 = vpack.c.bf16 %v5683, %v5675
    %v5740 = vpack.c.bf16 %v5684, %v5676
    %v5741 = vpack.c.bf16 %v5685, %v5677
    %v5742 = vpack.c.bf16 %v5686, %v5678
    %v5743 = vmax.bf16 %v5687, %v5691
    %v5744 = vmax.bf16 %v5688, %v5692
    %v5745 = vmax.bf16 %v5689, %v5693
    %v5746 = vmax.bf16 %v5690, %v5694
    %v5747 = vmax.bf16 %v5695, %v5699
    %v5748 = vmax.bf16 %v5696, %v5700
    %v5749 = vmax.bf16 %v5697, %v5701
    %v5750 = vmax.bf16 %v5698, %v5702
    %v5751 = vmax.bf16 %v5703, %v5707
    %v5752 = vmax.bf16 %v5704, %v5708
    %v5753 = vmax.bf16 %v5705, %v5709
    %v5754 = vmax.bf16 %v5706, %v5710
    %v5755 = vmax.bf16 %v5711, %v5715
    %v5756 = vmax.bf16 %v5712, %v5716
    %v5757 = vmax.bf16 %v5713, %v5717
    %v5758 = vmax.bf16 %v5714, %v5718
    %v5759 = vmax.bf16 %v5719, %v5723
    %v5760 = vmax.bf16 %v5720, %v5724
    %v5761 = vmax.bf16 %v5721, %v5725
    %v5762 = vmax.bf16 %v5722, %v5726
    %v5763 = vmax.bf16 %v5727, %v5731
    %v5764 = vmax.bf16 %v5728, %v5732
    %v5765 = vmax.bf16 %v5729, %v5733
    %v5766 = vmax.bf16 %v5730, %v5734
    %v5767 = vmax.bf16 %v5735, %v5739
    %v5768 = vmax.bf16 %v5736, %v5740
    %v5769 = vmax.bf16 %v5737, %v5741
    %v5770 = vmax.bf16 %v5738, %v5742
    %v5799 = vcombine.low %v5743, %v5744
    %v5800 = vcombine.high %v5743, %v5744
    %v5801 = vcombine.low %v5745, %v5746
    %v5802 = vcombine.high %v5745, %v5746
    %v5804 = vunpack.c.l.s4 1983009808
    %v5805 = vunpack.c.0.s8 %v5804
    %v5806 = vlaneseq
    %v5807 = vshrl.u32 %v5806, 7
    %v5808 = vsub.s32 %v5805, %v5807
    %v5809 = vrot.slane %v5799, %v5808
    %v5811 = vunpack.c.l.s4 1983009808
    %v5812 = vunpack.c.0.s8 %v5811
    %v5813 = vlaneseq
    %v5814 = vshrl.u32 %v5813, 7
    %v5815 = vsub.s32 %v5812, %v5814
    %v5816 = vrot.slane %v5800, %v5815
    %v5818 = vunpack.c.l.s4 1983009808
    %v5819 = vunpack.c.0.s8 %v5818
    %v5820 = vlaneseq
    %v5821 = vshrl.u32 %v5820, 7
    %v5822 = vsub.s32 %v5819, %v5821
    %v5823 = vrot.slane %v5801, %v5822
    %v5825 = vunpack.c.l.s4 1983009808
    %v5826 = vunpack.c.0.s8 %v5825
    %v5827 = vlaneseq
    %v5828 = vshrl.u32 %v5827, 7
    %v5829 = vsub.s32 %v5826, %v5828
    %v5830 = vrot.slane %v5802, %v5829
    %v5831 = vcombine.low %v5809, %v5823
    %v5832 = vcombine.high %v5809, %v5823
    %v5833 = vcombine.low %v5816, %v5830
    %v5834 = vcombine.high %v5816, %v5830
    %v5835 = vcombine.low %v5747, %v5748
    %v5836 = vcombine.high %v5747, %v5748
    %v5837 = vcombine.low %v5749, %v5750
    %v5838 = vcombine.high %v5749, %v5750
    %v5840 = vunpack.c.l.s4 1983009808
    %v5841 = vunpack.c.0.s8 %v5840
    %v5842 = vlaneseq
    %v5843 = vshrl.u32 %v5842, 7
    %v5844 = vsub.s32 %v5841, %v5843
    %v5845 = vrot.slane %v5835, %v5844
    %v5847 = vunpack.c.l.s4 1983009808
    %v5848 = vunpack.c.0.s8 %v5847
    %v5849 = vlaneseq
    %v5850 = vshrl.u32 %v5849, 7
    %v5851 = vsub.s32 %v5848, %v5850
    %v5852 = vrot.slane %v5836, %v5851
    %v5854 = vunpack.c.l.s4 1983009808
    %v5855 = vunpack.c.0.s8 %v5854
    %v5856 = vlaneseq
    %v5857 = vshrl.u32 %v5856, 7
    %v5858 = vsub.s32 %v5855, %v5857
    %v5859 = vrot.slane %v5837, %v5858
    %v5861 = vunpack.c.l.s4 1983009808
    %v5862 = vunpack.c.0.s8 %v5861
    %v5863 = vlaneseq
    %v5864 = vshrl.u32 %v5863, 7
    %v5865 = vsub.s32 %v5862, %v5864
    %v5866 = vrot.slane %v5838, %v5865
    %v5867 = vcombine.low %v5845, %v5859
    %v5868 = vcombine.high %v5845, %v5859
    %v5869 = vcombine.low %v5852, %v5866
    %v5870 = vcombine.high %v5852, %v5866
    %v5871 = vcombine.low %v5751, %v5752
    %v5872 = vcombine.high %v5751, %v5752
    %v5873 = vcombine.low %v5753, %v5754
    %v5874 = vcombine.high %v5753, %v5754
    %v5876 = vunpack.c.l.s4 1983009808
    %v5877 = vunpack.c.0.s8 %v5876
    %v5878 = vlaneseq
    %v5879 = vshrl.u32 %v5878, 7
    %v5880 = vsub.s32 %v5877, %v5879
    %v5881 = vrot.slane %v5871, %v5880
    %v5883 = vunpack.c.l.s4 1983009808
    %v5884 = vunpack.c.0.s8 %v5883
    %v5885 = vlaneseq
    %v5886 = vshrl.u32 %v5885, 7
    %v5887 = vsub.s32 %v5884, %v5886
    %v5888 = vrot.slane %v5872, %v5887
    %v5890 = vunpack.c.l.s4 1983009808
    %v5891 = vunpack.c.0.s8 %v5890
    %v5892 = vlaneseq
    %v5893 = vshrl.u32 %v5892, 7
    %v5894 = vsub.s32 %v5891, %v5893
    %v5895 = vrot.slane %v5873, %v5894
    %v5897 = vunpack.c.l.s4 1983009808
    %v5898 = vunpack.c.0.s8 %v5897
    %v5899 = vlaneseq
    %v5900 = vshrl.u32 %v5899, 7
    %v5901 = vsub.s32 %v5898, %v5900
    %v5902 = vrot.slane %v5874, %v5901
    %v5903 = vcombine.low %v5881, %v5895
    %v5904 = vcombine.high %v5881, %v5895
    %v5905 = vcombine.low %v5888, %v5902
    %v5906 = vcombine.high %v5888, %v5902
    %v5907 = vcombine.low %v5755, %v5756
    %v5908 = vcombine.high %v5755, %v5756
    %v5909 = vcombine.low %v5757, %v5758
    %v5910 = vcombine.high %v5757, %v5758
    %v5912 = vunpack.c.l.s4 1983009808
    %v5913 = vunpack.c.0.s8 %v5912
    %v5914 = vlaneseq
    %v5915 = vshrl.u32 %v5914, 7
    %v5916 = vsub.s32 %v5913, %v5915
    %v5917 = vrot.slane %v5907, %v5916
    %v5919 = vunpack.c.l.s4 1983009808
    %v5920 = vunpack.c.0.s8 %v5919
    %v5921 = vlaneseq
    %v5922 = vshrl.u32 %v5921, 7
    %v5923 = vsub.s32 %v5920, %v5922
    %v5924 = vrot.slane %v5908, %v5923
    %v5926 = vunpack.c.l.s4 1983009808
    %v5927 = vunpack.c.0.s8 %v5926
    %v5928 = vlaneseq
    %v5929 = vshrl.u32 %v5928, 7
    %v5930 = vsub.s32 %v5927, %v5929
    %v5931 = vrot.slane %v5909, %v5930
    %v5933 = vunpack.c.l.s4 1983009808
    %v5934 = vunpack.c.0.s8 %v5933
    %v5935 = vlaneseq
    %v5936 = vshrl.u32 %v5935, 7
    %v5937 = vsub.s32 %v5934, %v5936
    %v5938 = vrot.slane %v5910, %v5937
    %v5939 = vcombine.low %v5917, %v5931
    %v5940 = vcombine.high %v5917, %v5931
    %v5941 = vcombine.low %v5924, %v5938
    %v5942 = vcombine.high %v5924, %v5938
    %v5943 = vcombine.low %v5759, %v5760
    %v5944 = vcombine.high %v5759, %v5760
    %v5945 = vcombine.low %v5761, %v5762
    %v5946 = vcombine.high %v5761, %v5762
    %v5948 = vunpack.c.l.s4 1983009808
    %v5949 = vunpack.c.0.s8 %v5948
    %v5950 = vlaneseq
    %v5951 = vshrl.u32 %v5950, 7
    %v5952 = vsub.s32 %v5949, %v5951
    %v5953 = vrot.slane %v5943, %v5952
    %v5955 = vunpack.c.l.s4 1983009808
    %v5956 = vunpack.c.0.s8 %v5955
    %v5957 = vlaneseq
    %v5958 = vshrl.u32 %v5957, 7
    %v5959 = vsub.s32 %v5956, %v5958
    %v5960 = vrot.slane %v5944, %v5959
    %v5962 = vunpack.c.l.s4 1983009808
    %v5963 = vunpack.c.0.s8 %v5962
    %v5964 = vlaneseq
    %v5965 = vshrl.u32 %v5964, 7
    %v5966 = vsub.s32 %v5963, %v5965
    %v5967 = vrot.slane %v5945, %v5966
    %v5969 = vunpack.c.l.s4 1983009808
    %v5970 = vunpack.c.0.s8 %v5969
    %v5971 = vlaneseq
    %v5972 = vshrl.u32 %v5971, 7
    %v5973 = vsub.s32 %v5970, %v5972
    %v5974 = vrot.slane %v5946, %v5973
    %v5975 = vcombine.low %v5953, %v5967
    %v5976 = vcombine.high %v5953, %v5967
    %v5977 = vcombine.low %v5960, %v5974
    %v5978 = vcombine.high %v5960, %v5974
    %v5979 = vcombine.low %v5763, %v5764
    %v5980 = vcombine.high %v5763, %v5764
    %v5981 = vcombine.low %v5765, %v5766
    %v5982 = vcombine.high %v5765, %v5766
    %v5984 = vunpack.c.l.s4 1983009808
    %v5985 = vunpack.c.0.s8 %v5984
    %v5986 = vlaneseq
    %v5987 = vshrl.u32 %v5986, 7
    %v5988 = vsub.s32 %v5985, %v5987
    %v5989 = vrot.slane %v5979, %v5988
    %v5991 = vunpack.c.l.s4 1983009808
    %v5992 = vunpack.c.0.s8 %v5991
    %v5993 = vlaneseq
    %v5994 = vshrl.u32 %v5993, 7
    %v5995 = vsub.s32 %v5992, %v5994
    %v5996 = vrot.slane %v5980, %v5995
    %v5998 = vunpack.c.l.s4 1983009808
    %v5999 = vunpack.c.0.s8 %v5998
    %v6000 = vlaneseq
    %v6001 = vshrl.u32 %v6000, 7
    %v6002 = vsub.s32 %v5999, %v6001
    %v6003 = vrot.slane %v5981, %v6002
    %v6005 = vunpack.c.l.s4 1983009808
    %v6006 = vunpack.c.0.s8 %v6005
    %v6007 = vlaneseq
    %v6008 = vshrl.u32 %v6007, 7
    %v6009 = vsub.s32 %v6006, %v6008
    %v6010 = vrot.slane %v5982, %v6009
    %v6011 = vcombine.low %v5989, %v6003
    %v6012 = vcombine.high %v5989, %v6003
    %v6013 = vcombine.low %v5996, %v6010
    %v6014 = vcombine.high %v5996, %v6010
    %v6015 = vcombine.low %v5767, %v5768
    %v6016 = vcombine.high %v5767, %v5768
    %v6017 = vcombine.low %v5769, %v5770
    %v6018 = vcombine.high %v5769, %v5770
    %v6020 = vunpack.c.l.s4 1983009808
    %v6021 = vunpack.c.0.s8 %v6020
    %v6022 = vlaneseq
    %v6023 = vshrl.u32 %v6022, 7
    %v6024 = vsub.s32 %v6021, %v6023
    %v6025 = vrot.slane %v6015, %v6024
    %v6027 = vunpack.c.l.s4 1983009808
    %v6028 = vunpack.c.0.s8 %v6027
    %v6029 = vlaneseq
    %v6030 = vshrl.u32 %v6029, 7
    %v6031 = vsub.s32 %v6028, %v6030
    %v6032 = vrot.slane %v6016, %v6031
    %v6034 = vunpack.c.l.s4 1983009808
    %v6035 = vunpack.c.0.s8 %v6034
    %v6036 = vlaneseq
    %v6037 = vshrl.u32 %v6036, 7
    %v6038 = vsub.s32 %v6035, %v6037
    %v6039 = vrot.slane %v6017, %v6038
    %v6041 = vunpack.c.l.s4 1983009808
    %v6042 = vunpack.c.0.s8 %v6041
    %v6043 = vlaneseq
    %v6044 = vshrl.u32 %v6043, 7
    %v6045 = vsub.s32 %v6042, %v6044
    %v6046 = vrot.slane %v6018, %v6045
    %v6047 = vcombine.low %v6025, %v6039
    %v6048 = vcombine.high %v6025, %v6039
    %v6049 = vcombine.low %v6032, %v6046
    %v6050 = vcombine.high %v6032, %v6046
    %v6051 = vunpack.i.l.s16 %v5831
    %v6052 = vunpack.i.h.s16 %v5831
    %v6053 = vpack.c.b16 %v6052, %v6051
    %v6055 = vunpack.i.l.s16 %v5832
    %v6056 = vunpack.i.h.s16 %v5832
    %v6057 = vpack.c.b16 %v6056, %v6055
    %v6059 = vunpack.i.l.s16 %v5833
    %v6060 = vunpack.i.h.s16 %v5833
    %v6061 = vpack.c.b16 %v6060, %v6059
    %v6063 = vunpack.i.l.s16 %v5834
    %v6064 = vunpack.i.h.s16 %v5834
    %v6065 = vpack.c.b16 %v6064, %v6063
    %v6067 = vunpack.i.l.s16 %v5867
    %v6068 = vunpack.i.h.s16 %v5867
    %v6069 = vpack.c.b16 %v6068, %v6067
    %v6071 = vunpack.i.l.s16 %v5868
    %v6072 = vunpack.i.h.s16 %v5868
    %v6073 = vpack.c.b16 %v6072, %v6071
    %v6075 = vunpack.i.l.s16 %v5869
    %v6076 = vunpack.i.h.s16 %v5869
    %v6077 = vpack.c.b16 %v6076, %v6075
    %v6079 = vunpack.i.l.s16 %v5870
    %v6080 = vunpack.i.h.s16 %v5870
    %v6081 = vpack.c.b16 %v6080, %v6079
    %v6083 = vunpack.i.l.s16 %v5903
    %v6084 = vunpack.i.h.s16 %v5903
    %v6085 = vpack.c.b16 %v6084, %v6083
    %v6087 = vunpack.i.l.s16 %v5904
    %v6088 = vunpack.i.h.s16 %v5904
    %v6089 = vpack.c.b16 %v6088, %v6087
    %v6091 = vunpack.i.l.s16 %v5905
    %v6092 = vunpack.i.h.s16 %v5905
    %v6093 = vpack.c.b16 %v6092, %v6091
    %v6095 = vunpack.i.l.s16 %v5906
    %v6096 = vunpack.i.h.s16 %v5906
    %v6097 = vpack.c.b16 %v6096, %v6095
    %v6099 = vunpack.i.l.s16 %v5939
    %v6100 = vunpack.i.h.s16 %v5939
    %v6101 = vpack.c.b16 %v6100, %v6099
    %v6103 = vunpack.i.l.s16 %v5940
    %v6104 = vunpack.i.h.s16 %v5940
    %v6105 = vpack.c.b16 %v6104, %v6103
    %v6107 = vunpack.i.l.s16 %v5941
    %v6108 = vunpack.i.h.s16 %v5941
    %v6109 = vpack.c.b16 %v6108, %v6107
    %v6111 = vunpack.i.l.s16 %v5942
    %v6112 = vunpack.i.h.s16 %v5942
    %v6113 = vpack.c.b16 %v6112, %v6111
    %v6115 = vunpack.i.l.s16 %v5975
    %v6116 = vunpack.i.h.s16 %v5975
    %v6117 = vpack.c.b16 %v6116, %v6115
    %v6119 = vunpack.i.l.s16 %v5976
    %v6120 = vunpack.i.h.s16 %v5976
    %v6121 = vpack.c.b16 %v6120, %v6119
    %v6123 = vunpack.i.l.s16 %v5977
    %v6124 = vunpack.i.h.s16 %v5977
    %v6125 = vpack.c.b16 %v6124, %v6123
    %v6127 = vunpack.i.l.s16 %v5978
    %v6128 = vunpack.i.h.s16 %v5978
    %v6129 = vpack.c.b16 %v6128, %v6127
    %v6131 = vunpack.i.l.s16 %v6011
    %v6132 = vunpack.i.h.s16 %v6011
    %v6133 = vpack.c.b16 %v6132, %v6131
    %v6135 = vunpack.i.l.s16 %v6012
    %v6136 = vunpack.i.h.s16 %v6012
    %v6137 = vpack.c.b16 %v6136, %v6135
    %v6139 = vunpack.i.l.s16 %v6013
    %v6140 = vunpack.i.h.s16 %v6013
    %v6141 = vpack.c.b16 %v6140, %v6139
    %v6143 = vunpack.i.l.s16 %v6014
    %v6144 = vunpack.i.h.s16 %v6014
    %v6145 = vpack.c.b16 %v6144, %v6143
    %v6147 = vunpack.i.l.s16 %v6047
    %v6148 = vunpack.i.h.s16 %v6047
    %v6149 = vpack.c.b16 %v6148, %v6147
    %v6151 = vunpack.i.l.s16 %v6048
    %v6152 = vunpack.i.h.s16 %v6048
    %v6153 = vpack.c.b16 %v6152, %v6151
    %v6155 = vunpack.i.l.s16 %v6049
    %v6156 = vunpack.i.h.s16 %v6049
    %v6157 = vpack.c.b16 %v6156, %v6155
    %v6159 = vunpack.i.l.s16 %v6050
    %v6160 = vunpack.i.h.s16 %v6050
    %v6161 = vpack.c.b16 %v6160, %v6159
    %v6163 = vrot.slane %v6053, 4
    %v6164 = vrot.slane %v6057, 4
    %v6165 = vrot.slane %v6061, 4
    %v6166 = vrot.slane %v6065, 4
    %v6167 = vrot.slane %v6069, 4
    %v6168 = vrot.slane %v6073, 4
    %v6169 = vrot.slane %v6077, 4
    %v6170 = vrot.slane %v6081, 4
    %v6171 = vrot.slane %v6085, 4
    %v6172 = vrot.slane %v6089, 4
    %v6173 = vrot.slane %v6093, 4
    %v6174 = vrot.slane %v6097, 4
    %v6175 = vrot.slane %v6101, 4
    %v6176 = vrot.slane %v6105, 4
    %v6177 = vrot.slane %v6109, 4
    %v6178 = vrot.slane %v6113, 4
    %v6179 = vrot.slane %v6117, 4
    %v6180 = vrot.slane %v6121, 4
    %v6181 = vrot.slane %v6125, 4
    %v6182 = vrot.slane %v6129, 4
    %v6183 = vrot.slane %v6133, 4
    %v6184 = vrot.slane %v6137, 4
    %v6185 = vrot.slane %v6141, 4
    %v6186 = vrot.slane %v6145, 4
    %v6187 = vrot.slane %v6149, 4
    %v6188 = vrot.slane %v6153, 4
    %v6189 = vrot.slane %v6157, 4
    %v6190 = vrot.slane %v6161, 4
    %v6219 = vmax.bf16 %v6053, %v6163
    %v6220 = vmax.bf16 %v6057, %v6164
    %v6221 = vmax.bf16 %v6061, %v6165
    %v6222 = vmax.bf16 %v6065, %v6166
    %v6223 = vmax.bf16 %v6069, %v6167
    %v6224 = vmax.bf16 %v6073, %v6168
    %v6225 = vmax.bf16 %v6077, %v6169
    %v6226 = vmax.bf16 %v6081, %v6170
    %v6227 = vmax.bf16 %v6085, %v6171
    %v6228 = vmax.bf16 %v6089, %v6172
    %v6229 = vmax.bf16 %v6093, %v6173
    %v6230 = vmax.bf16 %v6097, %v6174
    %v6231 = vmax.bf16 %v6101, %v6175
    %v6232 = vmax.bf16 %v6105, %v6176
    %v6233 = vmax.bf16 %v6109, %v6177
    %v6234 = vmax.bf16 %v6113, %v6178
    %v6235 = vmax.bf16 %v6117, %v6179
    %v6236 = vmax.bf16 %v6121, %v6180
    %v6237 = vmax.bf16 %v6125, %v6181
    %v6238 = vmax.bf16 %v6129, %v6182
    %v6239 = vmax.bf16 %v6133, %v6183
    %v6240 = vmax.bf16 %v6137, %v6184
    %v6241 = vmax.bf16 %v6141, %v6185
    %v6242 = vmax.bf16 %v6145, %v6186
    %v6243 = vmax.bf16 %v6149, %v6187
    %v6244 = vmax.bf16 %v6153, %v6188
    %v6245 = vmax.bf16 %v6157, %v6189
    %v6246 = vmax.bf16 %v6161, %v6190
    %v6275 = vcombine.low %v6219, %v6220
    %v6276 = vcombine.low %v6221, %v6222
    %v6277 = vcombine.low %v6223, %v6224
    %v6278 = vcombine.low %v6225, %v6226
    %v6280 = vunpack.c.l.s4 1966171168
    %v6281 = vunpack.c.0.s8 %v6280
    %v6282 = vlaneseq
    %v6283 = vshrl.u32 %v6282, 7
    %v6284 = vsub.s32 %v6281, %v6283
    %v6285 = vrot.slane %v6275, %v6284
    %v6287 = vunpack.c.l.s4 1966171168
    %v6288 = vunpack.c.0.s8 %v6287
    %v6289 = vlaneseq
    %v6290 = vshrl.u32 %v6289, 7
    %v6291 = vsub.s32 %v6288, %v6290
    %v6292 = vrot.slane %v6276, %v6291
    %v6294 = vunpack.c.l.s4 1966171168
    %v6295 = vunpack.c.0.s8 %v6294
    %v6296 = vlaneseq
    %v6297 = vshrl.u32 %v6296, 7
    %v6298 = vsub.s32 %v6295, %v6297
    %v6299 = vrot.slane %v6277, %v6298
    %v6301 = vunpack.c.l.s4 1966171168
    %v6302 = vunpack.c.0.s8 %v6301
    %v6303 = vlaneseq
    %v6304 = vshrl.u32 %v6303, 7
    %v6305 = vsub.s32 %v6302, %v6304
    %v6306 = vrot.slane %v6278, %v6305
    %v6307 = vcombine.low %v6285, %v6292
    %v6308 = vcombine.high %v6285, %v6292
    %v6309 = vcombine.low %v6299, %v6306
    %v6310 = vcombine.high %v6299, %v6306
    %v6312 = vunpack.c.l.s4 1966171168
    %v6313 = vunpack.c.0.s8 %v6312
    %v6314 = vlaneseq
    %v6315 = vshrl.u32 %v6314, 7
    %v6316 = vsub.s32 %v6313, %v6315
    %v6317 = vrot.slane %v6307, %v6316
    %v6319 = vunpack.c.l.s4 1966171168
    %v6320 = vunpack.c.0.s8 %v6319
    %v6321 = vlaneseq
    %v6322 = vshrl.u32 %v6321, 7
    %v6323 = vsub.s32 %v6320, %v6322
    %v6324 = vrot.slane %v6308, %v6323
    %v6326 = vunpack.c.l.s4 1966171168
    %v6327 = vunpack.c.0.s8 %v6326
    %v6328 = vlaneseq
    %v6329 = vshrl.u32 %v6328, 7
    %v6330 = vsub.s32 %v6327, %v6329
    %v6331 = vrot.slane %v6309, %v6330
    %v6333 = vunpack.c.l.s4 1966171168
    %v6334 = vunpack.c.0.s8 %v6333
    %v6335 = vlaneseq
    %v6336 = vshrl.u32 %v6335, 7
    %v6337 = vsub.s32 %v6334, %v6336
    %v6338 = vrot.slane %v6310, %v6337
    %v6339 = vcombine.low %v6317, %v6331
    %v6340 = vcombine.high %v6317, %v6331
    %v6341 = vcombine.low %v6324, %v6338
    %v6342 = vcombine.high %v6324, %v6338
    %v6343 = vcombine.low %v6227, %v6228
    %v6344 = vcombine.low %v6229, %v6230
    %v6345 = vcombine.low %v6231, %v6232
    %v6346 = vcombine.low %v6233, %v6234
    %v6348 = vunpack.c.l.s4 1966171168
    %v6349 = vunpack.c.0.s8 %v6348
    %v6350 = vlaneseq
    %v6351 = vshrl.u32 %v6350, 7
    %v6352 = vsub.s32 %v6349, %v6351
    %v6353 = vrot.slane %v6343, %v6352
    %v6355 = vunpack.c.l.s4 1966171168
    %v6356 = vunpack.c.0.s8 %v6355
    %v6357 = vlaneseq
    %v6358 = vshrl.u32 %v6357, 7
    %v6359 = vsub.s32 %v6356, %v6358
    %v6360 = vrot.slane %v6344, %v6359
    %v6362 = vunpack.c.l.s4 1966171168
    %v6363 = vunpack.c.0.s8 %v6362
    %v6364 = vlaneseq
    %v6365 = vshrl.u32 %v6364, 7
    %v6366 = vsub.s32 %v6363, %v6365
    %v6367 = vrot.slane %v6345, %v6366
    %v6369 = vunpack.c.l.s4 1966171168
    %v6370 = vunpack.c.0.s8 %v6369
    %v6371 = vlaneseq
    %v6372 = vshrl.u32 %v6371, 7
    %v6373 = vsub.s32 %v6370, %v6372
    %v6374 = vrot.slane %v6346, %v6373
    %v6375 = vcombine.low %v6353, %v6360
    %v6376 = vcombine.high %v6353, %v6360
    %v6377 = vcombine.low %v6367, %v6374
    %v6378 = vcombine.high %v6367, %v6374
    %v6380 = vunpack.c.l.s4 1966171168
    %v6381 = vunpack.c.0.s8 %v6380
    %v6382 = vlaneseq
    %v6383 = vshrl.u32 %v6382, 7
    %v6384 = vsub.s32 %v6381, %v6383
    %v6385 = vrot.slane %v6375, %v6384
    %v6387 = vunpack.c.l.s4 1966171168
    %v6388 = vunpack.c.0.s8 %v6387
    %v6389 = vlaneseq
    %v6390 = vshrl.u32 %v6389, 7
    %v6391 = vsub.s32 %v6388, %v6390
    %v6392 = vrot.slane %v6376, %v6391
    %v6394 = vunpack.c.l.s4 1966171168
    %v6395 = vunpack.c.0.s8 %v6394
    %v6396 = vlaneseq
    %v6397 = vshrl.u32 %v6396, 7
    %v6398 = vsub.s32 %v6395, %v6397
    %v6399 = vrot.slane %v6377, %v6398
    %v6401 = vunpack.c.l.s4 1966171168
    %v6402 = vunpack.c.0.s8 %v6401
    %v6403 = vlaneseq
    %v6404 = vshrl.u32 %v6403, 7
    %v6405 = vsub.s32 %v6402, %v6404
    %v6406 = vrot.slane %v6378, %v6405
    %v6407 = vcombine.low %v6385, %v6399
    %v6408 = vcombine.high %v6385, %v6399
    %v6409 = vcombine.low %v6392, %v6406
    %v6410 = vcombine.high %v6392, %v6406
    %v6411 = vcombine.low %v6235, %v6236
    %v6412 = vcombine.low %v6237, %v6238
    %v6413 = vcombine.low %v6239, %v6240
    %v6414 = vcombine.low %v6241, %v6242
    %v6416 = vunpack.c.l.s4 1966171168
    %v6417 = vunpack.c.0.s8 %v6416
    %v6418 = vlaneseq
    %v6419 = vshrl.u32 %v6418, 7
    %v6420 = vsub.s32 %v6417, %v6419
    %v6421 = vrot.slane %v6411, %v6420
    %v6423 = vunpack.c.l.s4 1966171168
    %v6424 = vunpack.c.0.s8 %v6423
    %v6425 = vlaneseq
    %v6426 = vshrl.u32 %v6425, 7
    %v6427 = vsub.s32 %v6424, %v6426
    %v6428 = vrot.slane %v6412, %v6427
    %v6430 = vunpack.c.l.s4 1966171168
    %v6431 = vunpack.c.0.s8 %v6430
    %v6432 = vlaneseq
    %v6433 = vshrl.u32 %v6432, 7
    %v6434 = vsub.s32 %v6431, %v6433
    %v6435 = vrot.slane %v6413, %v6434
    %v6437 = vunpack.c.l.s4 1966171168
    %v6438 = vunpack.c.0.s8 %v6437
    %v6439 = vlaneseq
    %v6440 = vshrl.u32 %v6439, 7
    %v6441 = vsub.s32 %v6438, %v6440
    %v6442 = vrot.slane %v6414, %v6441
    %v6443 = vcombine.low %v6421, %v6428
    %v6444 = vcombine.high %v6421, %v6428
    %v6445 = vcombine.low %v6435, %v6442
    %v6446 = vcombine.high %v6435, %v6442
    %v6448 = vunpack.c.l.s4 1966171168
    %v6449 = vunpack.c.0.s8 %v6448
    %v6450 = vlaneseq
    %v6451 = vshrl.u32 %v6450, 7
    %v6452 = vsub.s32 %v6449, %v6451
    %v6453 = vrot.slane %v6443, %v6452
    %v6455 = vunpack.c.l.s4 1966171168
    %v6456 = vunpack.c.0.s8 %v6455
    %v6457 = vlaneseq
    %v6458 = vshrl.u32 %v6457, 7
    %v6459 = vsub.s32 %v6456, %v6458
    %v6460 = vrot.slane %v6444, %v6459
    %v6462 = vunpack.c.l.s4 1966171168
    %v6463 = vunpack.c.0.s8 %v6462
    %v6464 = vlaneseq
    %v6465 = vshrl.u32 %v6464, 7
    %v6466 = vsub.s32 %v6463, %v6465
    %v6467 = vrot.slane %v6445, %v6466
    %v6469 = vunpack.c.l.s4 1966171168
    %v6470 = vunpack.c.0.s8 %v6469
    %v6471 = vlaneseq
    %v6472 = vshrl.u32 %v6471, 7
    %v6473 = vsub.s32 %v6470, %v6472
    %v6474 = vrot.slane %v6446, %v6473
    %v6475 = vcombine.low %v6453, %v6467
    %v6476 = vcombine.high %v6453, %v6467
    %v6477 = vcombine.low %v6460, %v6474
    %v6478 = vcombine.high %v6460, %v6474
    %v6479 = vcombine.low %v6243, %v6244
    %v6480 = vcombine.low %v6245, %v6246
    %v6482 = vunpack.c.l.s4 1966171168
    %v6483 = vunpack.c.0.s8 %v6482
    %v6484 = vlaneseq
    %v6485 = vshrl.u32 %v6484, 7
    %v6486 = vsub.s32 %v6483, %v6485
    %v6487 = vrot.slane %v6479, %v6486
    %v6489 = vunpack.c.l.s4 1966171168
    %v6490 = vunpack.c.0.s8 %v6489
    %v6491 = vlaneseq
    %v6492 = vshrl.u32 %v6491, 7
    %v6493 = vsub.s32 %v6490, %v6492
    %v6494 = vrot.slane %v6480, %v6493
    %v6495 = vcombine.low %v6487, %v6494
    %v6496 = vcombine.high %v6487, %v6494
    %v6498 = vunpack.c.l.s4 1966171168
    %v6499 = vunpack.c.0.s8 %v6498
    %v6500 = vlaneseq
    %v6501 = vshrl.u32 %v6500, 7
    %v6502 = vsub.s32 %v6499, %v6501
    %v6503 = vrot.slane %v6495, %v6502
    %v6505 = vunpack.c.l.s4 1966171168
    %v6506 = vunpack.c.0.s8 %v6505
    %v6507 = vlaneseq
    %v6508 = vshrl.u32 %v6507, 7
    %v6509 = vsub.s32 %v6506, %v6508
    %v6510 = vrot.slane %v6496, %v6509
    %v6511 = vcombine.high %v6503, %v6503
    %v6512 = vcombine.high %v6510, %v6510
    %v6529 = vsel %vm173, %v6339, 0
    %v6530 = vrot.slane %v6339, 3
    %vm6531 = vsmask.f32 770
    %v6532 = vsel %vm6531, %v6530, %v6529
    %v6533 = vrot.slane %v6339, 6
    %vm6534 = vsmask.f32 1284
    %v6535 = vsel %vm6534, %v6533, %v6532
    %v6536 = vrot.slane %v6407, 1
    %vm6537 = vsmask.f32 1798
    %v6538 = vsel %vm6537, %v6536, %v6535
    %v6539 = vrot.slane %v6407, 4
    %vm6540 = vsmask.f32 2312
    %v6541 = vsel %vm6540, %v6539, %v6538
    %v6542 = vrot.slane %v6475, 7
    %vm6543 = vsmask.f32 2826
    %v6544 = vsel %vm6543, %v6542, %v6541
    %v6545 = vrot.slane %v6475, 2
    %vm6546 = vsmask.f32 3340
    %v6547 = vsel %vm6546, %v6545, %v6544
    %v6548 = vrot.slane %v6503, 5
    %vm6549 = vsmask.f32 3854
    %v6550 = vsel %vm6549, %v6548, %v6547
    %v6551 = vsel %vm173, %v6341, 0
    %v6552 = vrot.slane %v6341, 3
    %v6553 = vsel %vm6531, %v6552, %v6551
    %v6554 = vrot.slane %v6341, 6
    %v6555 = vsel %vm6534, %v6554, %v6553
    %v6556 = vrot.slane %v6409, 1
    %v6557 = vsel %vm6537, %v6556, %v6555
    %v6558 = vrot.slane %v6409, 4
    %v6559 = vsel %vm6540, %v6558, %v6557
    %v6560 = vrot.slane %v6477, 7
    %v6561 = vsel %vm6543, %v6560, %v6559
    %v6562 = vrot.slane %v6477, 2
    %v6563 = vsel %vm6546, %v6562, %v6561
    %v6564 = vrot.slane %v6510, 5
    %v6565 = vsel %vm6549, %v6564, %v6563
    %v6566 = vsel %vm173, %v6340, 0
    %v6567 = vrot.slane %v6340, 3
    %v6568 = vsel %vm6531, %v6567, %v6566
    %v6569 = vrot.slane %v6340, 6
    %v6570 = vsel %vm6534, %v6569, %v6568
    %v6571 = vrot.slane %v6408, 1
    %v6572 = vsel %vm6537, %v6571, %v6570
    %v6573 = vrot.slane %v6408, 4
    %v6574 = vsel %vm6540, %v6573, %v6572
    %v6575 = vrot.slane %v6476, 7
    %v6576 = vsel %vm6543, %v6575, %v6574
    %v6577 = vrot.slane %v6476, 2
    %v6578 = vsel %vm6546, %v6577, %v6576
    %v6579 = vrot.slane %v6511, 5
    %v6580 = vsel %vm6549, %v6579, %v6578
    %v6581 = vsel %vm173, %v6342, 0
    %v6582 = vrot.slane %v6342, 3
    %v6583 = vsel %vm6531, %v6582, %v6581
    %v6584 = vrot.slane %v6342, 6
    %v6585 = vsel %vm6534, %v6584, %v6583
    %v6586 = vrot.slane %v6410, 1
    %v6587 = vsel %vm6537, %v6586, %v6585
    %v6588 = vrot.slane %v6410, 4
    %v6589 = vsel %vm6540, %v6588, %v6587
    %v6590 = vrot.slane %v6478, 7
    %v6591 = vsel %vm6543, %v6590, %v6589
    %v6592 = vrot.slane %v6478, 2
    %v6593 = vsel %vm6546, %v6592, %v6591
    %v6594 = vrot.slane %v6512, 5
    %v6595 = vsel %vm6549, %v6594, %v6593
    %v6597 = vshrl.u32 %v6339, 16
    %v6599 = vsel %vm173, %v6597, 0
    %v6600 = vrot.slane %v6339, 4
    %v6602 = vshll.u32 %v6600, 16
    %v6604 = vsel %vm6531, %v6602, %v6599
    %v6606 = vshrl.u32 %v6533, 16
    %v6608 = vsel %vm6534, %v6606, %v6604
    %v6609 = vrot.slane %v6407, 2
    %v6611 = vshll.u32 %v6609, 16
    %v6613 = vsel %vm6537, %v6611, %v6608
    %v6615 = vshrl.u32 %v6539, 16
    %v6617 = vsel %vm6540, %v6615, %v6613
    %v6619 = vshll.u32 %v6475, 16
    %v6621 = vsel %vm6543, %v6619, %v6617
    %v6623 = vshrl.u32 %v6545, 16
    %v6625 = vsel %vm6546, %v6623, %v6621
    %v6626 = vrot.slane %v6503, 6
    %v6628 = vshll.u32 %v6626, 16
    %v6630 = vsel %vm6549, %v6628, %v6625
    %v6632 = vshrl.u32 %v6341, 16
    %v6634 = vsel %vm173, %v6632, 0
    %v6635 = vrot.slane %v6341, 4
    %v6637 = vshll.u32 %v6635, 16
    %v6639 = vsel %vm6531, %v6637, %v6634
    %v6641 = vshrl.u32 %v6554, 16
    %v6643 = vsel %vm6534, %v6641, %v6639
    %v6644 = vrot.slane %v6409, 2
    %v6646 = vshll.u32 %v6644, 16
    %v6648 = vsel %vm6537, %v6646, %v6643
    %v6650 = vshrl.u32 %v6558, 16
    %v6652 = vsel %vm6540, %v6650, %v6648
    %v6654 = vshll.u32 %v6477, 16
    %v6656 = vsel %vm6543, %v6654, %v6652
    %v6658 = vshrl.u32 %v6562, 16
    %v6660 = vsel %vm6546, %v6658, %v6656
    %v6661 = vrot.slane %v6510, 6
    %v6663 = vshll.u32 %v6661, 16
    %v6665 = vsel %vm6549, %v6663, %v6660
    %v6667 = vshrl.u32 %v6340, 16
    %v6669 = vsel %vm173, %v6667, 0
    %v6670 = vrot.slane %v6340, 4
    %v6672 = vshll.u32 %v6670, 16
    %v6674 = vsel %vm6531, %v6672, %v6669
    %v6676 = vshrl.u32 %v6569, 16
    %v6678 = vsel %vm6534, %v6676, %v6674
    %v6679 = vrot.slane %v6408, 2
    %v6681 = vshll.u32 %v6679, 16
    %v6683 = vsel %vm6537, %v6681, %v6678
    %v6685 = vshrl.u32 %v6573, 16
    %v6687 = vsel %vm6540, %v6685, %v6683
    %v6689 = vshll.u32 %v6476, 16
    %v6691 = vsel %vm6543, %v6689, %v6687
    %v6693 = vshrl.u32 %v6577, 16
    %v6695 = vsel %vm6546, %v6693, %v6691
    %v6696 = vrot.slane %v6511, 6
    %v6698 = vshll.u32 %v6696, 16
    %v6700 = vsel %vm6549, %v6698, %v6695
    %v6702 = vshrl.u32 %v6342, 16
    %v6704 = vsel %vm173, %v6702, 0
    %v6705 = vrot.slane %v6342, 4
    %v6707 = vshll.u32 %v6705, 16
    %v6709 = vsel %vm6531, %v6707, %v6704
    %v6711 = vshrl.u32 %v6584, 16
    %v6713 = vsel %vm6534, %v6711, %v6709
    %v6714 = vrot.slane %v6410, 2
    %v6716 = vshll.u32 %v6714, 16
    %v6718 = vsel %vm6537, %v6716, %v6713
    %v6720 = vshrl.u32 %v6588, 16
    %v6722 = vsel %vm6540, %v6720, %v6718
    %v6724 = vshll.u32 %v6478, 16
    %v6726 = vsel %vm6543, %v6724, %v6722
    %v6728 = vshrl.u32 %v6592, 16
    %v6730 = vsel %vm6546, %v6728, %v6726
    %v6731 = vrot.slane %v6512, 6
    %v6733 = vshll.u32 %v6731, 16
    %v6735 = vsel %vm6549, %v6733, %v6730
    %v6736 = vrot.slane %v6339, 1
    %v6737 = vsel %vm173, %v6736, 0
    %v6738 = vsel %vm6531, %v6600, %v6737
    %v6739 = vrot.slane %v6407, 7
    %v6740 = vsel %vm6534, %v6739, %v6738
    %v6741 = vsel %vm6537, %v6609, %v6740
    %v6742 = vrot.slane %v6407, 5
    %v6743 = vsel %vm6540, %v6742, %v6741
    %v6744 = vsel %vm6543, %v6475, %v6743
    %v6745 = vrot.slane %v6475, 3
    %v6746 = vsel %vm6546, %v6745, %v6744
    %v6747 = vsel %vm6549, %v6626, %v6746
    %v6748 = vrot.slane %v6341, 1
    %v6749 = vsel %vm173, %v6748, 0
    %v6750 = vsel %vm6531, %v6635, %v6749
    %v6751 = vrot.slane %v6409, 7
    %v6752 = vsel %vm6534, %v6751, %v6750
    %v6753 = vsel %vm6537, %v6644, %v6752
    %v6754 = vrot.slane %v6409, 5
    %v6755 = vsel %vm6540, %v6754, %v6753
    %v6756 = vsel %vm6543, %v6477, %v6755
    %v6757 = vrot.slane %v6477, 3
    %v6758 = vsel %vm6546, %v6757, %v6756
    %v6759 = vsel %vm6549, %v6661, %v6758
    %v6760 = vrot.slane %v6340, 1
    %v6761 = vsel %vm173, %v6760, 0
    %v6762 = vsel %vm6531, %v6670, %v6761
    %v6763 = vrot.slane %v6408, 7
    %v6764 = vsel %vm6534, %v6763, %v6762
    %v6765 = vsel %vm6537, %v6679, %v6764
    %v6766 = vrot.slane %v6408, 5
    %v6767 = vsel %vm6540, %v6766, %v6765
    %v6768 = vsel %vm6543, %v6476, %v6767
    %v6769 = vrot.slane %v6476, 3
    %v6770 = vsel %vm6546, %v6769, %v6768
    %v6771 = vsel %vm6549, %v6696, %v6770
    %v6772 = vrot.slane %v6342, 1
    %v6773 = vsel %vm173, %v6772, 0
    %v6774 = vsel %vm6531, %v6705, %v6773
    %v6775 = vrot.slane %v6410, 7
    %v6776 = vsel %vm6534, %v6775, %v6774
    %v6777 = vsel %vm6537, %v6714, %v6776
    %v6778 = vrot.slane %v6410, 5
    %v6779 = vsel %vm6540, %v6778, %v6777
    %v6780 = vsel %vm6543, %v6478, %v6779
    %v6781 = vrot.slane %v6478, 3
    %v6782 = vsel %vm6546, %v6781, %v6780
    %v6783 = vsel %vm6549, %v6731, %v6782
    %v6785 = vshrl.u32 %v6736, 16
    %v6787 = vsel %vm173, %v6785, 0
    %v6788 = vrot.slane %v6339, 5
    %v6790 = vshll.u32 %v6788, 16
    %v6792 = vsel %vm6531, %v6790, %v6787
    %v6794 = vshrl.u32 %v6739, 16
    %v6796 = vsel %vm6534, %v6794, %v6792
    %v6797 = vrot.slane %v6407, 3
    %v6799 = vshll.u32 %v6797, 16
    %v6801 = vsel %vm6537, %v6799, %v6796
    %v6803 = vshrl.u32 %v6742, 16
    %v6805 = vsel %vm6540, %v6803, %v6801
    %v6806 = vrot.slane %v6475, 1
    %v6808 = vshll.u32 %v6806, 16
    %v6810 = vsel %vm6543, %v6808, %v6805
    %v6812 = vshrl.u32 %v6745, 16
    %v6814 = vsel %vm6546, %v6812, %v6810
    %v6815 = vrot.slane %v6503, 7
    %v6817 = vshll.u32 %v6815, 16
    %v6819 = vsel %vm6549, %v6817, %v6814
    %v6821 = vshrl.u32 %v6748, 16
    %v6823 = vsel %vm173, %v6821, 0
    %v6824 = vrot.slane %v6341, 5
    %v6826 = vshll.u32 %v6824, 16
    %v6828 = vsel %vm6531, %v6826, %v6823
    %v6830 = vshrl.u32 %v6751, 16
    %v6832 = vsel %vm6534, %v6830, %v6828
    %v6833 = vrot.slane %v6409, 3
    %v6835 = vshll.u32 %v6833, 16
    %v6837 = vsel %vm6537, %v6835, %v6832
    %v6839 = vshrl.u32 %v6754, 16
    %v6841 = vsel %vm6540, %v6839, %v6837
    %v6842 = vrot.slane %v6477, 1
    %v6844 = vshll.u32 %v6842, 16
    %v6846 = vsel %vm6543, %v6844, %v6841
    %v6848 = vshrl.u32 %v6757, 16
    %v6850 = vsel %vm6546, %v6848, %v6846
    %v6851 = vrot.slane %v6510, 7
    %v6853 = vshll.u32 %v6851, 16
    %v6855 = vsel %vm6549, %v6853, %v6850
    %v6857 = vshrl.u32 %v6760, 16
    %v6859 = vsel %vm173, %v6857, 0
    %v6860 = vrot.slane %v6340, 5
    %v6862 = vshll.u32 %v6860, 16
    %v6864 = vsel %vm6531, %v6862, %v6859
    %v6866 = vshrl.u32 %v6763, 16
    %v6868 = vsel %vm6534, %v6866, %v6864
    %v6869 = vrot.slane %v6408, 3
    %v6871 = vshll.u32 %v6869, 16
    %v6873 = vsel %vm6537, %v6871, %v6868
    %v6875 = vshrl.u32 %v6766, 16
    %v6877 = vsel %vm6540, %v6875, %v6873
    %v6878 = vrot.slane %v6476, 1
    %v6880 = vshll.u32 %v6878, 16
    %v6882 = vsel %vm6543, %v6880, %v6877
    %v6884 = vshrl.u32 %v6769, 16
    %v6886 = vsel %vm6546, %v6884, %v6882
    %v6887 = vrot.slane %v6511, 7
    %v6889 = vshll.u32 %v6887, 16
    %v6891 = vsel %vm6549, %v6889, %v6886
    %v6893 = vshrl.u32 %v6772, 16
    %v6895 = vsel %vm173, %v6893, 0
    %v6896 = vrot.slane %v6342, 5
    %v6898 = vshll.u32 %v6896, 16
    %v6900 = vsel %vm6531, %v6898, %v6895
    %v6902 = vshrl.u32 %v6775, 16
    %v6904 = vsel %vm6534, %v6902, %v6900
    %v6905 = vrot.slane %v6410, 3
    %v6907 = vshll.u32 %v6905, 16
    %v6909 = vsel %vm6537, %v6907, %v6904
    %v6911 = vshrl.u32 %v6778, 16
    %v6913 = vsel %vm6540, %v6911, %v6909
    %v6914 = vrot.slane %v6478, 1
    %v6916 = vshll.u32 %v6914, 16
    %v6918 = vsel %vm6543, %v6916, %v6913
    %v6920 = vshrl.u32 %v6781, 16
    %v6922 = vsel %vm6546, %v6920, %v6918
    %v6923 = vrot.slane %v6512, 7
    %v6925 = vshll.u32 %v6923, 16
    %v6927 = vsel %vm6549, %v6925, %v6922
    %v6928 = vrot.slane %v6339, 2
    %v6929 = vsel %vm173, %v6928, 0
    %v6930 = vsel %vm6531, %v6788, %v6929
    %v6931 = vsel %vm6534, %v6407, %v6930
    %v6932 = vsel %vm6537, %v6797, %v6931
    %v6933 = vrot.slane %v6475, 6
    %v6934 = vsel %vm6540, %v6933, %v6932
    %v6935 = vsel %vm6543, %v6806, %v6934
    %v6936 = vrot.slane %v6475, 4
    %v6937 = vsel %vm6546, %v6936, %v6935
    %v6938 = vsel %vm6549, %v6815, %v6937
    %v6939 = vrot.slane %v6341, 2
    %v6940 = vsel %vm173, %v6939, 0
    %v6941 = vsel %vm6531, %v6824, %v6940
    %v6942 = vsel %vm6534, %v6409, %v6941
    %v6943 = vsel %vm6537, %v6833, %v6942
    %v6944 = vrot.slane %v6477, 6
    %v6945 = vsel %vm6540, %v6944, %v6943
    %v6946 = vsel %vm6543, %v6842, %v6945
    %v6947 = vrot.slane %v6477, 4
    %v6948 = vsel %vm6546, %v6947, %v6946
    %v6949 = vsel %vm6549, %v6851, %v6948
    %v6950 = vrot.slane %v6340, 2
    %v6951 = vsel %vm173, %v6950, 0
    %v6952 = vsel %vm6531, %v6860, %v6951
    %v6953 = vsel %vm6534, %v6408, %v6952
    %v6954 = vsel %vm6537, %v6869, %v6953
    %v6955 = vrot.slane %v6476, 6
    %v6956 = vsel %vm6540, %v6955, %v6954
    %v6957 = vsel %vm6543, %v6878, %v6956
    %v6958 = vrot.slane %v6476, 4
    %v6959 = vsel %vm6546, %v6958, %v6957
    %v6960 = vsel %vm6549, %v6887, %v6959
    %v6961 = vrot.slane %v6342, 2
    %v6962 = vsel %vm173, %v6961, 0
    %v6963 = vsel %vm6531, %v6896, %v6962
    %v6964 = vsel %vm6534, %v6410, %v6963
    %v6965 = vsel %vm6537, %v6905, %v6964
    %v6966 = vrot.slane %v6478, 6
    %v6967 = vsel %vm6540, %v6966, %v6965
    %v6968 = vsel %vm6543, %v6914, %v6967
    %v6969 = vrot.slane %v6478, 4
    %v6970 = vsel %vm6546, %v6969, %v6968
    %v6971 = vsel %vm6549, %v6923, %v6970
    %v6973 = vshrl.u32 %v6928, 16
    %v6975 = vsel %vm173, %v6973, 0
    %v6976 = vshll.u32 %v6533, 16
    %v6978 = vsel %vm6531, %v6976, %v6975
    %v6980 = vshrl.u32 %v6407, 16
    %v6982 = vsel %vm6534, %v6980, %v6978
    %v6983 = vshll.u32 %v6539, 16
    %v6985 = vsel %vm6537, %v6983, %v6982
    %v6987 = vshrl.u32 %v6933, 16
    %v6989 = vsel %vm6540, %v6987, %v6985
    %v6990 = vshll.u32 %v6545, 16
    %v6992 = vsel %vm6543, %v6990, %v6989
    %v6994 = vshrl.u32 %v6936, 16
    %v6996 = vsel %vm6546, %v6994, %v6992
    %v6998 = vshll.u32 %v6503, 16
    %v7000 = vsel %vm6549, %v6998, %v6996
    %v7002 = vshrl.u32 %v6939, 16
    %v7004 = vsel %vm173, %v7002, 0
    %v7005 = vshll.u32 %v6554, 16
    %v7007 = vsel %vm6531, %v7005, %v7004
    %v7009 = vshrl.u32 %v6409, 16
    %v7011 = vsel %vm6534, %v7009, %v7007
    %v7012 = vshll.u32 %v6558, 16
    %v7014 = vsel %vm6537, %v7012, %v7011
    %v7016 = vshrl.u32 %v6944, 16
    %v7018 = vsel %vm6540, %v7016, %v7014
    %v7019 = vshll.u32 %v6562, 16
    %v7021 = vsel %vm6543, %v7019, %v7018
    %v7023 = vshrl.u32 %v6947, 16
    %v7025 = vsel %vm6546, %v7023, %v7021
    %v7027 = vshll.u32 %v6510, 16
    %v7029 = vsel %vm6549, %v7027, %v7025
    %v7031 = vshrl.u32 %v6950, 16
    %v7033 = vsel %vm173, %v7031, 0
    %v7034 = vshll.u32 %v6569, 16
    %v7036 = vsel %vm6531, %v7034, %v7033
    %v7038 = vshrl.u32 %v6408, 16
    %v7040 = vsel %vm6534, %v7038, %v7036
    %v7041 = vshll.u32 %v6573, 16
    %v7043 = vsel %vm6537, %v7041, %v7040
    %v7045 = vshrl.u32 %v6955, 16
    %v7047 = vsel %vm6540, %v7045, %v7043
    %v7048 = vshll.u32 %v6577, 16
    %v7050 = vsel %vm6543, %v7048, %v7047
    %v7052 = vshrl.u32 %v6958, 16
    %v7054 = vsel %vm6546, %v7052, %v7050
    %v7056 = vshll.u32 %v6511, 16
    %v7058 = vsel %vm6549, %v7056, %v7054
    %v7060 = vshrl.u32 %v6961, 16
    %v7062 = vsel %vm173, %v7060, 0
    %v7063 = vshll.u32 %v6584, 16
    %v7065 = vsel %vm6531, %v7063, %v7062
    %v7067 = vshrl.u32 %v6410, 16
    %v7069 = vsel %vm6534, %v7067, %v7065
    %v7070 = vshll.u32 %v6588, 16
    %v7072 = vsel %vm6537, %v7070, %v7069
    %v7074 = vshrl.u32 %v6966, 16
    %v7076 = vsel %vm6540, %v7074, %v7072
    %v7077 = vshll.u32 %v6592, 16
    %v7079 = vsel %vm6543, %v7077, %v7076
    %v7081 = vshrl.u32 %v6969, 16
    %v7083 = vsel %vm6546, %v7081, %v7079
    %v7085 = vshll.u32 %v6512, 16
    %v7087 = vsel %vm6549, %v7085, %v7083
    %v7088 = vsel %vm173, %v6530, 0
    %v7089 = vsel %vm6531, %v6533, %v7088
    %v7090 = vsel %vm6534, %v6536, %v7089
    %v7091 = vsel %vm6537, %v6539, %v7090
    %v7092 = vsel %vm6540, %v6542, %v7091
    %v7093 = vsel %vm6543, %v6545, %v7092
    %v7094 = vsel %vm6546, %v6548, %v7093
    %v7095 = vsel %vm6549, %v6503, %v7094
    %v7096 = vsel %vm173, %v6552, 0
    %v7097 = vsel %vm6531, %v6554, %v7096
    %v7098 = vsel %vm6534, %v6556, %v7097
    %v7099 = vsel %vm6537, %v6558, %v7098
    %v7100 = vsel %vm6540, %v6560, %v7099
    %v7101 = vsel %vm6543, %v6562, %v7100
    %v7102 = vsel %vm6546, %v6564, %v7101
    %v7103 = vsel %vm6549, %v6510, %v7102
    %v7104 = vsel %vm173, %v6567, 0
    %v7105 = vsel %vm6531, %v6569, %v7104
    %v7106 = vsel %vm6534, %v6571, %v7105
    %v7107 = vsel %vm6537, %v6573, %v7106
    %v7108 = vsel %vm6540, %v6575, %v7107
    %v7109 = vsel %vm6543, %v6577, %v7108
    %v7110 = vsel %vm6546, %v6579, %v7109
    %v7111 = vsel %vm6549, %v6511, %v7110
    %v7112 = vsel %vm173, %v6582, 0
    %v7113 = vsel %vm6531, %v6584, %v7112
    %v7114 = vsel %vm6534, %v6586, %v7113
    %v7115 = vsel %vm6537, %v6588, %v7114
    %v7116 = vsel %vm6540, %v6590, %v7115
    %v7117 = vsel %vm6543, %v6592, %v7116
    %v7118 = vsel %vm6546, %v6594, %v7117
    %v7119 = vsel %vm6549, %v6512, %v7118
    %v7120 = vld [vmem:[#allocation4] sm:$0xf]
    %v7121 = vld [vmem:[#allocation4 + $0x4] sm:$0xf]
    %v7122 = vld [vmem:[#allocation4 + $0x8] sm:$0xf]
    %v7123 = vld [vmem:[#allocation4 + $0xc] sm:$0xf]
    %v7124 = vld [vmem:[#allocation4 + $0x10] sm:$0xf]
    %v7125 = vld [vmem:[#allocation4 + $0x14] sm:$0xf]
    %v7126 = vld [vmem:[#allocation4 + $0x18] sm:$0xf]
    %v7127 = vld [vmem:[#allocation4 + $0x1c] sm:$0xf]
    %v7128 = vld [vmem:[#allocation4 + $0x20] sm:$0xf]
    %v7129 = vld [vmem:[#allocation4 + $0x24] sm:$0xf]
    %v7130 = vld [vmem:[#allocation4 + $0x28] sm:$0xf]
    %v7131 = vld [vmem:[#allocation4 + $0x2c] sm:$0xf]
    %v7132 = vld [vmem:[#allocation4 + $0x30] sm:$0xf]
    %v7133 = vld [vmem:[#allocation4 + $0x34] sm:$0xf]
    %v7134 = vld [vmem:[#allocation4 + $0x38] sm:$0xf]
    %v7135 = vld [vmem:[#allocation4 + $0x3c] sm:$0xf]
    %v7136 = vld [vmem:[#allocation4 + $0x40] sm:$0xf]
    %v7137 = vld [vmem:[#allocation4 + $0x44] sm:$0xf]
    %v7138 = vld [vmem:[#allocation4 + $0x48] sm:$0xf]
    %v7139 = vld [vmem:[#allocation4 + $0x4c] sm:$0xf]
    %v7140 = vld [vmem:[#allocation4 + $0x50] sm:$0xf]
    %v7141 = vld [vmem:[#allocation4 + $0x54] sm:$0xf]
    %v7142 = vld [vmem:[#allocation4 + $0x58] sm:$0xf]
    %v7143 = vld [vmem:[#allocation4 + $0x5c] sm:$0xf]
    %v7144 = vld [vmem:[#allocation4 + $0x60] sm:$0xf]
    %v7145 = vld [vmem:[#allocation4 + $0x64] sm:$0xf]
    %v7146 = vld [vmem:[#allocation4 + $0x68] sm:$0xf]
    %v7147 = vld [vmem:[#allocation4 + $0x6c] sm:$0xf]
    %v7148 = vld [vmem:[#allocation4 + $0x70] sm:$0xf]
    %v7149 = vld [vmem:[#allocation4 + $0x74] sm:$0xf]
    %v7150 = vld [vmem:[#allocation4 + $0x78] sm:$0xf]
    %v7151 = vld [vmem:[#allocation4 + $0x7c] sm:$0xf]
    %v7152 = vld [vmem:[#allocation4 + $0x80] sm:$0xf]
    %v7153 = vld [vmem:[#allocation4 + $0x84] sm:$0xf]
    %v7154 = vld [vmem:[#allocation4 + $0x88] sm:$0xf]
    %v7155 = vld [vmem:[#allocation4 + $0x8c] sm:$0xf]
    %v7156 = vld [vmem:[#allocation4 + $0x90] sm:$0xf]
    %v7157 = vld [vmem:[#allocation4 + $0x94] sm:$0xf]
    %v7158 = vld [vmem:[#allocation4 + $0x98] sm:$0xf]
    %v7159 = vld [vmem:[#allocation4 + $0x9c] sm:$0xf]
    %v7160 = vld [vmem:[#allocation4 + $0xa0] sm:$0xf]
    %v7161 = vld [vmem:[#allocation4 + $0xa4] sm:$0xf]
    %v7162 = vld [vmem:[#allocation4 + $0xa8] sm:$0xf]
    %v7163 = vld [vmem:[#allocation4 + $0xac] sm:$0xf]
    %v7164 = vld [vmem:[#allocation4 + $0xb0] sm:$0xf]
    %v7165 = vld [vmem:[#allocation4 + $0xb4] sm:$0xf]
    %v7166 = vld [vmem:[#allocation4 + $0xb8] sm:$0xf]
    %v7167 = vld [vmem:[#allocation4 + $0xbc] sm:$0xf]
    %v7168 = vld [vmem:[#allocation4 + $0xc0] sm:$0xf]
    %v7169 = vld [vmem:[#allocation4 + $0xc4] sm:$0xf]
    %v7170 = vld [vmem:[#allocation4 + $0xc8] sm:$0xf]
    %v7171 = vld [vmem:[#allocation4 + $0xcc] sm:$0xf]
    %v7172 = vld [vmem:[#allocation4 + $0xd0] sm:$0xf]
    %v7173 = vld [vmem:[#allocation4 + $0xd4] sm:$0xf]
    %v7174 = vld [vmem:[#allocation4 + $0xd8] sm:$0xf]
    %v7175 = vld [vmem:[#allocation4 + $0xdc] sm:$0xf]
    %v7176 = vld [vmem:[#allocation4 + $0xe0] sm:$0xf]
    %v7177 = vld [vmem:[#allocation4 + $0xe4] sm:$0xf]
    %v7178 = vld [vmem:[#allocation4 + $0xe8] sm:$0xf]
    %v7179 = vld [vmem:[#allocation4 + $0xec] sm:$0xf]
    %v7180 = vld [vmem:[#allocation4 + $0xf0] sm:$0xf]
    %v7181 = vld [vmem:[#allocation4 + $0xf4] sm:$0xf]
    %v7182 = vld [vmem:[#allocation4 + $0xf8] sm:$0xf]
    %v7183 = vld [vmem:[#allocation4 + $0xfc] sm:$0xf]
    %v7184 = vld [vmem:[#allocation4 + $0x100] sm:$0xf]
    %v7185 = vld [vmem:[#allocation4 + $0x104] sm:$0xf]
    %v7186 = vld [vmem:[#allocation4 + $0x108] sm:$0xf]
    %v7187 = vld [vmem:[#allocation4 + $0x10c] sm:$0xf]
    %v7188 = vld [vmem:[#allocation4 + $0x110] sm:$0xf]
    %v7189 = vld [vmem:[#allocation4 + $0x114] sm:$0xf]
    %v7190 = vld [vmem:[#allocation4 + $0x118] sm:$0xf]
    %v7191 = vld [vmem:[#allocation4 + $0x11c] sm:$0xf]
    %v7192 = vld [vmem:[#allocation4 + $0x120] sm:$0xf]
    %v7193 = vld [vmem:[#allocation4 + $0x124] sm:$0xf]
    %v7194 = vld [vmem:[#allocation4 + $0x128] sm:$0xf]
    %v7195 = vld [vmem:[#allocation4 + $0x12c] sm:$0xf]
    %v7196 = vld [vmem:[#allocation4 + $0x130] sm:$0xf]
    %v7197 = vld [vmem:[#allocation4 + $0x134] sm:$0xf]
    %v7198 = vld [vmem:[#allocation4 + $0x138] sm:$0xf]
    %v7199 = vld [vmem:[#allocation4 + $0x13c] sm:$0xf]
    %v7200 = vld [vmem:[#allocation4 + $0x140] sm:$0xf]
    %v7201 = vld [vmem:[#allocation4 + $0x144] sm:$0xf]
    %v7202 = vld [vmem:[#allocation4 + $0x148] sm:$0xf]
    %v7203 = vld [vmem:[#allocation4 + $0x14c] sm:$0xf]
    %v7204 = vld [vmem:[#allocation4 + $0x150] sm:$0xf]
    %v7205 = vld [vmem:[#allocation4 + $0x154] sm:$0xf]
    %v7206 = vld [vmem:[#allocation4 + $0x158] sm:$0xf]
    %v7207 = vld [vmem:[#allocation4 + $0x15c] sm:$0xf]
    %v7208 = vld [vmem:[#allocation4 + $0x160] sm:$0xf]
    %v7209 = vld [vmem:[#allocation4 + $0x164] sm:$0xf]
    %v7210 = vld [vmem:[#allocation4 + $0x168] sm:$0xf]
    %v7211 = vld [vmem:[#allocation4 + $0x16c] sm:$0xf]
    %v7212 = vld [vmem:[#allocation4 + $0x170] sm:$0xf]
    %v7213 = vld [vmem:[#allocation4 + $0x174] sm:$0xf]
    %v7214 = vld [vmem:[#allocation4 + $0x178] sm:$0xf]
    %v7215 = vld [vmem:[#allocation4 + $0x17c] sm:$0xf]
    %v7216 = vld [vmem:[#allocation4 + $0x180] sm:$0xf]
    %v7217 = vld [vmem:[#allocation4 + $0x184] sm:$0xf]
    %v7218 = vld [vmem:[#allocation4 + $0x188] sm:$0xf]
    %v7219 = vld [vmem:[#allocation4 + $0x18c] sm:$0xf]
    %v7220 = vld [vmem:[#allocation4 + $0x190] sm:$0xf]
    %v7221 = vld [vmem:[#allocation4 + $0x194] sm:$0xf]
    %v7222 = vld [vmem:[#allocation4 + $0x198] sm:$0xf]
    %v7223 = vld [vmem:[#allocation4 + $0x19c] sm:$0xf]
    %v7224 = vld [vmem:[#allocation4 + $0x1a0] sm:$0xf]
    %v7225 = vld [vmem:[#allocation4 + $0x1a4] sm:$0xf]
    %v7226 = vld [vmem:[#allocation4 + $0x1a8] sm:$0xf]
    %v7227 = vld [vmem:[#allocation4 + $0x1ac] sm:$0xf]
    %v7228 = vld [vmem:[#allocation4 + $0x1b0] sm:$0xf]
    %v7229 = vld [vmem:[#allocation4 + $0x1b4] sm:$0xf]
    %v7230 = vld [vmem:[#allocation4 + $0x1b8] sm:$0xf]
    %v7231 = vld [vmem:[#allocation4 + $0x1bc] sm:$0xf]
    %v7232 = vld [vmem:[#allocation4 + $0x1c0] sm:$0xf]
    %v7233 = vld [vmem:[#allocation4 + $0x1c4] sm:$0xf]
    %v7234 = vld [vmem:[#allocation4 + $0x1c8] sm:$0xf]
    %v7235 = vld [vmem:[#allocation4 + $0x1cc] sm:$0xf]
    %v7236 = vld [vmem:[#allocation4 + $0x1d0] sm:$0xf]
    %v7237 = vld [vmem:[#allocation4 + $0x1d4] sm:$0xf]
    %v7238 = vld [vmem:[#allocation4 + $0x1d8] sm:$0xf]
    %v7239 = vld [vmem:[#allocation4 + $0x1dc] sm:$0xf]
    %v7240 = vld [vmem:[#allocation4 + $0x1e0] sm:$0xf]
    %v7241 = vld [vmem:[#allocation4 + $0x1e4] sm:$0xf]
    %v7242 = vld [vmem:[#allocation4 + $0x1e8] sm:$0xf]
    %v7243 = vld [vmem:[#allocation4 + $0x1ec] sm:$0xf]
    %v7244 = vld [vmem:[#allocation4 + $0x1f0] sm:$0xf]
    %v7245 = vld [vmem:[#allocation4 + $0x1f4] sm:$0xf]
    %v7246 = vld [vmem:[#allocation4 + $0x1f8] sm:$0xf]
    %v7247 = vld [vmem:[#allocation4 + $0x1fc] sm:$0xf]
    %v7248 = vld [vmem:[#allocation4 + $0x200] sm:$0xf]
    %v7249 = vld [vmem:[#allocation4 + $0x204] sm:$0xf]
    %v7250 = vld [vmem:[#allocation4 + $0x208] sm:$0xf]
    %v7251 = vld [vmem:[#allocation4 + $0x20c] sm:$0xf]
    %v7252 = vld [vmem:[#allocation4 + $0x210] sm:$0xf]
    %v7253 = vld [vmem:[#allocation4 + $0x214] sm:$0xf]
    %v7254 = vld [vmem:[#allocation4 + $0x218] sm:$0xf]
    %v7255 = vld [vmem:[#allocation4 + $0x21c] sm:$0xf]
    %v7256 = vld [vmem:[#allocation4 + $0x220] sm:$0xf]
    %v7257 = vld [vmem:[#allocation4 + $0x224] sm:$0xf]
    %v7258 = vld [vmem:[#allocation4 + $0x228] sm:$0xf]
    %v7259 = vld [vmem:[#allocation4 + $0x22c] sm:$0xf]
    %v7260 = vld [vmem:[#allocation4 + $0x230] sm:$0xf]
    %v7261 = vld [vmem:[#allocation4 + $0x234] sm:$0xf]
    %v7262 = vld [vmem:[#allocation4 + $0x238] sm:$0xf]
    %v7263 = vld [vmem:[#allocation4 + $0x23c] sm:$0xf]
    %v7264 = vld [vmem:[#allocation4 + $0x240] sm:$0xf]
    %v7265 = vld [vmem:[#allocation4 + $0x244] sm:$0xf]
    %v7266 = vld [vmem:[#allocation4 + $0x248] sm:$0xf]
    %v7267 = vld [vmem:[#allocation4 + $0x24c] sm:$0xf]
    %v7268 = vld [vmem:[#allocation4 + $0x250] sm:$0xf]
    %v7269 = vld [vmem:[#allocation4 + $0x254] sm:$0xf]
    %v7270 = vld [vmem:[#allocation4 + $0x258] sm:$0xf]
    %v7271 = vld [vmem:[#allocation4 + $0x25c] sm:$0xf]
    %v7272 = vld [vmem:[#allocation4 + $0x260] sm:$0xf]
    %v7273 = vld [vmem:[#allocation4 + $0x264] sm:$0xf]
    %v7274 = vld [vmem:[#allocation4 + $0x268] sm:$0xf]
    %v7275 = vld [vmem:[#allocation4 + $0x26c] sm:$0xf]
    %v7276 = vld [vmem:[#allocation4 + $0x270] sm:$0xf]
    %v7277 = vld [vmem:[#allocation4 + $0x274] sm:$0xf]
    %v7278 = vld [vmem:[#allocation4 + $0x278] sm:$0xf]
    %v7279 = vld [vmem:[#allocation4 + $0x27c] sm:$0xf]
    %v7280 = vld [vmem:[#allocation4 + $0x280] sm:$0xf]
    %v7281 = vld [vmem:[#allocation4 + $0x284] sm:$0xf]
    %v7282 = vld [vmem:[#allocation4 + $0x288] sm:$0xf]
    %v7283 = vld [vmem:[#allocation4 + $0x28c] sm:$0xf]
    %v7284 = vld [vmem:[#allocation4 + $0x290] sm:$0xf]
    %v7285 = vld [vmem:[#allocation4 + $0x294] sm:$0xf]
    %v7286 = vld [vmem:[#allocation4 + $0x298] sm:$0xf]
    %v7287 = vld [vmem:[#allocation4 + $0x29c] sm:$0xf]
    %v7288 = vld [vmem:[#allocation4 + $0x2a0] sm:$0xf]
    %v7289 = vld [vmem:[#allocation4 + $0x2a4] sm:$0xf]
    %v7290 = vld [vmem:[#allocation4 + $0x2a8] sm:$0xf]
    %v7291 = vld [vmem:[#allocation4 + $0x2ac] sm:$0xf]
    %v7292 = vld [vmem:[#allocation4 + $0x2b0] sm:$0xf]
    %v7293 = vld [vmem:[#allocation4 + $0x2b4] sm:$0xf]
    %v7294 = vld [vmem:[#allocation4 + $0x2b8] sm:$0xf]
    %v7295 = vld [vmem:[#allocation4 + $0x2bc] sm:$0xf]
    %v7296 = vld [vmem:[#allocation4 + $0x2c0] sm:$0xf]
    %v7297 = vld [vmem:[#allocation4 + $0x2c4] sm:$0xf]
    %v7298 = vld [vmem:[#allocation4 + $0x2c8] sm:$0xf]
    %v7299 = vld [vmem:[#allocation4 + $0x2cc] sm:$0xf]
    %v7300 = vld [vmem:[#allocation4 + $0x2d0] sm:$0xf]
    %v7301 = vld [vmem:[#allocation4 + $0x2d4] sm:$0xf]
    %v7302 = vld [vmem:[#allocation4 + $0x2d8] sm:$0xf]
    %v7303 = vld [vmem:[#allocation4 + $0x2dc] sm:$0xf]
    %v7304 = vld [vmem:[#allocation4 + $0x2e0] sm:$0xf]
    %v7305 = vld [vmem:[#allocation4 + $0x2e4] sm:$0xf]
    %v7306 = vld [vmem:[#allocation4 + $0x2e8] sm:$0xf]
    %v7307 = vld [vmem:[#allocation4 + $0x2ec] sm:$0xf]
    %v7308 = vld [vmem:[#allocation4 + $0x2f0] sm:$0xf]
    %v7309 = vld [vmem:[#allocation4 + $0x2f4] sm:$0xf]
    %v7310 = vld [vmem:[#allocation4 + $0x2f8] sm:$0xf]
    %v7311 = vld [vmem:[#allocation4 + $0x2fc] sm:$0xf]
    %v7312 = vld [vmem:[#allocation4 + $0x300] sm:$0xf]
    %v7313 = vld [vmem:[#allocation4 + $0x304] sm:$0xf]
    %v7314 = vld [vmem:[#allocation4 + $0x308] sm:$0xf]
    %v7315 = vld [vmem:[#allocation4 + $0x30c] sm:$0xf]
    %v7316 = vld [vmem:[#allocation4 + $0x310] sm:$0xf]
    %v7317 = vld [vmem:[#allocation4 + $0x314] sm:$0xf]
    %v7318 = vld [vmem:[#allocation4 + $0x318] sm:$0xf]
    %v7319 = vld [vmem:[#allocation4 + $0x31c] sm:$0xf]
    %v7320 = vld [vmem:[#allocation4 + $0x320] sm:$0xf]
    %v7321 = vld [vmem:[#allocation4 + $0x324] sm:$0xf]
    %v7322 = vld [vmem:[#allocation4 + $0x328] sm:$0xf]
    %v7323 = vld [vmem:[#allocation4 + $0x32c] sm:$0xf]
    %v7324 = vld [vmem:[#allocation4 + $0x330] sm:$0xf]
    %v7325 = vld [vmem:[#allocation4 + $0x334] sm:$0xf]
    %v7326 = vld [vmem:[#allocation4 + $0x338] sm:$0xf]
    %v7327 = vld [vmem:[#allocation4 + $0x33c] sm:$0xf]
    %v7328 = vld [vmem:[#allocation4 + $0x340] sm:$0xf]
    %v7329 = vld [vmem:[#allocation4 + $0x344] sm:$0xf]
    %v7330 = vld [vmem:[#allocation4 + $0x348] sm:$0xf]
    %v7331 = vld [vmem:[#allocation4 + $0x34c] sm:$0xf]
    %v7332 = vld [vmem:[#allocation4 + $0x350] sm:$0xf]
    %v7333 = vld [vmem:[#allocation4 + $0x354] sm:$0xf]
    %v7334 = vld [vmem:[#allocation4 + $0x358] sm:$0xf]
    %v7335 = vld [vmem:[#allocation4 + $0x35c] sm:$0xf]
    %v7336 = vld [vmem:[#allocation4 + $0x360] sm:$0xf]
    %v7337 = vld [vmem:[#allocation4 + $0x364] sm:$0xf]
    %v7338 = vld [vmem:[#allocation4 + $0x368] sm:$0xf]
    %v7339 = vld [vmem:[#allocation4 + $0x36c] sm:$0xf]
    %v7340 = vld [vmem:[#allocation4 + $0x370] sm:$0xf]
    %v7341 = vld [vmem:[#allocation4 + $0x374] sm:$0xf]
    %v7342 = vld [vmem:[#allocation4 + $0x378] sm:$0xf]
    %v7343 = vld [vmem:[#allocation4 + $0x37c] sm:$0xf]
    %v7344 = vld [vmem:[#allocation4 + $0x380] sm:$0xf]
    %v7345 = vld [vmem:[#allocation4 + $0x384] sm:$0xf]
    %v7346 = vld [vmem:[#allocation4 + $0x388] sm:$0xf]
    %v7347 = vld [vmem:[#allocation4 + $0x38c] sm:$0xf]
    %v7348 = vld [vmem:[#allocation4 + $0x390] sm:$0xf]
    %v7349 = vld [vmem:[#allocation4 + $0x394] sm:$0xf]
    %v7350 = vld [vmem:[#allocation4 + $0x398] sm:$0xf]
    %v7351 = vld [vmem:[#allocation4 + $0x39c] sm:$0xf]
    %v7352 = vld [vmem:[#allocation4 + $0x3a0] sm:$0xf]
    %v7353 = vld [vmem:[#allocation4 + $0x3a4] sm:$0xf]
    %v7354 = vld [vmem:[#allocation4 + $0x3a8] sm:$0xf]
    %v7355 = vld [vmem:[#allocation4 + $0x3ac] sm:$0xf]
    %v7356 = vld [vmem:[#allocation4 + $0x3b0] sm:$0xf]
    %v7357 = vld [vmem:[#allocation4 + $0x3b4] sm:$0xf]
    %v7358 = vld [vmem:[#allocation4 + $0x3b8] sm:$0xf]
    %v7359 = vld [vmem:[#allocation4 + $0x3bc] sm:$0xf]
    %v7360 = vld [vmem:[#allocation4 + $0x3c0] sm:$0xf]
    %v7361 = vld [vmem:[#allocation4 + $0x3c4] sm:$0xf]
    %v7362 = vld [vmem:[#allocation4 + $0x3c8] sm:$0xf]
    %v7363 = vld [vmem:[#allocation4 + $0x3cc] sm:$0xf]
    %v7364 = vld [vmem:[#allocation4 + $0x3d0] sm:$0xf]
    %v7365 = vld [vmem:[#allocation4 + $0x3d4] sm:$0xf]
    %v7366 = vld [vmem:[#allocation4 + $0x3d8] sm:$0xf]
    %v7367 = vld [vmem:[#allocation4 + $0x3dc] sm:$0xf]
    %v7368 = vld [vmem:[#allocation4 + $0x3e0] sm:$0xf]
    %v7369 = vld [vmem:[#allocation4 + $0x3e4] sm:$0xf]
    %v7370 = vld [vmem:[#allocation4 + $0x3e8] sm:$0xf]
    %v7371 = vld [vmem:[#allocation4 + $0x3ec] sm:$0xf]
    %v7372 = vld [vmem:[#allocation4 + $0x3f0] sm:$0xf]
    %v7373 = vld [vmem:[#allocation4 + $0x3f4] sm:$0xf]
    %v7374 = vld [vmem:[#allocation4 + $0x3f8] sm:$0xf]
    %v7375 = vld [vmem:[#allocation4 + $0x3fc] sm:$0xf]
    %v7376 = vld [vmem:[#allocation4 + $0x400] sm:$0xf]
    %v7377 = vld [vmem:[#allocation4 + $0x404] sm:$0xf]
    %v7378 = vld [vmem:[#allocation4 + $0x408] sm:$0xf]
    %v7379 = vld [vmem:[#allocation4 + $0x40c] sm:$0xf]
    %v7380 = vld [vmem:[#allocation4 + $0x410] sm:$0xf]
    %v7381 = vld [vmem:[#allocation4 + $0x414] sm:$0xf]
    %v7382 = vld [vmem:[#allocation4 + $0x418] sm:$0xf]
    %v7383 = vld [vmem:[#allocation4 + $0x41c] sm:$0xf]
    %v7384 = vld [vmem:[#allocation4 + $0x420] sm:$0xf]
    %v7385 = vld [vmem:[#allocation4 + $0x424] sm:$0xf]
    %v7386 = vld [vmem:[#allocation4 + $0x428] sm:$0xf]
    %v7387 = vld [vmem:[#allocation4 + $0x42c] sm:$0xf]
    %v7388 = vld [vmem:[#allocation4 + $0x430] sm:$0xf]
    %v7389 = vld [vmem:[#allocation4 + $0x434] sm:$0xf]
    %v7390 = vld [vmem:[#allocation4 + $0x438] sm:$0xf]
    %v7391 = vld [vmem:[#allocation4 + $0x43c] sm:$0xf]
    %v7392 = vld [vmem:[#allocation4 + $0x440] sm:$0xf]
    %v7393 = vld [vmem:[#allocation4 + $0x444] sm:$0xf]
    %v7394 = vld [vmem:[#allocation4 + $0x448] sm:$0xf]
    %v7395 = vld [vmem:[#allocation4 + $0x44c] sm:$0xf]
    %v7396 = vld [vmem:[#allocation4 + $0x450] sm:$0xf]
    %v7397 = vld [vmem:[#allocation4 + $0x454] sm:$0xf]
    %v7398 = vld [vmem:[#allocation4 + $0x458] sm:$0xf]
    %v7399 = vld [vmem:[#allocation4 + $0x45c] sm:$0xf]
    %v7400 = vld [vmem:[#allocation4 + $0x460] sm:$0xf]
    %v7401 = vld [vmem:[#allocation4 + $0x464] sm:$0xf]
    %v7402 = vld [vmem:[#allocation4 + $0x468] sm:$0xf]
    %v7403 = vld [vmem:[#allocation4 + $0x46c] sm:$0xf]
    %v7404 = vld [vmem:[#allocation4 + $0x470] sm:$0xf]
    %v7405 = vld [vmem:[#allocation4 + $0x474] sm:$0xf]
    %v7406 = vld [vmem:[#allocation4 + $0x478] sm:$0xf]
    %v7407 = vld [vmem:[#allocation4 + $0x47c] sm:$0xf]
    %v7408 = vld [vmem:[#allocation4 + $0x480] sm:$0xf]
    %v7409 = vld [vmem:[#allocation4 + $0x484] sm:$0xf]
    %v7410 = vld [vmem:[#allocation4 + $0x488] sm:$0xf]
    %v7411 = vld [vmem:[#allocation4 + $0x48c] sm:$0xf]
    %v7412 = vld [vmem:[#allocation4 + $0x490] sm:$0xf]
    %v7413 = vld [vmem:[#allocation4 + $0x494] sm:$0xf]
    %v7414 = vld [vmem:[#allocation4 + $0x498] sm:$0xf]
    %v7415 = vld [vmem:[#allocation4 + $0x49c] sm:$0xf]
    %v7416 = vld [vmem:[#allocation4 + $0x4a0] sm:$0xf]
    %v7417 = vld [vmem:[#allocation4 + $0x4a4] sm:$0xf]
    %v7418 = vld [vmem:[#allocation4 + $0x4a8] sm:$0xf]
    %v7419 = vld [vmem:[#allocation4 + $0x4ac] sm:$0xf]
    %v7420 = vld [vmem:[#allocation4 + $0x4b0] sm:$0xf]
    %v7421 = vld [vmem:[#allocation4 + $0x4b4] sm:$0xf]
    %v7422 = vld [vmem:[#allocation4 + $0x4b8] sm:$0xf]
    %v7423 = vld [vmem:[#allocation4 + $0x4bc] sm:$0xf]
    %v7424 = vld [vmem:[#allocation4 + $0x4c0] sm:$0xf]
    %v7425 = vld [vmem:[#allocation4 + $0x4c4] sm:$0xf]
    %v7426 = vld [vmem:[#allocation4 + $0x4c8] sm:$0xf]
    %v7427 = vld [vmem:[#allocation4 + $0x4cc] sm:$0xf]
    %v7428 = vld [vmem:[#allocation4 + $0x4d0] sm:$0xf]
    %v7429 = vld [vmem:[#allocation4 + $0x4d4] sm:$0xf]
    %v7430 = vld [vmem:[#allocation4 + $0x4d8] sm:$0xf]
    %v7431 = vld [vmem:[#allocation4 + $0x4dc] sm:$0xf]
    %v7432 = vld [vmem:[#allocation4 + $0x4e0] sm:$0xf]
    %v7433 = vld [vmem:[#allocation4 + $0x4e4] sm:$0xf]
    %v7434 = vld [vmem:[#allocation4 + $0x4e8] sm:$0xf]
    %v7435 = vld [vmem:[#allocation4 + $0x4ec] sm:$0xf]
    %v7436 = vld [vmem:[#allocation4 + $0x4f0] sm:$0xf]
    %v7437 = vld [vmem:[#allocation4 + $0x4f4] sm:$0xf]
    %v7438 = vld [vmem:[#allocation4 + $0x4f8] sm:$0xf]
    %v7439 = vld [vmem:[#allocation4 + $0x4fc] sm:$0xf]
    %v7440 = vld [vmem:[#allocation4 + $0x500] sm:$0xf]
    %v7441 = vld [vmem:[#allocation4 + $0x504] sm:$0xf]
    %v7442 = vld [vmem:[#allocation4 + $0x508] sm:$0xf]
    %v7443 = vld [vmem:[#allocation4 + $0x50c] sm:$0xf]
    %v7444 = vld [vmem:[#allocation4 + $0x510] sm:$0xf]
    %v7445 = vld [vmem:[#allocation4 + $0x514] sm:$0xf]
    %v7446 = vld [vmem:[#allocation4 + $0x518] sm:$0xf]
    %v7447 = vld [vmem:[#allocation4 + $0x51c] sm:$0xf]
    %v7448 = vld [vmem:[#allocation4 + $0x520] sm:$0xf]
    %v7449 = vld [vmem:[#allocation4 + $0x524] sm:$0xf]
    %v7450 = vld [vmem:[#allocation4 + $0x528] sm:$0xf]
    %v7451 = vld [vmem:[#allocation4 + $0x52c] sm:$0xf]
    %v7452 = vld [vmem:[#allocation4 + $0x530] sm:$0xf]
    %v7453 = vld [vmem:[#allocation4 + $0x534] sm:$0xf]
    %v7454 = vld [vmem:[#allocation4 + $0x538] sm:$0xf]
    %v7455 = vld [vmem:[#allocation4 + $0x53c] sm:$0xf]
    %v7456 = vld [vmem:[#allocation4 + $0x540] sm:$0xf]
    %v7457 = vld [vmem:[#allocation4 + $0x544] sm:$0xf]
    %v7458 = vld [vmem:[#allocation4 + $0x548] sm:$0xf]
    %v7459 = vld [vmem:[#allocation4 + $0x54c] sm:$0xf]
    %v7460 = vld [vmem:[#allocation4 + $0x550] sm:$0xf]
    %v7461 = vld [vmem:[#allocation4 + $0x554] sm:$0xf]
    %v7462 = vld [vmem:[#allocation4 + $0x558] sm:$0xf]
    %v7463 = vld [vmem:[#allocation4 + $0x55c] sm:$0xf]
    %v7464 = vld [vmem:[#allocation4 + $0x560] sm:$0xf]
    %v7465 = vld [vmem:[#allocation4 + $0x564] sm:$0xf]
    %v7466 = vld [vmem:[#allocation4 + $0x568] sm:$0xf]
    %v7467 = vld [vmem:[#allocation4 + $0x56c] sm:$0xf]
    %v7468 = vld [vmem:[#allocation4 + $0x570] sm:$0xf]
    %v7469 = vld [vmem:[#allocation4 + $0x574] sm:$0xf]
    %v7470 = vld [vmem:[#allocation4 + $0x578] sm:$0xf]
    %v7471 = vld [vmem:[#allocation4 + $0x57c] sm:$0xf]
    %v7472 = vld [vmem:[#allocation4 + $0x580] sm:$0xf]
    %v7473 = vld [vmem:[#allocation4 + $0x584] sm:$0xf]
    %v7474 = vld [vmem:[#allocation4 + $0x588] sm:$0xf]
    %v7475 = vld [vmem:[#allocation4 + $0x58c] sm:$0xf]
    %v7476 = vld [vmem:[#allocation4 + $0x590] sm:$0xf]
    %v7477 = vld [vmem:[#allocation4 + $0x594] sm:$0xf]
    %v7478 = vld [vmem:[#allocation4 + $0x598] sm:$0xf]
    %v7479 = vld [vmem:[#allocation4 + $0x59c] sm:$0xf]
    %v7480 = vld [vmem:[#allocation4 + $0x5a0] sm:$0xf]
    %v7481 = vld [vmem:[#allocation4 + $0x5a4] sm:$0xf]
    %v7482 = vld [vmem:[#allocation4 + $0x5a8] sm:$0xf]
    %v7483 = vld [vmem:[#allocation4 + $0x5ac] sm:$0xf]
    %v7484 = vld [vmem:[#allocation4 + $0x5b0] sm:$0xf]
    %v7485 = vld [vmem:[#allocation4 + $0x5b4] sm:$0xf]
    %v7486 = vld [vmem:[#allocation4 + $0x5b8] sm:$0xf]
    %v7487 = vld [vmem:[#allocation4 + $0x5bc] sm:$0xf]
    %v7488 = vld [vmem:[#allocation4 + $0x5c0] sm:$0xf]
    %v7489 = vld [vmem:[#allocation4 + $0x5c4] sm:$0xf]
    %v7490 = vld [vmem:[#allocation4 + $0x5c8] sm:$0xf]
    %v7491 = vld [vmem:[#allocation4 + $0x5cc] sm:$0xf]
    %v7492 = vld [vmem:[#allocation4 + $0x5d0] sm:$0xf]
    %v7493 = vld [vmem:[#allocation4 + $0x5d4] sm:$0xf]
    %v7494 = vld [vmem:[#allocation4 + $0x5d8] sm:$0xf]
    %v7495 = vld [vmem:[#allocation4 + $0x5dc] sm:$0xf]
    %v7496 = vld [vmem:[#allocation4 + $0x5e0] sm:$0xf]
    %v7497 = vld [vmem:[#allocation4 + $0x5e4] sm:$0xf]
    %v7498 = vld [vmem:[#allocation4 + $0x5e8] sm:$0xf]
    %v7499 = vld [vmem:[#allocation4 + $0x5ec] sm:$0xf]
    %v7500 = vld [vmem:[#allocation4 + $0x5f0] sm:$0xf]
    %v7501 = vld [vmem:[#allocation4 + $0x5f4] sm:$0xf]
    %v7502 = vld [vmem:[#allocation4 + $0x5f8] sm:$0xf]
    %v7503 = vld [vmem:[#allocation4 + $0x5fc] sm:$0xf]
    %v7504 = vld [vmem:[#allocation4 + $0x600] sm:$0xf]
    %v7505 = vld [vmem:[#allocation4 + $0x604] sm:$0xf]
    %v7506 = vld [vmem:[#allocation4 + $0x608] sm:$0xf]
    %v7507 = vld [vmem:[#allocation4 + $0x60c] sm:$0xf]
    %v7508 = vld [vmem:[#allocation4 + $0x610] sm:$0xf]
    %v7509 = vld [vmem:[#allocation4 + $0x614] sm:$0xf]
    %v7510 = vld [vmem:[#allocation4 + $0x618] sm:$0xf]
    %v7511 = vld [vmem:[#allocation4 + $0x61c] sm:$0xf]
    %v7512 = vld [vmem:[#allocation4 + $0x620] sm:$0xf]
    %v7513 = vld [vmem:[#allocation4 + $0x624] sm:$0xf]
    %v7514 = vld [vmem:[#allocation4 + $0x628] sm:$0xf]
    %v7515 = vld [vmem:[#allocation4 + $0x62c] sm:$0xf]
    %v7516 = vld [vmem:[#allocation4 + $0x630] sm:$0xf]
    %v7517 = vld [vmem:[#allocation4 + $0x634] sm:$0xf]
    %v7518 = vld [vmem:[#allocation4 + $0x638] sm:$0xf]
    %v7519 = vld [vmem:[#allocation4 + $0x63c] sm:$0xf]
    %v7520 = vld [vmem:[#allocation4 + $0x640] sm:$0xf]
    %v7521 = vld [vmem:[#allocation4 + $0x644] sm:$0xf]
    %v7522 = vld [vmem:[#allocation4 + $0x648] sm:$0xf]
    %v7523 = vld [vmem:[#allocation4 + $0x64c] sm:$0xf]
    %v7524 = vld [vmem:[#allocation4 + $0x650] sm:$0xf]
    %v7525 = vld [vmem:[#allocation4 + $0x654] sm:$0xf]
    %v7526 = vld [vmem:[#allocation4 + $0x658] sm:$0xf]
    %v7527 = vld [vmem:[#allocation4 + $0x65c] sm:$0xf]
    %v7528 = vld [vmem:[#allocation4 + $0x660] sm:$0xf]
    %v7529 = vld [vmem:[#allocation4 + $0x664] sm:$0xf]
    %v7530 = vld [vmem:[#allocation4 + $0x668] sm:$0xf]
    %v7531 = vld [vmem:[#allocation4 + $0x66c] sm:$0xf]
    %v7532 = vld [vmem:[#allocation4 + $0x670] sm:$0xf]
    %v7533 = vld [vmem:[#allocation4 + $0x674] sm:$0xf]
    %v7534 = vld [vmem:[#allocation4 + $0x678] sm:$0xf]
    %v7535 = vld [vmem:[#allocation4 + $0x67c] sm:$0xf]
    %v7536 = vld [vmem:[#allocation4 + $0x680] sm:$0xf]
    %v7537 = vld [vmem:[#allocation4 + $0x684] sm:$0xf]
    %v7538 = vld [vmem:[#allocation4 + $0x688] sm:$0xf]
    %v7539 = vld [vmem:[#allocation4 + $0x68c] sm:$0xf]
    %v7540 = vld [vmem:[#allocation4 + $0x690] sm:$0xf]
    %v7541 = vld [vmem:[#allocation4 + $0x694] sm:$0xf]
    %v7542 = vld [vmem:[#allocation4 + $0x698] sm:$0xf]
    %v7543 = vld [vmem:[#allocation4 + $0x69c] sm:$0xf]
    %v7544 = vld [vmem:[#allocation4 + $0x6a0] sm:$0xf]
    %v7545 = vld [vmem:[#allocation4 + $0x6a4] sm:$0xf]
    %v7546 = vld [vmem:[#allocation4 + $0x6a8] sm:$0xf]
    %v7547 = vld [vmem:[#allocation4 + $0x6ac] sm:$0xf]
    %v7548 = vld [vmem:[#allocation4 + $0x6b0] sm:$0xf]
    %v7549 = vld [vmem:[#allocation4 + $0x6b4] sm:$0xf]
    %v7550 = vld [vmem:[#allocation4 + $0x6b8] sm:$0xf]
    %v7551 = vld [vmem:[#allocation4 + $0x6bc] sm:$0xf]
    %v7552 = vld [vmem:[#allocation4 + $0x6c0] sm:$0xf]
    %v7553 = vld [vmem:[#allocation4 + $0x6c4] sm:$0xf]
    %v7554 = vld [vmem:[#allocation4 + $0x6c8] sm:$0xf]
    %v7555 = vld [vmem:[#allocation4 + $0x6cc] sm:$0xf]
    %v7556 = vld [vmem:[#allocation4 + $0x6d0] sm:$0xf]
    %v7557 = vld [vmem:[#allocation4 + $0x6d4] sm:$0xf]
    %v7558 = vld [vmem:[#allocation4 + $0x6d8] sm:$0xf]
    %v7559 = vld [vmem:[#allocation4 + $0x6dc] sm:$0xf]
    %v7560 = vld [vmem:[#allocation4 + $0x6e0] sm:$0xf]
    %v7561 = vld [vmem:[#allocation4 + $0x6e4] sm:$0xf]
    %v7562 = vld [vmem:[#allocation4 + $0x6e8] sm:$0xf]
    %v7563 = vld [vmem:[#allocation4 + $0x6ec] sm:$0xf]
    %v7564 = vld [vmem:[#allocation4 + $0x6f0] sm:$0xf]
    %v7565 = vld [vmem:[#allocation4 + $0x6f4] sm:$0xf]
    %v7566 = vld [vmem:[#allocation4 + $0x6f8] sm:$0xf]
    %v7567 = vld [vmem:[#allocation4 + $0x6fc] sm:$0xf]
    %v7568 = vld [vmem:[%s6] sm:$0x1]
    %v7570 = vlaneseq
    %v7571 = vshrl.u32 %v7570, 7
    %v7572 = vsub.s32 0, %v7571
    %v7573 = vrot.slane %v7568, %v7572
    %v8023 = vunpack.c.l.b16 %v7120
    %v8024 = vunpack.c.l.b16 %v7121
    %v8025 = vunpack.c.l.b16 %v7122
    %v8026 = vunpack.c.l.b16 %v7123
    %v8027 = vunpack.c.l.b16 %v7124
    %v8028 = vunpack.c.l.b16 %v7125
    %v8029 = vunpack.c.l.b16 %v7126
    %v8030 = vunpack.c.l.b16 %v7127
    %v8031 = vunpack.c.l.b16 %v7128
    %v8032 = vunpack.c.l.b16 %v7129
    %v8033 = vunpack.c.l.b16 %v7130
    %v8034 = vunpack.c.l.b16 %v7131
    %v8035 = vunpack.c.l.b16 %v7132
    %v8036 = vunpack.c.l.b16 %v7133
    %v8037 = vunpack.c.l.b16 %v7134
    %v8038 = vunpack.c.l.b16 %v7135
    %v8039 = vunpack.c.l.b16 %v7136
    %v8040 = vunpack.c.l.b16 %v7137
    %v8041 = vunpack.c.l.b16 %v7138
    %v8042 = vunpack.c.l.b16 %v7139
    %v8043 = vunpack.c.l.b16 %v7140
    %v8044 = vunpack.c.l.b16 %v7141
    %v8045 = vunpack.c.l.b16 %v7142
    %v8046 = vunpack.c.l.b16 %v7143
    %v8047 = vunpack.c.l.b16 %v7144
    %v8048 = vunpack.c.l.b16 %v7145
    %v8049 = vunpack.c.l.b16 %v7146
    %v8050 = vunpack.c.l.b16 %v7147
    %v8051 = vunpack.c.l.b16 %v7148
    %v8052 = vunpack.c.l.b16 %v7149
    %v8053 = vunpack.c.l.b16 %v7150
    %v8054 = vunpack.c.l.b16 %v7151
    %v8055 = vunpack.c.l.b16 %v7152
    %v8056 = vunpack.c.l.b16 %v7153
    %v8057 = vunpack.c.l.b16 %v7154
    %v8058 = vunpack.c.l.b16 %v7155
    %v8059 = vunpack.c.l.b16 %v7156
    %v8060 = vunpack.c.l.b16 %v7157
    %v8061 = vunpack.c.l.b16 %v7158
    %v8062 = vunpack.c.l.b16 %v7159
    %v8063 = vunpack.c.l.b16 %v7160
    %v8064 = vunpack.c.l.b16 %v7161
    %v8065 = vunpack.c.l.b16 %v7162
    %v8066 = vunpack.c.l.b16 %v7163
    %v8067 = vunpack.c.l.b16 %v7164
    %v8068 = vunpack.c.l.b16 %v7165
    %v8069 = vunpack.c.l.b16 %v7166
    %v8070 = vunpack.c.l.b16 %v7167
    %v8071 = vunpack.c.l.b16 %v7168
    %v8072 = vunpack.c.l.b16 %v7169
    %v8073 = vunpack.c.l.b16 %v7170
    %v8074 = vunpack.c.l.b16 %v7171
    %v8075 = vunpack.c.l.b16 %v7172
    %v8076 = vunpack.c.l.b16 %v7173
    %v8077 = vunpack.c.l.b16 %v7174
    %v8078 = vunpack.c.l.b16 %v7175
    %v8079 = vunpack.c.l.b16 %v7176
    %v8080 = vunpack.c.l.b16 %v7177
    %v8081 = vunpack.c.l.b16 %v7178
    %v8082 = vunpack.c.l.b16 %v7179
    %v8083 = vunpack.c.l.b16 %v7180
    %v8084 = vunpack.c.l.b16 %v7181
    %v8085 = vunpack.c.l.b16 %v7182
    %v8086 = vunpack.c.l.b16 %v7183
    %v8087 = vunpack.c.l.b16 %v7184
    %v8088 = vunpack.c.l.b16 %v7185
    %v8089 = vunpack.c.l.b16 %v7186
    %v8090 = vunpack.c.l.b16 %v7187
    %v8091 = vunpack.c.l.b16 %v7188
    %v8092 = vunpack.c.l.b16 %v7189
    %v8093 = vunpack.c.l.b16 %v7190
    %v8094 = vunpack.c.l.b16 %v7191
    %v8095 = vunpack.c.l.b16 %v7192
    %v8096 = vunpack.c.l.b16 %v7193
    %v8097 = vunpack.c.l.b16 %v7194
    %v8098 = vunpack.c.l.b16 %v7195
    %v8099 = vunpack.c.l.b16 %v7196
    %v8100 = vunpack.c.l.b16 %v7197
    %v8101 = vunpack.c.l.b16 %v7198
    %v8102 = vunpack.c.l.b16 %v7199
    %v8103 = vunpack.c.l.b16 %v7200
    %v8104 = vunpack.c.l.b16 %v7201
    %v8105 = vunpack.c.l.b16 %v7202
    %v8106 = vunpack.c.l.b16 %v7203
    %v8107 = vunpack.c.l.b16 %v7204
    %v8108 = vunpack.c.l.b16 %v7205
    %v8109 = vunpack.c.l.b16 %v7206
    %v8110 = vunpack.c.l.b16 %v7207
    %v8111 = vunpack.c.l.b16 %v7208
    %v8112 = vunpack.c.l.b16 %v7209
    %v8113 = vunpack.c.l.b16 %v7210
    %v8114 = vunpack.c.l.b16 %v7211
    %v8115 = vunpack.c.l.b16 %v7212
    %v8116 = vunpack.c.l.b16 %v7213
    %v8117 = vunpack.c.l.b16 %v7214
    %v8118 = vunpack.c.l.b16 %v7215
    %v8119 = vunpack.c.l.b16 %v7216
    %v8120 = vunpack.c.l.b16 %v7217
    %v8121 = vunpack.c.l.b16 %v7218
    %v8122 = vunpack.c.l.b16 %v7219
    %v8123 = vunpack.c.l.b16 %v7220
    %v8124 = vunpack.c.l.b16 %v7221
    %v8125 = vunpack.c.l.b16 %v7222
    %v8126 = vunpack.c.l.b16 %v7223
    %v8127 = vunpack.c.l.b16 %v7224
    %v8128 = vunpack.c.l.b16 %v7225
    %v8129 = vunpack.c.l.b16 %v7226
    %v8130 = vunpack.c.l.b16 %v7227
    %v8131 = vunpack.c.l.b16 %v7228
    %v8132 = vunpack.c.l.b16 %v7229
    %v8133 = vunpack.c.l.b16 %v7230
    %v8134 = vunpack.c.l.b16 %v7231
    %v8135 = vunpack.c.l.b16 %v7232
    %v8136 = vunpack.c.l.b16 %v7233
    %v8137 = vunpack.c.l.b16 %v7234
    %v8138 = vunpack.c.l.b16 %v7235
    %v8139 = vunpack.c.l.b16 %v7236
    %v8140 = vunpack.c.l.b16 %v7237
    %v8141 = vunpack.c.l.b16 %v7238
    %v8142 = vunpack.c.l.b16 %v7239
    %v8143 = vunpack.c.l.b16 %v7240
    %v8144 = vunpack.c.l.b16 %v7241
    %v8145 = vunpack.c.l.b16 %v7242
    %v8146 = vunpack.c.l.b16 %v7243
    %v8147 = vunpack.c.l.b16 %v7244
    %v8148 = vunpack.c.l.b16 %v7245
    %v8149 = vunpack.c.l.b16 %v7246
    %v8150 = vunpack.c.l.b16 %v7247
    %v8151 = vunpack.c.l.b16 %v7248
    %v8152 = vunpack.c.l.b16 %v7249
    %v8153 = vunpack.c.l.b16 %v7250
    %v8154 = vunpack.c.l.b16 %v7251
    %v8155 = vunpack.c.l.b16 %v7252
    %v8156 = vunpack.c.l.b16 %v7253
    %v8157 = vunpack.c.l.b16 %v7254
    %v8158 = vunpack.c.l.b16 %v7255
    %v8159 = vunpack.c.l.b16 %v7256
    %v8160 = vunpack.c.l.b16 %v7257
    %v8161 = vunpack.c.l.b16 %v7258
    %v8162 = vunpack.c.l.b16 %v7259
    %v8163 = vunpack.c.l.b16 %v7260
    %v8164 = vunpack.c.l.b16 %v7261
    %v8165 = vunpack.c.l.b16 %v7262
    %v8166 = vunpack.c.l.b16 %v7263
    %v8167 = vunpack.c.l.b16 %v7264
    %v8168 = vunpack.c.l.b16 %v7265
    %v8169 = vunpack.c.l.b16 %v7266
    %v8170 = vunpack.c.l.b16 %v7267
    %v8171 = vunpack.c.l.b16 %v7268
    %v8172 = vunpack.c.l.b16 %v7269
    %v8173 = vunpack.c.l.b16 %v7270
    %v8174 = vunpack.c.l.b16 %v7271
    %v8175 = vunpack.c.l.b16 %v7272
    %v8176 = vunpack.c.l.b16 %v7273
    %v8177 = vunpack.c.l.b16 %v7274
    %v8178 = vunpack.c.l.b16 %v7275
    %v8179 = vunpack.c.l.b16 %v7276
    %v8180 = vunpack.c.l.b16 %v7277
    %v8181 = vunpack.c.l.b16 %v7278
    %v8182 = vunpack.c.l.b16 %v7279
    %v8183 = vunpack.c.l.b16 %v7280
    %v8184 = vunpack.c.l.b16 %v7281
    %v8185 = vunpack.c.l.b16 %v7282
    %v8186 = vunpack.c.l.b16 %v7283
    %v8187 = vunpack.c.l.b16 %v7284
    %v8188 = vunpack.c.l.b16 %v7285
    %v8189 = vunpack.c.l.b16 %v7286
    %v8190 = vunpack.c.l.b16 %v7287
    %v8191 = vunpack.c.l.b16 %v7288
    %v8192 = vunpack.c.l.b16 %v7289
    %v8193 = vunpack.c.l.b16 %v7290
    %v8194 = vunpack.c.l.b16 %v7291
    %v8195 = vunpack.c.l.b16 %v7292
    %v8196 = vunpack.c.l.b16 %v7293
    %v8197 = vunpack.c.l.b16 %v7294
    %v8198 = vunpack.c.l.b16 %v7295
    %v8199 = vunpack.c.l.b16 %v7296
    %v8200 = vunpack.c.l.b16 %v7297
    %v8201 = vunpack.c.l.b16 %v7298
    %v8202 = vunpack.c.l.b16 %v7299
    %v8203 = vunpack.c.l.b16 %v7300
    %v8204 = vunpack.c.l.b16 %v7301
    %v8205 = vunpack.c.l.b16 %v7302
    %v8206 = vunpack.c.l.b16 %v7303
    %v8207 = vunpack.c.l.b16 %v7304
    %v8208 = vunpack.c.l.b16 %v7305
    %v8209 = vunpack.c.l.b16 %v7306
    %v8210 = vunpack.c.l.b16 %v7307
    %v8211 = vunpack.c.l.b16 %v7308
    %v8212 = vunpack.c.l.b16 %v7309
    %v8213 = vunpack.c.l.b16 %v7310
    %v8214 = vunpack.c.l.b16 %v7311
    %v8215 = vunpack.c.l.b16 %v7312
    %v8216 = vunpack.c.l.b16 %v7313
    %v8217 = vunpack.c.l.b16 %v7314
    %v8218 = vunpack.c.l.b16 %v7315
    %v8219 = vunpack.c.l.b16 %v7316
    %v8220 = vunpack.c.l.b16 %v7317
    %v8221 = vunpack.c.l.b16 %v7318
    %v8222 = vunpack.c.l.b16 %v7319
    %v8223 = vunpack.c.l.b16 %v7320
    %v8224 = vunpack.c.l.b16 %v7321
    %v8225 = vunpack.c.l.b16 %v7322
    %v8226 = vunpack.c.l.b16 %v7323
    %v8227 = vunpack.c.l.b16 %v7324
    %v8228 = vunpack.c.l.b16 %v7325
    %v8229 = vunpack.c.l.b16 %v7326
    %v8230 = vunpack.c.l.b16 %v7327
    %v8231 = vunpack.c.l.b16 %v7328
    %v8232 = vunpack.c.l.b16 %v7329
    %v8233 = vunpack.c.l.b16 %v7330
    %v8234 = vunpack.c.l.b16 %v7331
    %v8235 = vunpack.c.l.b16 %v7332
    %v8236 = vunpack.c.l.b16 %v7333
    %v8237 = vunpack.c.l.b16 %v7334
    %v8238 = vunpack.c.l.b16 %v7335
    %v8239 = vunpack.c.l.b16 %v7336
    %v8240 = vunpack.c.l.b16 %v7337
    %v8241 = vunpack.c.l.b16 %v7338
    %v8242 = vunpack.c.l.b16 %v7339
    %v8243 = vunpack.c.l.b16 %v7340
    %v8244 = vunpack.c.l.b16 %v7341
    %v8245 = vunpack.c.l.b16 %v7342
    %v8246 = vunpack.c.l.b16 %v7343
    %v8247 = vunpack.c.l.b16 %v7344
    %v8248 = vunpack.c.l.b16 %v7345
    %v8249 = vunpack.c.l.b16 %v7346
    %v8250 = vunpack.c.l.b16 %v7347
    %v8251 = vunpack.c.l.b16 %v7348
    %v8252 = vunpack.c.l.b16 %v7349
    %v8253 = vunpack.c.l.b16 %v7350
    %v8254 = vunpack.c.l.b16 %v7351
    %v8255 = vunpack.c.l.b16 %v7352
    %v8256 = vunpack.c.l.b16 %v7353
    %v8257 = vunpack.c.l.b16 %v7354
    %v8258 = vunpack.c.l.b16 %v7355
    %v8259 = vunpack.c.l.b16 %v7356
    %v8260 = vunpack.c.l.b16 %v7357
    %v8261 = vunpack.c.l.b16 %v7358
    %v8262 = vunpack.c.l.b16 %v7359
    %v8263 = vunpack.c.l.b16 %v7360
    %v8264 = vunpack.c.l.b16 %v7361
    %v8265 = vunpack.c.l.b16 %v7362
    %v8266 = vunpack.c.l.b16 %v7363
    %v8267 = vunpack.c.l.b16 %v7364
    %v8268 = vunpack.c.l.b16 %v7365
    %v8269 = vunpack.c.l.b16 %v7366
    %v8270 = vunpack.c.l.b16 %v7367
    %v8271 = vunpack.c.l.b16 %v7368
    %v8272 = vunpack.c.l.b16 %v7369
    %v8273 = vunpack.c.l.b16 %v7370
    %v8274 = vunpack.c.l.b16 %v7371
    %v8275 = vunpack.c.l.b16 %v7372
    %v8276 = vunpack.c.l.b16 %v7373
    %v8277 = vunpack.c.l.b16 %v7374
    %v8278 = vunpack.c.l.b16 %v7375
    %v8279 = vunpack.c.l.b16 %v7376
    %v8280 = vunpack.c.l.b16 %v7377
    %v8281 = vunpack.c.l.b16 %v7378
    %v8282 = vunpack.c.l.b16 %v7379
    %v8283 = vunpack.c.l.b16 %v7380
    %v8284 = vunpack.c.l.b16 %v7381
    %v8285 = vunpack.c.l.b16 %v7382
    %v8286 = vunpack.c.l.b16 %v7383
    %v8287 = vunpack.c.l.b16 %v7384
    %v8288 = vunpack.c.l.b16 %v7385
    %v8289 = vunpack.c.l.b16 %v7386
    %v8290 = vunpack.c.l.b16 %v7387
    %v8291 = vunpack.c.l.b16 %v7388
    %v8292 = vunpack.c.l.b16 %v7389
    %v8293 = vunpack.c.l.b16 %v7390
    %v8294 = vunpack.c.l.b16 %v7391
    %v8295 = vunpack.c.l.b16 %v7392
    %v8296 = vunpack.c.l.b16 %v7393
    %v8297 = vunpack.c.l.b16 %v7394
    %v8298 = vunpack.c.l.b16 %v7395
    %v8299 = vunpack.c.l.b16 %v7396
    %v8300 = vunpack.c.l.b16 %v7397
    %v8301 = vunpack.c.l.b16 %v7398
    %v8302 = vunpack.c.l.b16 %v7399
    %v8303 = vunpack.c.l.b16 %v7400
    %v8304 = vunpack.c.l.b16 %v7401
    %v8305 = vunpack.c.l.b16 %v7402
    %v8306 = vunpack.c.l.b16 %v7403
    %v8307 = vunpack.c.l.b16 %v7404
    %v8308 = vunpack.c.l.b16 %v7405
    %v8309 = vunpack.c.l.b16 %v7406
    %v8310 = vunpack.c.l.b16 %v7407
    %v8311 = vunpack.c.l.b16 %v7408
    %v8312 = vunpack.c.l.b16 %v7409
    %v8313 = vunpack.c.l.b16 %v7410
    %v8314 = vunpack.c.l.b16 %v7411
    %v8315 = vunpack.c.l.b16 %v7412
    %v8316 = vunpack.c.l.b16 %v7413
    %v8317 = vunpack.c.l.b16 %v7414
    %v8318 = vunpack.c.l.b16 %v7415
    %v8319 = vunpack.c.l.b16 %v7416
    %v8320 = vunpack.c.l.b16 %v7417
    %v8321 = vunpack.c.l.b16 %v7418
    %v8322 = vunpack.c.l.b16 %v7419
    %v8323 = vunpack.c.l.b16 %v7420
    %v8324 = vunpack.c.l.b16 %v7421
    %v8325 = vunpack.c.l.b16 %v7422
    %v8326 = vunpack.c.l.b16 %v7423
    %v8327 = vunpack.c.l.b16 %v7424
    %v8328 = vunpack.c.l.b16 %v7425
    %v8329 = vunpack.c.l.b16 %v7426
    %v8330 = vunpack.c.l.b16 %v7427
    %v8331 = vunpack.c.l.b16 %v7428
    %v8332 = vunpack.c.l.b16 %v7429
    %v8333 = vunpack.c.l.b16 %v7430
    %v8334 = vunpack.c.l.b16 %v7431
    %v8335 = vunpack.c.l.b16 %v7432
    %v8336 = vunpack.c.l.b16 %v7433
    %v8337 = vunpack.c.l.b16 %v7434
    %v8338 = vunpack.c.l.b16 %v7435
    %v8339 = vunpack.c.l.b16 %v7436
    %v8340 = vunpack.c.l.b16 %v7437
    %v8341 = vunpack.c.l.b16 %v7438
    %v8342 = vunpack.c.l.b16 %v7439
    %v8343 = vunpack.c.l.b16 %v7440
    %v8344 = vunpack.c.l.b16 %v7441
    %v8345 = vunpack.c.l.b16 %v7442
    %v8346 = vunpack.c.l.b16 %v7443
    %v8347 = vunpack.c.l.b16 %v7444
    %v8348 = vunpack.c.l.b16 %v7445
    %v8349 = vunpack.c.l.b16 %v7446
    %v8350 = vunpack.c.l.b16 %v7447
    %v8351 = vunpack.c.l.b16 %v7448
    %v8352 = vunpack.c.l.b16 %v7449
    %v8353 = vunpack.c.l.b16 %v7450
    %v8354 = vunpack.c.l.b16 %v7451
    %v8355 = vunpack.c.l.b16 %v7452
    %v8356 = vunpack.c.l.b16 %v7453
    %v8357 = vunpack.c.l.b16 %v7454
    %v8358 = vunpack.c.l.b16 %v7455
    %v8359 = vunpack.c.l.b16 %v7456
    %v8360 = vunpack.c.l.b16 %v7457
    %v8361 = vunpack.c.l.b16 %v7458
    %v8362 = vunpack.c.l.b16 %v7459
    %v8363 = vunpack.c.l.b16 %v7460
    %v8364 = vunpack.c.l.b16 %v7461
    %v8365 = vunpack.c.l.b16 %v7462
    %v8366 = vunpack.c.l.b16 %v7463
    %v8367 = vunpack.c.l.b16 %v7464
    %v8368 = vunpack.c.l.b16 %v7465
    %v8369 = vunpack.c.l.b16 %v7466
    %v8370 = vunpack.c.l.b16 %v7467
    %v8371 = vunpack.c.l.b16 %v7468
    %v8372 = vunpack.c.l.b16 %v7469
    %v8373 = vunpack.c.l.b16 %v7470
    %v8374 = vunpack.c.l.b16 %v7471
    %v8375 = vunpack.c.l.b16 %v7472
    %v8376 = vunpack.c.l.b16 %v7473
    %v8377 = vunpack.c.l.b16 %v7474
    %v8378 = vunpack.c.l.b16 %v7475
    %v8379 = vunpack.c.l.b16 %v7476
    %v8380 = vunpack.c.l.b16 %v7477
    %v8381 = vunpack.c.l.b16 %v7478
    %v8382 = vunpack.c.l.b16 %v7479
    %v8383 = vunpack.c.l.b16 %v7480
    %v8384 = vunpack.c.l.b16 %v7481
    %v8385 = vunpack.c.l.b16 %v7482
    %v8386 = vunpack.c.l.b16 %v7483
    %v8387 = vunpack.c.l.b16 %v7484
    %v8388 = vunpack.c.l.b16 %v7485
    %v8389 = vunpack.c.l.b16 %v7486
    %v8390 = vunpack.c.l.b16 %v7487
    %v8391 = vunpack.c.l.b16 %v7488
    %v8392 = vunpack.c.l.b16 %v7489
    %v8393 = vunpack.c.l.b16 %v7490
    %v8394 = vunpack.c.l.b16 %v7491
    %v8395 = vunpack.c.l.b16 %v7492
    %v8396 = vunpack.c.l.b16 %v7493
    %v8397 = vunpack.c.l.b16 %v7494
    %v8398 = vunpack.c.l.b16 %v7495
    %v8399 = vunpack.c.l.b16 %v7496
    %v8400 = vunpack.c.l.b16 %v7497
    %v8401 = vunpack.c.l.b16 %v7498
    %v8402 = vunpack.c.l.b16 %v7499
    %v8403 = vunpack.c.l.b16 %v7500
    %v8404 = vunpack.c.l.b16 %v7501
    %v8405 = vunpack.c.l.b16 %v7502
    %v8406 = vunpack.c.l.b16 %v7503
    %v8407 = vunpack.c.l.b16 %v7504
    %v8408 = vunpack.c.l.b16 %v7505
    %v8409 = vunpack.c.l.b16 %v7506
    %v8410 = vunpack.c.l.b16 %v7507
    %v8411 = vunpack.c.l.b16 %v7508
    %v8412 = vunpack.c.l.b16 %v7509
    %v8413 = vunpack.c.l.b16 %v7510
    %v8414 = vunpack.c.l.b16 %v7511
    %v8415 = vunpack.c.l.b16 %v7512
    %v8416 = vunpack.c.l.b16 %v7513
    %v8417 = vunpack.c.l.b16 %v7514
    %v8418 = vunpack.c.l.b16 %v7515
    %v8419 = vunpack.c.l.b16 %v7516
    %v8420 = vunpack.c.l.b16 %v7517
    %v8421 = vunpack.c.l.b16 %v7518
    %v8422 = vunpack.c.l.b16 %v7519
    %v8423 = vunpack.c.l.b16 %v7520
    %v8424 = vunpack.c.l.b16 %v7521
    %v8425 = vunpack.c.l.b16 %v7522
    %v8426 = vunpack.c.l.b16 %v7523
    %v8427 = vunpack.c.l.b16 %v7524
    %v8428 = vunpack.c.l.b16 %v7525
    %v8429 = vunpack.c.l.b16 %v7526
    %v8430 = vunpack.c.l.b16 %v7527
    %v8431 = vunpack.c.l.b16 %v7528
    %v8432 = vunpack.c.l.b16 %v7529
    %v8433 = vunpack.c.l.b16 %v7530
    %v8434 = vunpack.c.l.b16 %v7531
    %v8435 = vunpack.c.l.b16 %v7532
    %v8436 = vunpack.c.l.b16 %v7533
    %v8437 = vunpack.c.l.b16 %v7534
    %v8438 = vunpack.c.l.b16 %v7535
    %v8439 = vunpack.c.l.b16 %v7536
    %v8440 = vunpack.c.l.b16 %v7537
    %v8441 = vunpack.c.l.b16 %v7538
    %v8442 = vunpack.c.l.b16 %v7539
    %v8443 = vunpack.c.l.b16 %v7540
    %v8444 = vunpack.c.l.b16 %v7541
    %v8445 = vunpack.c.l.b16 %v7542
    %v8446 = vunpack.c.l.b16 %v7543
    %v8447 = vunpack.c.l.b16 %v7544
    %v8448 = vunpack.c.l.b16 %v7545
    %v8449 = vunpack.c.l.b16 %v7546
    %v8450 = vunpack.c.l.b16 %v7547
    %v8451 = vunpack.c.l.b16 %v7548
    %v8452 = vunpack.c.l.b16 %v7549
    %v8453 = vunpack.c.l.b16 %v7550
    %v8454 = vunpack.c.l.b16 %v7551
    %v8455 = vunpack.c.l.b16 %v7552
    %v8456 = vunpack.c.l.b16 %v7553
    %v8457 = vunpack.c.l.b16 %v7554
    %v8458 = vunpack.c.l.b16 %v7555
    %v8459 = vunpack.c.l.b16 %v7556
    %v8460 = vunpack.c.l.b16 %v7557
    %v8461 = vunpack.c.l.b16 %v7558
    %v8462 = vunpack.c.l.b16 %v7559
    %v8463 = vunpack.c.l.b16 %v7560
    %v8464 = vunpack.c.l.b16 %v7561
    %v8465 = vunpack.c.l.b16 %v7562
    %v8466 = vunpack.c.l.b16 %v7563
    %v8467 = vunpack.c.l.b16 %v7564
    %v8468 = vunpack.c.l.b16 %v7565
    %v8469 = vunpack.c.l.b16 %v7566
    %v8470 = vunpack.c.l.b16 %v7567
    %v8471 = vpack.c.b16 %v8024, %v8023
    %v8472 = vpack.c.b16 %v8026, %v8025
    %v8473 = vpack.c.b16 %v8028, %v8027
    %v8474 = vpack.c.b16 %v8030, %v8029
    %v8475 = vpack.c.b16 %v8032, %v8031
    %v8476 = vpack.c.b16 %v8034, %v8033
    %v8477 = vpack.c.b16 %v8036, %v8035
    %v8478 = vpack.c.b16 %v8038, %v8037
    %v8479 = vpack.c.b16 %v8040, %v8039
    %v8480 = vpack.c.b16 %v8042, %v8041
    %v8481 = vpack.c.b16 %v8044, %v8043
    %v8482 = vpack.c.b16 %v8046, %v8045
    %v8483 = vpack.c.b16 %v8048, %v8047
    %v8484 = vpack.c.b16 %v8050, %v8049
    %v8485 = vpack.c.b16 %v8052, %v8051
    %v8486 = vpack.c.b16 %v8054, %v8053
    %v8487 = vpack.c.b16 %v8056, %v8055
    %v8488 = vpack.c.b16 %v8058, %v8057
    %v8489 = vpack.c.b16 %v8060, %v8059
    %v8490 = vpack.c.b16 %v8062, %v8061
    %v8491 = vpack.c.b16 %v8064, %v8063
    %v8492 = vpack.c.b16 %v8066, %v8065
    %v8493 = vpack.c.b16 %v8068, %v8067
    %v8494 = vpack.c.b16 %v8070, %v8069
    %v8495 = vpack.c.b16 %v8072, %v8071
    %v8496 = vpack.c.b16 %v8074, %v8073
    %v8497 = vpack.c.b16 %v8076, %v8075
    %v8498 = vpack.c.b16 %v8078, %v8077
    %v8499 = vpack.c.b16 %v8080, %v8079
    %v8500 = vpack.c.b16 %v8082, %v8081
    %v8501 = vpack.c.b16 %v8084, %v8083
    %v8502 = vpack.c.b16 %v8086, %v8085
    %v8503 = vpack.c.b16 %v8088, %v8087
    %v8504 = vpack.c.b16 %v8090, %v8089
    %v8505 = vpack.c.b16 %v8092, %v8091
    %v8506 = vpack.c.b16 %v8094, %v8093
    %v8507 = vpack.c.b16 %v8096, %v8095
    %v8508 = vpack.c.b16 %v8098, %v8097
    %v8509 = vpack.c.b16 %v8100, %v8099
    %v8510 = vpack.c.b16 %v8102, %v8101
    %v8511 = vpack.c.b16 %v8104, %v8103
    %v8512 = vpack.c.b16 %v8106, %v8105
    %v8513 = vpack.c.b16 %v8108, %v8107
    %v8514 = vpack.c.b16 %v8110, %v8109
    %v8515 = vpack.c.b16 %v8112, %v8111
    %v8516 = vpack.c.b16 %v8114, %v8113
    %v8517 = vpack.c.b16 %v8116, %v8115
    %v8518 = vpack.c.b16 %v8118, %v8117
    %v8519 = vpack.c.b16 %v8120, %v8119
    %v8520 = vpack.c.b16 %v8122, %v8121
    %v8521 = vpack.c.b16 %v8124, %v8123
    %v8522 = vpack.c.b16 %v8126, %v8125
    %v8523 = vpack.c.b16 %v8128, %v8127
    %v8524 = vpack.c.b16 %v8130, %v8129
    %v8525 = vpack.c.b16 %v8132, %v8131
    %v8526 = vpack.c.b16 %v8134, %v8133
    %v8527 = vpack.c.b16 %v8136, %v8135
    %v8528 = vpack.c.b16 %v8138, %v8137
    %v8529 = vpack.c.b16 %v8140, %v8139
    %v8530 = vpack.c.b16 %v8142, %v8141
    %v8531 = vpack.c.b16 %v8144, %v8143
    %v8532 = vpack.c.b16 %v8146, %v8145
    %v8533 = vpack.c.b16 %v8148, %v8147
    %v8534 = vpack.c.b16 %v8150, %v8149
    %v8535 = vpack.c.b16 %v8152, %v8151
    %v8536 = vpack.c.b16 %v8154, %v8153
    %v8537 = vpack.c.b16 %v8156, %v8155
    %v8538 = vpack.c.b16 %v8158, %v8157
    %v8539 = vpack.c.b16 %v8160, %v8159
    %v8540 = vpack.c.b16 %v8162, %v8161
    %v8541 = vpack.c.b16 %v8164, %v8163
    %v8542 = vpack.c.b16 %v8166, %v8165
    %v8543 = vpack.c.b16 %v8168, %v8167
    %v8544 = vpack.c.b16 %v8170, %v8169
    %v8545 = vpack.c.b16 %v8172, %v8171
    %v8546 = vpack.c.b16 %v8174, %v8173
    %v8547 = vpack.c.b16 %v8176, %v8175
    %v8548 = vpack.c.b16 %v8178, %v8177
    %v8549 = vpack.c.b16 %v8180, %v8179
    %v8550 = vpack.c.b16 %v8182, %v8181
    %v8551 = vpack.c.b16 %v8184, %v8183
    %v8552 = vpack.c.b16 %v8186, %v8185
    %v8553 = vpack.c.b16 %v8188, %v8187
    %v8554 = vpack.c.b16 %v8190, %v8189
    %v8555 = vpack.c.b16 %v8192, %v8191
    %v8556 = vpack.c.b16 %v8194, %v8193
    %v8557 = vpack.c.b16 %v8196, %v8195
    %v8558 = vpack.c.b16 %v8198, %v8197
    %v8559 = vpack.c.b16 %v8200, %v8199
    %v8560 = vpack.c.b16 %v8202, %v8201
    %v8561 = vpack.c.b16 %v8204, %v8203
    %v8562 = vpack.c.b16 %v8206, %v8205
    %v8563 = vpack.c.b16 %v8208, %v8207
    %v8564 = vpack.c.b16 %v8210, %v8209
    %v8565 = vpack.c.b16 %v8212, %v8211
    %v8566 = vpack.c.b16 %v8214, %v8213
    %v8567 = vpack.c.b16 %v8216, %v8215
    %v8568 = vpack.c.b16 %v8218, %v8217
    %v8569 = vpack.c.b16 %v8220, %v8219
    %v8570 = vpack.c.b16 %v8222, %v8221
    %v8571 = vpack.c.b16 %v8224, %v8223
    %v8572 = vpack.c.b16 %v8226, %v8225
    %v8573 = vpack.c.b16 %v8228, %v8227
    %v8574 = vpack.c.b16 %v8230, %v8229
    %v8575 = vpack.c.b16 %v8232, %v8231
    %v8576 = vpack.c.b16 %v8234, %v8233
    %v8577 = vpack.c.b16 %v8236, %v8235
    %v8578 = vpack.c.b16 %v8238, %v8237
    %v8579 = vpack.c.b16 %v8240, %v8239
    %v8580 = vpack.c.b16 %v8242, %v8241
    %v8581 = vpack.c.b16 %v8244, %v8243
    %v8582 = vpack.c.b16 %v8246, %v8245
    %v8583 = vpack.c.b16 %v8248, %v8247
    %v8584 = vpack.c.b16 %v8250, %v8249
    %v8585 = vpack.c.b16 %v8252, %v8251
    %v8586 = vpack.c.b16 %v8254, %v8253
    %v8587 = vpack.c.b16 %v8256, %v8255
    %v8588 = vpack.c.b16 %v8258, %v8257
    %v8589 = vpack.c.b16 %v8260, %v8259
    %v8590 = vpack.c.b16 %v8262, %v8261
    %v8591 = vpack.c.b16 %v8264, %v8263
    %v8592 = vpack.c.b16 %v8266, %v8265
    %v8593 = vpack.c.b16 %v8268, %v8267
    %v8594 = vpack.c.b16 %v8270, %v8269
    %v8595 = vpack.c.b16 %v8272, %v8271
    %v8596 = vpack.c.b16 %v8274, %v8273
    %v8597 = vpack.c.b16 %v8276, %v8275
    %v8598 = vpack.c.b16 %v8278, %v8277
    %v8599 = vpack.c.b16 %v8280, %v8279
    %v8600 = vpack.c.b16 %v8282, %v8281
    %v8601 = vpack.c.b16 %v8284, %v8283
    %v8602 = vpack.c.b16 %v8286, %v8285
    %v8603 = vpack.c.b16 %v8288, %v8287
    %v8604 = vpack.c.b16 %v8290, %v8289
    %v8605 = vpack.c.b16 %v8292, %v8291
    %v8606 = vpack.c.b16 %v8294, %v8293
    %v8607 = vpack.c.b16 %v8296, %v8295
    %v8608 = vpack.c.b16 %v8298, %v8297
    %v8609 = vpack.c.b16 %v8300, %v8299
    %v8610 = vpack.c.b16 %v8302, %v8301
    %v8611 = vpack.c.b16 %v8304, %v8303
    %v8612 = vpack.c.b16 %v8306, %v8305
    %v8613 = vpack.c.b16 %v8308, %v8307
    %v8614 = vpack.c.b16 %v8310, %v8309
    %v8615 = vpack.c.b16 %v8312, %v8311
    %v8616 = vpack.c.b16 %v8314, %v8313
    %v8617 = vpack.c.b16 %v8316, %v8315
    %v8618 = vpack.c.b16 %v8318, %v8317
    %v8619 = vpack.c.b16 %v8320, %v8319
    %v8620 = vpack.c.b16 %v8322, %v8321
    %v8621 = vpack.c.b16 %v8324, %v8323
    %v8622 = vpack.c.b16 %v8326, %v8325
    %v8623 = vpack.c.b16 %v8328, %v8327
    %v8624 = vpack.c.b16 %v8330, %v8329
    %v8625 = vpack.c.b16 %v8332, %v8331
    %v8626 = vpack.c.b16 %v8334, %v8333
    %v8627 = vpack.c.b16 %v8336, %v8335
    %v8628 = vpack.c.b16 %v8338, %v8337
    %v8629 = vpack.c.b16 %v8340, %v8339
    %v8630 = vpack.c.b16 %v8342, %v8341
    %v8631 = vpack.c.b16 %v8344, %v8343
    %v8632 = vpack.c.b16 %v8346, %v8345
    %v8633 = vpack.c.b16 %v8348, %v8347
    %v8634 = vpack.c.b16 %v8350, %v8349
    %v8635 = vpack.c.b16 %v8352, %v8351
    %v8636 = vpack.c.b16 %v8354, %v8353
    %v8637 = vpack.c.b16 %v8356, %v8355
    %v8638 = vpack.c.b16 %v8358, %v8357
    %v8639 = vpack.c.b16 %v8360, %v8359
    %v8640 = vpack.c.b16 %v8362, %v8361
    %v8641 = vpack.c.b16 %v8364, %v8363
    %v8642 = vpack.c.b16 %v8366, %v8365
    %v8643 = vpack.c.b16 %v8368, %v8367
    %v8644 = vpack.c.b16 %v8370, %v8369
    %v8645 = vpack.c.b16 %v8372, %v8371
    %v8646 = vpack.c.b16 %v8374, %v8373
    %v8647 = vpack.c.b16 %v8376, %v8375
    %v8648 = vpack.c.b16 %v8378, %v8377
    %v8649 = vpack.c.b16 %v8380, %v8379
    %v8650 = vpack.c.b16 %v8382, %v8381
    %v8651 = vpack.c.b16 %v8384, %v8383
    %v8652 = vpack.c.b16 %v8386, %v8385
    %v8653 = vpack.c.b16 %v8388, %v8387
    %v8654 = vpack.c.b16 %v8390, %v8389
    %v8655 = vpack.c.b16 %v8392, %v8391
    %v8656 = vpack.c.b16 %v8394, %v8393
    %v8657 = vpack.c.b16 %v8396, %v8395
    %v8658 = vpack.c.b16 %v8398, %v8397
    %v8659 = vpack.c.b16 %v8400, %v8399
    %v8660 = vpack.c.b16 %v8402, %v8401
    %v8661 = vpack.c.b16 %v8404, %v8403
    %v8662 = vpack.c.b16 %v8406, %v8405
    %v8663 = vpack.c.b16 %v8408, %v8407
    %v8664 = vpack.c.b16 %v8410, %v8409
    %v8665 = vpack.c.b16 %v8412, %v8411
    %v8666 = vpack.c.b16 %v8414, %v8413
    %v8667 = vpack.c.b16 %v8416, %v8415
    %v8668 = vpack.c.b16 %v8418, %v8417
    %v8669 = vpack.c.b16 %v8420, %v8419
    %v8670 = vpack.c.b16 %v8422, %v8421
    %v8671 = vpack.c.b16 %v8424, %v8423
    %v8672 = vpack.c.b16 %v8426, %v8425
    %v8673 = vpack.c.b16 %v8428, %v8427
    %v8674 = vpack.c.b16 %v8430, %v8429
    %v8675 = vpack.c.b16 %v8432, %v8431
    %v8676 = vpack.c.b16 %v8434, %v8433
    %v8677 = vpack.c.b16 %v8436, %v8435
    %v8678 = vpack.c.b16 %v8438, %v8437
    %v8679 = vpack.c.b16 %v8440, %v8439
    %v8680 = vpack.c.b16 %v8442, %v8441
    %v8681 = vpack.c.b16 %v8444, %v8443
    %v8682 = vpack.c.b16 %v8446, %v8445
    %v8683 = vpack.c.b16 %v8448, %v8447
    %v8684 = vpack.c.b16 %v8450, %v8449
    %v8685 = vpack.c.b16 %v8452, %v8451
    %v8686 = vpack.c.b16 %v8454, %v8453
    %v8687 = vpack.c.b16 %v8456, %v8455
    %v8688 = vpack.c.b16 %v8458, %v8457
    %v8689 = vpack.c.b16 %v8460, %v8459
    %v8690 = vpack.c.b16 %v8462, %v8461
    %v8691 = vpack.c.b16 %v8464, %v8463
    %v8692 = vpack.c.b16 %v8466, %v8465
    %v8693 = vpack.c.b16 %v8468, %v8467
    %v8694 = vpack.c.b16 %v8470, %v8469
    %8919 = vmatprep.subr.bf16.mxu0 0
    %8920 = vmatpush1.bf16.msra.mxu0 %v8471
    %8921 = vmatprep.subr.bf16.mxu0 0
    %8922 = vmatpush1.bf16.msra.mxu0 %v8472
    %8923 = vmatprep.subr.bf16.mxu0 0
    %8924 = vmatpush1.bf16.msra.mxu0 %v8473
    %8925 = vmatprep.subr.bf16.mxu0 0
    %8926 = vmatpush1.bf16.msra.mxu0 %v8474
    %8927 = vmatprep.subr.bf16.mxu0 0
    %8928 = vmatpush1.bf16.msra.mxu0 %v8475
    %8929 = vmatprep.subr.bf16.mxu0 0
    %8930 = vmatpush1.bf16.msra.mxu0 %v8476
    %8931 = vmatprep.subr.bf16.mxu0 0
    %8932 = vmatpush1.bf16.msra.mxu0 %v8477
    %8933 = vmatprep.subr.bf16.mxu0 0
    %8934 = vmatpush1.bf16.msra.mxu0 %v8478
    %8935 = vmatprep.subr.bf16.mxu0 0
    %8936 = vmatpush1.bf16.msra.mxu0 %v8479
    %8937 = vmatprep.subr.bf16.mxu0 0
    %8938 = vmatpush1.bf16.msra.mxu0 %v8480
    %8939 = vmatprep.subr.bf16.mxu0 0
    %8940 = vmatpush1.bf16.msra.mxu0 %v8481
    %8941 = vmatprep.subr.bf16.mxu0 0
    %8942 = vmatpush1.bf16.msra.mxu0 %v8482
    %8943 = vmatprep.subr.bf16.mxu0 0
    %8944 = vmatpush1.bf16.msra.mxu0 %v8483
    %8945 = vmatprep.subr.bf16.mxu0 0
    %8946 = vmatpush1.bf16.msra.mxu0 %v8484
    %8947 = vmatprep.subr.bf16.mxu0 0
    %8948 = vmatpush1.bf16.msra.mxu0 %v8485
    %8949 = vmatprep.subr.bf16.mxu0 0
    %8950 = vmatpush1.bf16.msra.mxu0 %v8486
    %8951 = vmatprep.mubr.bf16.mxu0 %v6565
    %8952 = vmatmul.mubr.bf16.gmra.mrb[0].mxu0 %v6550
    %v8953 = vpop.f32.mrb[0].mxu0
    %v8954 = vadd.f32 %v7573, %v8953
    %v8955 = vpop.f32.mrb[0].mxu0
    %v8956 = vpop.f32.mrb[0].mxu0
    %v8957 = vpop.f32.mrb[0].mxu0
    %8958 = vdwg.mxu0
    %8959 = vmatprep.subr.bf16.mxu0 0
    %8960 = vmatpush1.bf16.msra.mxu0 %v8487
    %8961 = vmatprep.subr.bf16.mxu0 0
    %8962 = vmatpush1.bf16.msra.mxu0 %v8488
    %8963 = vmatprep.subr.bf16.mxu0 0
    %8964 = vmatpush1.bf16.msra.mxu0 %v8489
    %8965 = vmatprep.subr.bf16.mxu0 0
    %8966 = vmatpush1.bf16.msra.mxu0 %v8490
    %8967 = vmatprep.subr.bf16.mxu0 0
    %8968 = vmatpush1.bf16.msra.mxu0 %v8491
    %8969 = vmatprep.subr.bf16.mxu0 0
    %8970 = vmatpush1.bf16.msra.mxu0 %v8492
    %8971 = vmatprep.subr.bf16.mxu0 0
    %8972 = vmatpush1.bf16.msra.mxu0 %v8493
    %8973 = vmatprep.subr.bf16.mxu0 0
    %8974 = vmatpush1.bf16.msra.mxu0 %v8494
    %8975 = vmatprep.subr.bf16.mxu0 0
    %8976 = vmatpush1.bf16.msra.mxu0 %v8495
    %8977 = vmatprep.subr.bf16.mxu0 0
    %8978 = vmatpush1.bf16.msra.mxu0 %v8496
    %8979 = vmatprep.subr.bf16.mxu0 0
    %8980 = vmatpush1.bf16.msra.mxu0 %v8497
    %8981 = vmatprep.subr.bf16.mxu0 0
    %8982 = vmatpush1.bf16.msra.mxu0 %v8498
    %8983 = vmatprep.subr.bf16.mxu0 0
    %8984 = vmatpush1.bf16.msra.mxu0 %v8499
    %8985 = vmatprep.subr.bf16.mxu0 0
    %8986 = vmatpush1.bf16.msra.mxu0 %v8500
    %8987 = vmatprep.subr.bf16.mxu0 0
    %8988 = vmatpush1.bf16.msra.mxu0 %v8501
    %8989 = vmatprep.subr.bf16.mxu0 0
    %8990 = vmatpush1.bf16.msra.mxu0 %v8502
    %8991 = vmatprep.mubr.bf16.mxu0 %v6595
    %8992 = vmatmul.mubr.bf16.gmra.mrb[0].mxu0 %v6580
    %v8993 = vpop.f32.mrb[0].mxu0
    %v8994 = vadd.f32 %v8954, %v8993
    %v8995 = vpop.f32.mrb[0].mxu0
    %v8996 = vpop.f32.mrb[0].mxu0
    %v8997 = vpop.f32.mrb[0].mxu0
    %8998 = vdwg.mxu0
    %8999 = vmatprep.subr.bf16.mxu0 0
    %9000 = vmatpush1.bf16.msra.mxu0 %v8503
    %9001 = vmatprep.subr.bf16.mxu0 0
    %9002 = vmatpush1.bf16.msra.mxu0 %v8504
    %9003 = vmatprep.subr.bf16.mxu0 0
    %9004 = vmatpush1.bf16.msra.mxu0 %v8505
    %9005 = vmatprep.subr.bf16.mxu0 0
    %9006 = vmatpush1.bf16.msra.mxu0 %v8506
    %9007 = vmatprep.subr.bf16.mxu0 0
    %9008 = vmatpush1.bf16.msra.mxu0 %v8507
    %9009 = vmatprep.subr.bf16.mxu0 0
    %9010 = vmatpush1.bf16.msra.mxu0 %v8508
    %9011 = vmatprep.subr.bf16.mxu0 0
    %9012 = vmatpush1.bf16.msra.mxu0 %v8509
    %9013 = vmatprep.subr.bf16.mxu0 0
    %9014 = vmatpush1.bf16.msra.mxu0 %v8510
    %9015 = vmatprep.subr.bf16.mxu0 0
    %9016 = vmatpush1.bf16.msra.mxu0 %v8511
    %9017 = vmatprep.subr.bf16.mxu0 0
    %9018 = vmatpush1.bf16.msra.mxu0 %v8512
    %9019 = vmatprep.subr.bf16.mxu0 0
    %9020 = vmatpush1.bf16.msra.mxu0 %v8513
    %9021 = vmatprep.subr.bf16.mxu0 0
    %9022 = vmatpush1.bf16.msra.mxu0 %v8514
    %9023 = vmatprep.subr.bf16.mxu0 0
    %9024 = vmatpush1.bf16.msra.mxu0 %v8515
    %9025 = vmatprep.subr.bf16.mxu0 0
    %9026 = vmatpush1.bf16.msra.mxu0 %v8516
    %9027 = vmatprep.subr.bf16.mxu0 0
    %9028 = vmatpush1.bf16.msra.mxu0 %v8517
    %9029 = vmatprep.subr.bf16.mxu0 0
    %9030 = vmatpush1.bf16.msra.mxu0 %v8518
    %9031 = vmatprep.mubr.bf16.mxu0 %v6665
    %9032 = vmatmul.mubr.bf16.gmra.mrb[0].mxu0 %v6630
    %v9033 = vpop.f32.mrb[0].mxu0
    %v9034 = vadd.f32 %v8994, %v9033
    %v9035 = vpop.f32.mrb[0].mxu0
    %v9036 = vpop.f32.mrb[0].mxu0
    %v9037 = vpop.f32.mrb[0].mxu0
    %9038 = vdwg.mxu0
    %9039 = vmatprep.subr.bf16.mxu0 0
    %9040 = vmatpush1.bf16.msra.mxu0 %v8519
    %9041 = vmatprep.subr.bf16.mxu0 0
    %9042 = vmatpush1.bf16.msra.mxu0 %v8520
    %9043 = vmatprep.subr.bf16.mxu0 0
    %9044 = vmatpush1.bf16.msra.mxu0 %v8521
    %9045 = vmatprep.subr.bf16.mxu0 0
    %9046 = vmatpush1.bf16.msra.mxu0 %v8522
    %9047 = vmatprep.subr.bf16.mxu0 0
    %9048 = vmatpush1.bf16.msra.mxu0 %v8523
    %9049 = vmatprep.subr.bf16.mxu0 0
    %9050 = vmatpush1.bf16.msra.mxu0 %v8524
    %9051 = vmatprep.subr.bf16.mxu0 0
    %9052 = vmatpush1.bf16.msra.mxu0 %v8525
    %9053 = vmatprep.subr.bf16.mxu0 0
    %9054 = vmatpush1.bf16.msra.mxu0 %v8526
    %9055 = vmatprep.subr.bf16.mxu0 0
    %9056 = vmatpush1.bf16.msra.mxu0 %v8527
    %9057 = vmatprep.subr.bf16.mxu0 0
    %9058 = vmatpush1.bf16.msra.mxu0 %v8528
    %9059 = vmatprep.subr.bf16.mxu0 0
    %9060 = vmatpush1.bf16.msra.mxu0 %v8529
    %9061 = vmatprep.subr.bf16.mxu0 0
    %9062 = vmatpush1.bf16.msra.mxu0 %v8530
    %9063 = vmatprep.subr.bf16.mxu0 0
    %9064 = vmatpush1.bf16.msra.mxu0 %v8531
    %9065 = vmatprep.subr.bf16.mxu0 0
    %9066 = vmatpush1.bf16.msra.mxu0 %v8532
    %9067 = vmatprep.subr.bf16.mxu0 0
    %9068 = vmatpush1.bf16.msra.mxu0 %v8533
    %9069 = vmatprep.subr.bf16.mxu0 0
    %9070 = vmatpush1.bf16.msra.mxu0 %v8534
    %9071 = vmatprep.mubr.bf16.mxu0 %v6735
    %9072 = vmatmul.mubr.bf16.gmra.mrb[0].mxu0 %v6700
    %v9073 = vpop.f32.mrb[0].mxu0
    %v9074 = vadd.f32 %v9034, %v9073
    %v9075 = vpop.f32.mrb[0].mxu0
    %v9076 = vpop.f32.mrb[0].mxu0
    %v9077 = vpop.f32.mrb[0].mxu0
    %9078 = vdwg.mxu0
    %9079 = vmatprep.subr.bf16.mxu0 0
    %9080 = vmatpush1.bf16.msra.mxu0 %v8535
    %9081 = vmatprep.subr.bf16.mxu0 0
    %9082 = vmatpush1.bf16.msra.mxu0 %v8536
    %9083 = vmatprep.subr.bf16.mxu0 0
    %9084 = vmatpush1.bf16.msra.mxu0 %v8537
    %9085 = vmatprep.subr.bf16.mxu0 0
    %9086 = vmatpush1.bf16.msra.mxu0 %v8538
    %9087 = vmatprep.subr.bf16.mxu0 0
    %9088 = vmatpush1.bf16.msra.mxu0 %v8539
    %9089 = vmatprep.subr.bf16.mxu0 0
    %9090 = vmatpush1.bf16.msra.mxu0 %v8540
    %9091 = vmatprep.subr.bf16.mxu0 0
    %9092 = vmatpush1.bf16.msra.mxu0 %v8541
    %9093 = vmatprep.subr.bf16.mxu0 0
    %9094 = vmatpush1.bf16.msra.mxu0 %v8542
    %9095 = vmatprep.subr.bf16.mxu0 0
    %9096 = vmatpush1.bf16.msra.mxu0 %v8543
    %9097 = vmatprep.subr.bf16.mxu0 0
    %9098 = vmatpush1.bf16.msra.mxu0 %v8544
    %9099 = vmatprep.subr.bf16.mxu0 0
    %9100 = vmatpush1.bf16.msra.mxu0 %v8545
    %9101 = vmatprep.subr.bf16.mxu0 0
    %9102 = vmatpush1.bf16.msra.mxu0 %v8546
    %9103 = vmatprep.subr.bf16.mxu0 0
    %9104 = vmatpush1.bf16.msra.mxu0 %v8547
    %9105 = vmatprep.subr.bf16.mxu0 0
    %9106 = vmatpush1.bf16.msra.mxu0 %v8548
    %9107 = vmatprep.subr.bf16.mxu0 0
    %9108 = vmatpush1.bf16.msra.mxu0 %v8549
    %9109 = vmatprep.subr.bf16.mxu0 0
    %9110 = vmatpush1.bf16.msra.mxu0 %v8550
    %9111 = vmatprep.mubr.bf16.mxu0 %v6759
    %9112 = vmatmul.mubr.bf16.gmra.mrb[0].mxu0 %v6747
    %v9113 = vpop.f32.mrb[0].mxu0
    %v9114 = vadd.f32 %v9074, %v9113
    %v9115 = vpop.f32.mrb[0].mxu0
    %v9116 = vpop.f32.mrb[0].mxu0
    %v9117 = vpop.f32.mrb[0].mxu0
    %9118 = vdwg.mxu0
    %9119 = vmatprep.subr.bf16.mxu0 0
    %9120 = vmatpush1.bf16.msra.mxu0 %v8551
    %9121 = vmatprep.subr.bf16.mxu0 0
    %9122 = vmatpush1.bf16.msra.mxu0 %v8552
    %9123 = vmatprep.subr.bf16.mxu0 0
    %9124 = vmatpush1.bf16.msra.mxu0 %v8553
    %9125 = vmatprep.subr.bf16.mxu0 0
    %9126 = vmatpush1.bf16.msra.mxu0 %v8554
    %9127 = vmatprep.subr.bf16.mxu0 0
    %9128 = vmatpush1.bf16.msra.mxu0 %v8555
    %9129 = vmatprep.subr.bf16.mxu0 0
    %9130 = vmatpush1.bf16.msra.mxu0 %v8556
    %9131 = vmatprep.subr.bf16.mxu0 0
    %9132 = vmatpush1.bf16.msra.mxu0 %v8557
    %9133 = vmatprep.subr.bf16.mxu0 0
    %9134 = vmatpush1.bf16.msra.mxu0 %v8558
    %9135 = vmatprep.subr.bf16.mxu0 0
    %9136 = vmatpush1.bf16.msra.mxu0 %v8559
    %9137 = vmatprep.subr.bf16.mxu0 0
    %9138 = vmatpush1.bf16.msra.mxu0 %v8560
    %9139 = vmatprep.subr.bf16.mxu0 0
    %9140 = vmatpush1.bf16.msra.mxu0 %v8561
    %9141 = vmatprep.subr.bf16.mxu0 0
    %9142 = vmatpush1.bf16.msra.mxu0 %v8562
    %9143 = vmatprep.subr.bf16.mxu0 0
    %9144 = vmatpush1.bf16.msra.mxu0 %v8563
    %9145 = vmatprep.subr.bf16.mxu0 0
    %9146 = vmatpush1.bf16.msra.mxu0 %v8564
    %9147 = vmatprep.subr.bf16.mxu0 0
    %9148 = vmatpush1.bf16.msra.mxu0 %v8565
    %9149 = vmatprep.subr.bf16.mxu0 0
    %9150 = vmatpush1.bf16.msra.mxu0 %v8566
    %9151 = vmatprep.mubr.bf16.mxu0 %v6783
    %9152 = vmatmul.mubr.bf16.gmra.mrb[0].mxu0 %v6771
    %v9153 = vpop.f32.mrb[0].mxu0
    %v9154 = vadd.f32 %v9114, %v9153
    %v9155 = vpop.f32.mrb[0].mxu0
    %v9156 = vpop.f32.mrb[0].mxu0
    %v9157 = vpop.f32.mrb[0].mxu0
    %9158 = vdwg.mxu0
    %9159 = vmatprep.subr.bf16.mxu0 0
    %9160 = vmatpush1.bf16.msra.mxu0 %v8567
    %9161 = vmatprep.subr.bf16.mxu0 0
    %9162 = vmatpush1.bf16.msra.mxu0 %v8568
    %9163 = vmatprep.subr.bf16.mxu0 0
    %9164 = vmatpush1.bf16.msra.mxu0 %v8569
    %9165 = vmatprep.subr.bf16.mxu0 0
    %9166 = vmatpush1.bf16.msra.mxu0 %v8570
    %9167 = vmatprep.subr.bf16.mxu0 0
    %9168 = vmatpush1.bf16.msra.mxu0 %v8571
    %9169 = vmatprep.subr.bf16.mxu0 0
    %9170 = vmatpush1.bf16.msra.mxu0 %v8572
    %9171 = vmatprep.subr.bf16.mxu0 0
    %9172 = vmatpush1.bf16.msra.mxu0 %v8573
    %9173 = vmatprep.subr.bf16.mxu0 0
    %9174 = vmatpush1.bf16.msra.mxu0 %v8574
    %9175 = vmatprep.subr.bf16.mxu0 0
    %9176 = vmatpush1.bf16.msra.mxu0 %v8575
    %9177 = vmatprep.subr.bf16.mxu0 0
    %9178 = vmatpush1.bf16.msra.mxu0 %v8576
    %9179 = vmatprep.subr.bf16.mxu0 0
    %9180 = vmatpush1.bf16.msra.mxu0 %v8577
    %9181 = vmatprep.subr.bf16.mxu0 0
    %9182 = vmatpush1.bf16.msra.mxu0 %v8578
    %9183 = vmatprep.subr.bf16.mxu0 0
    %9184 = vmatpush1.bf16.msra.mxu0 %v8579
    %9185 = vmatprep.subr.bf16.mxu0 0
    %9186 = vmatpush1.bf16.msra.mxu0 %v8580
    %9187 = vmatprep.subr.bf16.mxu0 0
    %9188 = vmatpush1.bf16.msra.mxu0 %v8581
    %9189 = vmatprep.subr.bf16.mxu0 0
    %9190 = vmatpush1.bf16.msra.mxu0 %v8582
    %9191 = vmatprep.mubr.bf16.mxu0 %v6855
    %9192 = vmatmul.mubr.bf16.gmra.mrb[0].mxu0 %v6819
    %v9193 = vpop.f32.mrb[0].mxu0
    %v9194 = vadd.f32 %v9154, %v9193
    %v9195 = vpop.f32.mrb[0].mxu0
    %v9196 = vpop.f32.mrb[0].mxu0
    %v9197 = vpop.f32.mrb[0].mxu0
    %9198 = vdwg.mxu0
    %9199 = vmatprep.subr.bf16.mxu0 0
    %9200 = vmatpush1.bf16.msra.mxu0 %v8583
    %9201 = vmatprep.subr.bf16.mxu0 0
    %9202 = vmatpush1.bf16.msra.mxu0 %v8584
    %9203 = vmatprep.subr.bf16.mxu0 0
    %9204 = vmatpush1.bf16.msra.mxu0 %v8585
    %9205 = vmatprep.subr.bf16.mxu0 0
    %9206 = vmatpush1.bf16.msra.mxu0 %v8586
    %9207 = vmatprep.subr.bf16.mxu0 0
    %9208 = vmatpush1.bf16.msra.mxu0 %v8587
    %9209 = vmatprep.subr.bf16.mxu0 0
    %9210 = vmatpush1.bf16.msra.mxu0 %v8588
    %9211 = vmatprep.subr.bf16.mxu0 0
    %9212 = vmatpush1.bf16.msra.mxu0 %v8589
    %9213 = vmatprep.subr.bf16.mxu0 0
    %9214 = vmatpush1.bf16.msra.mxu0 %v8590
    %9215 = vmatprep.subr.bf16.mxu0 0
    %9216 = vmatpush1.bf16.msra.mxu0 %v8591
    %9217 = vmatprep.subr.bf16.mxu0 0
    %9218 = vmatpush1.bf16.msra.mxu0 %v8592
    %9219 = vmatprep.subr.bf16.mxu0 0
    %9220 = vmatpush1.bf16.msra.mxu0 %v8593
    %9221 = vmatprep.subr.bf16.mxu0 0
    %9222 = vmatpush1.bf16.msra.mxu0 %v8594
    %9223 = vmatprep.subr.bf16.mxu0 0
    %9224 = vmatpush1.bf16.msra.mxu0 %v8595
    %9225 = vmatprep.subr.bf16.mxu0 0
    %9226 = vmatpush1.bf16.msra.mxu0 %v8596
    %9227 = vmatprep.subr.bf16.mxu0 0
    %9228 = vmatpush1.bf16.msra.mxu0 %v8597
    %9229 = vmatprep.subr.bf16.mxu0 0
    %9230 = vmatpush1.bf16.msra.mxu0 %v8598
    %9231 = vmatprep.mubr.bf16.mxu0 %v6927
    %9232 = vmatmul.mubr.bf16.gmra.mrb[0].mxu0 %v6891
    %v9233 = vpop.f32.mrb[0].mxu0
    %v9234 = vadd.f32 %v9194, %v9233
    %v9235 = vpop.f32.mrb[0].mxu0
    %v9236 = vpop.f32.mrb[0].mxu0
    %v9237 = vpop.f32.mrb[0].mxu0
    %9238 = vdwg.mxu0
    %9239 = vmatprep.subr.bf16.mxu0 0
    %9240 = vmatpush1.bf16.msra.mxu0 %v8599
    %9241 = vmatprep.subr.bf16.mxu0 0
    %9242 = vmatpush1.bf16.msra.mxu0 %v8600
    %9243 = vmatprep.subr.bf16.mxu0 0
    %9244 = vmatpush1.bf16.msra.mxu0 %v8601
    %9245 = vmatprep.subr.bf16.mxu0 0
    %9246 = vmatpush1.bf16.msra.mxu0 %v8602
    %9247 = vmatprep.subr.bf16.mxu0 0
    %9248 = vmatpush1.bf16.msra.mxu0 %v8603
    %9249 = vmatprep.subr.bf16.mxu0 0
    %9250 = vmatpush1.bf16.msra.mxu0 %v8604
    %9251 = vmatprep.subr.bf16.mxu0 0
    %9252 = vmatpush1.bf16.msra.mxu0 %v8605
    %9253 = vmatprep.subr.bf16.mxu0 0
    %9254 = vmatpush1.bf16.msra.mxu0 %v8606
    %9255 = vmatprep.subr.bf16.mxu0 0
    %9256 = vmatpush1.bf16.msra.mxu0 %v8607
    %9257 = vmatprep.subr.bf16.mxu0 0
    %9258 = vmatpush1.bf16.msra.mxu0 %v8608
    %9259 = vmatprep.subr.bf16.mxu0 0
    %9260 = vmatpush1.bf16.msra.mxu0 %v8609
    %9261 = vmatprep.subr.bf16.mxu0 0
    %9262 = vmatpush1.bf16.msra.mxu0 %v8610
    %9263 = vmatprep.subr.bf16.mxu0 0
    %9264 = vmatpush1.bf16.msra.mxu0 %v8611
    %9265 = vmatprep.subr.bf16.mxu0 0
    %9266 = vmatpush1.bf16.msra.mxu0 %v8612
    %9267 = vmatprep.subr.bf16.mxu0 0
    %9268 = vmatpush1.bf16.msra.mxu0 %v8613
    %9269 = vmatprep.subr.bf16.mxu0 0
    %9270 = vmatpush1.bf16.msra.mxu0 %v8614
    %9271 = vmatprep.mubr.bf16.mxu0 %v6949
    %9272 = vmatmul.mubr.bf16.gmra.mrb[0].mxu0 %v6938
    %v9273 = vpop.f32.mrb[0].mxu0
    %v9274 = vadd.f32 %v9234, %v9273
    %v9275 = vpop.f32.mrb[0].mxu0
    %v9276 = vpop.f32.mrb[0].mxu0
    %v9277 = vpop.f32.mrb[0].mxu0
    %9278 = vdwg.mxu0
    %9279 = vmatprep.subr.bf16.mxu0 0
    %9280 = vmatpush1.bf16.msra.mxu0 %v8615
    %9281 = vmatprep.subr.bf16.mxu0 0
    %9282 = vmatpush1.bf16.msra.mxu0 %v8616
    %9283 = vmatprep.subr.bf16.mxu0 0
    %9284 = vmatpush1.bf16.msra.mxu0 %v8617
    %9285 = vmatprep.subr.bf16.mxu0 0
    %9286 = vmatpush1.bf16.msra.mxu0 %v8618
    %9287 = vmatprep.subr.bf16.mxu0 0
    %9288 = vmatpush1.bf16.msra.mxu0 %v8619
    %9289 = vmatprep.subr.bf16.mxu0 0
    %9290 = vmatpush1.bf16.msra.mxu0 %v8620
    %9291 = vmatprep.subr.bf16.mxu0 0
    %9292 = vmatpush1.bf16.msra.mxu0 %v8621
    %9293 = vmatprep.subr.bf16.mxu0 0
    %9294 = vmatpush1.bf16.msra.mxu0 %v8622
    %9295 = vmatprep.subr.bf16.mxu0 0
    %9296 = vmatpush1.bf16.msra.mxu0 %v8623
    %9297 = vmatprep.subr.bf16.mxu0 0
    %9298 = vmatpush1.bf16.msra.mxu0 %v8624
    %9299 = vmatprep.subr.bf16.mxu0 0
    %9300 = vmatpush1.bf16.msra.mxu0 %v8625
    %9301 = vmatprep.subr.bf16.mxu0 0
    %9302 = vmatpush1.bf16.msra.mxu0 %v8626
    %9303 = vmatprep.subr.bf16.mxu0 0
    %9304 = vmatpush1.bf16.msra.mxu0 %v8627
    %9305 = vmatprep.subr.bf16.mxu0 0
    %9306 = vmatpush1.bf16.msra.mxu0 %v8628
    %9307 = vmatprep.subr.bf16.mxu0 0
    %9308 = vmatpush1.bf16.msra.mxu0 %v8629
    %9309 = vmatprep.subr.bf16.mxu0 0
    %9310 = vmatpush1.bf16.msra.mxu0 %v8630
    %9311 = vmatprep.mubr.bf16.mxu0 %v6971
    %9312 = vmatmul.mubr.bf16.gmra.mrb[0].mxu0 %v6960
    %v9313 = vpop.f32.mrb[0].mxu0
    %v9314 = vadd.f32 %v9274, %v9313
    %v9315 = vpop.f32.mrb[0].mxu0
    %v9316 = vpop.f32.mrb[0].mxu0
    %v9317 = vpop.f32.mrb[0].mxu0
    %9318 = vdwg.mxu0
    %9319 = vmatprep.subr.bf16.mxu0 0
    %9320 = vmatpush1.bf16.msra.mxu0 %v8631
    %9321 = vmatprep.subr.bf16.mxu0 0
    %9322 = vmatpush1.bf16.msra.mxu0 %v8632
    %9323 = vmatprep.subr.bf16.mxu0 0
    %9324 = vmatpush1.bf16.msra.mxu0 %v8633
    %9325 = vmatprep.subr.bf16.mxu0 0
    %9326 = vmatpush1.bf16.msra.mxu0 %v8634
    %9327 = vmatprep.subr.bf16.mxu0 0
    %9328 = vmatpush1.bf16.msra.mxu0 %v8635
    %9329 = vmatprep.subr.bf16.mxu0 0
    %9330 = vmatpush1.bf16.msra.mxu0 %v8636
    %9331 = vmatprep.subr.bf16.mxu0 0
    %9332 = vmatpush1.bf16.msra.mxu0 %v8637
    %9333 = vmatprep.subr.bf16.mxu0 0
    %9334 = vmatpush1.bf16.msra.mxu0 %v8638
    %9335 = vmatprep.subr.bf16.mxu0 0
    %9336 = vmatpush1.bf16.msra.mxu0 %v8639
    %9337 = vmatprep.subr.bf16.mxu0 0
    %9338 = vmatpush1.bf16.msra.mxu0 %v8640
    %9339 = vmatprep.subr.bf16.mxu0 0
    %9340 = vmatpush1.bf16.msra.mxu0 %v8641
    %9341 = vmatprep.subr.bf16.mxu0 0
    %9342 = vmatpush1.bf16.msra.mxu0 %v8642
    %9343 = vmatprep.subr.bf16.mxu0 0
    %9344 = vmatpush1.bf16.msra.mxu0 %v8643
    %9345 = vmatprep.subr.bf16.mxu0 0
    %9346 = vmatpush1.bf16.msra.mxu0 %v8644
    %9347 = vmatprep.subr.bf16.mxu0 0
    %9348 = vmatpush1.bf16.msra.mxu0 %v8645
    %9349 = vmatprep.subr.bf16.mxu0 0
    %9350 = vmatpush1.bf16.msra.mxu0 %v8646
    %9351 = vmatprep.mubr.bf16.mxu0 %v7029
    %9352 = vmatmul.mubr.bf16.gmra.mrb[0].mxu0 %v7000
    %v9353 = vpop.f32.mrb[0].mxu0
    %v9354 = vadd.f32 %v9314, %v9353
    %v9355 = vpop.f32.mrb[0].mxu0
    %v9356 = vpop.f32.mrb[0].mxu0
    %v9357 = vpop.f32.mrb[0].mxu0
    %9358 = vdwg.mxu0
    %9359 = vmatprep.subr.bf16.mxu0 0
    %9360 = vmatpush1.bf16.msra.mxu0 %v8647
    %9361 = vmatprep.subr.bf16.mxu0 0
    %9362 = vmatpush1.bf16.msra.mxu0 %v8648
    %9363 = vmatprep.subr.bf16.mxu0 0
    %9364 = vmatpush1.bf16.msra.mxu0 %v8649
    %9365 = vmatprep.subr.bf16.mxu0 0
    %9366 = vmatpush1.bf16.msra.mxu0 %v8650
    %9367 = vmatprep.subr.bf16.mxu0 0
    %9368 = vmatpush1.bf16.msra.mxu0 %v8651
    %9369 = vmatprep.subr.bf16.mxu0 0
    %9370 = vmatpush1.bf16.msra.mxu0 %v8652
    %9371 = vmatprep.subr.bf16.mxu0 0
    %9372 = vmatpush1.bf16.msra.mxu0 %v8653
    %9373 = vmatprep.subr.bf16.mxu0 0
    %9374 = vmatpush1.bf16.msra.mxu0 %v8654
    %9375 = vmatprep.subr.bf16.mxu0 0
    %9376 = vmatpush1.bf16.msra.mxu0 %v8655
    %9377 = vmatprep.subr.bf16.mxu0 0
    %9378 = vmatpush1.bf16.msra.mxu0 %v8656
    %9379 = vmatprep.subr.bf16.mxu0 0
    %9380 = vmatpush1.bf16.msra.mxu0 %v8657
    %9381 = vmatprep.subr.bf16.mxu0 0
    %9382 = vmatpush1.bf16.msra.mxu0 %v8658
    %9383 = vmatprep.subr.bf16.mxu0 0
    %9384 = vmatpush1.bf16.msra.mxu0 %v8659
    %9385 = vmatprep.subr.bf16.mxu0 0
    %9386 = vmatpush1.bf16.msra.mxu0 %v8660
    %9387 = vmatprep.subr.bf16.mxu0 0
    %9388 = vmatpush1.bf16.msra.mxu0 %v8661
    %9389 = vmatprep.subr.bf16.mxu0 0
    %9390 = vmatpush1.bf16.msra.mxu0 %v8662
    %9391 = vmatprep.mubr.bf16.mxu0 %v7087
    %9392 = vmatmul.mubr.bf16.gmra.mrb[0].mxu0 %v7058
    %v9393 = vpop.f32.mrb[0].mxu0
    %v9394 = vadd.f32 %v9354, %v9393
    %v9395 = vpop.f32.mrb[0].mxu0
    %v9396 = vpop.f32.mrb[0].mxu0
    %v9397 = vpop.f32.mrb[0].mxu0
    %9398 = vdwg.mxu0
    %9399 = vmatprep.subr.bf16.mxu0 0
    %9400 = vmatpush1.bf16.msra.mxu0 %v8663
    %9401 = vmatprep.subr.bf16.mxu0 0
    %9402 = vmatpush1.bf16.msra.mxu0 %v8664
    %9403 = vmatprep.subr.bf16.mxu0 0
    %9404 = vmatpush1.bf16.msra.mxu0 %v8665
    %9405 = vmatprep.subr.bf16.mxu0 0
    %9406 = vmatpush1.bf16.msra.mxu0 %v8666
    %9407 = vmatprep.subr.bf16.mxu0 0
    %9408 = vmatpush1.bf16.msra.mxu0 %v8667
    %9409 = vmatprep.subr.bf16.mxu0 0
    %9410 = vmatpush1.bf16.msra.mxu0 %v8668
    %9411 = vmatprep.subr.bf16.mxu0 0
    %9412 = vmatpush1.bf16.msra.mxu0 %v8669
    %9413 = vmatprep.subr.bf16.mxu0 0
    %9414 = vmatpush1.bf16.msra.mxu0 %v8670
    %9415 = vmatprep.subr.bf16.mxu0 0
    %9416 = vmatpush1.bf16.msra.mxu0 %v8671
    %9417 = vmatprep.subr.bf16.mxu0 0
    %9418 = vmatpush1.bf16.msra.mxu0 %v8672
    %9419 = vmatprep.subr.bf16.mxu0 0
    %9420 = vmatpush1.bf16.msra.mxu0 %v8673
    %9421 = vmatprep.subr.bf16.mxu0 0
    %9422 = vmatpush1.bf16.msra.mxu0 %v8674
    %9423 = vmatprep.subr.bf16.mxu0 0
    %9424 = vmatpush1.bf16.msra.mxu0 %v8675
    %9425 = vmatprep.subr.bf16.mxu0 0
    %9426 = vmatpush1.bf16.msra.mxu0 %v8676
    %9427 = vmatprep.subr.bf16.mxu0 0
    %9428 = vmatpush1.bf16.msra.mxu0 %v8677
    %9429 = vmatprep.subr.bf16.mxu0 0
    %9430 = vmatpush1.bf16.msra.mxu0 %v8678
    %9431 = vmatprep.mubr.bf16.mxu0 %v7103
    %9432 = vmatmul.mubr.bf16.gmra.mrb[0].mxu0 %v7095
    %v9433 = vpop.f32.mrb[0].mxu0
    %v9434 = vadd.f32 %v9394, %v9433
    %v9435 = vpop.f32.mrb[0].mxu0
    %v9436 = vpop.f32.mrb[0].mxu0
    %v9437 = vpop.f32.mrb[0].mxu0
    %9438 = vdwg.mxu0
    %9439 = vmatprep.subr.bf16.mxu0 0
    %9440 = vmatpush1.bf16.msra.mxu0 %v8679
    %9441 = vmatprep.subr.bf16.mxu0 0
    %9442 = vmatpush1.bf16.msra.mxu0 %v8680
    %9443 = vmatprep.subr.bf16.mxu0 0
    %9444 = vmatpush1.bf16.msra.mxu0 %v8681
    %9445 = vmatprep.subr.bf16.mxu0 0
    %9446 = vmatpush1.bf16.msra.mxu0 %v8682
    %9447 = vmatprep.subr.bf16.mxu0 0
    %9448 = vmatpush1.bf16.msra.mxu0 %v8683
    %9449 = vmatprep.subr.bf16.mxu0 0
    %9450 = vmatpush1.bf16.msra.mxu0 %v8684
    %9451 = vmatprep.subr.bf16.mxu0 0
    %9452 = vmatpush1.bf16.msra.mxu0 %v8685
    %9453 = vmatprep.subr.bf16.mxu0 0
    %9454 = vmatpush1.bf16.msra.mxu0 %v8686
    %9455 = vmatprep.subr.bf16.mxu0 0
    %9456 = vmatpush1.bf16.msra.mxu0 %v8687
    %9457 = vmatprep.subr.bf16.mxu0 0
    %9458 = vmatpush1.bf16.msra.mxu0 %v8688
    %9459 = vmatprep.subr.bf16.mxu0 0
    %9460 = vmatpush1.bf16.msra.mxu0 %v8689
    %9461 = vmatprep.subr.bf16.mxu0 0
    %9462 = vmatpush1.bf16.msra.mxu0 %v8690
    %9463 = vmatprep.subr.bf16.mxu0 0
    %9464 = vmatpush1.bf16.msra.mxu0 %v8691
    %9465 = vmatprep.subr.bf16.mxu0 0
    %9466 = vmatpush1.bf16.msra.mxu0 %v8692
    %9467 = vmatprep.subr.bf16.mxu0 0
    %9468 = vmatpush1.bf16.msra.mxu0 %v8693
    %9469 = vmatprep.subr.bf16.mxu0 0
    %9470 = vmatpush1.bf16.msra.mxu0 %v8694
    %9471 = vmatprep.mubr.bf16.mxu0 %v7119
    %9472 = vmatmul.mubr.bf16.gmra.mrb[0].mxu0 %v7111
    %v9473 = vpop.f32.mrb[0].mxu0
    %v9474 = vadd.f32 %v9434, %v9473
    %v9475 = vpop.f32.mrb[0].mxu0
    %v9476 = vpop.f32.mrb[0].mxu0
    %v9477 = vpop.f32.mrb[0].mxu0
    %9478 = vdwg.mxu0
    %v9479 = vmax.f32 %v9474, 0.0
    %v9480 = vpack.c.bf16 %v9479, %v9479
    %v9481 = vld [vmem:[%s7] sm:$0xf]
    %v9482 = vld [vmem:[%s7 + $0x4] sm:$0xf]
    %v9483 = vld [vmem:[%s7 + $0x8] sm:$0xf]
    %v9484 = vld [vmem:[%s7 + $0xc] sm:$0xf]
    %v9485 = vld [vmem:[%s7 + $0x10] sm:$0xf]
    %v9486 = vld [vmem:[%s7 + $0x14] sm:$0xf]
    %v9487 = vld [vmem:[%s7 + $0x18] sm:$0xf]
    %v9488 = vld [vmem:[%s7 + $0x1c] sm:$0xf]
    %v9489 = vld [vmem:[%s7 + $0x20] sm:$0xf]
    %v9490 = vld [vmem:[%s7 + $0x24] sm:$0xf]
    %v9491 = vld [vmem:[%s7 + $0x28] sm:$0xf]
    %v9492 = vld [vmem:[%s7 + $0x2c] sm:$0xf]
    %v9493 = vld [vmem:[%s7 + $0x30] sm:$0xf]
    %v9494 = vld [vmem:[%s7 + $0x34] sm:$0xf]
    %v9495 = vld [vmem:[%s7 + $0x38] sm:$0xf]
    %v9496 = vld [vmem:[%s7 + $0x3c] sm:$0xf]
    %v9497 = vld [vmem:[%s8] sm:$0x1]
    %v9499 = vlaneseq
    %v9500 = vshrl.u32 %v9499, 7
    %v9501 = vsub.s32 0, %v9500
    %v9502 = vrot.slane %v9497, %v9501
    %v9520 = vunpack.c.l.b16 %v9481
    %v9521 = vunpack.c.l.b16 %v9482
    %v9522 = vunpack.c.l.b16 %v9483
    %v9523 = vunpack.c.l.b16 %v9484
    %v9524 = vunpack.c.l.b16 %v9485
    %v9525 = vunpack.c.l.b16 %v9486
    %v9526 = vunpack.c.l.b16 %v9487
    %v9527 = vunpack.c.l.b16 %v9488
    %v9528 = vunpack.c.l.b16 %v9489
    %v9529 = vunpack.c.l.b16 %v9490
    %v9530 = vunpack.c.l.b16 %v9491
    %v9531 = vunpack.c.l.b16 %v9492
    %v9532 = vunpack.c.l.b16 %v9493
    %v9533 = vunpack.c.l.b16 %v9494
    %v9534 = vunpack.c.l.b16 %v9495
    %v9535 = vunpack.c.l.b16 %v9496
    %v9536 = vpack.c.b16 %v9521, %v9520
    %v9537 = vpack.c.b16 %v9523, %v9522
    %v9538 = vpack.c.b16 %v9525, %v9524
    %v9539 = vpack.c.b16 %v9527, %v9526
    %v9540 = vpack.c.b16 %v9529, %v9528
    %v9541 = vpack.c.b16 %v9531, %v9530
    %v9542 = vpack.c.b16 %v9533, %v9532
    %v9543 = vpack.c.b16 %v9535, %v9534
    %9552 = vmatprep.subr.bf16.mxu0 0
    %9553 = vmatpush1.bf16.msra.mxu0 %v9536
    %9554 = vmatprep.subr.bf16.mxu0 0
    %9555 = vmatpush1.bf16.msra.mxu0 %v9537
    %9556 = vmatprep.subr.bf16.mxu0 0
    %9557 = vmatpush1.bf16.msra.mxu0 %v9538
    %9558 = vmatprep.subr.bf16.mxu0 0
    %9559 = vmatpush1.bf16.msra.mxu0 %v9539
    %9560 = vmatprep.subr.bf16.mxu0 0
    %9561 = vmatpush1.bf16.msra.mxu0 %v9540
    %9562 = vmatprep.subr.bf16.mxu0 0
    %9563 = vmatpush1.bf16.msra.mxu0 %v9541
    %9564 = vmatprep.subr.bf16.mxu0 0
    %9565 = vmatpush1.bf16.msra.mxu0 %v9542
    %9566 = vmatprep.subr.bf16.mxu0 0
    %9567 = vmatpush1.bf16.msra.mxu0 %v9543
    %9568 = vmatprep.subr.bf16.mxu0 0
    %9569 = vmatpush1.bf16.msra.mxu0 0
    %9570 = vmatprep.subr.bf16.mxu0 0
    %9571 = vmatpush1.bf16.msra.mxu0 0
    %9572 = vmatprep.subr.bf16.mxu0 0
    %9573 = vmatpush1.bf16.msra.mxu0 0
    %9574 = vmatprep.subr.bf16.mxu0 0
    %9575 = vmatpush1.bf16.msra.mxu0 0
    %9576 = vmatprep.subr.bf16.mxu0 0
    %9577 = vmatpush1.bf16.msra.mxu0 0
    %9578 = vmatprep.subr.bf16.mxu0 0
    %9579 = vmatpush1.bf16.msra.mxu0 0
    %9580 = vmatprep.subr.bf16.mxu0 0
    %9581 = vmatpush1.bf16.msra.mxu0 0
    %9582 = vmatprep.subr.bf16.mxu0 0
    %9583 = vmatpush1.bf16.msra.mxu0 0
    %9584 = vmatprep.mubr.bf16.mxu0 0
    %9585 = vmatmul.mubr.bf16.gmra.mrb[0].mxu0 %v9480
    %v9586 = vpop.f32.mrb[0].mxu0
    %v9587 = vadd.f32 %v9502, %v9586
    %v9588 = vpop.f32.mrb[0].mxu0
    %v9589 = vpop.f32.mrb[0].mxu0
    %v9590 = vpop.f32.mrb[0].mxu0
    %9591 = vdwg.mxu0
    %9592 = vst [vmem:[%s9] sm:$0xff] %v9587
    // Predicated region
    $region46: #{cnn1_forward.1} parent=1 // pred_check
      _
    $region47: #{cnn1_forward.1} parent=1 // pred_check_branch
      %9594 = sbr.rel (0) target = $region49
    $region48: #{cnn1_forward.1} parent=1 // pred_region
      _
    $region49: #{cnn1_forward.1} parent=1 // pred_fallthru
      _
    // Predicated region
    $region50: #{cnn1_forward.1} parent=1 // pred_check
      _
    $region51: #{cnn1_forward.1} parent=1 // pred_check_branch
      %9596 = sbr.rel (0) target = $region53
    $region52: #{cnn1_forward.1} parent=1 // pred_region
      _
    $region53: #{cnn1_forward.1} parent=1 // pred_fallthru
      _
    %9597 = vsyncpa [#allocation3], 1
    %9598 = vsyncpa [#allocation5], 1

</llo_original>
